<compile_context>
chip_gen: v7x
topology: tpu7x:2x2x1
jax: 0.10.0
libtpu: 0.0.40
codegen_flags: <defaults>
</compile_context>

<pallas_src>
import jax
import jax.numpy as jnp
from jax.experimental import pallas as pl
from jax.experimental.pallas import tpu as pltpu

_LANE = 128
_SUBLANE = 8


def _vmem_limit_bytes():
    """Generation-aware VMEM budget: ~75% of physical capacity, capped.
    128 MiB parts (v5e/v6e) -> 96 MiB, v7x's 64 MiB -> 48 MiB; falls back to a
    conservative 32 MiB (known to fit this kernel at test sizes)."""
    try:
        cap = int(pltpu.get_tpu_info().vmem_capacity_bytes)
        return max(32 * 1024 * 1024, min((cap * 3) // 4, 100 * 1024 * 1024))
    except Exception:
        return 32 * 1024 * 1024


def _make_kernel(H, W, C_pad, Wp_pad, eps):
    M2 = H * Wp_pad              # flattened conv-output rows (incl. junk w >= W)
    M_img = (H + 2) * Wp_pad     # flattened padded-image rows
    M_pad = (H + 3) * Wp_pad     # + spare row-block (read only by junk rows)
    span = (H + 2) * Wp_pad      # rows covered per kw Ref load (all kh, all outputs)
    inv_n = 1.0 / float(H * W)   # InstanceNorm divisor (valid spatial positions)

    def kernel(x_ref, w1_ref, b1_ref, w2_ref, b2_ref, o_ref, pbuf):
        cdt = pbuf.dtype                      # MXU compute dtype (bf16 or f32)

        # Only the spare tail row-block ever stays unwritten (it is read by the
        # junk output rows at h = H-1); zero it once per grid step so reads are
        # deterministic / NaN-free.  Everything else is overwritten per conv.
        pbuf[M_img:M_pad, :] = jnp.zeros((M_pad - M_img, C_pad), cdt)

        x = x_ref[0]                          # (H, W, C_pad) f32

        def conv_in(img, w_ref, b_ref, relu):
            # ---- ReflectionPad2d(1): aligned assembly into the flat scratch --
            src = img.astype(cdt)                                  # (H, W, C_pad)
            pieces = [src[:, 1:2, :], src, src[:, W - 2:W - 1, :]]
            if Wp_pad > W + 2:
                pieces.append(jnp.zeros((H, Wp_pad - W - 2, C_pad), cdt))
            rows = jnp.concatenate(pieces, axis=1)                 # (H, Wp_pad, C_pad)
            pbuf[Wp_pad:(H + 1) * Wp_pad, :] = rows.reshape(H * Wp_pad, C_pad)
            pbuf[0:Wp_pad, :] = rows[1]                            # top reflection
            pbuf[(H + 1) * Wp_pad:M_img, :] = rows[H - 2]          # bottom reflection

            # ---- 3x3 conv = 9 row-offset MXU matmuls -------------------------
            # Padded pixel (i, j) lives at flat row i*Wp_pad + j, so tap (kh, kw)
            # for output row r' = h*Wp_pad + w is row r' + kh*Wp_pad + kw.  One
            # (possibly sublane-shifted) Ref load per kw; 8-aligned value slices
            # per kh; acc is seeded with the first dot (no zero-fill + add pass).
            acc = None
            for kw in range(3):
                q = pbuf[kw:kw + span, :]                          # (span, C_pad)
                for kh in range(3):
                    t = jnp.dot(q[kh * Wp_pad:kh * Wp_pad + M2, :],
                                w_ref[kh * 3 + kw],
                                preferred_element_type=jnp.float32)
                    acc = t if acc is None else acc + t            # (M2, C_pad) f32

            # ---- fused bias + two-pass InstanceNorm (+ optional ReLU) --------
            # Stats are computed only on the valid [:, :W, :] columns (the junk
            # w >= W columns are dropped before any reduction), with a two-pass
            # mean / variance to avoid E[x^2]-E[x]^2 cancellation.
            a = (acc.reshape(H, Wp_pad, C_pad)[:, :W, :]
                 + b_ref[...].reshape(1, 1, C_pad))                # (H, W, C_pad) f32
            mean = jnp.sum(a, axis=(0, 1), keepdims=True) * inv_n
            d = a - mean
            var = jnp.sum(d * d, axis=(0, 1), keepdims=True) * inv_n
            y = d * jax.lax.rsqrt(var + eps)
            if relu:
                y = jnp.maximum(y, 0.0)
            return y                                               # (H, W, C_pad) f32

        y = conv_in(x, w1_ref, b1_ref, relu=True)      # conv1 -> IN -> ReLU
        z = conv_in(y, w2_ref, b2_ref, relu=False)     # conv2 -> IN
        o_ref[0] = (x + z).astype(o_ref.dtype)         # residual add

    return kernel


def resnet_block_nhwc(x, w1, b1, w2, b2, *, compute_dtype=jnp.bfloat16, eps=1e-5):
    """ResnetBlock forward, NHWC layout (preferred entry point).

    x      : (N, H, W, C) float32
    w1, w2 : (3, 3, C, C) conv weights, HWIO layout
             (PyTorch OIHW weights -> transpose(2, 3, 1, 0) once at setup)
    b1, b2 : (C,) or (1, C) conv biases
    Returns (N, H, W, C) float32.
    """
    N, H, W, C = x.shape
    if H < 3 or W < 3:
        raise ValueError("ReflectionPad2d(1) + 3x3 conv needs H, W >= 3")

    C_pad = ((C + _LANE - 1) // _LANE) * _LANE                 # lane-dense channels
    Wp_pad = ((W + 2 + _SUBLANE - 1) // _SUBLANE) * _SUBLANE   # padded width (sublane mult.)
    M2 = H * Wp_pad
    M_pad = (H + 3) * Wp_pad
    dc = C_pad - C

    x_p = x.astype(jnp.float32)
    if dc:
        x_p = jnp.pad(x_p, ((0, 0), (0, 0), (0, 0), (0, dc)))

    def pad_w(w):
        if dc:
            w = jnp.pad(w, ((0, 0), (0, 0), (0, dc), (0, dc)))
        return w.reshape(9, C_pad, C_pad).astype(compute_dtype)

    def pad_b(b):
        b = b.reshape(1, C).astype(jnp.float32)
        return jnp.pad(b, ((0, 0), (0, dc))) if dc else b

    w1_p, w2_p = pad_w(w1), pad_w(w2)
    b1_p, b2_p = pad_b(b1), pad_b(b2)

    kernel = _make_kernel(H, W, C_pad, Wp_pad, eps)

    wbytes = 2 * 9 * C_pad * C_pad * jnp.dtype(compute_dtype).itemsize
    cost = pl.CostEstimate(
        flops=int(2 * N * 2 * 9 * M2 * C_pad * C_pad),
        transcendentals=int(2 * N * C_pad),
        bytes_accessed=int((x_p.size + N * H * W * C_pad) * 4 + wbytes
                           + (b1_p.size + b2_p.size) * 4),
    )

    # Grid-invariant operands (constant index_map) are single-buffered so the
    # big bf16 weight blocks are not double-buffered in VMEM.
    inv = dict(pipeline_mode=pl.Buffered(1))

    out = pl.pallas_call(
        kernel,
        out_shape=jax.ShapeDtypeStruct((N, H, W, C_pad), x_p.dtype),
        grid_spec=pltpu.PrefetchScalarGridSpec(
            num_scalar_prefetch=0,
            grid=(N,),
            in_specs=[
                pl.BlockSpec((1, H, W, C_pad), lambda n: (n, 0, 0, 0)),
                pl.BlockSpec((9, C_pad, C_pad), lambda n: (0, 0, 0), **inv),
                pl.BlockSpec((1, C_pad), lambda n: (0, 0), **inv),
                pl.BlockSpec((9, C_pad, C_pad), lambda n: (0, 0, 0), **inv),
                pl.BlockSpec((1, C_pad), lambda n: (0, 0), **inv),
            ],
            out_specs=pl.BlockSpec((1, H, W, C_pad), lambda n: (n, 0, 0, 0)),
            scratch_shapes=[pltpu.VMEM((M_pad, C_pad), compute_dtype)],
        ),
        compiler_params=pltpu.CompilerParams(
            dimension_semantics=("parallel",),
            vmem_limit_bytes=_vmem_limit_bytes(),
        ),
        cost_estimate=cost,
    )(x_p, w1_p, b1_p, w2_p, b2_p)

    return out[..., :C] if dc else out


def resnet_block_nchw(x_nchw, w1, b1, w2, b2, *, compute_dtype=jnp.bfloat16,
                      eps=1e-5):
    """PyTorch-layout wrapper.  NOTE: these two transposes are pure HBM traffic;
    in a full pix2pixHD generator convert NCHW->NHWC once for the whole network
    (use `resnet_block_nhwc` directly), not once per block."""
    x = jnp.transpose(x_nchw, (0, 2, 3, 1))
    out = resnet_block_nhwc(x, w1, b1, w2, b2, compute_dtype=compute_dtype,
                            eps=eps)
    return jnp.transpose(out, (0, 3, 1, 2))


def _reference(x_nchw, w1, b1, w2, b2, eps=1e-5, conv_dtype=jnp.float32):
    # Pure-JAX reference (NHWC conv via lax.conv_general_dilated).
    x = jnp.transpose(x_nchw, (0, 2, 3, 1))

    def conv(a, w, b):
        ap = jnp.pad(a, ((0, 0), (1, 1), (1, 1), (0, 0)), mode="reflect")
        y = jax.lax.conv_general_dilated(
            ap.astype(conv_dtype), w.astype(conv_dtype),
            window_strides=(1, 1), padding="VALID",
            dimension_numbers=("NHWC", "HWIO", "NHWC"),
            preferred_element_type=jnp.float32)
        return y + b.reshape(1, 1, 1, -1)

    def inorm(a):
        m = jnp.mean(a, axis=(1, 2), keepdims=True)
        v = jnp.mean((a - m) ** 2, axis=(1, 2), keepdims=True)
        return (a - m) * jax.lax.rsqrt(v + eps)

    y = jnp.maximum(inorm(conv(x, w1, b1)), 0.0)
    z = inorm(conv(y, w2, b2))
    return jnp.transpose(x + z, (0, 3, 1, 2))


if __name__ == "__main__":
    key = jax.random.PRNGKey(0)
    N, C, H, W = 2, 4, 16, 16                      # dim = C (small test shapes)

    kx, kw1, kb1, kw2, kb2 = jax.random.split(key, 5)
    x = jax.random.normal(kx, (N, C, H, W), jnp.float32)
    # Synthetic Conv2d(dim, dim, 3) params, stored directly in HWIO layout.
    w1 = jax.random.normal(kw1, (3, 3, C, C), jnp.float32) * 0.1
    b1 = jax.random.normal(kb1, (1, C), jnp.float32) * 0.1
    w2 = jax.random.normal(kw2, (3, 3, C, C), jnp.float32) * 0.1
    b2 = jax.random.normal(kb2, (1, C), jnp.float32) * 0.1

    # --- strict semantic check: f32 MXU operands vs pure-JAX reference -------
    ref_f32 = jax.block_until_ready(_reference(x, w1, b1, w2, b2))
    out_f32 = jax.block_until_ready(
        resnet_block_nchw(x, w1, b1, w2, b2, compute_dtype=jnp.float32))
    assert out_f32.shape == (N, C, H, W)
    err_f32 = float(jnp.max(jnp.abs(out_f32 - ref_f32)))
    assert jnp.allclose(out_f32, ref_f32, atol=1e-3, rtol=1e-3), err_f32

    # --- production path: bf16 MXU operands, f32 accumulation ----------------
    # Compared against a bf16-operand reference so only the summation order /
    # tiling differs (MXU rounding of operands is identical).  Explicit,
    # documented accuracy trade-off; the f32 path above stays available.
    ref_bf16 = jax.block_until_ready(
        _reference(x, w1, b1, w2, b2, conv_dtype=jnp.bfloat16))
    out_bf16 = jax.block_until_ready(
        resnet_block_nchw(x, w1, b1, w2, b2, compute_dtype=jnp.bfloat16))
    err_bf16 = float(jnp.max(jnp.abs(out_bf16 - ref_bf16)))
    assert jnp.allclose(out_bf16, ref_bf16, atol=1e-2, rtol=1e-2), err_bf16

    print("KERNEL_OK")
</pallas_src>

<mosaic_0001>
module attributes {stable_mosaic.version = 11 : i64} {
  func.func @kernel(%arg0: i32, %arg1: memref<1x16x16x128xf32, #tpu.memory_space<vmem>>, %arg2: memref<9x128x128xf32, #tpu.memory_space<vmem>>, %arg3: memref<1x128xf32, #tpu.memory_space<vmem>>, %arg4: memref<9x128x128xf32, #tpu.memory_space<vmem>>, %arg5: memref<1x128xf32, #tpu.memory_space<vmem>>, %arg6: memref<1x16x16x128xf32, #tpu.memory_space<vmem>>, %arg7: memref<456x128xf32, #tpu.memory_space<vmem>>) attributes {dimension_semantics = [#tpu.dimension_semantics<parallel>], iteration_bounds = array<i64: 2>, scalar_prefetch = 0 : i64, scratch_operands = 1 : i64, tpu.core_type = #tpu.core_type<tc>, window_params = [{transform_indices = @transform_0, window_bounds = array<i64: 1, 16, 16, 128>}, {pipeline_mode = #tpu.pipeline_mode<synchronous>, transform_indices = @transform_1, window_bounds = array<i64: 9, 128, 128>}, {pipeline_mode = #tpu.pipeline_mode<synchronous>, transform_indices = @transform_2, window_bounds = array<i64: 1, 128>}, {pipeline_mode = #tpu.pipeline_mode<synchronous>, transform_indices = @transform_3, window_bounds = array<i64: 9, 128, 128>}, {pipeline_mode = #tpu.pipeline_mode<synchronous>, transform_indices = @transform_4, window_bounds = array<i64: 1, 128>}, {transform_indices = @transform_5, window_bounds = array<i64: 1, 16, 16, 128>}]} {
    %cst = arith.constant 0.000000e+00 : f32
    %0 = vector.broadcast %cst : f32 to vector<24x128xf32>
    %c432 = arith.constant 432 : index
    %c0 = arith.constant 0 : index
    %1 = vector.load %arg7[%c432, %c0] : memref<456x128xf32, #tpu.memory_space<vmem>>, vector<24x128xf32>
    tpu.vector_store %arg7[%c432, %c0], %0 {strides = array<i32>} : memref<456x128xf32, #tpu.memory_space<vmem>>, vector<24x128xf32>,
    %c0_0 = arith.constant 0 : index
    %c0_1 = arith.constant 0 : index
    %c0_2 = arith.constant 0 : index
    %c0_3 = arith.constant 0 : index
    %2 = vector.load %arg1[%c0_0, %c0_1, %c0_2, %c0_3] : memref<1x16x16x128xf32, #tpu.memory_space<vmem>>, vector<1x16x16x128xf32>
    %3 = vector.shape_cast %2 : vector<1x16x16x128xf32> to vector<16x16x128xf32>
    %4 = vector.extract_strided_slice %3 {offsets = [0, 1, 0], sizes = [16, 1, 128], strides = [1, 1, 1]} : vector<16x16x128xf32> to vector<16x1x128xf32>
    %5 = vector.extract_strided_slice %3 {offsets = [0, 14, 0], sizes = [16, 1, 128], strides = [1, 1, 1]} : vector<16x16x128xf32> to vector<16x1x128xf32>
    %cst_4 = arith.constant 0.000000e+00 : f32
    %6 = vector.broadcast %cst_4 : f32 to vector<16x6x128xf32>
    %7 = tpu.concatenate %4, %3, %5, %6 in 1 : vector<16x1x128xf32>, vector<16x16x128xf32>, vector<16x1x128xf32>, vector<16x6x128xf32> -> vector<16x24x128xf32>
    %8 = vector.shape_cast %7 : vector<16x24x128xf32> to vector<384x128xf32>
    %c24 = arith.constant 24 : index
    %c0_5 = arith.constant 0 : index
    %9 = vector.load %arg7[%c24, %c0_5] : memref<456x128xf32, #tpu.memory_space<vmem>>, vector<384x128xf32>
    tpu.vector_store %arg7[%c24, %c0_5], %8 {strides = array<i32>} : memref<456x128xf32, #tpu.memory_space<vmem>>, vector<384x128xf32>,
    %10 = vector.extract_strided_slice %7 {offsets = [1, 0, 0], sizes = [1, 24, 128], strides = [1, 1, 1]} : vector<16x24x128xf32> to vector<1x24x128xf32>
    %11 = vector.shape_cast %10 : vector<1x24x128xf32> to vector<24x128xf32>
    %c0_6 = arith.constant 0 : index
    %c0_7 = arith.constant 0 : index
    %12 = vector.load %arg7[%c0_6, %c0_7] : memref<456x128xf32, #tpu.memory_space<vmem>>, vector<24x128xf32>
    tpu.vector_store %arg7[%c0_6, %c0_7], %11 {strides = array<i32>} : memref<456x128xf32, #tpu.memory_space<vmem>>, vector<24x128xf32>,
    %13 = vector.extract_strided_slice %7 {offsets = [14, 0, 0], sizes = [1, 24, 128], strides = [1, 1, 1]} : vector<16x24x128xf32> to vector<1x24x128xf32>
    %14 = vector.shape_cast %13 : vector<1x24x128xf32> to vector<24x128xf32>
    %c408 = arith.constant 408 : index
    %c0_8 = arith.constant 0 : index
    %15 = vector.load %arg7[%c408, %c0_8] : memref<456x128xf32, #tpu.memory_space<vmem>>, vector<24x128xf32>
    tpu.vector_store %arg7[%c408, %c0_8], %14 {strides = array<i32>} : memref<456x128xf32, #tpu.memory_space<vmem>>, vector<24x128xf32>,
    %c0_9 = arith.constant 0 : index
    %c0_10 = arith.constant 0 : index
    %16 = vector.load %arg7[%c0_9, %c0_10] : memref<456x128xf32, #tpu.memory_space<vmem>>, vector<432x128xf32>
    %17 = vector.extract_strided_slice %16 {offsets = [0, 0], sizes = [384, 128], strides = [1, 1]} : vector<432x128xf32> to vector<384x128xf32>
    %c0_11 = arith.constant 0 : index
    %c0_12 = arith.constant 0 : index
    %c0_13 = arith.constant 0 : index
    %18 = vector.load %arg2[%c0_11, %c0_12, %c0_13] : memref<9x128x128xf32, #tpu.memory_space<vmem>>, vector<1x128x128xf32>
    %19 = vector.shape_cast %18 : vector<1x128x128xf32> to vector<128x128xf32>
    %cst_14 = arith.constant dense<0.000000e+00> : vector<384x128xf32>
    %20 = tpu.matmul %17, %19, %cst_14 {dimension_numbers = #tpu.dot_dimension_numbers<[1], [0], [0], [1], [0, 0, 1, 1], [], []>} : vector<384x128xf32>, vector<128x128xf32>, vector<384x128xf32> -> vector<384x128xf32>
    %21 = vector.extract_strided_slice %16 {offsets = [24, 0], sizes = [384, 128], strides = [1, 1]} : vector<432x128xf32> to vector<384x128xf32>
    %c3 = arith.constant 3 : index
    %c0_15 = arith.constant 0 : index
    %c0_16 = arith.constant 0 : index
    %22 = vector.load %arg2[%c3, %c0_15, %c0_16] : memref<9x128x128xf32, #tpu.memory_space<vmem>>, vector<1x128x128xf32>
    %23 = vector.shape_cast %22 : vector<1x128x128xf32> to vector<128x128xf32>
    %cst_17 = arith.constant dense<0.000000e+00> : vector<384x128xf32>
    %24 = tpu.matmul %21, %23, %cst_17 {dimension_numbers = #tpu.dot_dimension_numbers<[1], [0], [0], [1], [0, 0, 1, 1], [], []>} : vector<384x128xf32>, vector<128x128xf32>, vector<384x128xf32> -> vector<384x128xf32>
    %25 = arith.addf %20, %24 : vector<384x128xf32>
    %26 = vector.extract_strided_slice %16 {offsets = [48, 0], sizes = [384, 128], strides = [1, 1]} : vector<432x128xf32> to vector<384x128xf32>
    %c6 = arith.constant 6 : index
    %c0_18 = arith.constant 0 : index
    %c0_19 = arith.constant 0 : index
    %27 = vector.load %arg2[%c6, %c0_18, %c0_19] : memref<9x128x128xf32, #tpu.memory_space<vmem>>, vector<1x128x128xf32>
    %28 = vector.shape_cast %27 : vector<1x128x128xf32> to vector<128x128xf32>
    %cst_20 = arith.constant dense<0.000000e+00> : vector<384x128xf32>
    %29 = tpu.matmul %26, %28, %cst_20 {dimension_numbers = #tpu.dot_dimension_numbers<[1], [0], [0], [1], [0, 0, 1, 1], [], []>} : vector<384x128xf32>, vector<128x128xf32>, vector<384x128xf32> -> vector<384x128xf32>
    %30 = arith.addf %25, %29 : vector<384x128xf32>
    %c1 = arith.constant 1 : index
    %c0_21 = arith.constant 0 : index
    %31 = vector.load %arg7[%c1, %c0_21] : memref<456x128xf32, #tpu.memory_space<vmem>>, vector<432x128xf32>
    %32 = vector.extract_strided_slice %31 {offsets = [0, 0], sizes = [384, 128], strides = [1, 1]} : vector<432x128xf32> to vector<384x128xf32>
    %c1_22 = arith.constant 1 : index
    %c0_23 = arith.constant 0 : index
    %c0_24 = arith.constant 0 : index
    %33 = vector.load %arg2[%c1_22, %c0_23, %c0_24] : memref<9x128x128xf32, #tpu.memory_space<vmem>>, vector<1x128x128xf32>
    %34 = vector.shape_cast %33 : vector<1x128x128xf32> to vector<128x128xf32>
    %cst_25 = arith.constant dense<0.000000e+00> : vector<384x128xf32>
    %35 = tpu.matmul %32, %34, %cst_25 {dimension_numbers = #tpu.dot_dimension_numbers<[1], [0], [0], [1], [0, 0, 1, 1], [], []>} : vector<384x128xf32>, vector<128x128xf32>, vector<384x128xf32> -> vector<384x128xf32>
    %36 = arith.addf %30, %35 : vector<384x128xf32>
    %37 = vector.extract_strided_slice %31 {offsets = [24, 0], sizes = [384, 128], strides = [1, 1]} : vector<432x128xf32> to vector<384x128xf32>
    %c4 = arith.constant 4 : index
    %c0_26 = arith.constant 0 : index
    %c0_27 = arith.constant 0 : index
    %38 = vector.load %arg2[%c4, %c0_26, %c0_27] : memref<9x128x128xf32, #tpu.memory_space<vmem>>, vector<1x128x128xf32>
    %39 = vector.shape_cast %38 : vector<1x128x128xf32> to vector<128x128xf32>
    %cst_28 = arith.constant dense<0.000000e+00> : vector<384x128xf32>
    %40 = tpu.matmul %37, %39, %cst_28 {dimension_numbers = #tpu.dot_dimension_numbers<[1], [0], [0], [1], [0, 0, 1, 1], [], []>} : vector<384x128xf32>, vector<128x128xf32>, vector<384x128xf32> -> vector<384x128xf32>
    %41 = arith.addf %36, %40 : vector<384x128xf32>
    %42 = vector.extract_strided_slice %31 {offsets = [48, 0], sizes = [384, 128], strides = [1, 1]} : vector<432x128xf32> to vector<384x128xf32>
    %c7 = arith.constant 7 : index
    %c0_29 = arith.constant 0 : index
    %c0_30 = arith.constant 0 : index
    %43 = vector.load %arg2[%c7, %c0_29, %c0_30] : memref<9x128x128xf32, #tpu.memory_space<vmem>>, vector<1x128x128xf32>
    %44 = vector.shape_cast %43 : vector<1x128x128xf32> to vector<128x128xf32>
    %cst_31 = arith.constant dense<0.000000e+00> : vector<384x128xf32>
    %45 = tpu.matmul %42, %44, %cst_31 {dimension_numbers = #tpu.dot_dimension_numbers<[1], [0], [0], [1], [0, 0, 1, 1], [], []>} : vector<384x128xf32>, vector<128x128xf32>, vector<384x128xf32> -> vector<384x128xf32>
    %46 = arith.addf %41, %45 : vector<384x128xf32>
    %c2 = arith.constant 2 : index
    %c0_32 = arith.constant 0 : index
    %47 = vector.load %arg7[%c2, %c0_32] : memref<456x128xf32, #tpu.memory_space<vmem>>, vector<432x128xf32>
    %48 = vector.extract_strided_slice %47 {offsets = [0, 0], sizes = [384, 128], strides = [1, 1]} : vector<432x128xf32> to vector<384x128xf32>
    %c2_33 = arith.constant 2 : index
    %c0_34 = arith.constant 0 : index
    %c0_35 = arith.constant 0 : index
    %49 = vector.load %arg2[%c2_33, %c0_34, %c0_35] : memref<9x128x128xf32, #tpu.memory_space<vmem>>, vector<1x128x128xf32>
    %50 = vector.shape_cast %49 : vector<1x128x128xf32> to vector<128x128xf32>
    %cst_36 = arith.constant dense<0.000000e+00> : vector<384x128xf32>
    %51 = tpu.matmul %48, %50, %cst_36 {dimension_numbers = #tpu.dot_dimension_numbers<[1], [0], [0], [1], [0, 0, 1, 1], [], []>} : vector<384x128xf32>, vector<128x128xf32>, vector<384x128xf32> -> vector<384x128xf32>
    %52 = arith.addf %46, %51 : vector<384x128xf32>
    %53 = vector.extract_strided_slice %47 {offsets = [24, 0], sizes = [384, 128], strides = [1, 1]} : vector<432x128xf32> to vector<384x128xf32>
    %c5 = arith.constant 5 : index
    %c0_37 = arith.constant 0 : index
    %c0_38 = arith.constant 0 : index
    %54 = vector.load %arg2[%c5, %c0_37, %c0_38] : memref<9x128x128xf32, #tpu.memory_space<vmem>>, vector<1x128x128xf32>
    %55 = vector.shape_cast %54 : vector<1x128x128xf32> to vector<128x128xf32>
    %cst_39 = arith.constant dense<0.000000e+00> : vector<384x128xf32>
    %56 = tpu.matmul %53, %55, %cst_39 {dimension_numbers = #tpu.dot_dimension_numbers<[1], [0], [0], [1], [0, 0, 1, 1], [], []>} : vector<384x128xf32>, vector<128x128xf32>, vector<384x128xf32> -> vector<384x128xf32>
    %57 = arith.addf %52, %56 : vector<384x128xf32>
    %58 = vector.extract_strided_slice %47 {offsets = [48, 0], sizes = [384, 128], strides = [1, 1]} : vector<432x128xf32> to vector<384x128xf32>
    %c8 = arith.constant 8 : index
    %c0_40 = arith.constant 0 : index
    %c0_41 = arith.constant 0 : index
    %59 = vector.load %arg2[%c8, %c0_40, %c0_41] : memref<9x128x128xf32, #tpu.memory_space<vmem>>, vector<1x128x128xf32>
    %60 = vector.shape_cast %59 : vector<1x128x128xf32> to vector<128x128xf32>
    %cst_42 = arith.constant dense<0.000000e+00> : vector<384x128xf32>
    %61 = tpu.matmul %58, %60, %cst_42 {dimension_numbers = #tpu.dot_dimension_numbers<[1], [0], [0], [1], [0, 0, 1, 1], [], []>} : vector<384x128xf32>, vector<128x128xf32>, vector<384x128xf32> -> vector<384x128xf32>
    %62 = arith.addf %57, %61 : vector<384x128xf32>
    %63 = vector.shape_cast %62 : vector<384x128xf32> to vector<16x24x128xf32>
    %64 = vector.extract_strided_slice %63 {offsets = [0, 0, 0], sizes = [16, 16, 128], strides = [1, 1, 1]} : vector<16x24x128xf32> to vector<16x16x128xf32>
    %c0_43 = arith.constant 0 : index
    %c0_44 = arith.constant 0 : index
    %65 = vector.load %arg3[%c0_43, %c0_44] : memref<1x128xf32, #tpu.memory_space<vmem>>, vector<1x128xf32>
    %66 = vector.shape_cast %65 : vector<1x128xf32> to vector<1x1x128xf32>
    %67 = vector.broadcast %66 : vector<1x1x128xf32> to vector<16x16x128xf32>
    %68 = arith.addf %64, %67 : vector<16x16x128xf32>
    %cst_45 = arith.constant dense<0.000000e+00> : vector<128xf32>
    %69 = vector.multi_reduction <add>, %68, %cst_45 [0, 1] : vector<16x16x128xf32> to vector<128xf32>
    %70 = vector.shape_cast %69 : vector<128xf32> to vector<1x1x128xf32>
    %cst_46 = arith.constant 3.906250e-03 : f32
    %71 = vector.broadcast %cst_46 : f32 to vector<1x1x128xf32>
    %72 = arith.mulf %70, %71 : vector<1x1x128xf32>
    %73 = vector.broadcast %72 : vector<1x1x128xf32> to vector<16x16x128xf32>
    %74 = arith.subf %68, %73 : vector<16x16x128xf32>
    %75 = arith.mulf %74, %74 : vector<16x16x128xf32>
    %cst_47 = arith.constant dense<0.000000e+00> : vector<128xf32>
    %76 = vector.multi_reduction <add>, %75, %cst_47 [0, 1] : vector<16x16x128xf32> to vector<128xf32>
    %77 = vector.shape_cast %76 : vector<128xf32> to vector<1x1x128xf32>
    %cst_48 = arith.constant 3.906250e-03 : f32
    %78 = vector.broadcast %cst_48 : f32 to vector<1x1x128xf32>
    %79 = arith.mulf %77, %78 : vector<1x1x128xf32>
    %cst_49 = arith.constant 9.99999974E-6 : f32
    %80 = vector.broadcast %cst_49 : f32 to vector<1x1x128xf32>
    %81 = arith.addf %79, %80 : vector<1x1x128xf32>
    %82 = math.rsqrt %81 : vector<1x1x128xf32>
    %83 = vector.broadcast %82 : vector<1x1x128xf32> to vector<16x16x128xf32>
    %84 = arith.mulf %74, %83 : vector<16x16x128xf32>
    %cst_50 = arith.constant 0.000000e+00 : f32
    %85 = vector.broadcast %cst_50 : f32 to vector<16x16x128xf32>
    %86 = arith.maximumf %84, %85 : vector<16x16x128xf32>
    %87 = vector.extract_strided_slice %86 {offsets = [0, 1, 0], sizes = [16, 1, 128], strides = [1, 1, 1]} : vector<16x16x128xf32> to vector<16x1x128xf32>
    %88 = vector.extract_strided_slice %86 {offsets = [0, 14, 0], sizes = [16, 1, 128], strides = [1, 1, 1]} : vector<16x16x128xf32> to vector<16x1x128xf32>
    %cst_51 = arith.constant 0.000000e+00 : f32
    %89 = vector.broadcast %cst_51 : f32 to vector<16x6x128xf32>
    %90 = tpu.concatenate %87, %86, %88, %89 in 1 : vector<16x1x128xf32>, vector<16x16x128xf32>, vector<16x1x128xf32>, vector<16x6x128xf32> -> vector<16x24x128xf32>
    %91 = vector.shape_cast %90 : vector<16x24x128xf32> to vector<384x128xf32>
    %c24_52 = arith.constant 24 : index
    %c0_53 = arith.constant 0 : index
    %92 = vector.load %arg7[%c24_52, %c0_53] : memref<456x128xf32, #tpu.memory_space<vmem>>, vector<384x128xf32>
    tpu.vector_store %arg7[%c24_52, %c0_53], %91 {strides = array<i32>} : memref<456x128xf32, #tpu.memory_space<vmem>>, vector<384x128xf32>,
    %93 = vector.extract_strided_slice %90 {offsets = [1, 0, 0], sizes = [1, 24, 128], strides = [1, 1, 1]} : vector<16x24x128xf32> to vector<1x24x128xf32>
    %94 = vector.shape_cast %93 : vector<1x24x128xf32> to vector<24x128xf32>
    %c0_54 = arith.constant 0 : index
    %c0_55 = arith.constant 0 : index
    %95 = vector.load %arg7[%c0_54, %c0_55] : memref<456x128xf32, #tpu.memory_space<vmem>>, vector<24x128xf32>
    tpu.vector_store %arg7[%c0_54, %c0_55], %94 {strides = array<i32>} : memref<456x128xf32, #tpu.memory_space<vmem>>, vector<24x128xf32>,
    %96 = vector.extract_strided_slice %90 {offsets = [14, 0, 0], sizes = [1, 24, 128], strides = [1, 1, 1]} : vector<16x24x128xf32> to vector<1x24x128xf32>
    %97 = vector.shape_cast %96 : vector<1x24x128xf32> to vector<24x128xf32>
    %c408_56 = arith.constant 408 : index
    %c0_57 = arith.constant 0 : index
    %98 = vector.load %arg7[%c408_56, %c0_57] : memref<456x128xf32, #tpu.memory_space<vmem>>, vector<24x128xf32>
    tpu.vector_store %arg7[%c408_56, %c0_57], %97 {strides = array<i32>} : memref<456x128xf32, #tpu.memory_space<vmem>>, vector<24x128xf32>,
    %c0_58 = arith.constant 0 : index
    %c0_59 = arith.constant 0 : index
    %99 = vector.load %arg7[%c0_58, %c0_59] : memref<456x128xf32, #tpu.memory_space<vmem>>, vector<432x128xf32>
    %100 = vector.extract_strided_slice %99 {offsets = [0, 0], sizes = [384, 128], strides = [1, 1]} : vector<432x128xf32> to vector<384x128xf32>
    %c0_60 = arith.constant 0 : index
    %c0_61 = arith.constant 0 : index
    %c0_62 = arith.constant 0 : index
    %101 = vector.load %arg4[%c0_60, %c0_61, %c0_62] : memref<9x128x128xf32, #tpu.memory_space<vmem>>, vector<1x128x128xf32>
    %102 = vector.shape_cast %101 : vector<1x128x128xf32> to vector<128x128xf32>
    %cst_63 = arith.constant dense<0.000000e+00> : vector<384x128xf32>
    %103 = tpu.matmul %100, %102, %cst_63 {dimension_numbers = #tpu.dot_dimension_numbers<[1], [0], [0], [1], [0, 0, 1, 1], [], []>} : vector<384x128xf32>, vector<128x128xf32>, vector<384x128xf32> -> vector<384x128xf32>
    %104 = vector.extract_strided_slice %99 {offsets = [24, 0], sizes = [384, 128], strides = [1, 1]} : vector<432x128xf32> to vector<384x128xf32>
    %c3_64 = arith.constant 3 : index
    %c0_65 = arith.constant 0 : index
    %c0_66 = arith.constant 0 : index
    %105 = vector.load %arg4[%c3_64, %c0_65, %c0_66] : memref<9x128x128xf32, #tpu.memory_space<vmem>>, vector<1x128x128xf32>
    %106 = vector.shape_cast %105 : vector<1x128x128xf32> to vector<128x128xf32>
    %cst_67 = arith.constant dense<0.000000e+00> : vector<384x128xf32>
    %107 = tpu.matmul %104, %106, %cst_67 {dimension_numbers = #tpu.dot_dimension_numbers<[1], [0], [0], [1], [0, 0, 1, 1], [], []>} : vector<384x128xf32>, vector<128x128xf32>, vector<384x128xf32> -> vector<384x128xf32>
    %108 = arith.addf %103, %107 : vector<384x128xf32>
    %109 = vector.extract_strided_slice %99 {offsets = [48, 0], sizes = [384, 128], strides = [1, 1]} : vector<432x128xf32> to vector<384x128xf32>
    %c6_68 = arith.constant 6 : index
    %c0_69 = arith.constant 0 : index
    %c0_70 = arith.constant 0 : index
    %110 = vector.load %arg4[%c6_68, %c0_69, %c0_70] : memref<9x128x128xf32, #tpu.memory_space<vmem>>, vector<1x128x128xf32>
    %111 = vector.shape_cast %110 : vector<1x128x128xf32> to vector<128x128xf32>
    %cst_71 = arith.constant dense<0.000000e+00> : vector<384x128xf32>
    %112 = tpu.matmul %109, %111, %cst_71 {dimension_numbers = #tpu.dot_dimension_numbers<[1], [0], [0], [1], [0, 0, 1, 1], [], []>} : vector<384x128xf32>, vector<128x128xf32>, vector<384x128xf32> -> vector<384x128xf32>
    %113 = arith.addf %108, %112 : vector<384x128xf32>
    %c1_72 = arith.constant 1 : index
    %c0_73 = arith.constant 0 : index
    %114 = vector.load %arg7[%c1_72, %c0_73] : memref<456x128xf32, #tpu.memory_space<vmem>>, vector<432x128xf32>
    %115 = vector.extract_strided_slice %114 {offsets = [0, 0], sizes = [384, 128], strides = [1, 1]} : vector<432x128xf32> to vector<384x128xf32>
    %c1_74 = arith.constant 1 : index
    %c0_75 = arith.constant 0 : index
    %c0_76 = arith.constant 0 : index
    %116 = vector.load %arg4[%c1_74, %c0_75, %c0_76] : memref<9x128x128xf32, #tpu.memory_space<vmem>>, vector<1x128x128xf32>
    %117 = vector.shape_cast %116 : vector<1x128x128xf32> to vector<128x128xf32>
    %cst_77 = arith.constant dense<0.000000e+00> : vector<384x128xf32>
    %118 = tpu.matmul %115, %117, %cst_77 {dimension_numbers = #tpu.dot_dimension_numbers<[1], [0], [0], [1], [0, 0, 1, 1], [], []>} : vector<384x128xf32>, vector<128x128xf32>, vector<384x128xf32> -> vector<384x128xf32>
    %119 = arith.addf %113, %118 : vector<384x128xf32>
    %120 = vector.extract_strided_slice %114 {offsets = [24, 0], sizes = [384, 128], strides = [1, 1]} : vector<432x128xf32> to vector<384x128xf32>
    %c4_78 = arith.constant 4 : index
    %c0_79 = arith.constant 0 : index
    %c0_80 = arith.constant 0 : index
    %121 = vector.load %arg4[%c4_78, %c0_79, %c0_80] : memref<9x128x128xf32, #tpu.memory_space<vmem>>, vector<1x128x128xf32>
    %122 = vector.shape_cast %121 : vector<1x128x128xf32> to vector<128x128xf32>
    %cst_81 = arith.constant dense<0.000000e+00> : vector<384x128xf32>
    %123 = tpu.matmul %120, %122, %cst_81 {dimension_numbers = #tpu.dot_dimension_numbers<[1], [0], [0], [1], [0, 0, 1, 1], [], []>} : vector<384x128xf32>, vector<128x128xf32>, vector<384x128xf32> -> vector<384x128xf32>
    %124 = arith.addf %119, %123 : vector<384x128xf32>
    %125 = vector.extract_strided_slice %114 {offsets = [48, 0], sizes = [384, 128], strides = [1, 1]} : vector<432x128xf32> to vector<384x128xf32>
    %c7_82 = arith.constant 7 : index
    %c0_83 = arith.constant 0 : index
    %c0_84 = arith.constant 0 : index
    %126 = vector.load %arg4[%c7_82, %c0_83, %c0_84] : memref<9x128x128xf32, #tpu.memory_space<vmem>>, vector<1x128x128xf32>
    %127 = vector.shape_cast %126 : vector<1x128x128xf32> to vector<128x128xf32>
    %cst_85 = arith.constant dense<0.000000e+00> : vector<384x128xf32>
    %128 = tpu.matmul %125, %127, %cst_85 {dimension_numbers = #tpu.dot_dimension_numbers<[1], [0], [0], [1], [0, 0, 1, 1], [], []>} : vector<384x128xf32>, vector<128x128xf32>, vector<384x128xf32> -> vector<384x128xf32>
    %129 = arith.addf %124, %128 : vector<384x128xf32>
    %c2_86 = arith.constant 2 : index
    %c0_87 = arith.constant 0 : index
    %130 = vector.load %arg7[%c2_86, %c0_87] : memref<456x128xf32, #tpu.memory_space<vmem>>, vector<432x128xf32>
    %131 = vector.extract_strided_slice %130 {offsets = [0, 0], sizes = [384, 128], strides = [1, 1]} : vector<432x128xf32> to vector<384x128xf32>
    %c2_88 = arith.constant 2 : index
    %c0_89 = arith.constant 0 : index
    %c0_90 = arith.constant 0 : index
    %132 = vector.load %arg4[%c2_88, %c0_89, %c0_90] : memref<9x128x128xf32, #tpu.memory_space<vmem>>, vector<1x128x128xf32>
    %133 = vector.shape_cast %132 : vector<1x128x128xf32> to vector<128x128xf32>
    %cst_91 = arith.constant dense<0.000000e+00> : vector<384x128xf32>
    %134 = tpu.matmul %131, %133, %cst_91 {dimension_numbers = #tpu.dot_dimension_numbers<[1], [0], [0], [1], [0, 0, 1, 1], [], []>} : vector<384x128xf32>, vector<128x128xf32>, vector<384x128xf32> -> vector<384x128xf32>
    %135 = arith.addf %129, %134 : vector<384x128xf32>
    %136 = vector.extract_strided_slice %130 {offsets = [24, 0], sizes = [384, 128], strides = [1, 1]} : vector<432x128xf32> to vector<384x128xf32>
    %c5_92 = arith.constant 5 : index
    %c0_93 = arith.constant 0 : index
    %c0_94 = arith.constant 0 : index
    %137 = vector.load %arg4[%c5_92, %c0_93, %c0_94] : memref<9x128x128xf32, #tpu.memory_space<vmem>>, vector<1x128x128xf32>
    %138 = vector.shape_cast %137 : vector<1x128x128xf32> to vector<128x128xf32>
    %cst_95 = arith.constant dense<0.000000e+00> : vector<384x128xf32>
    %139 = tpu.matmul %136, %138, %cst_95 {dimension_numbers = #tpu.dot_dimension_numbers<[1], [0], [0], [1], [0, 0, 1, 1], [], []>} : vector<384x128xf32>, vector<128x128xf32>, vector<384x128xf32> -> vector<384x128xf32>
    %140 = arith.addf %135, %139 : vector<384x128xf32>
    %141 = vector.extract_strided_slice %130 {offsets = [48, 0], sizes = [384, 128], strides = [1, 1]} : vector<432x128xf32> to vector<384x128xf32>
    %c8_96 = arith.constant 8 : index
    %c0_97 = arith.constant 0 : index
    %c0_98 = arith.constant 0 : index
    %142 = vector.load %arg4[%c8_96, %c0_97, %c0_98] : memref<9x128x128xf32, #tpu.memory_space<vmem>>, vector<1x128x128xf32>
    %143 = vector.shape_cast %142 : vector<1x128x128xf32> to vector<128x128xf32>
    %cst_99 = arith.constant dense<0.000000e+00> : vector<384x128xf32>
    %144 = tpu.matmul %141, %143, %cst_99 {dimension_numbers = #tpu.dot_dimension_numbers<[1], [0], [0], [1], [0, 0, 1, 1], [], []>} : vector<384x128xf32>, vector<128x128xf32>, vector<384x128xf32> -> vector<384x128xf32>
    %145 = arith.addf %140, %144 : vector<384x128xf32>
    %146 = vector.shape_cast %145 : vector<384x128xf32> to vector<16x24x128xf32>
    %147 = vector.extract_strided_slice %146 {offsets = [0, 0, 0], sizes = [16, 16, 128], strides = [1, 1, 1]} : vector<16x24x128xf32> to vector<16x16x128xf32>
    %c0_100 = arith.constant 0 : index
    %c0_101 = arith.constant 0 : index
    %148 = vector.load %arg5[%c0_100, %c0_101] : memref<1x128xf32, #tpu.memory_space<vmem>>, vector<1x128xf32>
    %149 = vector.shape_cast %148 : vector<1x128xf32> to vector<1x1x128xf32>
    %150 = vector.broadcast %149 : vector<1x1x128xf32> to vector<16x16x128xf32>
    %151 = arith.addf %147, %150 : vector<16x16x128xf32>
    %cst_102 = arith.constant dense<0.000000e+00> : vector<128xf32>
    %152 = vector.multi_reduction <add>, %151, %cst_102 [0, 1] : vector<16x16x128xf32> to vector<128xf32>
    %153 = vector.shape_cast %152 : vector<128xf32> to vector<1x1x128xf32>
    %cst_103 = arith.constant 3.906250e-03 : f32
    %154 = vector.broadcast %cst_103 : f32 to vector<1x1x128xf32>
    %155 = arith.mulf %153, %154 : vector<1x1x128xf32>
    %156 = vector.broadcast %155 : vector<1x1x128xf32> to vector<16x16x128xf32>
    %157 = arith.subf %151, %156 : vector<16x16x128xf32>
    %158 = arith.mulf %157, %157 : vector<16x16x128xf32>
    %cst_104 = arith.constant dense<0.000000e+00> : vector<128xf32>
    %159 = vector.multi_reduction <add>, %158, %cst_104 [0, 1] : vector<16x16x128xf32> to vector<128xf32>
    %160 = vector.shape_cast %159 : vector<128xf32> to vector<1x1x128xf32>
    %cst_105 = arith.constant 3.906250e-03 : f32
    %161 = vector.broadcast %cst_105 : f32 to vector<1x1x128xf32>
    %162 = arith.mulf %160, %161 : vector<1x1x128xf32>
    %cst_106 = arith.constant 9.99999974E-6 : f32
    %163 = vector.broadcast %cst_106 : f32 to vector<1x1x128xf32>
    %164 = arith.addf %162, %163 : vector<1x1x128xf32>
    %165 = math.rsqrt %164 : vector<1x1x128xf32>
    %166 = vector.broadcast %165 : vector<1x1x128xf32> to vector<16x16x128xf32>
    %167 = arith.mulf %157, %166 : vector<16x16x128xf32>
    %168 = arith.addf %3, %167 : vector<16x16x128xf32>
    %c0_107 = arith.constant 0 : index
    %c0_108 = arith.constant 0 : index
    %c0_109 = arith.constant 0 : index
    %c0_110 = arith.constant 0 : index
    %169 = vector.load %arg6[%c0_107, %c0_108, %c0_109, %c0_110] : memref<1x16x16x128xf32, #tpu.memory_space<vmem>>, vector<1x16x16x128xf32>
    %170 = vector.shape_cast %169 : vector<1x16x16x128xf32> to vector<16x16x128xf32>
    %171 = vector.shape_cast %168 : vector<16x16x128xf32> to vector<1x16x16x128xf32>
    tpu.vector_store %arg6[%c0_107, %c0_108, %c0_109, %c0_110], %171 {strides = array<i32>} : memref<1x16x16x128xf32, #tpu.memory_space<vmem>>, vector<1x16x16x128xf32>,
    return
  }
  func.func @transform_0(%arg0: i32) -> (i32, i32, i32, i32) {
    %c0_i32 = arith.constant 0 : i32
    %c0_i32_0 = arith.constant 0 : i32
    %c0_i32_1 = arith.constant 0 : i32
    %c0_i32_2 = arith.constant 0 : i32
    return %arg0, %c0_i32, %c0_i32_0, %c0_i32_1 : i32, i32, i32, i32
  }
  func.func @transform_1(%arg0: i32) -> (i32, i32, i32) {
    %c0_i32 = arith.constant 0 : i32
    %c0_i32_0 = arith.constant 0 : i32
    %c0_i32_1 = arith.constant 0 : i32
    %c0_i32_2 = arith.constant 0 : i32
    return %c0_i32, %c0_i32_0, %c0_i32_1 : i32, i32, i32
  }
  func.func @transform_2(%arg0: i32) -> (i32, i32) {
    %c0_i32 = arith.constant 0 : i32
    %c0_i32_0 = arith.constant 0 : i32
    %c0_i32_1 = arith.constant 0 : i32
    return %c0_i32, %c0_i32_0 : i32, i32
  }
  func.func @transform_3(%arg0: i32) -> (i32, i32, i32) {
    %c0_i32 = arith.constant 0 : i32
    %c0_i32_0 = arith.constant 0 : i32
    %c0_i32_1 = arith.constant 0 : i32
    %c0_i32_2 = arith.constant 0 : i32
    return %c0_i32, %c0_i32_0, %c0_i32_1 : i32, i32, i32
  }
  func.func @transform_4(%arg0: i32) -> (i32, i32) {
    %c0_i32 = arith.constant 0 : i32
    %c0_i32_0 = arith.constant 0 : i32
    %c0_i32_1 = arith.constant 0 : i32
    return %c0_i32, %c0_i32_0 : i32, i32
  }
  func.func @transform_5(%arg0: i32) -> (i32, i32, i32, i32) {
    %c0_i32 = arith.constant 0 : i32
    %c0_i32_0 = arith.constant 0 : i32
    %c0_i32_1 = arith.constant 0 : i32
    %c0_i32_2 = arith.constant 0 : i32
    return %arg0, %c0_i32, %c0_i32_0, %c0_i32_1 : i32, i32, i32, i32
  }
}

</mosaic_0001>

<llo_original>
// kernel: tpu_custom_call.1
$region0: #{tpu_custom_call.1}
  #allocation0 [shape = 'u32[]', space=smem, size = 0x4, offset = 0x4, fixed_abs, tag = 'smem constant byte address 0x4 - core index']
  #allocation1 [shape = 'u32[144,128]{1,0:T(1,128)}', space=vmem, size = 0x12000, scoped, tag = 'internal scratch']
  #allocation2 [shape = 'f32[456,128]{1,0:T(8,128)}', space=vmem, size = 0x39000, scoped, tag = 'scratch operand']
  %s0 = inlined_call_operand.hbm [shape: f32[2,16,16,128], index: 0, kind: input, shape index: {}]
  %s1 = inlined_call_operand.hbm [shape: f32[9,128,128], index: 1, kind: input, shape index: {}]
  %s2 = inlined_call_operand.vmem [shape: f32[1,128], index: 2, kind: input, shape index: {}]
  %s3 = inlined_call_operand.hbm [shape: f32[9,128,128], index: 3, kind: input, shape index: {}]
  %s4 = inlined_call_operand.vmem [shape: f32[1,128], index: 4, kind: input, shape index: {}]
  %s5 = inlined_call_operand.hbm [shape: f32[2,16,16,128], index: 5, kind: output, shape index: {}]
  %s6 = sld [smem:[#allocation0]]
  $region65: #{tpu_custom_call.1} parent=0
    _
  %s8 = ssub.s32 1, %s6
  %s9 = scalar_select 0, %s8, %s6
  $region1: #{tpu_custom_call.1} parent=0
    #allocation3 [shape = 'u8[262144]{0}', space=vmem, size = 0x40000, scoped, tag = 'input window, operand 0']
    #allocation4 [shape = 's32[2]{0}', space=sflag, size = 0x8, scoped, tag = 'scoped memory for tpu_custom_call.1']
    #allocation5 [shape = 's32[2]{0}', space=sflag, size = 0x8, scoped, tag = 'scoped memory for tpu_custom_call.1']
    #allocation6 [shape = 'u8[589824]{0}', space=vmem, size = 0x90000, scoped, tag = 'input window, operand 1, single buffered']
    #allocation7 [shape = 's32[1]{0}', space=sflag, size = 0x4, scoped, tag = 'scoped memory for tpu_custom_call.1']
    #allocation8 [shape = 'u8[589824]{0}', space=vmem, size = 0x90000, scoped, tag = 'input window, operand 3, single buffered']
    #allocation9 [shape = 'u8[262144]{0}', space=vmem, size = 0x40000, scoped, tag = 'output window, operand 0']
    %10 = vsyncpa [#allocation4], 0
    %s11 = scalar_lea.sflag [#allocation4], 1
    %12 = vsyncpa %s11, 0
    %13 = vsyncpa [#allocation7], 0
    %14 = vsyncpa [#allocation5], 0
    %s15 = scalar_lea.sflag [#allocation5], 1
    %16 = vsyncpa %s15, 0
    loop: start=0, step=1, limit=4
    $region2: #{tpu_custom_call.1} parent=1 // loop_pre_header
      _
    $region3: #{tpu_custom_call.1} parent=1 // loop_header
      %s18 = sphi 0, %s22
      %p19 = scmp.ge.s32.totalorder %s18, 4
      %s28 = sphi 0, %s30
      %s31 = sphi 0, %s28
      %s32 = sphi 0, %s31
      %s48 = sphi 0, %s32
      %s52 = sphi 0, %s52
      %s54 = sphi 0, %s52
      %s55 = sphi 0, %s54
      %s69 = sphi 0, %s55
      %s73 = sphi 0, %s73
      %s75 = sphi 0, %s73
      %s76 = sphi 0, %s75
      %s90 = sphi 0, %s76
      %s94 = sphi 0, %s94
      %s96 = sphi 0, %s94
      %s97 = sphi 0, %s96
      %s111 = sphi 0, %s97
      %s115 = sphi 0, %s115
      %s117 = sphi 0, %s115
      %s118 = sphi 0, %s117
      %s132 = sphi 0, %s118
      %s138 = sphi 0, %s140
      %s141 = sphi 0, %s138
      %s142 = sphi 0, %s141
      %s158 = sphi 0, %s142
    $region4: #{tpu_custom_call.1} parent=1 // loop_header_branch
      %21 = sbr.rel (%p19) target = $region8
    $region5: #{tpu_custom_call.1} parent=1 // loop_body
      %s23 = ssub.s32 %s18, 1
      %s24 = ssub.s32 %s18, 2
      %s25 = sadd.s32 %s18, 1
      %s26 = ssub.s32 %s18, %s25
      %p27 = scmp.eq.s32.totalorder %s26, 0
      %s29 = sadd.s32 %s28, 1
      %s30 = scalar_select %p27, %s28, %s29
      %p33 = pneg %p27
      %p34 = scmp.eq.s32.totalorder %s18, 1
      %p35 = por %p33, %p34
      %p36 = scmp.ne.s32.totalorder %s28, %s31
      %p37 = scmp.eq.s32.totalorder %s18, 0
      %p38 = por %p36, %p37
      %p39 = scmp.ne.s32.totalorder %s28, %s31
      %p40 = scmp.eq.s32.totalorder %s23, 1
      %p41 = por %p39, %p40
      %p42 = scmp.ne.s32.totalorder %s31, %s32
      %p43 = scmp.eq.s32.totalorder %s23, 0
      %p44 = por %p42, %p43
      %p45 = scmp.ne.s32.totalorder %s31, %s32
      %p46 = scmp.eq.s32.totalorder %s24, 1
      %p47 = por %p45, %p46
      %p49 = scmp.ne.s32.totalorder %s32, %s48
      %p50 = scmp.eq.s32.totalorder %s24, 0
      %p51 = por %p49, %p50
      %s53 = sadd.s32 %s52, 1
      %p56 = scmp.eq.s32.totalorder %s18, 1
      %p57 = scmp.ne.s32.totalorder %s52, %s54
      %p58 = scmp.eq.s32.totalorder %s18, 0
      %p59 = por %p57, %p58
      %p60 = scmp.ne.s32.totalorder %s52, %s54
      %p61 = scmp.eq.s32.totalorder %s23, 1
      %p62 = por %p60, %p61
      %p63 = scmp.ne.s32.totalorder %s54, %s55
      %p64 = scmp.eq.s32.totalorder %s23, 0
      %p65 = por %p63, %p64
      %p66 = scmp.ne.s32.totalorder %s54, %s55
      %p67 = scmp.eq.s32.totalorder %s24, 1
      %p68 = por %p66, %p67
      %p70 = scmp.ne.s32.totalorder %s55, %s69
      %p71 = scmp.eq.s32.totalorder %s24, 0
      %p72 = por %p70, %p71
      %s74 = sadd.s32 %s73, 1
      %p77 = scmp.eq.s32.totalorder %s18, 1
      %p78 = scmp.ne.s32.totalorder %s73, %s75
      %p79 = scmp.eq.s32.totalorder %s18, 0
      %p80 = por %p78, %p79
      %p81 = scmp.ne.s32.totalorder %s73, %s75
      %p82 = scmp.eq.s32.totalorder %s23, 1
      %p83 = por %p81, %p82
      %p84 = scmp.ne.s32.totalorder %s75, %s76
      %p85 = scmp.eq.s32.totalorder %s23, 0
      %p86 = por %p84, %p85
      %p87 = scmp.ne.s32.totalorder %s75, %s76
      %p88 = scmp.eq.s32.totalorder %s24, 1
      %p89 = por %p87, %p88
      %p91 = scmp.ne.s32.totalorder %s76, %s90
      %p92 = scmp.eq.s32.totalorder %s24, 0
      %p93 = por %p91, %p92
      %s95 = sadd.s32 %s94, 1
      %p98 = scmp.eq.s32.totalorder %s18, 1
      %p99 = scmp.ne.s32.totalorder %s94, %s96
      %p100 = scmp.eq.s32.totalorder %s18, 0
      %p101 = por %p99, %p100
      %p102 = scmp.ne.s32.totalorder %s94, %s96
      %p103 = scmp.eq.s32.totalorder %s23, 1
      %p104 = por %p102, %p103
      %p105 = scmp.ne.s32.totalorder %s96, %s97
      %p106 = scmp.eq.s32.totalorder %s23, 0
      %p107 = por %p105, %p106
      %p108 = scmp.ne.s32.totalorder %s96, %s97
      %p109 = scmp.eq.s32.totalorder %s24, 1
      %p110 = por %p108, %p109
      %p112 = scmp.ne.s32.totalorder %s97, %s111
      %p113 = scmp.eq.s32.totalorder %s24, 0
      %p114 = por %p112, %p113
      %s116 = sadd.s32 %s115, 1
      %p119 = scmp.eq.s32.totalorder %s18, 1
      %p120 = scmp.ne.s32.totalorder %s115, %s117
      %p121 = scmp.eq.s32.totalorder %s18, 0
      %p122 = por %p120, %p121
      %p123 = scmp.ne.s32.totalorder %s115, %s117
      %p124 = scmp.eq.s32.totalorder %s23, 1
      %p125 = por %p123, %p124
      %p126 = scmp.ne.s32.totalorder %s117, %s118
      %p127 = scmp.eq.s32.totalorder %s23, 0
      %p128 = por %p126, %p127
      %p129 = scmp.ne.s32.totalorder %s117, %s118
      %p130 = scmp.eq.s32.totalorder %s24, 1
      %p131 = por %p129, %p130
      %p133 = scmp.ne.s32.totalorder %s118, %s132
      %p134 = scmp.eq.s32.totalorder %s24, 0
      %p135 = por %p133, %p134
      %s136 = ssub.s32 %s18, %s25
      %p137 = scmp.eq.s32.totalorder %s136, 0
      %s139 = sadd.s32 %s138, 1
      %s140 = scalar_select %p137, %s138, %s139
      %p143 = pneg %p137
      %p144 = scmp.eq.s32.totalorder %s18, 1
      %p145 = por %p143, %p144
      %p146 = scmp.ne.s32.totalorder %s138, %s141
      %p147 = scmp.eq.s32.totalorder %s18, 0
      %p148 = por %p146, %p147
      %p149 = scmp.ne.s32.totalorder %s138, %s141
      %p150 = scmp.eq.s32.totalorder %s23, 1
      %p151 = por %p149, %p150
      %p152 = scmp.ne.s32.totalorder %s141, %s142
      %p153 = scmp.eq.s32.totalorder %s23, 0
      %p154 = por %p152, %p153
      %p155 = scmp.ne.s32.totalorder %s141, %s142
      %p156 = scmp.eq.s32.totalorder %s24, 1
      %p157 = por %p155, %p156
      %p159 = scmp.ne.s32.totalorder %s142, %s158
      %p160 = scmp.eq.s32.totalorder %s24, 0
      %p161 = por %p159, %p160
      %p162 = scmp.le.s32.totalorder 1, %s18
      %p163 = scmp.lt.s32.totalorder %s18, 3
      %p164 = pnand %p162, %p163
      %p165 = pneg %p164
      // Predicated region
      $region9: #{tpu_custom_call.1} parent=5 // pred_check
        _
      $region10: #{tpu_custom_call.1} parent=5 // pred_check_branch
        %167 = sbr.rel (%p164) target = $region12
      $region11: #{tpu_custom_call.1} parent=5 // pred_region
        %s168 = ssub.s32 %s18, 1
        // Predicated region
        $region13: #{tpu_custom_call.1} parent=11 // pred_check
          %p169 = pneg %p65
        $region14: #{tpu_custom_call.1} parent=11 // pred_check_branch
          %171 = sbr.rel (%p169) target = $region16
        $region15: #{tpu_custom_call.1} parent=11 // pred_region
          %s173 = ssub.s32 18432, 18432
          %174 = vsyncadd [#allocation7], %s173
          %s175 = sshll.u32 [#allocation6], 4
          %s176 = int_to_ptr.vmem [resolvable:$true] %s175
          %181 = dma.hbm_to_vmem [thread:$0]  %s1, 18432, %s176, [#allocation7], 128, 128, 8
        $region16: #{tpu_custom_call.1} parent=11 // pred_fallthru
          _
        // Predicated region
        $region17: #{tpu_custom_call.1} parent=11 // pred_check
          %p182 = pneg %p86
        $region18: #{tpu_custom_call.1} parent=11 // pred_check_branch
          %184 = sbr.rel (%p182) target = $region20
        $region19: #{tpu_custom_call.1} parent=11 // pred_region
          _
        $region20: #{tpu_custom_call.1} parent=11 // pred_fallthru
          _
        // Predicated region
        $region21: #{tpu_custom_call.1} parent=11 // pred_check
          %p185 = pneg %p107
        $region22: #{tpu_custom_call.1} parent=11 // pred_check_branch
          %187 = sbr.rel (%p185) target = $region24
        $region23: #{tpu_custom_call.1} parent=11 // pred_region
          %s189 = ssub.s32 18432, 18432
          %190 = vsyncadd [#allocation7], %s189
          %s191 = sshll.u32 [#allocation8], 4
          %s192 = int_to_ptr.vmem [resolvable:$true] %s191
          %197 = dma.hbm_to_vmem [thread:$0]  %s3, 18432, %s192, [#allocation7], 128, 128, 8
        $region24: #{tpu_custom_call.1} parent=11 // pred_fallthru
          _
        // Predicated region
        $region25: #{tpu_custom_call.1} parent=11 // pred_check
          %p198 = pneg %p128
        $region26: #{tpu_custom_call.1} parent=11 // pred_check_branch
          %200 = sbr.rel (%p198) target = $region28
        $region27: #{tpu_custom_call.1} parent=11 // pred_region
          _
        $region28: #{tpu_custom_call.1} parent=11 // pred_fallthru
          _
      $region12: #{tpu_custom_call.1} parent=5 // pred_fallthru
        _
      %p201 = scmp.lt.s32.totalorder %s18, 2
      // Predicated region
      $region29: #{tpu_custom_call.1} parent=5 // pred_check
        %p202 = pneg %p201
      $region30: #{tpu_custom_call.1} parent=5 // pred_check_branch
        %204 = sbr.rel (%p202) target = $region32
      $region31: #{tpu_custom_call.1} parent=5 // pred_region
        // Predicated region
        $region33: #{tpu_custom_call.1} parent=31 // pred_check
          %p205 = pneg %p38
        $region34: #{tpu_custom_call.1} parent=31 // pred_check_branch
          %207 = sbr.rel (%p205) target = $region36
        $region35: #{tpu_custom_call.1} parent=31 // pred_region
          %s208 = sand.u32 %s28, 1
          %s209 = scalar_lea.sflag [#allocation4], %s208
          %s210 = sand.u32 %s28, 1
          %s211 = smul.addr %s210, 256
          %s212 = scalar_lea.vmem [#allocation3], %s211
          %s214 = ssub.s32 4096, 4096
          %215 = vsyncadd %s209, %s214
          %s216 = smul.addr %s18, 32
          %s217 = smul.addr %s216, 128
          %s218 = scalar_lea.hbm %s0, %s217
          %s219 = sshll.u32 %s212, 4
          %s220 = int_to_ptr.vmem [resolvable:$true] %s219
          %225 = dma.hbm_to_vmem [thread:$0]  %s218, 4096, %s220, %s209, 128, 128, 8
        $region36: #{tpu_custom_call.1} parent=31 // pred_fallthru
          _
      $region32: #{tpu_custom_call.1} parent=5 // pred_fallthru
        _
      %p226 = scmp.le.s32.totalorder 1, %s18
      %p227 = scmp.lt.s32.totalorder %s18, 3
      %p228 = pnand %p226, %p227
      %p229 = pneg %p228
      // Predicated region
      $region37: #{tpu_custom_call.1} parent=5 // pred_check
        _
      $region38: #{tpu_custom_call.1} parent=5 // pred_check_branch
        %231 = sbr.rel (%p228) target = $region40
      $region39: #{tpu_custom_call.1} parent=5 // pred_region
        %s232 = ssub.s32 %s18, 1
        %s233 = sand.u32 %s31, 1
        %s234 = scalar_lea.sflag [#allocation4], %s233
        %s235 = sand.u32 %s31, 1
        %s236 = smul.addr %s235, 256
        %s237 = scalar_lea.vmem [#allocation3], %s236
        // Predicated region
        $region41: #{tpu_custom_call.1} parent=39 // pred_check
          %p238 = pneg %p44
        $region42: #{tpu_custom_call.1} parent=39 // pred_check_branch
          %240 = sbr.rel (%p238) target = $region44
        $region43: #{tpu_custom_call.1} parent=39 // pred_region
          %241 = dma.done %s234, 4096
        $region44: #{tpu_custom_call.1} parent=39 // pred_fallthru
          _
        // Predicated region
        $region45: #{tpu_custom_call.1} parent=39 // pred_check
          %p242 = pneg %p65
        $region46: #{tpu_custom_call.1} parent=39 // pred_check_branch
          %244 = sbr.rel (%p242) target = $region48
        $region47: #{tpu_custom_call.1} parent=39 // pred_region
          %245 = dma.done [#allocation7], 18432
        $region48: #{tpu_custom_call.1} parent=39 // pred_fallthru
          _
        // Predicated region
        $region49: #{tpu_custom_call.1} parent=39 // pred_check
          %p246 = pneg %p107
        $region50: #{tpu_custom_call.1} parent=39 // pred_check_branch
          %248 = sbr.rel (%p246) target = $region52
        $region51: #{tpu_custom_call.1} parent=39 // pred_region
          %249 = dma.done [#allocation7], 18432
        $region52: #{tpu_custom_call.1} parent=39 // pred_fallthru
          _
        %s250 = sand.u32 %s31, 1
        %s251 = scalar_lea.sflag [#allocation4], %s250
        %s252 = sand.u32 %s31, 1
        %s253 = smul.addr %s252, 256
        %s254 = scalar_lea.vmem [#allocation3], %s253
        %p255 = pneg %p44
        %p256 = pneg %p41
        %p257 = pneg %p65
        %p258 = pneg %p62
        %p259 = pneg %p86
        %p260 = pneg %p83
        %p261 = pneg %p107
        %p262 = pneg %p104
        %p263 = pneg %p128
        %p264 = pneg %p125
        %p265 = pneg %p154
        %p266 = pneg %p151
        %s267 = sand.u32 %s141, 1
        %s268 = scalar_lea.sflag [#allocation5], %s267
        %s269 = sand.u32 %s141, 1
        %s270 = smul.addr %s269, 256
        %s271 = scalar_lea.vmem [#allocation9], %s270
        %272 = vst [vmem:[#allocation2 + $0x1b0] sm:$0xff] 0.0
        %273 = vst [vmem:[#allocation2 + $0x1b8] sm:$0xff] 0.0
        %274 = vst [vmem:[#allocation2 + $0x1c0] sm:$0xff] 0.0
        %v275 = vld [vmem:[%s237] sm:$0xff]
        %v276 = vld [vmem:[%s237 + $0x8] sm:$0xff]
        %v277 = vld [vmem:[%s237 + $0x10] sm:$0xff]
        %v278 = vld [vmem:[%s237 + $0x18] sm:$0xff]
        %v279 = vld [vmem:[%s237 + $0x20] sm:$0xff]
        %v280 = vld [vmem:[%s237 + $0x28] sm:$0xff]
        %v281 = vld [vmem:[%s237 + $0x30] sm:$0xff]
        %v282 = vld [vmem:[%s237 + $0x38] sm:$0xff]
        %v283 = vld [vmem:[%s237 + $0x40] sm:$0xff]
        %v284 = vld [vmem:[%s237 + $0x48] sm:$0xff]
        %v285 = vld [vmem:[%s237 + $0x50] sm:$0xff]
        %v286 = vld [vmem:[%s237 + $0x58] sm:$0xff]
        %v287 = vld [vmem:[%s237 + $0x60] sm:$0xff]
        %v288 = vld [vmem:[%s237 + $0x68] sm:$0xff]
        %v289 = vld [vmem:[%s237 + $0x70] sm:$0xff]
        %v290 = vld [vmem:[%s237 + $0x78] sm:$0xff]
        %v291 = vld [vmem:[%s237 + $0x80] sm:$0xff]
        %v292 = vld [vmem:[%s237 + $0x88] sm:$0xff]
        %v293 = vld [vmem:[%s237 + $0x90] sm:$0xff]
        %v294 = vld [vmem:[%s237 + $0x98] sm:$0xff]
        %v295 = vld [vmem:[%s237 + $0xa0] sm:$0xff]
        %v296 = vld [vmem:[%s237 + $0xa8] sm:$0xff]
        %v297 = vld [vmem:[%s237 + $0xb0] sm:$0xff]
        %v298 = vld [vmem:[%s237 + $0xb8] sm:$0xff]
        %v299 = vld [vmem:[%s237 + $0xc0] sm:$0xff]
        %v300 = vld [vmem:[%s237 + $0xc8] sm:$0xff]
        %v301 = vld [vmem:[%s237 + $0xd0] sm:$0xff]
        %v302 = vld [vmem:[%s237 + $0xd8] sm:$0xff]
        %v303 = vld [vmem:[%s237 + $0xe0] sm:$0xff]
        %v304 = vld [vmem:[%s237 + $0xe8] sm:$0xff]
        %v305 = vld [vmem:[%s237 + $0xf0] sm:$0xff]
        %v306 = vld [vmem:[%s237 + $0xf8] sm:$0xff]
        %v323 = vrot.slane %v275, 1
        %v324 = vrot.slane %v277, 1
        %v325 = vrot.slane %v279, 1
        %v326 = vrot.slane %v281, 1
        %v327 = vrot.slane %v283, 1
        %v328 = vrot.slane %v285, 1
        %v329 = vrot.slane %v287, 1
        %v330 = vrot.slane %v289, 1
        %v331 = vrot.slane %v291, 1
        %v332 = vrot.slane %v293, 1
        %v333 = vrot.slane %v295, 1
        %v334 = vrot.slane %v297, 1
        %v335 = vrot.slane %v299, 1
        %v336 = vrot.slane %v301, 1
        %v337 = vrot.slane %v303, 1
        %v338 = vrot.slane %v305, 1
        %vm371 = vcmask 1040384
        %v372 = vrot.slane %v275, 7
        %v373 = vrot.slane %v276, 7
        %v374 = vsel %vm371, %v372, %v373
        %v375 = vrot.slane %v277, 7
        %v376 = vrot.slane %v278, 7
        %v377 = vsel %vm371, %v375, %v376
        %v378 = vrot.slane %v279, 7
        %v379 = vrot.slane %v280, 7
        %v380 = vsel %vm371, %v378, %v379
        %v381 = vrot.slane %v281, 7
        %v382 = vrot.slane %v282, 7
        %v383 = vsel %vm371, %v381, %v382
        %v384 = vrot.slane %v283, 7
        %v385 = vrot.slane %v284, 7
        %v386 = vsel %vm371, %v384, %v385
        %v387 = vrot.slane %v285, 7
        %v388 = vrot.slane %v286, 7
        %v389 = vsel %vm371, %v387, %v388
        %v390 = vrot.slane %v287, 7
        %v391 = vrot.slane %v288, 7
        %v392 = vsel %vm371, %v390, %v391
        %v393 = vrot.slane %v289, 7
        %v394 = vrot.slane %v290, 7
        %v395 = vsel %vm371, %v393, %v394
        %v396 = vrot.slane %v291, 7
        %v397 = vrot.slane %v292, 7
        %v398 = vsel %vm371, %v396, %v397
        %v399 = vrot.slane %v293, 7
        %v400 = vrot.slane %v294, 7
        %v401 = vsel %vm371, %v399, %v400
        %v402 = vrot.slane %v295, 7
        %v403 = vrot.slane %v296, 7
        %v404 = vsel %vm371, %v402, %v403
        %v405 = vrot.slane %v297, 7
        %v406 = vrot.slane %v298, 7
        %v407 = vsel %vm371, %v405, %v406
        %v408 = vrot.slane %v299, 7
        %v409 = vrot.slane %v300, 7
        %v410 = vsel %vm371, %v408, %v409
        %v411 = vrot.slane %v301, 7
        %v412 = vrot.slane %v302, 7
        %v413 = vsel %vm371, %v411, %v412
        %v414 = vrot.slane %v303, 7
        %v415 = vrot.slane %v304, 7
        %v416 = vsel %vm371, %v414, %v415
        %v417 = vrot.slane %v305, 7
        %v418 = vrot.slane %v306, 7
        %v419 = vsel %vm371, %v417, %v418
        %v468 = vrot.slane %v276, 5
        %v469 = vrot.slane %v278, 5
        %v470 = vrot.slane %v280, 5
        %v471 = vrot.slane %v282, 5
        %v472 = vrot.slane %v284, 5
        %v473 = vrot.slane %v286, 5
        %v474 = vrot.slane %v288, 5
        %v475 = vrot.slane %v290, 5
        %v476 = vrot.slane %v292, 5
        %v477 = vrot.slane %v294, 5
        %v478 = vrot.slane %v296, 5
        %v479 = vrot.slane %v298, 5
        %v480 = vrot.slane %v300, 5
        %v481 = vrot.slane %v302, 5
        %v482 = vrot.slane %v304, 5
        %v483 = vrot.slane %v306, 5
        %v500 = vsel %vm371, %v323, %v372
        %v501 = vsel %vm371, %v324, %v375
        %v502 = vsel %vm371, %v325, %v378
        %v503 = vsel %vm371, %v326, %v381
        %v504 = vsel %vm371, %v327, %v384
        %v505 = vsel %vm371, %v328, %v387
        %v506 = vsel %vm371, %v329, %v390
        %v507 = vsel %vm371, %v330, %v393
        %v508 = vsel %vm371, %v331, %v396
        %v509 = vsel %vm371, %v332, %v399
        %v510 = vsel %vm371, %v333, %v402
        %v511 = vsel %vm371, %v334, %v405
        %v512 = vsel %vm371, %v335, %v408
        %v513 = vsel %vm371, %v336, %v411
        %v514 = vsel %vm371, %v337, %v414
        %v515 = vsel %vm371, %v338, %v417
        %v516 = vsel %vm371, %v373, %v468
        %v517 = vsel %vm371, %v376, %v469
        %v518 = vsel %vm371, %v379, %v470
        %v519 = vsel %vm371, %v382, %v471
        %v520 = vsel %vm371, %v385, %v472
        %v521 = vsel %vm371, %v388, %v473
        %v522 = vsel %vm371, %v391, %v474
        %v523 = vsel %vm371, %v394, %v475
        %v524 = vsel %vm371, %v397, %v476
        %v525 = vsel %vm371, %v400, %v477
        %v526 = vsel %vm371, %v403, %v478
        %v527 = vsel %vm371, %v406, %v479
        %v528 = vsel %vm371, %v409, %v480
        %v529 = vsel %vm371, %v412, %v481
        %v530 = vsel %vm371, %v415, %v482
        %v531 = vsel %vm371, %v418, %v483
        %vm532 = vcmask 1041408
        %v533 = vsel %vm532, %v516, 0.0
        %v534 = vsel %vm532, %v517, 0.0
        %v535 = vsel %vm532, %v518, 0.0
        %v536 = vsel %vm532, %v519, 0.0
        %v537 = vsel %vm532, %v520, 0.0
        %v538 = vsel %vm532, %v521, 0.0
        %v539 = vsel %vm532, %v522, 0.0
        %v540 = vsel %vm532, %v523, 0.0
        %v541 = vsel %vm532, %v524, 0.0
        %v542 = vsel %vm532, %v525, 0.0
        %v543 = vsel %vm532, %v526, 0.0
        %v544 = vsel %vm532, %v527, 0.0
        %v545 = vsel %vm532, %v528, 0.0
        %v546 = vsel %vm532, %v529, 0.0
        %v547 = vsel %vm532, %v530, 0.0
        %v548 = vsel %vm532, %v531, 0.0
        %549 = vst [vmem:[#allocation2 + $0x18] sm:$0xff] %v500
        %550 = vst [vmem:[#allocation2 + $0x20] sm:$0xff] %v374
        %551 = vst [vmem:[#allocation2 + $0x28] sm:$0xff] %v533
        %552 = vst [vmem:[#allocation2 + $0x30] sm:$0xff] %v501
        %553 = vst [vmem:[#allocation2 + $0x38] sm:$0xff] %v377
        %554 = vst [vmem:[#allocation2 + $0x40] sm:$0xff] %v534
        %555 = vst [vmem:[#allocation2 + $0x48] sm:$0xff] %v502
        %556 = vst [vmem:[#allocation2 + $0x50] sm:$0xff] %v380
        %557 = vst [vmem:[#allocation2 + $0x58] sm:$0xff] %v535
        %558 = vst [vmem:[#allocation2 + $0x60] sm:$0xff] %v503
        %559 = vst [vmem:[#allocation2 + $0x68] sm:$0xff] %v383
        %560 = vst [vmem:[#allocation2 + $0x70] sm:$0xff] %v536
        %561 = vst [vmem:[#allocation2 + $0x78] sm:$0xff] %v504
        %562 = vst [vmem:[#allocation2 + $0x80] sm:$0xff] %v386
        %563 = vst [vmem:[#allocation2 + $0x88] sm:$0xff] %v537
        %564 = vst [vmem:[#allocation2 + $0x90] sm:$0xff] %v505
        %565 = vst [vmem:[#allocation2 + $0x98] sm:$0xff] %v389
        %566 = vst [vmem:[#allocation2 + $0xa0] sm:$0xff] %v538
        %567 = vst [vmem:[#allocation2 + $0xa8] sm:$0xff] %v506
        %568 = vst [vmem:[#allocation2 + $0xb0] sm:$0xff] %v392
        %569 = vst [vmem:[#allocation2 + $0xb8] sm:$0xff] %v539
        %570 = vst [vmem:[#allocation2 + $0xc0] sm:$0xff] %v507
        %571 = vst [vmem:[#allocation2 + $0xc8] sm:$0xff] %v395
        %572 = vst [vmem:[#allocation2 + $0xd0] sm:$0xff] %v540
        %573 = vst [vmem:[#allocation2 + $0xd8] sm:$0xff] %v508
        %574 = vst [vmem:[#allocation2 + $0xe0] sm:$0xff] %v398
        %575 = vst [vmem:[#allocation2 + $0xe8] sm:$0xff] %v541
        %576 = vst [vmem:[#allocation2 + $0xf0] sm:$0xff] %v509
        %577 = vst [vmem:[#allocation2 + $0xf8] sm:$0xff] %v401
        %578 = vst [vmem:[#allocation2 + $0x100] sm:$0xff] %v542
        %579 = vst [vmem:[#allocation2 + $0x108] sm:$0xff] %v510
        %580 = vst [vmem:[#allocation2 + $0x110] sm:$0xff] %v404
        %581 = vst [vmem:[#allocation2 + $0x118] sm:$0xff] %v543
        %582 = vst [vmem:[#allocation2 + $0x120] sm:$0xff] %v511
        %583 = vst [vmem:[#allocation2 + $0x128] sm:$0xff] %v407
        %584 = vst [vmem:[#allocation2 + $0x130] sm:$0xff] %v544
        %585 = vst [vmem:[#allocation2 + $0x138] sm:$0xff] %v512
        %586 = vst [vmem:[#allocation2 + $0x140] sm:$0xff] %v410
        %587 = vst [vmem:[#allocation2 + $0x148] sm:$0xff] %v545
        %588 = vst [vmem:[#allocation2 + $0x150] sm:$0xff] %v513
        %589 = vst [vmem:[#allocation2 + $0x158] sm:$0xff] %v413
        %590 = vst [vmem:[#allocation2 + $0x160] sm:$0xff] %v546
        %591 = vst [vmem:[#allocation2 + $0x168] sm:$0xff] %v514
        %592 = vst [vmem:[#allocation2 + $0x170] sm:$0xff] %v416
        %593 = vst [vmem:[#allocation2 + $0x178] sm:$0xff] %v547
        %594 = vst [vmem:[#allocation2 + $0x180] sm:$0xff] %v515
        %595 = vst [vmem:[#allocation2 + $0x188] sm:$0xff] %v419
        %596 = vst [vmem:[#allocation2 + $0x190] sm:$0xff] %v548
        %597 = vst [vmem:[#allocation2] sm:$0xff] %v501
        %598 = vst [vmem:[#allocation2 + $0x8] sm:$0xff] %v377
        %599 = vst [vmem:[#allocation2 + $0x10] sm:$0xff] %v534
        %600 = vst [vmem:[#allocation2 + $0x198] sm:$0xff] %v514
        %601 = vst [vmem:[#allocation2 + $0x1a0] sm:$0xff] %v416
        %602 = vst [vmem:[#allocation2 + $0x1a8] sm:$0xff] %v547
        %v603 = vld [vmem:[#allocation2] sm:$0xff]
        %v604 = vld [vmem:[#allocation2 + $0x8] sm:$0xff]
        %v605 = vld [vmem:[#allocation2 + $0x10] sm:$0xff]
        %v606 = vld [vmem:[#allocation2 + $0x18] sm:$0xff]
        %v607 = vld [vmem:[#allocation2 + $0x20] sm:$0xff]
        %v608 = vld [vmem:[#allocation2 + $0x28] sm:$0xff]
        %v609 = vld [vmem:[#allocation2 + $0x30] sm:$0xff]
        %v610 = vld [vmem:[#allocation2 + $0x38] sm:$0xff]
        %v611 = vld [vmem:[#allocation2 + $0x40] sm:$0xff]
        %v612 = vld [vmem:[#allocation2 + $0x48] sm:$0xff]
        %v613 = vld [vmem:[#allocation2 + $0x50] sm:$0xff]
        %v614 = vld [vmem:[#allocation2 + $0x58] sm:$0xff]
        %v615 = vld [vmem:[#allocation2 + $0x60] sm:$0xff]
        %v616 = vld [vmem:[#allocation2 + $0x68] sm:$0xff]
        %v617 = vld [vmem:[#allocation2 + $0x70] sm:$0xff]
        %v618 = vld [vmem:[#allocation2 + $0x78] sm:$0xff]
        %v619 = vld [vmem:[#allocation2 + $0x80] sm:$0xff]
        %v620 = vld [vmem:[#allocation2 + $0x88] sm:$0xff]
        %v621 = vld [vmem:[#allocation2 + $0x90] sm:$0xff]
        %v622 = vld [vmem:[#allocation2 + $0x98] sm:$0xff]
        %v623 = vld [vmem:[#allocation2 + $0xa0] sm:$0xff]
        %v624 = vld [vmem:[#allocation2 + $0xa8] sm:$0xff]
        %v625 = vld [vmem:[#allocation2 + $0xb0] sm:$0xff]
        %v626 = vld [vmem:[#allocation2 + $0xb8] sm:$0xff]
        %v627 = vld [vmem:[#allocation2 + $0xc0] sm:$0xff]
        %v628 = vld [vmem:[#allocation2 + $0xc8] sm:$0xff]
        %v629 = vld [vmem:[#allocation2 + $0xd0] sm:$0xff]
        %v630 = vld [vmem:[#allocation2 + $0xd8] sm:$0xff]
        %v631 = vld [vmem:[#allocation2 + $0xe0] sm:$0xff]
        %v632 = vld [vmem:[#allocation2 + $0xe8] sm:$0xff]
        %v633 = vld [vmem:[#allocation2 + $0xf0] sm:$0xff]
        %v634 = vld [vmem:[#allocation2 + $0xf8] sm:$0xff]
        %v635 = vld [vmem:[#allocation2 + $0x100] sm:$0xff]
        %v636 = vld [vmem:[#allocation2 + $0x108] sm:$0xff]
        %v637 = vld [vmem:[#allocation2 + $0x110] sm:$0xff]
        %v638 = vld [vmem:[#allocation2 + $0x118] sm:$0xff]
        %v639 = vld [vmem:[#allocation2 + $0x120] sm:$0xff]
        %v640 = vld [vmem:[#allocation2 + $0x128] sm:$0xff]
        %v641 = vld [vmem:[#allocation2 + $0x130] sm:$0xff]
        %v642 = vld [vmem:[#allocation2 + $0x138] sm:$0xff]
        %v643 = vld [vmem:[#allocation2 + $0x140] sm:$0xff]
        %v644 = vld [vmem:[#allocation2 + $0x148] sm:$0xff]
        %v645 = vld [vmem:[#allocation2 + $0x150] sm:$0xff]
        %v646 = vld [vmem:[#allocation2 + $0x158] sm:$0xff]
        %v647 = vld [vmem:[#allocation2 + $0x160] sm:$0xff]
        %v648 = vld [vmem:[#allocation2 + $0x168] sm:$0xff]
        %v649 = vld [vmem:[#allocation2 + $0x170] sm:$0xff]
        %v650 = vld [vmem:[#allocation2 + $0x178] sm:$0xff]
        %v651 = vld [vmem:[#allocation2 + $0x180] sm:$0xff]
        %v652 = vld [vmem:[#allocation2 + $0x188] sm:$0xff]
        %v653 = vld [vmem:[#allocation2 + $0x190] sm:$0xff]
        %v654 = vld [vmem:[#allocation2 + $0x198] sm:$0xff]
        %v655 = vld [vmem:[#allocation2 + $0x1a0] sm:$0xff]
        %v656 = vld [vmem:[#allocation2 + $0x1a8] sm:$0xff]
        %v657 = vld [vmem:[#allocation6] sm:$0xff]
        %v658 = vld [vmem:[#allocation6 + $0x8] sm:$0xff]
        %v659 = vld [vmem:[#allocation6 + $0x10] sm:$0xff]
        %v660 = vld [vmem:[#allocation6 + $0x18] sm:$0xff]
        %v661 = vld [vmem:[#allocation6 + $0x20] sm:$0xff]
        %v662 = vld [vmem:[#allocation6 + $0x28] sm:$0xff]
        %v663 = vld [vmem:[#allocation6 + $0x30] sm:$0xff]
        %v664 = vld [vmem:[#allocation6 + $0x38] sm:$0xff]
        %v665 = vld [vmem:[#allocation6 + $0x40] sm:$0xff]
        %v666 = vld [vmem:[#allocation6 + $0x48] sm:$0xff]
        %v667 = vld [vmem:[#allocation6 + $0x50] sm:$0xff]
        %v668 = vld [vmem:[#allocation6 + $0x58] sm:$0xff]
        %v669 = vld [vmem:[#allocation6 + $0x60] sm:$0xff]
        %v670 = vld [vmem:[#allocation6 + $0x68] sm:$0xff]
        %v671 = vld [vmem:[#allocation6 + $0x70] sm:$0xff]
        %v672 = vld [vmem:[#allocation6 + $0x78] sm:$0xff]
        %s673 = scalar_lea.vmem [#allocation6], 384
        %v674 = vld [vmem:[%s673] sm:$0xff]
        %v675 = vld [vmem:[%s673 + $0x8] sm:$0xff]
        %v676 = vld [vmem:[%s673 + $0x10] sm:$0xff]
        %v677 = vld [vmem:[%s673 + $0x18] sm:$0xff]
        %v678 = vld [vmem:[%s673 + $0x20] sm:$0xff]
        %v679 = vld [vmem:[%s673 + $0x28] sm:$0xff]
        %v680 = vld [vmem:[%s673 + $0x30] sm:$0xff]
        %v681 = vld [vmem:[%s673 + $0x38] sm:$0xff]
        %v682 = vld [vmem:[%s673 + $0x40] sm:$0xff]
        %v683 = vld [vmem:[%s673 + $0x48] sm:$0xff]
        %v684 = vld [vmem:[%s673 + $0x50] sm:$0xff]
        %v685 = vld [vmem:[%s673 + $0x58] sm:$0xff]
        %v686 = vld [vmem:[%s673 + $0x60] sm:$0xff]
        %v687 = vld [vmem:[%s673 + $0x68] sm:$0xff]
        %v688 = vld [vmem:[%s673 + $0x70] sm:$0xff]
        %v689 = vld [vmem:[%s673 + $0x78] sm:$0xff]
        %690 = vmatprep.subr.mxu0 0.0
        %691 = vmatpush1.msra.mxu0 %v674
        %692 = vmatprep.subr.mxu0 0.0
        %693 = vmatpush1.msra.mxu0 %v675
        %694 = vmatprep.subr.mxu0 0.0
        %695 = vmatpush1.msra.mxu0 %v676
        %696 = vmatprep.subr.mxu0 0.0
        %697 = vmatpush1.msra.mxu0 %v677
        %698 = vmatprep.subr.mxu0 0.0
        %699 = vmatpush1.msra.mxu0 %v678
        %700 = vmatprep.subr.mxu0 0.0
        %701 = vmatpush1.msra.mxu0 %v679
        %702 = vmatprep.subr.mxu0 0.0
        %703 = vmatpush1.msra.mxu0 %v680
        %704 = vmatprep.subr.mxu0 0.0
        %705 = vmatpush1.msra.mxu0 %v681
        %706 = vmatprep.subr.mxu0 0.0
        %707 = vmatpush1.msra.mxu0 %v682
        %708 = vmatprep.subr.mxu0 0.0
        %709 = vmatpush1.msra.mxu0 %v683
        %710 = vmatprep.subr.mxu0 0.0
        %711 = vmatpush1.msra.mxu0 %v684
        %712 = vmatprep.subr.mxu0 0.0
        %713 = vmatpush1.msra.mxu0 %v685
        %714 = vmatprep.subr.mxu0 0.0
        %715 = vmatpush1.msra.mxu0 %v686
        %716 = vmatprep.subr.mxu0 0.0
        %717 = vmatpush1.msra.mxu0 %v687
        %718 = vmatprep.subr.mxu0 0.0
        %719 = vmatpush1.msra.mxu0 %v688
        %720 = vmatprep.subr.mxu0 0.0
        %721 = vmatpush1.msra.mxu0 %v689
        %722 = vmatprep.subr.mxu0 0.0
        %723 = vmatpush1.msra.mxu0 0.0
        %724 = vmatprep.subr.mxu0 0.0
        %725 = vmatpush1.msra.mxu0 0.0
        %726 = vmatprep.subr.mxu0 0.0
        %727 = vmatpush1.msra.mxu0 0.0
        %728 = vmatprep.subr.mxu0 0.0
        %729 = vmatpush1.msra.mxu0 0.0
        %730 = vmatprep.subr.mxu0 0.0
        %731 = vmatpush1.msra.mxu0 0.0
        %732 = vmatprep.subr.mxu0 0.0
        %733 = vmatpush1.msra.mxu0 0.0
        %734 = vmatprep.subr.mxu0 0.0
        %735 = vmatpush1.msra.mxu0 0.0
        %736 = vmatprep.subr.mxu0 0.0
        %737 = vmatpush1.msra.mxu0 0.0
        %738 = vmatprep.subr.mxu0 0.0
        %739 = vmatpush1.msra.mxu0 0.0
        %740 = vmatprep.subr.mxu0 0.0
        %741 = vmatpush1.msra.mxu0 0.0
        %742 = vmatprep.subr.mxu0 0.0
        %743 = vmatpush1.msra.mxu0 0.0
        %744 = vmatprep.subr.mxu0 0.0
        %745 = vmatpush1.msra.mxu0 0.0
        %746 = vmatprep.subr.mxu0 0.0
        %747 = vmatpush1.msra.mxu0 0.0
        %748 = vmatprep.subr.mxu0 0.0
        %749 = vmatpush1.msra.mxu0 0.0
        %750 = vmatprep.subr.mxu0 0.0
        %751 = vmatpush1.msra.mxu0 0.0
        %752 = vmatprep.subr.mxu0 0.0
        %753 = vmatpush1.msra.mxu0 0.0
        %754 = vmatprep.mubr.f32.mxu0 0.0
        %755 = vmatmul.mubr.f32.gmra.mrb[0].mxu0 %v606
        %v756 = vpop.f32.mrb[0].mxu0
        %v757 = vadd.f32 0.0, %v756
        %v758 = vpop.f32.mrb[0].mxu0
        %759 = vmatprep.mubr.f32.mxu0 0.0
        %760 = vmatmul.mubr.f32.gmra.mrb[0].mxu0 %v607
        %v761 = vpop.f32.mrb[0].mxu0
        %v762 = vadd.f32 0.0, %v761
        %v763 = vpop.f32.mrb[0].mxu0
        %764 = vmatprep.mubr.f32.mxu0 0.0
        %765 = vmatmul.mubr.f32.gmra.mrb[0].mxu0 %v608
        %v766 = vpop.f32.mrb[0].mxu0
        %v767 = vpop.f32.mrb[0].mxu0
        %768 = vmatprep.mubr.f32.mxu0 0.0
        %769 = vmatmul.mubr.f32.gmra.mrb[0].mxu0 %v609
        %v770 = vpop.f32.mrb[0].mxu0
        %v771 = vadd.f32 0.0, %v770
        %v772 = vpop.f32.mrb[0].mxu0
        %773 = vmatprep.mubr.f32.mxu0 0.0
        %774 = vmatmul.mubr.f32.gmra.mrb[0].mxu0 %v610
        %v775 = vpop.f32.mrb[0].mxu0
        %v776 = vadd.f32 0.0, %v775
        %v777 = vpop.f32.mrb[0].mxu0
        %778 = vmatprep.mubr.f32.mxu0 0.0
        %779 = vmatmul.mubr.f32.gmra.mrb[0].mxu0 %v611
        %v780 = vpop.f32.mrb[0].mxu0
        %v781 = vpop.f32.mrb[0].mxu0
        %782 = vmatprep.mubr.f32.mxu0 0.0
        %783 = vmatmul.mubr.f32.gmra.mrb[0].mxu0 %v612
        %v784 = vpop.f32.mrb[0].mxu0
        %v785 = vadd.f32 0.0, %v784
        %v786 = vpop.f32.mrb[0].mxu0
        %787 = vmatprep.mubr.f32.mxu0 0.0
        %788 = vmatmul.mubr.f32.gmra.mrb[0].mxu0 %v613
        %v789 = vpop.f32.mrb[0].mxu0
        %v790 = vadd.f32 0.0, %v789
        %v791 = vpop.f32.mrb[0].mxu0
        %792 = vmatprep.mubr.f32.mxu0 0.0
        %793 = vmatmul.mubr.f32.gmra.mrb[0].mxu0 %v614
        %v794 = vpop.f32.mrb[0].mxu0
        %v795 = vpop.f32.mrb[0].mxu0
        %796 = vmatprep.mubr.f32.mxu0 0.0
        %797 = vmatmul.mubr.f32.gmra.mrb[0].mxu0 %v615
        %v798 = vpop.f32.mrb[0].mxu0
        %v799 = vadd.f32 0.0, %v798
        %v800 = vpop.f32.mrb[0].mxu0
        %801 = vmatprep.mubr.f32.mxu0 0.0
        %802 = vmatmul.mubr.f32.gmra.mrb[0].mxu0 %v616
        %v803 = vpop.f32.mrb[0].mxu0
        %v804 = vadd.f32 0.0, %v803
        %v805 = vpop.f32.mrb[0].mxu0
        %806 = vmatprep.mubr.f32.mxu0 0.0
        %807 = vmatmul.mubr.f32.gmra.mrb[0].mxu0 %v617
        %v808 = vpop.f32.mrb[0].mxu0
        %v809 = vpop.f32.mrb[0].mxu0
        %810 = vmatprep.mubr.f32.mxu0 0.0
        %811 = vmatmul.mubr.f32.gmra.mrb[0].mxu0 %v618
        %v812 = vpop.f32.mrb[0].mxu0
        %v813 = vadd.f32 0.0, %v812
        %v814 = vpop.f32.mrb[0].mxu0
        %815 = vmatprep.mubr.f32.mxu0 0.0
        %816 = vmatmul.mubr.f32.gmra.mrb[0].mxu0 %v619
        %v817 = vpop.f32.mrb[0].mxu0
        %v818 = vadd.f32 0.0, %v817
        %v819 = vpop.f32.mrb[0].mxu0
        %820 = vmatprep.mubr.f32.mxu0 0.0
        %821 = vmatmul.mubr.f32.gmra.mrb[0].mxu0 %v620
        %v822 = vpop.f32.mrb[0].mxu0
        %v823 = vpop.f32.mrb[0].mxu0
        %824 = vmatprep.mubr.f32.mxu0 0.0
        %825 = vmatmul.mubr.f32.gmra.mrb[0].mxu0 %v621
        %v826 = vpop.f32.mrb[0].mxu0
        %v827 = vadd.f32 0.0, %v826
        %v828 = vpop.f32.mrb[0].mxu0
        %829 = vmatprep.mubr.f32.mxu0 0.0
        %830 = vmatmul.mubr.f32.gmra.mrb[0].mxu0 %v622
        %v831 = vpop.f32.mrb[0].mxu0
        %v832 = vadd.f32 0.0, %v831
        %v833 = vpop.f32.mrb[0].mxu0
        %834 = vmatprep.mubr.f32.mxu0 0.0
        %835 = vmatmul.mubr.f32.gmra.mrb[0].mxu0 %v623
        %v836 = vpop.f32.mrb[0].mxu0
        %v837 = vpop.f32.mrb[0].mxu0
        %838 = vmatprep.mubr.f32.mxu0 0.0
        %839 = vmatmul.mubr.f32.gmra.mrb[0].mxu0 %v624
        %v840 = vpop.f32.mrb[0].mxu0
        %v841 = vadd.f32 0.0, %v840
        %v842 = vpop.f32.mrb[0].mxu0
        %843 = vmatprep.mubr.f32.mxu0 0.0
        %844 = vmatmul.mubr.f32.gmra.mrb[0].mxu0 %v625
        %v845 = vpop.f32.mrb[0].mxu0
        %v846 = vadd.f32 0.0, %v845
        %v847 = vpop.f32.mrb[0].mxu0
        %848 = vmatprep.mubr.f32.mxu0 0.0
        %849 = vmatmul.mubr.f32.gmra.mrb[0].mxu0 %v626
        %v850 = vpop.f32.mrb[0].mxu0
        %v851 = vpop.f32.mrb[0].mxu0
        %852 = vmatprep.mubr.f32.mxu0 0.0
        %853 = vmatmul.mubr.f32.gmra.mrb[0].mxu0 %v627
        %v854 = vpop.f32.mrb[0].mxu0
        %v855 = vadd.f32 0.0, %v854
        %v856 = vpop.f32.mrb[0].mxu0
        %857 = vmatprep.mubr.f32.mxu0 0.0
        %858 = vmatmul.mubr.f32.gmra.mrb[0].mxu0 %v628
        %v859 = vpop.f32.mrb[0].mxu0
        %v860 = vadd.f32 0.0, %v859
        %v861 = vpop.f32.mrb[0].mxu0
        %862 = vmatprep.mubr.f32.mxu0 0.0
        %863 = vmatmul.mubr.f32.gmra.mrb[0].mxu0 %v629
        %v864 = vpop.f32.mrb[0].mxu0
        %v865 = vpop.f32.mrb[0].mxu0
        %866 = vmatprep.mubr.f32.mxu0 0.0
        %867 = vmatmul.mubr.f32.gmra.mrb[0].mxu0 %v630
        %v868 = vpop.f32.mrb[0].mxu0
        %v869 = vadd.f32 0.0, %v868
        %v870 = vpop.f32.mrb[0].mxu0
        %871 = vmatprep.mubr.f32.mxu0 0.0
        %872 = vmatmul.mubr.f32.gmra.mrb[0].mxu0 %v631
        %v873 = vpop.f32.mrb[0].mxu0
        %v874 = vadd.f32 0.0, %v873
        %v875 = vpop.f32.mrb[0].mxu0
        %876 = vmatprep.mubr.f32.mxu0 0.0
        %877 = vmatmul.mubr.f32.gmra.mrb[0].mxu0 %v632
        %v878 = vpop.f32.mrb[0].mxu0
        %v879 = vpop.f32.mrb[0].mxu0
        %880 = vmatprep.mubr.f32.mxu0 0.0
        %881 = vmatmul.mubr.f32.gmra.mrb[0].mxu0 %v633
        %v882 = vpop.f32.mrb[0].mxu0
        %v883 = vadd.f32 0.0, %v882
        %v884 = vpop.f32.mrb[0].mxu0
        %885 = vmatprep.mubr.f32.mxu0 0.0
        %886 = vmatmul.mubr.f32.gmra.mrb[0].mxu0 %v634
        %v887 = vpop.f32.mrb[0].mxu0
        %v888 = vadd.f32 0.0, %v887
        %v889 = vpop.f32.mrb[0].mxu0
        %890 = vmatprep.mubr.f32.mxu0 0.0
        %891 = vmatmul.mubr.f32.gmra.mrb[0].mxu0 %v635
        %v892 = vpop.f32.mrb[0].mxu0
        %v893 = vpop.f32.mrb[0].mxu0
        %894 = vmatprep.mubr.f32.mxu0 0.0
        %895 = vmatmul.mubr.f32.gmra.mrb[0].mxu0 %v636
        %v896 = vpop.f32.mrb[0].mxu0
        %v897 = vadd.f32 0.0, %v896
        %v898 = vpop.f32.mrb[0].mxu0
        %899 = vmatprep.mubr.f32.mxu0 0.0
        %900 = vmatmul.mubr.f32.gmra.mrb[0].mxu0 %v637
        %v901 = vpop.f32.mrb[0].mxu0
        %v902 = vadd.f32 0.0, %v901
        %v903 = vpop.f32.mrb[0].mxu0
        %904 = vmatprep.mubr.f32.mxu0 0.0
        %905 = vmatmul.mubr.f32.gmra.mrb[0].mxu0 %v638
        %v906 = vpop.f32.mrb[0].mxu0
        %v907 = vpop.f32.mrb[0].mxu0
        %908 = vmatprep.mubr.f32.mxu0 0.0
        %909 = vmatmul.mubr.f32.gmra.mrb[0].mxu0 %v639
        %v910 = vpop.f32.mrb[0].mxu0
        %v911 = vadd.f32 0.0, %v910
        %v912 = vpop.f32.mrb[0].mxu0
        %913 = vmatprep.mubr.f32.mxu0 0.0
        %914 = vmatmul.mubr.f32.gmra.mrb[0].mxu0 %v640
        %v915 = vpop.f32.mrb[0].mxu0
        %v916 = vadd.f32 0.0, %v915
        %v917 = vpop.f32.mrb[0].mxu0
        %918 = vmatprep.mubr.f32.mxu0 0.0
        %919 = vmatmul.mubr.f32.gmra.mrb[0].mxu0 %v641
        %v920 = vpop.f32.mrb[0].mxu0
        %v921 = vpop.f32.mrb[0].mxu0
        %922 = vmatprep.mubr.f32.mxu0 0.0
        %923 = vmatmul.mubr.f32.gmra.mrb[0].mxu0 %v642
        %v924 = vpop.f32.mrb[0].mxu0
        %v925 = vadd.f32 0.0, %v924
        %v926 = vpop.f32.mrb[0].mxu0
        %927 = vmatprep.mubr.f32.mxu0 0.0
        %928 = vmatmul.mubr.f32.gmra.mrb[0].mxu0 %v643
        %v929 = vpop.f32.mrb[0].mxu0
        %v930 = vadd.f32 0.0, %v929
        %v931 = vpop.f32.mrb[0].mxu0
        %932 = vmatprep.mubr.f32.mxu0 0.0
        %933 = vmatmul.mubr.f32.gmra.mrb[0].mxu0 %v644
        %v934 = vpop.f32.mrb[0].mxu0
        %v935 = vpop.f32.mrb[0].mxu0
        %936 = vmatprep.mubr.f32.mxu0 0.0
        %937 = vmatmul.mubr.f32.gmra.mrb[0].mxu0 %v645
        %v938 = vpop.f32.mrb[0].mxu0
        %v939 = vadd.f32 0.0, %v938
        %v940 = vpop.f32.mrb[0].mxu0
        %941 = vmatprep.mubr.f32.mxu0 0.0
        %942 = vmatmul.mubr.f32.gmra.mrb[0].mxu0 %v646
        %v943 = vpop.f32.mrb[0].mxu0
        %v944 = vadd.f32 0.0, %v943
        %v945 = vpop.f32.mrb[0].mxu0
        %946 = vmatprep.mubr.f32.mxu0 0.0
        %947 = vmatmul.mubr.f32.gmra.mrb[0].mxu0 %v647
        %v948 = vpop.f32.mrb[0].mxu0
        %v949 = vpop.f32.mrb[0].mxu0
        %950 = vmatprep.mubr.f32.mxu0 0.0
        %951 = vmatmul.mubr.f32.gmra.mrb[0].mxu0 %v648
        %v952 = vpop.f32.mrb[0].mxu0
        %v953 = vadd.f32 0.0, %v952
        %v954 = vpop.f32.mrb[0].mxu0
        %955 = vmatprep.mubr.f32.mxu0 0.0
        %956 = vmatmul.mubr.f32.gmra.mrb[0].mxu0 %v649
        %v957 = vpop.f32.mrb[0].mxu0
        %v958 = vadd.f32 0.0, %v957
        %v959 = vpop.f32.mrb[0].mxu0
        %960 = vmatprep.mubr.f32.mxu0 0.0
        %961 = vmatmul.mubr.f32.gmra.mrb[0].mxu0 %v650
        %v962 = vpop.f32.mrb[0].mxu0
        %v963 = vpop.f32.mrb[0].mxu0
        %964 = vmatprep.mubr.f32.mxu0 0.0
        %965 = vmatmul.mubr.f32.gmra.mrb[0].mxu0 %v651
        %v966 = vpop.f32.mrb[0].mxu0
        %v967 = vadd.f32 0.0, %v966
        %v968 = vpop.f32.mrb[0].mxu0
        %969 = vmatprep.mubr.f32.mxu0 0.0
        %970 = vmatmul.mubr.f32.gmra.mrb[0].mxu0 %v652
        %v971 = vpop.f32.mrb[0].mxu0
        %v972 = vadd.f32 0.0, %v971
        %v973 = vpop.f32.mrb[0].mxu0
        %974 = vmatprep.mubr.f32.mxu0 0.0
        %975 = vmatmul.mubr.f32.gmra.mrb[0].mxu0 %v653
        %v976 = vpop.f32.mrb[0].mxu0
        %v977 = vpop.f32.mrb[0].mxu0
        %978 = vdwg.mxu0
        %979 = vmatprep.subr.mxu0 0.0
        %980 = vmatpush1.msra.mxu0 %v657
        %981 = vmatprep.subr.mxu0 0.0
        %982 = vmatpush1.msra.mxu0 %v658
        %983 = vmatprep.subr.mxu0 0.0
        %984 = vmatpush1.msra.mxu0 %v659
        %985 = vmatprep.subr.mxu0 0.0
        %986 = vmatpush1.msra.mxu0 %v660
        %987 = vmatprep.subr.mxu0 0.0
        %988 = vmatpush1.msra.mxu0 %v661
        %989 = vmatprep.subr.mxu0 0.0
        %990 = vmatpush1.msra.mxu0 %v662
        %991 = vmatprep.subr.mxu0 0.0
        %992 = vmatpush1.msra.mxu0 %v663
        %993 = vmatprep.subr.mxu0 0.0
        %994 = vmatpush1.msra.mxu0 %v664
        %995 = vmatprep.subr.mxu0 0.0
        %996 = vmatpush1.msra.mxu0 %v665
        %997 = vmatprep.subr.mxu0 0.0
        %998 = vmatpush1.msra.mxu0 %v666
        %999 = vmatprep.subr.mxu0 0.0
        %1000 = vmatpush1.msra.mxu0 %v667
        %1001 = vmatprep.subr.mxu0 0.0
        %1002 = vmatpush1.msra.mxu0 %v668
        %1003 = vmatprep.subr.mxu0 0.0
        %1004 = vmatpush1.msra.mxu0 %v669
        %1005 = vmatprep.subr.mxu0 0.0
        %1006 = vmatpush1.msra.mxu0 %v670
        %1007 = vmatprep.subr.mxu0 0.0
        %1008 = vmatpush1.msra.mxu0 %v671
        %1009 = vmatprep.subr.mxu0 0.0
        %1010 = vmatpush1.msra.mxu0 %v672
        %1011 = vmatprep.subr.mxu0 0.0
        %1012 = vmatpush1.msra.mxu0 0.0
        %1013 = vmatprep.subr.mxu0 0.0
        %1014 = vmatpush1.msra.mxu0 0.0
        %1015 = vmatprep.subr.mxu0 0.0
        %1016 = vmatpush1.msra.mxu0 0.0
        %1017 = vmatprep.subr.mxu0 0.0
        %1018 = vmatpush1.msra.mxu0 0.0
        %1019 = vmatprep.subr.mxu0 0.0
        %1020 = vmatpush1.msra.mxu0 0.0
        %1021 = vmatprep.subr.mxu0 0.0
        %1022 = vmatpush1.msra.mxu0 0.0
        %1023 = vmatprep.subr.mxu0 0.0
        %1024 = vmatpush1.msra.mxu0 0.0
        %1025 = vmatprep.subr.mxu0 0.0
        %1026 = vmatpush1.msra.mxu0 0.0
        %1027 = vmatprep.subr.mxu0 0.0
        %1028 = vmatpush1.msra.mxu0 0.0
        %1029 = vmatprep.subr.mxu0 0.0
        %1030 = vmatpush1.msra.mxu0 0.0
        %1031 = vmatprep.subr.mxu0 0.0
        %1032 = vmatpush1.msra.mxu0 0.0
        %1033 = vmatprep.subr.mxu0 0.0
        %1034 = vmatpush1.msra.mxu0 0.0
        %1035 = vmatprep.subr.mxu0 0.0
        %1036 = vmatpush1.msra.mxu0 0.0
        %1037 = vmatprep.subr.mxu0 0.0
        %1038 = vmatpush1.msra.mxu0 0.0
        %1039 = vmatprep.subr.mxu0 0.0
        %1040 = vmatpush1.msra.mxu0 0.0
        %1041 = vmatprep.subr.mxu0 0.0
        %1042 = vmatpush1.msra.mxu0 0.0
        %1043 = vmatprep.mubr.f32.mxu0 0.0
        %1044 = vmatmul.mubr.f32.gmra.mrb[0].mxu0 %v603
        %v1045 = vpop.f32.mrb[0].mxu0
        %v1046 = vadd.f32 %v757, %v1045
        %v1047 = vpop.f32.mrb[0].mxu0
        %1048 = vmatprep.mubr.f32.mxu0 0.0
        %1049 = vmatmul.mubr.f32.gmra.mrb[0].mxu0 %v604
        %v1050 = vpop.f32.mrb[0].mxu0
        %v1051 = vadd.f32 %v762, %v1050
        %v1052 = vpop.f32.mrb[0].mxu0
        %1053 = vmatprep.mubr.f32.mxu0 0.0
        %1054 = vmatmul.mubr.f32.gmra.mrb[0].mxu0 %v605
        %v1055 = vpop.f32.mrb[0].mxu0
        %v1056 = vpop.f32.mrb[0].mxu0
        %1057 = vmatprep.mubr.f32.mxu0 0.0
        %1058 = vmatmul.mubr.f32.gmra.mrb[0].mxu0 %v606
        %v1059 = vpop.f32.mrb[0].mxu0
        %v1060 = vadd.f32 %v771, %v1059
        %v1061 = vpop.f32.mrb[0].mxu0
        %1062 = vmatprep.mubr.f32.mxu0 0.0
        %1063 = vmatmul.mubr.f32.gmra.mrb[0].mxu0 %v607
        %v1064 = vpop.f32.mrb[0].mxu0
        %v1065 = vadd.f32 %v776, %v1064
        %v1066 = vpop.f32.mrb[0].mxu0
        %1067 = vmatprep.mubr.f32.mxu0 0.0
        %1068 = vmatmul.mubr.f32.gmra.mrb[0].mxu0 %v608
        %v1069 = vpop.f32.mrb[0].mxu0
        %v1070 = vpop.f32.mrb[0].mxu0
        %1071 = vmatprep.mubr.f32.mxu0 0.0
        %1072 = vmatmul.mubr.f32.gmra.mrb[0].mxu0 %v609
        %v1073 = vpop.f32.mrb[0].mxu0
        %v1074 = vadd.f32 %v785, %v1073
        %v1075 = vpop.f32.mrb[0].mxu0
        %1076 = vmatprep.mubr.f32.mxu0 0.0
        %1077 = vmatmul.mubr.f32.gmra.mrb[0].mxu0 %v610
        %v1078 = vpop.f32.mrb[0].mxu0
        %v1079 = vadd.f32 %v790, %v1078
        %v1080 = vpop.f32.mrb[0].mxu0
        %1081 = vmatprep.mubr.f32.mxu0 0.0
        %1082 = vmatmul.mubr.f32.gmra.mrb[0].mxu0 %v611
        %v1083 = vpop.f32.mrb[0].mxu0
        %v1084 = vpop.f32.mrb[0].mxu0
        %1085 = vmatprep.mubr.f32.mxu0 0.0
        %1086 = vmatmul.mubr.f32.gmra.mrb[0].mxu0 %v612
        %v1087 = vpop.f32.mrb[0].mxu0
        %v1088 = vadd.f32 %v799, %v1087
        %v1089 = vpop.f32.mrb[0].mxu0
        %1090 = vmatprep.mubr.f32.mxu0 0.0
        %1091 = vmatmul.mubr.f32.gmra.mrb[0].mxu0 %v613
        %v1092 = vpop.f32.mrb[0].mxu0
        %v1093 = vadd.f32 %v804, %v1092
        %v1094 = vpop.f32.mrb[0].mxu0
        %1095 = vmatprep.mubr.f32.mxu0 0.0
        %1096 = vmatmul.mubr.f32.gmra.mrb[0].mxu0 %v614
        %v1097 = vpop.f32.mrb[0].mxu0
        %v1098 = vpop.f32.mrb[0].mxu0
        %1099 = vmatprep.mubr.f32.mxu0 0.0
        %1100 = vmatmul.mubr.f32.gmra.mrb[0].mxu0 %v615
        %v1101 = vpop.f32.mrb[0].mxu0
        %v1102 = vadd.f32 %v813, %v1101
        %v1103 = vpop.f32.mrb[0].mxu0
        %1104 = vmatprep.mubr.f32.mxu0 0.0
        %1105 = vmatmul.mubr.f32.gmra.mrb[0].mxu0 %v616
        %v1106 = vpop.f32.mrb[0].mxu0
        %v1107 = vadd.f32 %v818, %v1106
        %v1108 = vpop.f32.mrb[0].mxu0
        %1109 = vmatprep.mubr.f32.mxu0 0.0
        %1110 = vmatmul.mubr.f32.gmra.mrb[0].mxu0 %v617
        %v1111 = vpop.f32.mrb[0].mxu0
        %v1112 = vpop.f32.mrb[0].mxu0
        %1113 = vmatprep.mubr.f32.mxu0 0.0
        %1114 = vmatmul.mubr.f32.gmra.mrb[0].mxu0 %v618
        %v1115 = vpop.f32.mrb[0].mxu0
        %v1116 = vadd.f32 %v827, %v1115
        %v1117 = vpop.f32.mrb[0].mxu0
        %1118 = vmatprep.mubr.f32.mxu0 0.0
        %1119 = vmatmul.mubr.f32.gmra.mrb[0].mxu0 %v619
        %v1120 = vpop.f32.mrb[0].mxu0
        %v1121 = vadd.f32 %v832, %v1120
        %v1122 = vpop.f32.mrb[0].mxu0
        %1123 = vmatprep.mubr.f32.mxu0 0.0
        %1124 = vmatmul.mubr.f32.gmra.mrb[0].mxu0 %v620
        %v1125 = vpop.f32.mrb[0].mxu0
        %v1126 = vpop.f32.mrb[0].mxu0
        %1127 = vmatprep.mubr.f32.mxu0 0.0
        %1128 = vmatmul.mubr.f32.gmra.mrb[0].mxu0 %v621
        %v1129 = vpop.f32.mrb[0].mxu0
        %v1130 = vadd.f32 %v841, %v1129
        %v1131 = vpop.f32.mrb[0].mxu0
        %1132 = vmatprep.mubr.f32.mxu0 0.0
        %1133 = vmatmul.mubr.f32.gmra.mrb[0].mxu0 %v622
        %v1134 = vpop.f32.mrb[0].mxu0
        %v1135 = vadd.f32 %v846, %v1134
        %v1136 = vpop.f32.mrb[0].mxu0
        %1137 = vmatprep.mubr.f32.mxu0 0.0
        %1138 = vmatmul.mubr.f32.gmra.mrb[0].mxu0 %v623
        %v1139 = vpop.f32.mrb[0].mxu0
        %v1140 = vpop.f32.mrb[0].mxu0
        %1141 = vmatprep.mubr.f32.mxu0 0.0
        %1142 = vmatmul.mubr.f32.gmra.mrb[0].mxu0 %v624
        %v1143 = vpop.f32.mrb[0].mxu0
        %v1144 = vadd.f32 %v855, %v1143
        %v1145 = vpop.f32.mrb[0].mxu0
        %1146 = vmatprep.mubr.f32.mxu0 0.0
        %1147 = vmatmul.mubr.f32.gmra.mrb[0].mxu0 %v625
        %v1148 = vpop.f32.mrb[0].mxu0
        %v1149 = vadd.f32 %v860, %v1148
        %v1150 = vpop.f32.mrb[0].mxu0
        %1151 = vmatprep.mubr.f32.mxu0 0.0
        %1152 = vmatmul.mubr.f32.gmra.mrb[0].mxu0 %v626
        %v1153 = vpop.f32.mrb[0].mxu0
        %v1154 = vpop.f32.mrb[0].mxu0
        %1155 = vmatprep.mubr.f32.mxu0 0.0
        %1156 = vmatmul.mubr.f32.gmra.mrb[0].mxu0 %v627
        %v1157 = vpop.f32.mrb[0].mxu0
        %v1158 = vadd.f32 %v869, %v1157
        %v1159 = vpop.f32.mrb[0].mxu0
        %1160 = vmatprep.mubr.f32.mxu0 0.0
        %1161 = vmatmul.mubr.f32.gmra.mrb[0].mxu0 %v628
        %v1162 = vpop.f32.mrb[0].mxu0
        %v1163 = vadd.f32 %v874, %v1162
        %v1164 = vpop.f32.mrb[0].mxu0
        %1165 = vmatprep.mubr.f32.mxu0 0.0
        %1166 = vmatmul.mubr.f32.gmra.mrb[0].mxu0 %v629
        %v1167 = vpop.f32.mrb[0].mxu0
        %v1168 = vpop.f32.mrb[0].mxu0
        %1169 = vmatprep.mubr.f32.mxu0 0.0
        %1170 = vmatmul.mubr.f32.gmra.mrb[0].mxu0 %v630
        %v1171 = vpop.f32.mrb[0].mxu0
        %v1172 = vadd.f32 %v883, %v1171
        %v1173 = vpop.f32.mrb[0].mxu0
        %1174 = vmatprep.mubr.f32.mxu0 0.0
        %1175 = vmatmul.mubr.f32.gmra.mrb[0].mxu0 %v631
        %v1176 = vpop.f32.mrb[0].mxu0
        %v1177 = vadd.f32 %v888, %v1176
        %v1178 = vpop.f32.mrb[0].mxu0
        %1179 = vmatprep.mubr.f32.mxu0 0.0
        %1180 = vmatmul.mubr.f32.gmra.mrb[0].mxu0 %v632
        %v1181 = vpop.f32.mrb[0].mxu0
        %v1182 = vpop.f32.mrb[0].mxu0
        %1183 = vmatprep.mubr.f32.mxu0 0.0
        %1184 = vmatmul.mubr.f32.gmra.mrb[0].mxu0 %v633
        %v1185 = vpop.f32.mrb[0].mxu0
        %v1186 = vadd.f32 %v897, %v1185
        %v1187 = vpop.f32.mrb[0].mxu0
        %1188 = vmatprep.mubr.f32.mxu0 0.0
        %1189 = vmatmul.mubr.f32.gmra.mrb[0].mxu0 %v634
        %v1190 = vpop.f32.mrb[0].mxu0
        %v1191 = vadd.f32 %v902, %v1190
        %v1192 = vpop.f32.mrb[0].mxu0
        %1193 = vmatprep.mubr.f32.mxu0 0.0
        %1194 = vmatmul.mubr.f32.gmra.mrb[0].mxu0 %v635
        %v1195 = vpop.f32.mrb[0].mxu0
        %v1196 = vpop.f32.mrb[0].mxu0
        %1197 = vmatprep.mubr.f32.mxu0 0.0
        %1198 = vmatmul.mubr.f32.gmra.mrb[0].mxu0 %v636
        %v1199 = vpop.f32.mrb[0].mxu0
        %v1200 = vadd.f32 %v911, %v1199
        %v1201 = vpop.f32.mrb[0].mxu0
        %1202 = vmatprep.mubr.f32.mxu0 0.0
        %1203 = vmatmul.mubr.f32.gmra.mrb[0].mxu0 %v637
        %v1204 = vpop.f32.mrb[0].mxu0
        %v1205 = vadd.f32 %v916, %v1204
        %v1206 = vpop.f32.mrb[0].mxu0
        %1207 = vmatprep.mubr.f32.mxu0 0.0
        %1208 = vmatmul.mubr.f32.gmra.mrb[0].mxu0 %v638
        %v1209 = vpop.f32.mrb[0].mxu0
        %v1210 = vpop.f32.mrb[0].mxu0
        %1211 = vmatprep.mubr.f32.mxu0 0.0
        %1212 = vmatmul.mubr.f32.gmra.mrb[0].mxu0 %v639
        %v1213 = vpop.f32.mrb[0].mxu0
        %v1214 = vadd.f32 %v925, %v1213
        %v1215 = vpop.f32.mrb[0].mxu0
        %1216 = vmatprep.mubr.f32.mxu0 0.0
        %1217 = vmatmul.mubr.f32.gmra.mrb[0].mxu0 %v640
        %v1218 = vpop.f32.mrb[0].mxu0
        %v1219 = vadd.f32 %v930, %v1218
        %v1220 = vpop.f32.mrb[0].mxu0
        %1221 = vmatprep.mubr.f32.mxu0 0.0
        %1222 = vmatmul.mubr.f32.gmra.mrb[0].mxu0 %v641
        %v1223 = vpop.f32.mrb[0].mxu0
        %v1224 = vpop.f32.mrb[0].mxu0
        %1225 = vmatprep.mubr.f32.mxu0 0.0
        %1226 = vmatmul.mubr.f32.gmra.mrb[0].mxu0 %v642
        %v1227 = vpop.f32.mrb[0].mxu0
        %v1228 = vadd.f32 %v939, %v1227
        %v1229 = vpop.f32.mrb[0].mxu0
        %1230 = vmatprep.mubr.f32.mxu0 0.0
        %1231 = vmatmul.mubr.f32.gmra.mrb[0].mxu0 %v643
        %v1232 = vpop.f32.mrb[0].mxu0
        %v1233 = vadd.f32 %v944, %v1232
        %v1234 = vpop.f32.mrb[0].mxu0
        %1235 = vmatprep.mubr.f32.mxu0 0.0
        %1236 = vmatmul.mubr.f32.gmra.mrb[0].mxu0 %v644
        %v1237 = vpop.f32.mrb[0].mxu0
        %v1238 = vpop.f32.mrb[0].mxu0
        %1239 = vmatprep.mubr.f32.mxu0 0.0
        %1240 = vmatmul.mubr.f32.gmra.mrb[0].mxu0 %v645
        %v1241 = vpop.f32.mrb[0].mxu0
        %v1242 = vadd.f32 %v953, %v1241
        %v1243 = vpop.f32.mrb[0].mxu0
        %1244 = vmatprep.mubr.f32.mxu0 0.0
        %1245 = vmatmul.mubr.f32.gmra.mrb[0].mxu0 %v646
        %v1246 = vpop.f32.mrb[0].mxu0
        %v1247 = vadd.f32 %v958, %v1246
        %v1248 = vpop.f32.mrb[0].mxu0
        %1249 = vmatprep.mubr.f32.mxu0 0.0
        %1250 = vmatmul.mubr.f32.gmra.mrb[0].mxu0 %v647
        %v1251 = vpop.f32.mrb[0].mxu0
        %v1252 = vpop.f32.mrb[0].mxu0
        %1253 = vmatprep.mubr.f32.mxu0 0.0
        %1254 = vmatmul.mubr.f32.gmra.mrb[0].mxu0 %v648
        %v1255 = vpop.f32.mrb[0].mxu0
        %v1256 = vadd.f32 %v967, %v1255
        %v1257 = vpop.f32.mrb[0].mxu0
        %1258 = vmatprep.mubr.f32.mxu0 0.0
        %1259 = vmatmul.mubr.f32.gmra.mrb[0].mxu0 %v649
        %v1260 = vpop.f32.mrb[0].mxu0
        %v1261 = vadd.f32 %v972, %v1260
        %v1262 = vpop.f32.mrb[0].mxu0
        %1263 = vmatprep.mubr.f32.mxu0 0.0
        %1264 = vmatmul.mubr.f32.gmra.mrb[0].mxu0 %v650
        %v1265 = vpop.f32.mrb[0].mxu0
        %v1266 = vpop.f32.mrb[0].mxu0
        %1267 = vdwg.mxu0
        %s1268 = scalar_lea.vmem [#allocation6], 768
        %v1269 = vld [vmem:[%s1268] sm:$0xff]
        %v1270 = vld [vmem:[%s1268 + $0x8] sm:$0xff]
        %v1271 = vld [vmem:[%s1268 + $0x10] sm:$0xff]
        %v1272 = vld [vmem:[%s1268 + $0x18] sm:$0xff]
        %v1273 = vld [vmem:[%s1268 + $0x20] sm:$0xff]
        %v1274 = vld [vmem:[%s1268 + $0x28] sm:$0xff]
        %v1275 = vld [vmem:[%s1268 + $0x30] sm:$0xff]
        %v1276 = vld [vmem:[%s1268 + $0x38] sm:$0xff]
        %v1277 = vld [vmem:[%s1268 + $0x40] sm:$0xff]
        %v1278 = vld [vmem:[%s1268 + $0x48] sm:$0xff]
        %v1279 = vld [vmem:[%s1268 + $0x50] sm:$0xff]
        %v1280 = vld [vmem:[%s1268 + $0x58] sm:$0xff]
        %v1281 = vld [vmem:[%s1268 + $0x60] sm:$0xff]
        %v1282 = vld [vmem:[%s1268 + $0x68] sm:$0xff]
        %v1283 = vld [vmem:[%s1268 + $0x70] sm:$0xff]
        %v1284 = vld [vmem:[%s1268 + $0x78] sm:$0xff]
        %1285 = vmatprep.subr.mxu0 0.0
        %1286 = vmatpush1.msra.mxu0 %v1269
        %1287 = vmatprep.subr.mxu0 0.0
        %1288 = vmatpush1.msra.mxu0 %v1270
        %1289 = vmatprep.subr.mxu0 0.0
        %1290 = vmatpush1.msra.mxu0 %v1271
        %1291 = vmatprep.subr.mxu0 0.0
        %1292 = vmatpush1.msra.mxu0 %v1272
        %1293 = vmatprep.subr.mxu0 0.0
        %1294 = vmatpush1.msra.mxu0 %v1273
        %1295 = vmatprep.subr.mxu0 0.0
        %1296 = vmatpush1.msra.mxu0 %v1274
        %1297 = vmatprep.subr.mxu0 0.0
        %1298 = vmatpush1.msra.mxu0 %v1275
        %1299 = vmatprep.subr.mxu0 0.0
        %1300 = vmatpush1.msra.mxu0 %v1276
        %1301 = vmatprep.subr.mxu0 0.0
        %1302 = vmatpush1.msra.mxu0 %v1277
        %1303 = vmatprep.subr.mxu0 0.0
        %1304 = vmatpush1.msra.mxu0 %v1278
        %1305 = vmatprep.subr.mxu0 0.0
        %1306 = vmatpush1.msra.mxu0 %v1279
        %1307 = vmatprep.subr.mxu0 0.0
        %1308 = vmatpush1.msra.mxu0 %v1280
        %1309 = vmatprep.subr.mxu0 0.0
        %1310 = vmatpush1.msra.mxu0 %v1281
        %1311 = vmatprep.subr.mxu0 0.0
        %1312 = vmatpush1.msra.mxu0 %v1282
        %1313 = vmatprep.subr.mxu0 0.0
        %1314 = vmatpush1.msra.mxu0 %v1283
        %1315 = vmatprep.subr.mxu0 0.0
        %1316 = vmatpush1.msra.mxu0 %v1284
        %1317 = vmatprep.subr.mxu0 0.0
        %1318 = vmatpush1.msra.mxu0 0.0
        %1319 = vmatprep.subr.mxu0 0.0
        %1320 = vmatpush1.msra.mxu0 0.0
        %1321 = vmatprep.subr.mxu0 0.0
        %1322 = vmatpush1.msra.mxu0 0.0
        %1323 = vmatprep.subr.mxu0 0.0
        %1324 = vmatpush1.msra.mxu0 0.0
        %1325 = vmatprep.subr.mxu0 0.0
        %1326 = vmatpush1.msra.mxu0 0.0
        %1327 = vmatprep.subr.mxu0 0.0
        %1328 = vmatpush1.msra.mxu0 0.0
        %1329 = vmatprep.subr.mxu0 0.0
        %1330 = vmatpush1.msra.mxu0 0.0
        %1331 = vmatprep.subr.mxu0 0.0
        %1332 = vmatpush1.msra.mxu0 0.0
        %1333 = vmatprep.subr.mxu0 0.0
        %1334 = vmatpush1.msra.mxu0 0.0
        %1335 = vmatprep.subr.mxu0 0.0
        %1336 = vmatpush1.msra.mxu0 0.0
        %1337 = vmatprep.subr.mxu0 0.0
        %1338 = vmatpush1.msra.mxu0 0.0
        %1339 = vmatprep.subr.mxu0 0.0
        %1340 = vmatpush1.msra.mxu0 0.0
        %1341 = vmatprep.subr.mxu0 0.0
        %1342 = vmatpush1.msra.mxu0 0.0
        %1343 = vmatprep.subr.mxu0 0.0
        %1344 = vmatpush1.msra.mxu0 0.0
        %1345 = vmatprep.subr.mxu0 0.0
        %1346 = vmatpush1.msra.mxu0 0.0
        %1347 = vmatprep.subr.mxu0 0.0
        %1348 = vmatpush1.msra.mxu0 0.0
        %1349 = vmatprep.mubr.f32.mxu0 0.0
        %1350 = vmatmul.mubr.f32.gmra.mrb[0].mxu0 %v609
        %v1351 = vpop.f32.mrb[0].mxu0
        %v1352 = vadd.f32 0.0, %v1351
        %v1353 = vpop.f32.mrb[0].mxu0
        %1354 = vmatprep.mubr.f32.mxu0 0.0
        %1355 = vmatmul.mubr.f32.gmra.mrb[0].mxu0 %v610
        %v1356 = vpop.f32.mrb[0].mxu0
        %v1357 = vadd.f32 0.0, %v1356
        %v1358 = vpop.f32.mrb[0].mxu0
        %1359 = vmatprep.mubr.f32.mxu0 0.0
        %1360 = vmatmul.mubr.f32.gmra.mrb[0].mxu0 %v611
        %v1361 = vpop.f32.mrb[0].mxu0
        %v1362 = vpop.f32.mrb[0].mxu0
        %1363 = vmatprep.mubr.f32.mxu0 0.0
        %1364 = vmatmul.mubr.f32.gmra.mrb[0].mxu0 %v612
        %v1365 = vpop.f32.mrb[0].mxu0
        %v1366 = vadd.f32 0.0, %v1365
        %v1367 = vpop.f32.mrb[0].mxu0
        %1368 = vmatprep.mubr.f32.mxu0 0.0
        %1369 = vmatmul.mubr.f32.gmra.mrb[0].mxu0 %v613
        %v1370 = vpop.f32.mrb[0].mxu0
        %v1371 = vadd.f32 0.0, %v1370
        %v1372 = vpop.f32.mrb[0].mxu0
        %1373 = vmatprep.mubr.f32.mxu0 0.0
        %1374 = vmatmul.mubr.f32.gmra.mrb[0].mxu0 %v614
        %v1375 = vpop.f32.mrb[0].mxu0
        %v1376 = vpop.f32.mrb[0].mxu0
        %1377 = vmatprep.mubr.f32.mxu0 0.0
        %1378 = vmatmul.mubr.f32.gmra.mrb[0].mxu0 %v615
        %v1379 = vpop.f32.mrb[0].mxu0
        %v1380 = vadd.f32 0.0, %v1379
        %v1381 = vpop.f32.mrb[0].mxu0
        %1382 = vmatprep.mubr.f32.mxu0 0.0
        %1383 = vmatmul.mubr.f32.gmra.mrb[0].mxu0 %v616
        %v1384 = vpop.f32.mrb[0].mxu0
        %v1385 = vadd.f32 0.0, %v1384
        %v1386 = vpop.f32.mrb[0].mxu0
        %1387 = vmatprep.mubr.f32.mxu0 0.0
        %1388 = vmatmul.mubr.f32.gmra.mrb[0].mxu0 %v617
        %v1389 = vpop.f32.mrb[0].mxu0
        %v1390 = vpop.f32.mrb[0].mxu0
        %1391 = vmatprep.mubr.f32.mxu0 0.0
        %1392 = vmatmul.mubr.f32.gmra.mrb[0].mxu0 %v618
        %v1393 = vpop.f32.mrb[0].mxu0
        %v1394 = vadd.f32 0.0, %v1393
        %v1395 = vpop.f32.mrb[0].mxu0
        %1396 = vmatprep.mubr.f32.mxu0 0.0
        %1397 = vmatmul.mubr.f32.gmra.mrb[0].mxu0 %v619
        %v1398 = vpop.f32.mrb[0].mxu0
        %v1399 = vadd.f32 0.0, %v1398
        %v1400 = vpop.f32.mrb[0].mxu0
        %1401 = vmatprep.mubr.f32.mxu0 0.0
        %1402 = vmatmul.mubr.f32.gmra.mrb[0].mxu0 %v620
        %v1403 = vpop.f32.mrb[0].mxu0
        %v1404 = vpop.f32.mrb[0].mxu0
        %1405 = vmatprep.mubr.f32.mxu0 0.0
        %1406 = vmatmul.mubr.f32.gmra.mrb[0].mxu0 %v621
        %v1407 = vpop.f32.mrb[0].mxu0
        %v1408 = vadd.f32 0.0, %v1407
        %v1409 = vpop.f32.mrb[0].mxu0
        %1410 = vmatprep.mubr.f32.mxu0 0.0
        %1411 = vmatmul.mubr.f32.gmra.mrb[0].mxu0 %v622
        %v1412 = vpop.f32.mrb[0].mxu0
        %v1413 = vadd.f32 0.0, %v1412
        %v1414 = vpop.f32.mrb[0].mxu0
        %1415 = vmatprep.mubr.f32.mxu0 0.0
        %1416 = vmatmul.mubr.f32.gmra.mrb[0].mxu0 %v623
        %v1417 = vpop.f32.mrb[0].mxu0
        %v1418 = vpop.f32.mrb[0].mxu0
        %1419 = vmatprep.mubr.f32.mxu0 0.0
        %1420 = vmatmul.mubr.f32.gmra.mrb[0].mxu0 %v624
        %v1421 = vpop.f32.mrb[0].mxu0
        %v1422 = vadd.f32 0.0, %v1421
        %v1423 = vpop.f32.mrb[0].mxu0
        %1424 = vmatprep.mubr.f32.mxu0 0.0
        %1425 = vmatmul.mubr.f32.gmra.mrb[0].mxu0 %v625
        %v1426 = vpop.f32.mrb[0].mxu0
        %v1427 = vadd.f32 0.0, %v1426
        %v1428 = vpop.f32.mrb[0].mxu0
        %1429 = vmatprep.mubr.f32.mxu0 0.0
        %1430 = vmatmul.mubr.f32.gmra.mrb[0].mxu0 %v626
        %v1431 = vpop.f32.mrb[0].mxu0
        %v1432 = vpop.f32.mrb[0].mxu0
        %1433 = vmatprep.mubr.f32.mxu0 0.0
        %1434 = vmatmul.mubr.f32.gmra.mrb[0].mxu0 %v627
        %v1435 = vpop.f32.mrb[0].mxu0
        %v1436 = vadd.f32 0.0, %v1435
        %v1437 = vpop.f32.mrb[0].mxu0
        %1438 = vmatprep.mubr.f32.mxu0 0.0
        %1439 = vmatmul.mubr.f32.gmra.mrb[0].mxu0 %v628
        %v1440 = vpop.f32.mrb[0].mxu0
        %v1441 = vadd.f32 0.0, %v1440
        %v1442 = vpop.f32.mrb[0].mxu0
        %1443 = vmatprep.mubr.f32.mxu0 0.0
        %1444 = vmatmul.mubr.f32.gmra.mrb[0].mxu0 %v629
        %v1445 = vpop.f32.mrb[0].mxu0
        %v1446 = vpop.f32.mrb[0].mxu0
        %1447 = vmatprep.mubr.f32.mxu0 0.0
        %1448 = vmatmul.mubr.f32.gmra.mrb[0].mxu0 %v630
        %v1449 = vpop.f32.mrb[0].mxu0
        %v1450 = vadd.f32 0.0, %v1449
        %v1451 = vpop.f32.mrb[0].mxu0
        %1452 = vmatprep.mubr.f32.mxu0 0.0
        %1453 = vmatmul.mubr.f32.gmra.mrb[0].mxu0 %v631
        %v1454 = vpop.f32.mrb[0].mxu0
        %v1455 = vadd.f32 0.0, %v1454
        %v1456 = vpop.f32.mrb[0].mxu0
        %1457 = vmatprep.mubr.f32.mxu0 0.0
        %1458 = vmatmul.mubr.f32.gmra.mrb[0].mxu0 %v632
        %v1459 = vpop.f32.mrb[0].mxu0
        %v1460 = vpop.f32.mrb[0].mxu0
        %1461 = vmatprep.mubr.f32.mxu0 0.0
        %1462 = vmatmul.mubr.f32.gmra.mrb[0].mxu0 %v633
        %v1463 = vpop.f32.mrb[0].mxu0
        %v1464 = vadd.f32 0.0, %v1463
        %v1465 = vpop.f32.mrb[0].mxu0
        %1466 = vmatprep.mubr.f32.mxu0 0.0
        %1467 = vmatmul.mubr.f32.gmra.mrb[0].mxu0 %v634
        %v1468 = vpop.f32.mrb[0].mxu0
        %v1469 = vadd.f32 0.0, %v1468
        %v1470 = vpop.f32.mrb[0].mxu0
        %1471 = vmatprep.mubr.f32.mxu0 0.0
        %1472 = vmatmul.mubr.f32.gmra.mrb[0].mxu0 %v635
        %v1473 = vpop.f32.mrb[0].mxu0
        %v1474 = vpop.f32.mrb[0].mxu0
        %1475 = vmatprep.mubr.f32.mxu0 0.0
        %1476 = vmatmul.mubr.f32.gmra.mrb[0].mxu0 %v636
        %v1477 = vpop.f32.mrb[0].mxu0
        %v1478 = vadd.f32 0.0, %v1477
        %v1479 = vpop.f32.mrb[0].mxu0
        %1480 = vmatprep.mubr.f32.mxu0 0.0
        %1481 = vmatmul.mubr.f32.gmra.mrb[0].mxu0 %v637
        %v1482 = vpop.f32.mrb[0].mxu0
        %v1483 = vadd.f32 0.0, %v1482
        %v1484 = vpop.f32.mrb[0].mxu0
        %1485 = vmatprep.mubr.f32.mxu0 0.0
        %1486 = vmatmul.mubr.f32.gmra.mrb[0].mxu0 %v638
        %v1487 = vpop.f32.mrb[0].mxu0
        %v1488 = vpop.f32.mrb[0].mxu0
        %1489 = vmatprep.mubr.f32.mxu0 0.0
        %1490 = vmatmul.mubr.f32.gmra.mrb[0].mxu0 %v639
        %v1491 = vpop.f32.mrb[0].mxu0
        %v1492 = vadd.f32 0.0, %v1491
        %v1493 = vpop.f32.mrb[0].mxu0
        %1494 = vmatprep.mubr.f32.mxu0 0.0
        %1495 = vmatmul.mubr.f32.gmra.mrb[0].mxu0 %v640
        %v1496 = vpop.f32.mrb[0].mxu0
        %v1497 = vadd.f32 0.0, %v1496
        %v1498 = vpop.f32.mrb[0].mxu0
        %1499 = vmatprep.mubr.f32.mxu0 0.0
        %1500 = vmatmul.mubr.f32.gmra.mrb[0].mxu0 %v641
        %v1501 = vpop.f32.mrb[0].mxu0
        %v1502 = vpop.f32.mrb[0].mxu0
        %1503 = vmatprep.mubr.f32.mxu0 0.0
        %1504 = vmatmul.mubr.f32.gmra.mrb[0].mxu0 %v642
        %v1505 = vpop.f32.mrb[0].mxu0
        %v1506 = vadd.f32 0.0, %v1505
        %v1507 = vpop.f32.mrb[0].mxu0
        %1508 = vmatprep.mubr.f32.mxu0 0.0
        %1509 = vmatmul.mubr.f32.gmra.mrb[0].mxu0 %v643
        %v1510 = vpop.f32.mrb[0].mxu0
        %v1511 = vadd.f32 0.0, %v1510
        %v1512 = vpop.f32.mrb[0].mxu0
        %1513 = vmatprep.mubr.f32.mxu0 0.0
        %1514 = vmatmul.mubr.f32.gmra.mrb[0].mxu0 %v644
        %v1515 = vpop.f32.mrb[0].mxu0
        %v1516 = vpop.f32.mrb[0].mxu0
        %1517 = vmatprep.mubr.f32.mxu0 0.0
        %1518 = vmatmul.mubr.f32.gmra.mrb[0].mxu0 %v645
        %v1519 = vpop.f32.mrb[0].mxu0
        %v1520 = vadd.f32 0.0, %v1519
        %v1521 = vpop.f32.mrb[0].mxu0
        %1522 = vmatprep.mubr.f32.mxu0 0.0
        %1523 = vmatmul.mubr.f32.gmra.mrb[0].mxu0 %v646
        %v1524 = vpop.f32.mrb[0].mxu0
        %v1525 = vadd.f32 0.0, %v1524
        %v1526 = vpop.f32.mrb[0].mxu0
        %1527 = vmatprep.mubr.f32.mxu0 0.0
        %1528 = vmatmul.mubr.f32.gmra.mrb[0].mxu0 %v647
        %v1529 = vpop.f32.mrb[0].mxu0
        %v1530 = vpop.f32.mrb[0].mxu0
        %1531 = vmatprep.mubr.f32.mxu0 0.0
        %1532 = vmatmul.mubr.f32.gmra.mrb[0].mxu0 %v648
        %v1533 = vpop.f32.mrb[0].mxu0
        %v1534 = vadd.f32 0.0, %v1533
        %v1535 = vpop.f32.mrb[0].mxu0
        %1536 = vmatprep.mubr.f32.mxu0 0.0
        %1537 = vmatmul.mubr.f32.gmra.mrb[0].mxu0 %v649
        %v1538 = vpop.f32.mrb[0].mxu0
        %v1539 = vadd.f32 0.0, %v1538
        %v1540 = vpop.f32.mrb[0].mxu0
        %1541 = vmatprep.mubr.f32.mxu0 0.0
        %1542 = vmatmul.mubr.f32.gmra.mrb[0].mxu0 %v650
        %v1543 = vpop.f32.mrb[0].mxu0
        %v1544 = vpop.f32.mrb[0].mxu0
        %1545 = vmatprep.mubr.f32.mxu0 0.0
        %1546 = vmatmul.mubr.f32.gmra.mrb[0].mxu0 %v651
        %v1547 = vpop.f32.mrb[0].mxu0
        %v1548 = vadd.f32 0.0, %v1547
        %v1549 = vpop.f32.mrb[0].mxu0
        %1550 = vmatprep.mubr.f32.mxu0 0.0
        %1551 = vmatmul.mubr.f32.gmra.mrb[0].mxu0 %v652
        %v1552 = vpop.f32.mrb[0].mxu0
        %v1553 = vadd.f32 0.0, %v1552
        %v1554 = vpop.f32.mrb[0].mxu0
        %1555 = vmatprep.mubr.f32.mxu0 0.0
        %1556 = vmatmul.mubr.f32.gmra.mrb[0].mxu0 %v653
        %v1557 = vpop.f32.mrb[0].mxu0
        %v1558 = vpop.f32.mrb[0].mxu0
        %1559 = vmatprep.mubr.f32.mxu0 0.0
        %1560 = vmatmul.mubr.f32.gmra.mrb[0].mxu0 %v654
        %v1561 = vpop.f32.mrb[0].mxu0
        %v1562 = vadd.f32 0.0, %v1561
        %v1563 = vpop.f32.mrb[0].mxu0
        %1564 = vmatprep.mubr.f32.mxu0 0.0
        %1565 = vmatmul.mubr.f32.gmra.mrb[0].mxu0 %v655
        %v1566 = vpop.f32.mrb[0].mxu0
        %v1567 = vadd.f32 0.0, %v1566
        %v1568 = vpop.f32.mrb[0].mxu0
        %1569 = vmatprep.mubr.f32.mxu0 0.0
        %1570 = vmatmul.mubr.f32.gmra.mrb[0].mxu0 %v656
        %v1571 = vpop.f32.mrb[0].mxu0
        %v1572 = vpop.f32.mrb[0].mxu0
        %1573 = vdwg.mxu0
        %v1574 = vadd.f32 %v1046, %v1352
        %v1575 = vadd.f32 %v1051, %v1357
        %v1576 = vadd.f32 %v1060, %v1366
        %v1577 = vadd.f32 %v1065, %v1371
        %v1578 = vadd.f32 %v1074, %v1380
        %v1579 = vadd.f32 %v1079, %v1385
        %v1580 = vadd.f32 %v1088, %v1394
        %v1581 = vadd.f32 %v1093, %v1399
        %v1582 = vadd.f32 %v1102, %v1408
        %v1583 = vadd.f32 %v1107, %v1413
        %v1584 = vadd.f32 %v1116, %v1422
        %v1585 = vadd.f32 %v1121, %v1427
        %v1586 = vadd.f32 %v1130, %v1436
        %v1587 = vadd.f32 %v1135, %v1441
        %v1588 = vadd.f32 %v1144, %v1450
        %v1589 = vadd.f32 %v1149, %v1455
        %v1590 = vadd.f32 %v1158, %v1464
        %v1591 = vadd.f32 %v1163, %v1469
        %v1592 = vadd.f32 %v1172, %v1478
        %v1593 = vadd.f32 %v1177, %v1483
        %v1594 = vadd.f32 %v1186, %v1492
        %v1595 = vadd.f32 %v1191, %v1497
        %v1596 = vadd.f32 %v1200, %v1506
        %v1597 = vadd.f32 %v1205, %v1511
        %v1598 = vadd.f32 %v1214, %v1520
        %v1599 = vadd.f32 %v1219, %v1525
        %v1600 = vadd.f32 %v1228, %v1534
        %v1601 = vadd.f32 %v1233, %v1539
        %v1602 = vadd.f32 %v1242, %v1548
        %v1603 = vadd.f32 %v1247, %v1553
        %v1604 = vadd.f32 %v1256, %v1562
        %v1605 = vadd.f32 %v1261, %v1567
        %v1606 = vld [vmem:[#allocation2 + $0x1] sm:$0xff]
        %v1607 = vld [vmem:[#allocation2 + $0x9] sm:$0xff]
        %v1608 = vld [vmem:[#allocation2 + $0x11] sm:$0xff]
        %v1609 = vld [vmem:[#allocation2 + $0x19] sm:$0xff]
        %v1610 = vld [vmem:[#allocation2 + $0x21] sm:$0xff]
        %v1611 = vld [vmem:[#allocation2 + $0x29] sm:$0xff]
        %v1612 = vld [vmem:[#allocation2 + $0x31] sm:$0xff]
        %v1613 = vld [vmem:[#allocation2 + $0x39] sm:$0xff]
        %v1614 = vld [vmem:[#allocation2 + $0x41] sm:$0xff]
        %v1615 = vld [vmem:[#allocation2 + $0x49] sm:$0xff]
        %v1616 = vld [vmem:[#allocation2 + $0x51] sm:$0xff]
        %v1617 = vld [vmem:[#allocation2 + $0x59] sm:$0xff]
        %v1618 = vld [vmem:[#allocation2 + $0x61] sm:$0xff]
        %v1619 = vld [vmem:[#allocation2 + $0x69] sm:$0xff]
        %v1620 = vld [vmem:[#allocation2 + $0x71] sm:$0xff]
        %v1621 = vld [vmem:[#allocation2 + $0x79] sm:$0xff]
        %v1622 = vld [vmem:[#allocation2 + $0x81] sm:$0xff]
        %v1623 = vld [vmem:[#allocation2 + $0x89] sm:$0xff]
        %v1624 = vld [vmem:[#allocation2 + $0x91] sm:$0xff]
        %v1625 = vld [vmem:[#allocation2 + $0x99] sm:$0xff]
        %v1626 = vld [vmem:[#allocation2 + $0xa1] sm:$0xff]
        %v1627 = vld [vmem:[#allocation2 + $0xa9] sm:$0xff]
        %v1628 = vld [vmem:[#allocation2 + $0xb1] sm:$0xff]
        %v1629 = vld [vmem:[#allocation2 + $0xb9] sm:$0xff]
        %v1630 = vld [vmem:[#allocation2 + $0xc1] sm:$0xff]
        %v1631 = vld [vmem:[#allocation2 + $0xc9] sm:$0xff]
        %v1632 = vld [vmem:[#allocation2 + $0xd1] sm:$0xff]
        %v1633 = vld [vmem:[#allocation2 + $0xd9] sm:$0xff]
        %v1634 = vld [vmem:[#allocation2 + $0xe1] sm:$0xff]
        %v1635 = vld [vmem:[#allocation2 + $0xe9] sm:$0xff]
        %v1636 = vld [vmem:[#allocation2 + $0xf1] sm:$0xff]
        %v1637 = vld [vmem:[#allocation2 + $0xf9] sm:$0xff]
        %v1638 = vld [vmem:[#allocation2 + $0x101] sm:$0xff]
        %v1639 = vld [vmem:[#allocation2 + $0x109] sm:$0xff]
        %v1640 = vld [vmem:[#allocation2 + $0x111] sm:$0xff]
        %v1641 = vld [vmem:[#allocation2 + $0x119] sm:$0xff]
        %v1642 = vld [vmem:[#allocation2 + $0x121] sm:$0xff]
        %v1643 = vld [vmem:[#allocation2 + $0x129] sm:$0xff]
        %v1644 = vld [vmem:[#allocation2 + $0x131] sm:$0xff]
        %v1645 = vld [vmem:[#allocation2 + $0x139] sm:$0xff]
        %v1646 = vld [vmem:[#allocation2 + $0x141] sm:$0xff]
        %v1647 = vld [vmem:[#allocation2 + $0x149] sm:$0xff]
        %v1648 = vld [vmem:[#allocation2 + $0x151] sm:$0xff]
        %v1649 = vld [vmem:[#allocation2 + $0x159] sm:$0xff]
        %v1650 = vld [vmem:[#allocation2 + $0x161] sm:$0xff]
        %v1651 = vld [vmem:[#allocation2 + $0x169] sm:$0xff]
        %v1652 = vld [vmem:[#allocation2 + $0x171] sm:$0xff]
        %v1653 = vld [vmem:[#allocation2 + $0x179] sm:$0xff]
        %v1654 = vld [vmem:[#allocation2 + $0x181] sm:$0xff]
        %v1655 = vld [vmem:[#allocation2 + $0x189] sm:$0xff]
        %v1656 = vld [vmem:[#allocation2 + $0x191] sm:$0xff]
        %v1657 = vld [vmem:[#allocation2 + $0x199] sm:$0xff]
        %v1658 = vld [vmem:[#allocation2 + $0x1a1] sm:$0xff]
        %v1659 = vld [vmem:[#allocation2 + $0x1a9] sm:$0xff]
        %s1660 = scalar_lea.vmem [#allocation6], 128
        %v1661 = vld [vmem:[%s1660] sm:$0xff]
        %v1662 = vld [vmem:[%s1660 + $0x8] sm:$0xff]
        %v1663 = vld [vmem:[%s1660 + $0x10] sm:$0xff]
        %v1664 = vld [vmem:[%s1660 + $0x18] sm:$0xff]
        %v1665 = vld [vmem:[%s1660 + $0x20] sm:$0xff]
        %v1666 = vld [vmem:[%s1660 + $0x28] sm:$0xff]
        %v1667 = vld [vmem:[%s1660 + $0x30] sm:$0xff]
        %v1668 = vld [vmem:[%s1660 + $0x38] sm:$0xff]
        %v1669 = vld [vmem:[%s1660 + $0x40] sm:$0xff]
        %v1670 = vld [vmem:[%s1660 + $0x48] sm:$0xff]
        %v1671 = vld [vmem:[%s1660 + $0x50] sm:$0xff]
        %v1672 = vld [vmem:[%s1660 + $0x58] sm:$0xff]
        %v1673 = vld [vmem:[%s1660 + $0x60] sm:$0xff]
        %v1674 = vld [vmem:[%s1660 + $0x68] sm:$0xff]
        %v1675 = vld [vmem:[%s1660 + $0x70] sm:$0xff]
        %v1676 = vld [vmem:[%s1660 + $0x78] sm:$0xff]
        %1677 = vmatprep.subr.mxu0 0.0
        %1678 = vmatpush1.msra.mxu0 %v1661
        %1679 = vmatprep.subr.mxu0 0.0
        %1680 = vmatpush1.msra.mxu0 %v1662
        %1681 = vmatprep.subr.mxu0 0.0
        %1682 = vmatpush1.msra.mxu0 %v1663
        %1683 = vmatprep.subr.mxu0 0.0
        %1684 = vmatpush1.msra.mxu0 %v1664
        %1685 = vmatprep.subr.mxu0 0.0
        %1686 = vmatpush1.msra.mxu0 %v1665
        %1687 = vmatprep.subr.mxu0 0.0
        %1688 = vmatpush1.msra.mxu0 %v1666
        %1689 = vmatprep.subr.mxu0 0.0
        %1690 = vmatpush1.msra.mxu0 %v1667
        %1691 = vmatprep.subr.mxu0 0.0
        %1692 = vmatpush1.msra.mxu0 %v1668
        %1693 = vmatprep.subr.mxu0 0.0
        %1694 = vmatpush1.msra.mxu0 %v1669
        %1695 = vmatprep.subr.mxu0 0.0
        %1696 = vmatpush1.msra.mxu0 %v1670
        %1697 = vmatprep.subr.mxu0 0.0
        %1698 = vmatpush1.msra.mxu0 %v1671
        %1699 = vmatprep.subr.mxu0 0.0
        %1700 = vmatpush1.msra.mxu0 %v1672
        %1701 = vmatprep.subr.mxu0 0.0
        %1702 = vmatpush1.msra.mxu0 %v1673
        %1703 = vmatprep.subr.mxu0 0.0
        %1704 = vmatpush1.msra.mxu0 %v1674
        %1705 = vmatprep.subr.mxu0 0.0
        %1706 = vmatpush1.msra.mxu0 %v1675
        %1707 = vmatprep.subr.mxu0 0.0
        %1708 = vmatpush1.msra.mxu0 %v1676
        %1709 = vmatprep.subr.mxu0 0.0
        %1710 = vmatpush1.msra.mxu0 0.0
        %1711 = vmatprep.subr.mxu0 0.0
        %1712 = vmatpush1.msra.mxu0 0.0
        %1713 = vmatprep.subr.mxu0 0.0
        %1714 = vmatpush1.msra.mxu0 0.0
        %1715 = vmatprep.subr.mxu0 0.0
        %1716 = vmatpush1.msra.mxu0 0.0
        %1717 = vmatprep.subr.mxu0 0.0
        %1718 = vmatpush1.msra.mxu0 0.0
        %1719 = vmatprep.subr.mxu0 0.0
        %1720 = vmatpush1.msra.mxu0 0.0
        %1721 = vmatprep.subr.mxu0 0.0
        %1722 = vmatpush1.msra.mxu0 0.0
        %1723 = vmatprep.subr.mxu0 0.0
        %1724 = vmatpush1.msra.mxu0 0.0
        %1725 = vmatprep.subr.mxu0 0.0
        %1726 = vmatpush1.msra.mxu0 0.0
        %1727 = vmatprep.subr.mxu0 0.0
        %1728 = vmatpush1.msra.mxu0 0.0
        %1729 = vmatprep.subr.mxu0 0.0
        %1730 = vmatpush1.msra.mxu0 0.0
        %1731 = vmatprep.subr.mxu0 0.0
        %1732 = vmatpush1.msra.mxu0 0.0
        %1733 = vmatprep.subr.mxu0 0.0
        %1734 = vmatpush1.msra.mxu0 0.0
        %1735 = vmatprep.subr.mxu0 0.0
        %1736 = vmatpush1.msra.mxu0 0.0
        %1737 = vmatprep.subr.mxu0 0.0
        %1738 = vmatpush1.msra.mxu0 0.0
        %1739 = vmatprep.subr.mxu0 0.0
        %1740 = vmatpush1.msra.mxu0 0.0
        %1741 = vmatprep.mubr.f32.mxu0 0.0
        %1742 = vmatmul.mubr.f32.gmra.mrb[0].mxu0 %v1606
        %v1743 = vpop.f32.mrb[0].mxu0
        %v1744 = vadd.f32 0.0, %v1743
        %v1745 = vpop.f32.mrb[0].mxu0
        %1746 = vmatprep.mubr.f32.mxu0 0.0
        %1747 = vmatmul.mubr.f32.gmra.mrb[0].mxu0 %v1607
        %v1748 = vpop.f32.mrb[0].mxu0
        %v1749 = vadd.f32 0.0, %v1748
        %v1750 = vpop.f32.mrb[0].mxu0
        %1751 = vmatprep.mubr.f32.mxu0 0.0
        %1752 = vmatmul.mubr.f32.gmra.mrb[0].mxu0 %v1608
        %v1753 = vpop.f32.mrb[0].mxu0
        %v1754 = vpop.f32.mrb[0].mxu0
        %1755 = vmatprep.mubr.f32.mxu0 0.0
        %1756 = vmatmul.mubr.f32.gmra.mrb[0].mxu0 %v1609
        %v1757 = vpop.f32.mrb[0].mxu0
        %v1758 = vadd.f32 0.0, %v1757
        %v1759 = vpop.f32.mrb[0].mxu0
        %1760 = vmatprep.mubr.f32.mxu0 0.0
        %1761 = vmatmul.mubr.f32.gmra.mrb[0].mxu0 %v1610
        %v1762 = vpop.f32.mrb[0].mxu0
        %v1763 = vadd.f32 0.0, %v1762
        %v1764 = vpop.f32.mrb[0].mxu0
        %1765 = vmatprep.mubr.f32.mxu0 0.0
        %1766 = vmatmul.mubr.f32.gmra.mrb[0].mxu0 %v1611
        %v1767 = vpop.f32.mrb[0].mxu0
        %v1768 = vpop.f32.mrb[0].mxu0
        %1769 = vmatprep.mubr.f32.mxu0 0.0
        %1770 = vmatmul.mubr.f32.gmra.mrb[0].mxu0 %v1612
        %v1771 = vpop.f32.mrb[0].mxu0
        %v1772 = vadd.f32 0.0, %v1771
        %v1773 = vpop.f32.mrb[0].mxu0
        %1774 = vmatprep.mubr.f32.mxu0 0.0
        %1775 = vmatmul.mubr.f32.gmra.mrb[0].mxu0 %v1613
        %v1776 = vpop.f32.mrb[0].mxu0
        %v1777 = vadd.f32 0.0, %v1776
        %v1778 = vpop.f32.mrb[0].mxu0
        %1779 = vmatprep.mubr.f32.mxu0 0.0
        %1780 = vmatmul.mubr.f32.gmra.mrb[0].mxu0 %v1614
        %v1781 = vpop.f32.mrb[0].mxu0
        %v1782 = vpop.f32.mrb[0].mxu0
        %1783 = vmatprep.mubr.f32.mxu0 0.0
        %1784 = vmatmul.mubr.f32.gmra.mrb[0].mxu0 %v1615
        %v1785 = vpop.f32.mrb[0].mxu0
        %v1786 = vadd.f32 0.0, %v1785
        %v1787 = vpop.f32.mrb[0].mxu0
        %1788 = vmatprep.mubr.f32.mxu0 0.0
        %1789 = vmatmul.mubr.f32.gmra.mrb[0].mxu0 %v1616
        %v1790 = vpop.f32.mrb[0].mxu0
        %v1791 = vadd.f32 0.0, %v1790
        %v1792 = vpop.f32.mrb[0].mxu0
        %1793 = vmatprep.mubr.f32.mxu0 0.0
        %1794 = vmatmul.mubr.f32.gmra.mrb[0].mxu0 %v1617
        %v1795 = vpop.f32.mrb[0].mxu0
        %v1796 = vpop.f32.mrb[0].mxu0
        %1797 = vmatprep.mubr.f32.mxu0 0.0
        %1798 = vmatmul.mubr.f32.gmra.mrb[0].mxu0 %v1618
        %v1799 = vpop.f32.mrb[0].mxu0
        %v1800 = vadd.f32 0.0, %v1799
        %v1801 = vpop.f32.mrb[0].mxu0
        %1802 = vmatprep.mubr.f32.mxu0 0.0
        %1803 = vmatmul.mubr.f32.gmra.mrb[0].mxu0 %v1619
        %v1804 = vpop.f32.mrb[0].mxu0
        %v1805 = vadd.f32 0.0, %v1804
        %v1806 = vpop.f32.mrb[0].mxu0
        %1807 = vmatprep.mubr.f32.mxu0 0.0
        %1808 = vmatmul.mubr.f32.gmra.mrb[0].mxu0 %v1620
        %v1809 = vpop.f32.mrb[0].mxu0
        %v1810 = vpop.f32.mrb[0].mxu0
        %1811 = vmatprep.mubr.f32.mxu0 0.0
        %1812 = vmatmul.mubr.f32.gmra.mrb[0].mxu0 %v1621
        %v1813 = vpop.f32.mrb[0].mxu0
        %v1814 = vadd.f32 0.0, %v1813
        %v1815 = vpop.f32.mrb[0].mxu0
        %1816 = vmatprep.mubr.f32.mxu0 0.0
        %1817 = vmatmul.mubr.f32.gmra.mrb[0].mxu0 %v1622
        %v1818 = vpop.f32.mrb[0].mxu0
        %v1819 = vadd.f32 0.0, %v1818
        %v1820 = vpop.f32.mrb[0].mxu0
        %1821 = vmatprep.mubr.f32.mxu0 0.0
        %1822 = vmatmul.mubr.f32.gmra.mrb[0].mxu0 %v1623
        %v1823 = vpop.f32.mrb[0].mxu0
        %v1824 = vpop.f32.mrb[0].mxu0
        %1825 = vmatprep.mubr.f32.mxu0 0.0
        %1826 = vmatmul.mubr.f32.gmra.mrb[0].mxu0 %v1624
        %v1827 = vpop.f32.mrb[0].mxu0
        %v1828 = vadd.f32 0.0, %v1827
        %v1829 = vpop.f32.mrb[0].mxu0
        %1830 = vmatprep.mubr.f32.mxu0 0.0
        %1831 = vmatmul.mubr.f32.gmra.mrb[0].mxu0 %v1625
        %v1832 = vpop.f32.mrb[0].mxu0
        %v1833 = vadd.f32 0.0, %v1832
        %v1834 = vpop.f32.mrb[0].mxu0
        %1835 = vmatprep.mubr.f32.mxu0 0.0
        %1836 = vmatmul.mubr.f32.gmra.mrb[0].mxu0 %v1626
        %v1837 = vpop.f32.mrb[0].mxu0
        %v1838 = vpop.f32.mrb[0].mxu0
        %1839 = vmatprep.mubr.f32.mxu0 0.0
        %1840 = vmatmul.mubr.f32.gmra.mrb[0].mxu0 %v1627
        %v1841 = vpop.f32.mrb[0].mxu0
        %v1842 = vadd.f32 0.0, %v1841
        %v1843 = vpop.f32.mrb[0].mxu0
        %1844 = vmatprep.mubr.f32.mxu0 0.0
        %1845 = vmatmul.mubr.f32.gmra.mrb[0].mxu0 %v1628
        %v1846 = vpop.f32.mrb[0].mxu0
        %v1847 = vadd.f32 0.0, %v1846
        %v1848 = vpop.f32.mrb[0].mxu0
        %1849 = vmatprep.mubr.f32.mxu0 0.0
        %1850 = vmatmul.mubr.f32.gmra.mrb[0].mxu0 %v1629
        %v1851 = vpop.f32.mrb[0].mxu0
        %v1852 = vpop.f32.mrb[0].mxu0
        %1853 = vmatprep.mubr.f32.mxu0 0.0
        %1854 = vmatmul.mubr.f32.gmra.mrb[0].mxu0 %v1630
        %v1855 = vpop.f32.mrb[0].mxu0
        %v1856 = vadd.f32 0.0, %v1855
        %v1857 = vpop.f32.mrb[0].mxu0
        %1858 = vmatprep.mubr.f32.mxu0 0.0
        %1859 = vmatmul.mubr.f32.gmra.mrb[0].mxu0 %v1631
        %v1860 = vpop.f32.mrb[0].mxu0
        %v1861 = vadd.f32 0.0, %v1860
        %v1862 = vpop.f32.mrb[0].mxu0
        %1863 = vmatprep.mubr.f32.mxu0 0.0
        %1864 = vmatmul.mubr.f32.gmra.mrb[0].mxu0 %v1632
        %v1865 = vpop.f32.mrb[0].mxu0
        %v1866 = vpop.f32.mrb[0].mxu0
        %1867 = vmatprep.mubr.f32.mxu0 0.0
        %1868 = vmatmul.mubr.f32.gmra.mrb[0].mxu0 %v1633
        %v1869 = vpop.f32.mrb[0].mxu0
        %v1870 = vadd.f32 0.0, %v1869
        %v1871 = vpop.f32.mrb[0].mxu0
        %1872 = vmatprep.mubr.f32.mxu0 0.0
        %1873 = vmatmul.mubr.f32.gmra.mrb[0].mxu0 %v1634
        %v1874 = vpop.f32.mrb[0].mxu0
        %v1875 = vadd.f32 0.0, %v1874
        %v1876 = vpop.f32.mrb[0].mxu0
        %1877 = vmatprep.mubr.f32.mxu0 0.0
        %1878 = vmatmul.mubr.f32.gmra.mrb[0].mxu0 %v1635
        %v1879 = vpop.f32.mrb[0].mxu0
        %v1880 = vpop.f32.mrb[0].mxu0
        %1881 = vmatprep.mubr.f32.mxu0 0.0
        %1882 = vmatmul.mubr.f32.gmra.mrb[0].mxu0 %v1636
        %v1883 = vpop.f32.mrb[0].mxu0
        %v1884 = vadd.f32 0.0, %v1883
        %v1885 = vpop.f32.mrb[0].mxu0
        %1886 = vmatprep.mubr.f32.mxu0 0.0
        %1887 = vmatmul.mubr.f32.gmra.mrb[0].mxu0 %v1637
        %v1888 = vpop.f32.mrb[0].mxu0
        %v1889 = vadd.f32 0.0, %v1888
        %v1890 = vpop.f32.mrb[0].mxu0
        %1891 = vmatprep.mubr.f32.mxu0 0.0
        %1892 = vmatmul.mubr.f32.gmra.mrb[0].mxu0 %v1638
        %v1893 = vpop.f32.mrb[0].mxu0
        %v1894 = vpop.f32.mrb[0].mxu0
        %1895 = vmatprep.mubr.f32.mxu0 0.0
        %1896 = vmatmul.mubr.f32.gmra.mrb[0].mxu0 %v1639
        %v1897 = vpop.f32.mrb[0].mxu0
        %v1898 = vadd.f32 0.0, %v1897
        %v1899 = vpop.f32.mrb[0].mxu0
        %1900 = vmatprep.mubr.f32.mxu0 0.0
        %1901 = vmatmul.mubr.f32.gmra.mrb[0].mxu0 %v1640
        %v1902 = vpop.f32.mrb[0].mxu0
        %v1903 = vadd.f32 0.0, %v1902
        %v1904 = vpop.f32.mrb[0].mxu0
        %1905 = vmatprep.mubr.f32.mxu0 0.0
        %1906 = vmatmul.mubr.f32.gmra.mrb[0].mxu0 %v1641
        %v1907 = vpop.f32.mrb[0].mxu0
        %v1908 = vpop.f32.mrb[0].mxu0
        %1909 = vmatprep.mubr.f32.mxu0 0.0
        %1910 = vmatmul.mubr.f32.gmra.mrb[0].mxu0 %v1642
        %v1911 = vpop.f32.mrb[0].mxu0
        %v1912 = vadd.f32 0.0, %v1911
        %v1913 = vpop.f32.mrb[0].mxu0
        %1914 = vmatprep.mubr.f32.mxu0 0.0
        %1915 = vmatmul.mubr.f32.gmra.mrb[0].mxu0 %v1643
        %v1916 = vpop.f32.mrb[0].mxu0
        %v1917 = vadd.f32 0.0, %v1916
        %v1918 = vpop.f32.mrb[0].mxu0
        %1919 = vmatprep.mubr.f32.mxu0 0.0
        %1920 = vmatmul.mubr.f32.gmra.mrb[0].mxu0 %v1644
        %v1921 = vpop.f32.mrb[0].mxu0
        %v1922 = vpop.f32.mrb[0].mxu0
        %1923 = vmatprep.mubr.f32.mxu0 0.0
        %1924 = vmatmul.mubr.f32.gmra.mrb[0].mxu0 %v1645
        %v1925 = vpop.f32.mrb[0].mxu0
        %v1926 = vadd.f32 0.0, %v1925
        %v1927 = vpop.f32.mrb[0].mxu0
        %1928 = vmatprep.mubr.f32.mxu0 0.0
        %1929 = vmatmul.mubr.f32.gmra.mrb[0].mxu0 %v1646
        %v1930 = vpop.f32.mrb[0].mxu0
        %v1931 = vadd.f32 0.0, %v1930
        %v1932 = vpop.f32.mrb[0].mxu0
        %1933 = vmatprep.mubr.f32.mxu0 0.0
        %1934 = vmatmul.mubr.f32.gmra.mrb[0].mxu0 %v1647
        %v1935 = vpop.f32.mrb[0].mxu0
        %v1936 = vpop.f32.mrb[0].mxu0
        %1937 = vmatprep.mubr.f32.mxu0 0.0
        %1938 = vmatmul.mubr.f32.gmra.mrb[0].mxu0 %v1648
        %v1939 = vpop.f32.mrb[0].mxu0
        %v1940 = vadd.f32 0.0, %v1939
        %v1941 = vpop.f32.mrb[0].mxu0
        %1942 = vmatprep.mubr.f32.mxu0 0.0
        %1943 = vmatmul.mubr.f32.gmra.mrb[0].mxu0 %v1649
        %v1944 = vpop.f32.mrb[0].mxu0
        %v1945 = vadd.f32 0.0, %v1944
        %v1946 = vpop.f32.mrb[0].mxu0
        %1947 = vmatprep.mubr.f32.mxu0 0.0
        %1948 = vmatmul.mubr.f32.gmra.mrb[0].mxu0 %v1650
        %v1949 = vpop.f32.mrb[0].mxu0
        %v1950 = vpop.f32.mrb[0].mxu0
        %1951 = vmatprep.mubr.f32.mxu0 0.0
        %1952 = vmatmul.mubr.f32.gmra.mrb[0].mxu0 %v1651
        %v1953 = vpop.f32.mrb[0].mxu0
        %v1954 = vadd.f32 0.0, %v1953
        %v1955 = vpop.f32.mrb[0].mxu0
        %1956 = vmatprep.mubr.f32.mxu0 0.0
        %1957 = vmatmul.mubr.f32.gmra.mrb[0].mxu0 %v1652
        %v1958 = vpop.f32.mrb[0].mxu0
        %v1959 = vadd.f32 0.0, %v1958
        %v1960 = vpop.f32.mrb[0].mxu0
        %1961 = vmatprep.mubr.f32.mxu0 0.0
        %1962 = vmatmul.mubr.f32.gmra.mrb[0].mxu0 %v1653
        %v1963 = vpop.f32.mrb[0].mxu0
        %v1964 = vpop.f32.mrb[0].mxu0
        %1965 = vdwg.mxu0
        %v1966 = vadd.f32 %v1574, %v1744
        %v1967 = vadd.f32 %v1575, %v1749
        %v1968 = vadd.f32 %v1576, %v1758
        %v1969 = vadd.f32 %v1577, %v1763
        %v1970 = vadd.f32 %v1578, %v1772
        %v1971 = vadd.f32 %v1579, %v1777
        %v1972 = vadd.f32 %v1580, %v1786
        %v1973 = vadd.f32 %v1581, %v1791
        %v1974 = vadd.f32 %v1582, %v1800
        %v1975 = vadd.f32 %v1583, %v1805
        %v1976 = vadd.f32 %v1584, %v1814
        %v1977 = vadd.f32 %v1585, %v1819
        %v1978 = vadd.f32 %v1586, %v1828
        %v1979 = vadd.f32 %v1587, %v1833
        %v1980 = vadd.f32 %v1588, %v1842
        %v1981 = vadd.f32 %v1589, %v1847
        %v1982 = vadd.f32 %v1590, %v1856
        %v1983 = vadd.f32 %v1591, %v1861
        %v1984 = vadd.f32 %v1592, %v1870
        %v1985 = vadd.f32 %v1593, %v1875
        %v1986 = vadd.f32 %v1594, %v1884
        %v1987 = vadd.f32 %v1595, %v1889
        %v1988 = vadd.f32 %v1596, %v1898
        %v1989 = vadd.f32 %v1597, %v1903
        %v1990 = vadd.f32 %v1598, %v1912
        %v1991 = vadd.f32 %v1599, %v1917
        %v1992 = vadd.f32 %v1600, %v1926
        %v1993 = vadd.f32 %v1601, %v1931
        %v1994 = vadd.f32 %v1602, %v1940
        %v1995 = vadd.f32 %v1603, %v1945
        %v1996 = vadd.f32 %v1604, %v1954
        %v1997 = vadd.f32 %v1605, %v1959
        %s1998 = scalar_lea.vmem [#allocation6], 512
        %v1999 = vld [vmem:[%s1998] sm:$0xff]
        %v2000 = vld [vmem:[%s1998 + $0x8] sm:$0xff]
        %v2001 = vld [vmem:[%s1998 + $0x10] sm:$0xff]
        %v2002 = vld [vmem:[%s1998 + $0x18] sm:$0xff]
        %v2003 = vld [vmem:[%s1998 + $0x20] sm:$0xff]
        %v2004 = vld [vmem:[%s1998 + $0x28] sm:$0xff]
        %v2005 = vld [vmem:[%s1998 + $0x30] sm:$0xff]
        %v2006 = vld [vmem:[%s1998 + $0x38] sm:$0xff]
        %v2007 = vld [vmem:[%s1998 + $0x40] sm:$0xff]
        %v2008 = vld [vmem:[%s1998 + $0x48] sm:$0xff]
        %v2009 = vld [vmem:[%s1998 + $0x50] sm:$0xff]
        %v2010 = vld [vmem:[%s1998 + $0x58] sm:$0xff]
        %v2011 = vld [vmem:[%s1998 + $0x60] sm:$0xff]
        %v2012 = vld [vmem:[%s1998 + $0x68] sm:$0xff]
        %v2013 = vld [vmem:[%s1998 + $0x70] sm:$0xff]
        %v2014 = vld [vmem:[%s1998 + $0x78] sm:$0xff]
        %2015 = vmatprep.subr.mxu0 0.0
        %2016 = vmatpush1.msra.mxu0 %v1999
        %2017 = vmatprep.subr.mxu0 0.0
        %2018 = vmatpush1.msra.mxu0 %v2000
        %2019 = vmatprep.subr.mxu0 0.0
        %2020 = vmatpush1.msra.mxu0 %v2001
        %2021 = vmatprep.subr.mxu0 0.0
        %2022 = vmatpush1.msra.mxu0 %v2002
        %2023 = vmatprep.subr.mxu0 0.0
        %2024 = vmatpush1.msra.mxu0 %v2003
        %2025 = vmatprep.subr.mxu0 0.0
        %2026 = vmatpush1.msra.mxu0 %v2004
        %2027 = vmatprep.subr.mxu0 0.0
        %2028 = vmatpush1.msra.mxu0 %v2005
        %2029 = vmatprep.subr.mxu0 0.0
        %2030 = vmatpush1.msra.mxu0 %v2006
        %2031 = vmatprep.subr.mxu0 0.0
        %2032 = vmatpush1.msra.mxu0 %v2007
        %2033 = vmatprep.subr.mxu0 0.0
        %2034 = vmatpush1.msra.mxu0 %v2008
        %2035 = vmatprep.subr.mxu0 0.0
        %2036 = vmatpush1.msra.mxu0 %v2009
        %2037 = vmatprep.subr.mxu0 0.0
        %2038 = vmatpush1.msra.mxu0 %v2010
        %2039 = vmatprep.subr.mxu0 0.0
        %2040 = vmatpush1.msra.mxu0 %v2011
        %2041 = vmatprep.subr.mxu0 0.0
        %2042 = vmatpush1.msra.mxu0 %v2012
        %2043 = vmatprep.subr.mxu0 0.0
        %2044 = vmatpush1.msra.mxu0 %v2013
        %2045 = vmatprep.subr.mxu0 0.0
        %2046 = vmatpush1.msra.mxu0 %v2014
        %2047 = vmatprep.subr.mxu0 0.0
        %2048 = vmatpush1.msra.mxu0 0.0
        %2049 = vmatprep.subr.mxu0 0.0
        %2050 = vmatpush1.msra.mxu0 0.0
        %2051 = vmatprep.subr.mxu0 0.0
        %2052 = vmatpush1.msra.mxu0 0.0
        %2053 = vmatprep.subr.mxu0 0.0
        %2054 = vmatpush1.msra.mxu0 0.0
        %2055 = vmatprep.subr.mxu0 0.0
        %2056 = vmatpush1.msra.mxu0 0.0
        %2057 = vmatprep.subr.mxu0 0.0
        %2058 = vmatpush1.msra.mxu0 0.0
        %2059 = vmatprep.subr.mxu0 0.0
        %2060 = vmatpush1.msra.mxu0 0.0
        %2061 = vmatprep.subr.mxu0 0.0
        %2062 = vmatpush1.msra.mxu0 0.0
        %2063 = vmatprep.subr.mxu0 0.0
        %2064 = vmatpush1.msra.mxu0 0.0
        %2065 = vmatprep.subr.mxu0 0.0
        %2066 = vmatpush1.msra.mxu0 0.0
        %2067 = vmatprep.subr.mxu0 0.0
        %2068 = vmatpush1.msra.mxu0 0.0
        %2069 = vmatprep.subr.mxu0 0.0
        %2070 = vmatpush1.msra.mxu0 0.0
        %2071 = vmatprep.subr.mxu0 0.0
        %2072 = vmatpush1.msra.mxu0 0.0
        %2073 = vmatprep.subr.mxu0 0.0
        %2074 = vmatpush1.msra.mxu0 0.0
        %2075 = vmatprep.subr.mxu0 0.0
        %2076 = vmatpush1.msra.mxu0 0.0
        %2077 = vmatprep.subr.mxu0 0.0
        %2078 = vmatpush1.msra.mxu0 0.0
        %2079 = vmatprep.mubr.f32.mxu0 0.0
        %2080 = vmatmul.mubr.f32.gmra.mrb[0].mxu0 %v1609
        %v2081 = vpop.f32.mrb[0].mxu0
        %v2082 = vadd.f32 0.0, %v2081
        %v2083 = vpop.f32.mrb[0].mxu0
        %2084 = vmatprep.mubr.f32.mxu0 0.0
        %2085 = vmatmul.mubr.f32.gmra.mrb[0].mxu0 %v1610
        %v2086 = vpop.f32.mrb[0].mxu0
        %v2087 = vadd.f32 0.0, %v2086
        %v2088 = vpop.f32.mrb[0].mxu0
        %2089 = vmatprep.mubr.f32.mxu0 0.0
        %2090 = vmatmul.mubr.f32.gmra.mrb[0].mxu0 %v1611
        %v2091 = vpop.f32.mrb[0].mxu0
        %v2092 = vpop.f32.mrb[0].mxu0
        %2093 = vmatprep.mubr.f32.mxu0 0.0
        %2094 = vmatmul.mubr.f32.gmra.mrb[0].mxu0 %v1612
        %v2095 = vpop.f32.mrb[0].mxu0
        %v2096 = vadd.f32 0.0, %v2095
        %v2097 = vpop.f32.mrb[0].mxu0
        %2098 = vmatprep.mubr.f32.mxu0 0.0
        %2099 = vmatmul.mubr.f32.gmra.mrb[0].mxu0 %v1613
        %v2100 = vpop.f32.mrb[0].mxu0
        %v2101 = vadd.f32 0.0, %v2100
        %v2102 = vpop.f32.mrb[0].mxu0
        %2103 = vmatprep.mubr.f32.mxu0 0.0
        %2104 = vmatmul.mubr.f32.gmra.mrb[0].mxu0 %v1614
        %v2105 = vpop.f32.mrb[0].mxu0
        %v2106 = vpop.f32.mrb[0].mxu0
        %2107 = vmatprep.mubr.f32.mxu0 0.0
        %2108 = vmatmul.mubr.f32.gmra.mrb[0].mxu0 %v1615
        %v2109 = vpop.f32.mrb[0].mxu0
        %v2110 = vadd.f32 0.0, %v2109
        %v2111 = vpop.f32.mrb[0].mxu0
        %2112 = vmatprep.mubr.f32.mxu0 0.0
        %2113 = vmatmul.mubr.f32.gmra.mrb[0].mxu0 %v1616
        %v2114 = vpop.f32.mrb[0].mxu0
        %v2115 = vadd.f32 0.0, %v2114
        %v2116 = vpop.f32.mrb[0].mxu0
        %2117 = vmatprep.mubr.f32.mxu0 0.0
        %2118 = vmatmul.mubr.f32.gmra.mrb[0].mxu0 %v1617
        %v2119 = vpop.f32.mrb[0].mxu0
        %v2120 = vpop.f32.mrb[0].mxu0
        %2121 = vmatprep.mubr.f32.mxu0 0.0
        %2122 = vmatmul.mubr.f32.gmra.mrb[0].mxu0 %v1618
        %v2123 = vpop.f32.mrb[0].mxu0
        %v2124 = vadd.f32 0.0, %v2123
        %v2125 = vpop.f32.mrb[0].mxu0
        %2126 = vmatprep.mubr.f32.mxu0 0.0
        %2127 = vmatmul.mubr.f32.gmra.mrb[0].mxu0 %v1619
        %v2128 = vpop.f32.mrb[0].mxu0
        %v2129 = vadd.f32 0.0, %v2128
        %v2130 = vpop.f32.mrb[0].mxu0
        %2131 = vmatprep.mubr.f32.mxu0 0.0
        %2132 = vmatmul.mubr.f32.gmra.mrb[0].mxu0 %v1620
        %v2133 = vpop.f32.mrb[0].mxu0
        %v2134 = vpop.f32.mrb[0].mxu0
        %2135 = vmatprep.mubr.f32.mxu0 0.0
        %2136 = vmatmul.mubr.f32.gmra.mrb[0].mxu0 %v1621
        %v2137 = vpop.f32.mrb[0].mxu0
        %v2138 = vadd.f32 0.0, %v2137
        %v2139 = vpop.f32.mrb[0].mxu0
        %2140 = vmatprep.mubr.f32.mxu0 0.0
        %2141 = vmatmul.mubr.f32.gmra.mrb[0].mxu0 %v1622
        %v2142 = vpop.f32.mrb[0].mxu0
        %v2143 = vadd.f32 0.0, %v2142
        %v2144 = vpop.f32.mrb[0].mxu0
        %2145 = vmatprep.mubr.f32.mxu0 0.0
        %2146 = vmatmul.mubr.f32.gmra.mrb[0].mxu0 %v1623
        %v2147 = vpop.f32.mrb[0].mxu0
        %v2148 = vpop.f32.mrb[0].mxu0
        %2149 = vmatprep.mubr.f32.mxu0 0.0
        %2150 = vmatmul.mubr.f32.gmra.mrb[0].mxu0 %v1624
        %v2151 = vpop.f32.mrb[0].mxu0
        %v2152 = vadd.f32 0.0, %v2151
        %v2153 = vpop.f32.mrb[0].mxu0
        %2154 = vmatprep.mubr.f32.mxu0 0.0
        %2155 = vmatmul.mubr.f32.gmra.mrb[0].mxu0 %v1625
        %v2156 = vpop.f32.mrb[0].mxu0
        %v2157 = vadd.f32 0.0, %v2156
        %v2158 = vpop.f32.mrb[0].mxu0
        %2159 = vmatprep.mubr.f32.mxu0 0.0
        %2160 = vmatmul.mubr.f32.gmra.mrb[0].mxu0 %v1626
        %v2161 = vpop.f32.mrb[0].mxu0
        %v2162 = vpop.f32.mrb[0].mxu0
        %2163 = vmatprep.mubr.f32.mxu0 0.0
        %2164 = vmatmul.mubr.f32.gmra.mrb[0].mxu0 %v1627
        %v2165 = vpop.f32.mrb[0].mxu0
        %v2166 = vadd.f32 0.0, %v2165
        %v2167 = vpop.f32.mrb[0].mxu0
        %2168 = vmatprep.mubr.f32.mxu0 0.0
        %2169 = vmatmul.mubr.f32.gmra.mrb[0].mxu0 %v1628
        %v2170 = vpop.f32.mrb[0].mxu0
        %v2171 = vadd.f32 0.0, %v2170
        %v2172 = vpop.f32.mrb[0].mxu0
        %2173 = vmatprep.mubr.f32.mxu0 0.0
        %2174 = vmatmul.mubr.f32.gmra.mrb[0].mxu0 %v1629
        %v2175 = vpop.f32.mrb[0].mxu0
        %v2176 = vpop.f32.mrb[0].mxu0
        %2177 = vmatprep.mubr.f32.mxu0 0.0
        %2178 = vmatmul.mubr.f32.gmra.mrb[0].mxu0 %v1630
        %v2179 = vpop.f32.mrb[0].mxu0
        %v2180 = vadd.f32 0.0, %v2179
        %v2181 = vpop.f32.mrb[0].mxu0
        %2182 = vmatprep.mubr.f32.mxu0 0.0
        %2183 = vmatmul.mubr.f32.gmra.mrb[0].mxu0 %v1631
        %v2184 = vpop.f32.mrb[0].mxu0
        %v2185 = vadd.f32 0.0, %v2184
        %v2186 = vpop.f32.mrb[0].mxu0
        %2187 = vmatprep.mubr.f32.mxu0 0.0
        %2188 = vmatmul.mubr.f32.gmra.mrb[0].mxu0 %v1632
        %v2189 = vpop.f32.mrb[0].mxu0
        %v2190 = vpop.f32.mrb[0].mxu0
        %2191 = vmatprep.mubr.f32.mxu0 0.0
        %2192 = vmatmul.mubr.f32.gmra.mrb[0].mxu0 %v1633
        %v2193 = vpop.f32.mrb[0].mxu0
        %v2194 = vadd.f32 0.0, %v2193
        %v2195 = vpop.f32.mrb[0].mxu0
        %2196 = vmatprep.mubr.f32.mxu0 0.0
        %2197 = vmatmul.mubr.f32.gmra.mrb[0].mxu0 %v1634
        %v2198 = vpop.f32.mrb[0].mxu0
        %v2199 = vadd.f32 0.0, %v2198
        %v2200 = vpop.f32.mrb[0].mxu0
        %2201 = vmatprep.mubr.f32.mxu0 0.0
        %2202 = vmatmul.mubr.f32.gmra.mrb[0].mxu0 %v1635
        %v2203 = vpop.f32.mrb[0].mxu0
        %v2204 = vpop.f32.mrb[0].mxu0
        %2205 = vmatprep.mubr.f32.mxu0 0.0
        %2206 = vmatmul.mubr.f32.gmra.mrb[0].mxu0 %v1636
        %v2207 = vpop.f32.mrb[0].mxu0
        %v2208 = vadd.f32 0.0, %v2207
        %v2209 = vpop.f32.mrb[0].mxu0
        %2210 = vmatprep.mubr.f32.mxu0 0.0
        %2211 = vmatmul.mubr.f32.gmra.mrb[0].mxu0 %v1637
        %v2212 = vpop.f32.mrb[0].mxu0
        %v2213 = vadd.f32 0.0, %v2212
        %v2214 = vpop.f32.mrb[0].mxu0
        %2215 = vmatprep.mubr.f32.mxu0 0.0
        %2216 = vmatmul.mubr.f32.gmra.mrb[0].mxu0 %v1638
        %v2217 = vpop.f32.mrb[0].mxu0
        %v2218 = vpop.f32.mrb[0].mxu0
        %2219 = vmatprep.mubr.f32.mxu0 0.0
        %2220 = vmatmul.mubr.f32.gmra.mrb[0].mxu0 %v1639
        %v2221 = vpop.f32.mrb[0].mxu0
        %v2222 = vadd.f32 0.0, %v2221
        %v2223 = vpop.f32.mrb[0].mxu0
        %2224 = vmatprep.mubr.f32.mxu0 0.0
        %2225 = vmatmul.mubr.f32.gmra.mrb[0].mxu0 %v1640
        %v2226 = vpop.f32.mrb[0].mxu0
        %v2227 = vadd.f32 0.0, %v2226
        %v2228 = vpop.f32.mrb[0].mxu0
        %2229 = vmatprep.mubr.f32.mxu0 0.0
        %2230 = vmatmul.mubr.f32.gmra.mrb[0].mxu0 %v1641
        %v2231 = vpop.f32.mrb[0].mxu0
        %v2232 = vpop.f32.mrb[0].mxu0
        %2233 = vmatprep.mubr.f32.mxu0 0.0
        %2234 = vmatmul.mubr.f32.gmra.mrb[0].mxu0 %v1642
        %v2235 = vpop.f32.mrb[0].mxu0
        %v2236 = vadd.f32 0.0, %v2235
        %v2237 = vpop.f32.mrb[0].mxu0
        %2238 = vmatprep.mubr.f32.mxu0 0.0
        %2239 = vmatmul.mubr.f32.gmra.mrb[0].mxu0 %v1643
        %v2240 = vpop.f32.mrb[0].mxu0
        %v2241 = vadd.f32 0.0, %v2240
        %v2242 = vpop.f32.mrb[0].mxu0
        %2243 = vmatprep.mubr.f32.mxu0 0.0
        %2244 = vmatmul.mubr.f32.gmra.mrb[0].mxu0 %v1644
        %v2245 = vpop.f32.mrb[0].mxu0
        %v2246 = vpop.f32.mrb[0].mxu0
        %2247 = vmatprep.mubr.f32.mxu0 0.0
        %2248 = vmatmul.mubr.f32.gmra.mrb[0].mxu0 %v1645
        %v2249 = vpop.f32.mrb[0].mxu0
        %v2250 = vadd.f32 0.0, %v2249
        %v2251 = vpop.f32.mrb[0].mxu0
        %2252 = vmatprep.mubr.f32.mxu0 0.0
        %2253 = vmatmul.mubr.f32.gmra.mrb[0].mxu0 %v1646
        %v2254 = vpop.f32.mrb[0].mxu0
        %v2255 = vadd.f32 0.0, %v2254
        %v2256 = vpop.f32.mrb[0].mxu0
        %2257 = vmatprep.mubr.f32.mxu0 0.0
        %2258 = vmatmul.mubr.f32.gmra.mrb[0].mxu0 %v1647
        %v2259 = vpop.f32.mrb[0].mxu0
        %v2260 = vpop.f32.mrb[0].mxu0
        %2261 = vmatprep.mubr.f32.mxu0 0.0
        %2262 = vmatmul.mubr.f32.gmra.mrb[0].mxu0 %v1648
        %v2263 = vpop.f32.mrb[0].mxu0
        %v2264 = vadd.f32 0.0, %v2263
        %v2265 = vpop.f32.mrb[0].mxu0
        %2266 = vmatprep.mubr.f32.mxu0 0.0
        %2267 = vmatmul.mubr.f32.gmra.mrb[0].mxu0 %v1649
        %v2268 = vpop.f32.mrb[0].mxu0
        %v2269 = vadd.f32 0.0, %v2268
        %v2270 = vpop.f32.mrb[0].mxu0
        %2271 = vmatprep.mubr.f32.mxu0 0.0
        %2272 = vmatmul.mubr.f32.gmra.mrb[0].mxu0 %v1650
        %v2273 = vpop.f32.mrb[0].mxu0
        %v2274 = vpop.f32.mrb[0].mxu0
        %2275 = vmatprep.mubr.f32.mxu0 0.0
        %2276 = vmatmul.mubr.f32.gmra.mrb[0].mxu0 %v1651
        %v2277 = vpop.f32.mrb[0].mxu0
        %v2278 = vadd.f32 0.0, %v2277
        %v2279 = vpop.f32.mrb[0].mxu0
        %2280 = vmatprep.mubr.f32.mxu0 0.0
        %2281 = vmatmul.mubr.f32.gmra.mrb[0].mxu0 %v1652
        %v2282 = vpop.f32.mrb[0].mxu0
        %v2283 = vadd.f32 0.0, %v2282
        %v2284 = vpop.f32.mrb[0].mxu0
        %2285 = vmatprep.mubr.f32.mxu0 0.0
        %2286 = vmatmul.mubr.f32.gmra.mrb[0].mxu0 %v1653
        %v2287 = vpop.f32.mrb[0].mxu0
        %v2288 = vpop.f32.mrb[0].mxu0
        %2289 = vmatprep.mubr.f32.mxu0 0.0
        %2290 = vmatmul.mubr.f32.gmra.mrb[0].mxu0 %v1654
        %v2291 = vpop.f32.mrb[0].mxu0
        %v2292 = vadd.f32 0.0, %v2291
        %v2293 = vpop.f32.mrb[0].mxu0
        %2294 = vmatprep.mubr.f32.mxu0 0.0
        %2295 = vmatmul.mubr.f32.gmra.mrb[0].mxu0 %v1655
        %v2296 = vpop.f32.mrb[0].mxu0
        %v2297 = vadd.f32 0.0, %v2296
        %v2298 = vpop.f32.mrb[0].mxu0
        %2299 = vmatprep.mubr.f32.mxu0 0.0
        %2300 = vmatmul.mubr.f32.gmra.mrb[0].mxu0 %v1656
        %v2301 = vpop.f32.mrb[0].mxu0
        %v2302 = vpop.f32.mrb[0].mxu0
        %2303 = vdwg.mxu0
        %v2304 = vadd.f32 %v1966, %v2082
        %v2305 = vadd.f32 %v1967, %v2087
        %v2306 = vadd.f32 %v1968, %v2096
        %v2307 = vadd.f32 %v1969, %v2101
        %v2308 = vadd.f32 %v1970, %v2110
        %v2309 = vadd.f32 %v1971, %v2115
        %v2310 = vadd.f32 %v1972, %v2124
        %v2311 = vadd.f32 %v1973, %v2129
        %v2312 = vadd.f32 %v1974, %v2138
        %v2313 = vadd.f32 %v1975, %v2143
        %v2314 = vadd.f32 %v1976, %v2152
        %v2315 = vadd.f32 %v1977, %v2157
        %v2316 = vadd.f32 %v1978, %v2166
        %v2317 = vadd.f32 %v1979, %v2171
        %v2318 = vadd.f32 %v1980, %v2180
        %v2319 = vadd.f32 %v1981, %v2185
        %v2320 = vadd.f32 %v1982, %v2194
        %v2321 = vadd.f32 %v1983, %v2199
        %v2322 = vadd.f32 %v1984, %v2208
        %v2323 = vadd.f32 %v1985, %v2213
        %v2324 = vadd.f32 %v1986, %v2222
        %v2325 = vadd.f32 %v1987, %v2227
        %v2326 = vadd.f32 %v1988, %v2236
        %v2327 = vadd.f32 %v1989, %v2241
        %v2328 = vadd.f32 %v1990, %v2250
        %v2329 = vadd.f32 %v1991, %v2255
        %v2330 = vadd.f32 %v1992, %v2264
        %v2331 = vadd.f32 %v1993, %v2269
        %v2332 = vadd.f32 %v1994, %v2278
        %v2333 = vadd.f32 %v1995, %v2283
        %v2334 = vadd.f32 %v1996, %v2292
        %v2335 = vadd.f32 %v1997, %v2297
        %s2336 = scalar_lea.vmem [#allocation6], 896
        %v2337 = vld [vmem:[%s2336] sm:$0xff]
        %v2338 = vld [vmem:[%s2336 + $0x8] sm:$0xff]
        %v2339 = vld [vmem:[%s2336 + $0x10] sm:$0xff]
        %v2340 = vld [vmem:[%s2336 + $0x18] sm:$0xff]
        %v2341 = vld [vmem:[%s2336 + $0x20] sm:$0xff]
        %v2342 = vld [vmem:[%s2336 + $0x28] sm:$0xff]
        %v2343 = vld [vmem:[%s2336 + $0x30] sm:$0xff]
        %v2344 = vld [vmem:[%s2336 + $0x38] sm:$0xff]
        %v2345 = vld [vmem:[%s2336 + $0x40] sm:$0xff]
        %v2346 = vld [vmem:[%s2336 + $0x48] sm:$0xff]
        %v2347 = vld [vmem:[%s2336 + $0x50] sm:$0xff]
        %v2348 = vld [vmem:[%s2336 + $0x58] sm:$0xff]
        %v2349 = vld [vmem:[%s2336 + $0x60] sm:$0xff]
        %v2350 = vld [vmem:[%s2336 + $0x68] sm:$0xff]
        %v2351 = vld [vmem:[%s2336 + $0x70] sm:$0xff]
        %v2352 = vld [vmem:[%s2336 + $0x78] sm:$0xff]
        %2353 = vmatprep.subr.mxu0 0.0
        %2354 = vmatpush1.msra.mxu0 %v2337
        %2355 = vmatprep.subr.mxu0 0.0
        %2356 = vmatpush1.msra.mxu0 %v2338
        %2357 = vmatprep.subr.mxu0 0.0
        %2358 = vmatpush1.msra.mxu0 %v2339
        %2359 = vmatprep.subr.mxu0 0.0
        %2360 = vmatpush1.msra.mxu0 %v2340
        %2361 = vmatprep.subr.mxu0 0.0
        %2362 = vmatpush1.msra.mxu0 %v2341
        %2363 = vmatprep.subr.mxu0 0.0
        %2364 = vmatpush1.msra.mxu0 %v2342
        %2365 = vmatprep.subr.mxu0 0.0
        %2366 = vmatpush1.msra.mxu0 %v2343
        %2367 = vmatprep.subr.mxu0 0.0
        %2368 = vmatpush1.msra.mxu0 %v2344
        %2369 = vmatprep.subr.mxu0 0.0
        %2370 = vmatpush1.msra.mxu0 %v2345
        %2371 = vmatprep.subr.mxu0 0.0
        %2372 = vmatpush1.msra.mxu0 %v2346
        %2373 = vmatprep.subr.mxu0 0.0
        %2374 = vmatpush1.msra.mxu0 %v2347
        %2375 = vmatprep.subr.mxu0 0.0
        %2376 = vmatpush1.msra.mxu0 %v2348
        %2377 = vmatprep.subr.mxu0 0.0
        %2378 = vmatpush1.msra.mxu0 %v2349
        %2379 = vmatprep.subr.mxu0 0.0
        %2380 = vmatpush1.msra.mxu0 %v2350
        %2381 = vmatprep.subr.mxu0 0.0
        %2382 = vmatpush1.msra.mxu0 %v2351
        %2383 = vmatprep.subr.mxu0 0.0
        %2384 = vmatpush1.msra.mxu0 %v2352
        %2385 = vmatprep.subr.mxu0 0.0
        %2386 = vmatpush1.msra.mxu0 0.0
        %2387 = vmatprep.subr.mxu0 0.0
        %2388 = vmatpush1.msra.mxu0 0.0
        %2389 = vmatprep.subr.mxu0 0.0
        %2390 = vmatpush1.msra.mxu0 0.0
        %2391 = vmatprep.subr.mxu0 0.0
        %2392 = vmatpush1.msra.mxu0 0.0
        %2393 = vmatprep.subr.mxu0 0.0
        %2394 = vmatpush1.msra.mxu0 0.0
        %2395 = vmatprep.subr.mxu0 0.0
        %2396 = vmatpush1.msra.mxu0 0.0
        %2397 = vmatprep.subr.mxu0 0.0
        %2398 = vmatpush1.msra.mxu0 0.0
        %2399 = vmatprep.subr.mxu0 0.0
        %2400 = vmatpush1.msra.mxu0 0.0
        %2401 = vmatprep.subr.mxu0 0.0
        %2402 = vmatpush1.msra.mxu0 0.0
        %2403 = vmatprep.subr.mxu0 0.0
        %2404 = vmatpush1.msra.mxu0 0.0
        %2405 = vmatprep.subr.mxu0 0.0
        %2406 = vmatpush1.msra.mxu0 0.0
        %2407 = vmatprep.subr.mxu0 0.0
        %2408 = vmatpush1.msra.mxu0 0.0
        %2409 = vmatprep.subr.mxu0 0.0
        %2410 = vmatpush1.msra.mxu0 0.0
        %2411 = vmatprep.subr.mxu0 0.0
        %2412 = vmatpush1.msra.mxu0 0.0
        %2413 = vmatprep.subr.mxu0 0.0
        %2414 = vmatpush1.msra.mxu0 0.0
        %2415 = vmatprep.subr.mxu0 0.0
        %2416 = vmatpush1.msra.mxu0 0.0
        %2417 = vmatprep.mubr.f32.mxu0 0.0
        %2418 = vmatmul.mubr.f32.gmra.mrb[0].mxu0 %v1612
        %v2419 = vpop.f32.mrb[0].mxu0
        %v2420 = vadd.f32 0.0, %v2419
        %v2421 = vpop.f32.mrb[0].mxu0
        %2422 = vmatprep.mubr.f32.mxu0 0.0
        %2423 = vmatmul.mubr.f32.gmra.mrb[0].mxu0 %v1613
        %v2424 = vpop.f32.mrb[0].mxu0
        %v2425 = vadd.f32 0.0, %v2424
        %v2426 = vpop.f32.mrb[0].mxu0
        %2427 = vmatprep.mubr.f32.mxu0 0.0
        %2428 = vmatmul.mubr.f32.gmra.mrb[0].mxu0 %v1614
        %v2429 = vpop.f32.mrb[0].mxu0
        %v2430 = vpop.f32.mrb[0].mxu0
        %2431 = vmatprep.mubr.f32.mxu0 0.0
        %2432 = vmatmul.mubr.f32.gmra.mrb[0].mxu0 %v1615
        %v2433 = vpop.f32.mrb[0].mxu0
        %v2434 = vadd.f32 0.0, %v2433
        %v2435 = vpop.f32.mrb[0].mxu0
        %2436 = vmatprep.mubr.f32.mxu0 0.0
        %2437 = vmatmul.mubr.f32.gmra.mrb[0].mxu0 %v1616
        %v2438 = vpop.f32.mrb[0].mxu0
        %v2439 = vadd.f32 0.0, %v2438
        %v2440 = vpop.f32.mrb[0].mxu0
        %2441 = vmatprep.mubr.f32.mxu0 0.0
        %2442 = vmatmul.mubr.f32.gmra.mrb[0].mxu0 %v1617
        %v2443 = vpop.f32.mrb[0].mxu0
        %v2444 = vpop.f32.mrb[0].mxu0
        %2445 = vmatprep.mubr.f32.mxu0 0.0
        %2446 = vmatmul.mubr.f32.gmra.mrb[0].mxu0 %v1618
        %v2447 = vpop.f32.mrb[0].mxu0
        %v2448 = vadd.f32 0.0, %v2447
        %v2449 = vpop.f32.mrb[0].mxu0
        %2450 = vmatprep.mubr.f32.mxu0 0.0
        %2451 = vmatmul.mubr.f32.gmra.mrb[0].mxu0 %v1619
        %v2452 = vpop.f32.mrb[0].mxu0
        %v2453 = vadd.f32 0.0, %v2452
        %v2454 = vpop.f32.mrb[0].mxu0
        %2455 = vmatprep.mubr.f32.mxu0 0.0
        %2456 = vmatmul.mubr.f32.gmra.mrb[0].mxu0 %v1620
        %v2457 = vpop.f32.mrb[0].mxu0
        %v2458 = vpop.f32.mrb[0].mxu0
        %2459 = vmatprep.mubr.f32.mxu0 0.0
        %2460 = vmatmul.mubr.f32.gmra.mrb[0].mxu0 %v1621
        %v2461 = vpop.f32.mrb[0].mxu0
        %v2462 = vadd.f32 0.0, %v2461
        %v2463 = vpop.f32.mrb[0].mxu0
        %2464 = vmatprep.mubr.f32.mxu0 0.0
        %2465 = vmatmul.mubr.f32.gmra.mrb[0].mxu0 %v1622
        %v2466 = vpop.f32.mrb[0].mxu0
        %v2467 = vadd.f32 0.0, %v2466
        %v2468 = vpop.f32.mrb[0].mxu0
        %2469 = vmatprep.mubr.f32.mxu0 0.0
        %2470 = vmatmul.mubr.f32.gmra.mrb[0].mxu0 %v1623
        %v2471 = vpop.f32.mrb[0].mxu0
        %v2472 = vpop.f32.mrb[0].mxu0
        %2473 = vmatprep.mubr.f32.mxu0 0.0
        %2474 = vmatmul.mubr.f32.gmra.mrb[0].mxu0 %v1624
        %v2475 = vpop.f32.mrb[0].mxu0
        %v2476 = vadd.f32 0.0, %v2475
        %v2477 = vpop.f32.mrb[0].mxu0
        %2478 = vmatprep.mubr.f32.mxu0 0.0
        %2479 = vmatmul.mubr.f32.gmra.mrb[0].mxu0 %v1625
        %v2480 = vpop.f32.mrb[0].mxu0
        %v2481 = vadd.f32 0.0, %v2480
        %v2482 = vpop.f32.mrb[0].mxu0
        %2483 = vmatprep.mubr.f32.mxu0 0.0
        %2484 = vmatmul.mubr.f32.gmra.mrb[0].mxu0 %v1626
        %v2485 = vpop.f32.mrb[0].mxu0
        %v2486 = vpop.f32.mrb[0].mxu0
        %2487 = vmatprep.mubr.f32.mxu0 0.0
        %2488 = vmatmul.mubr.f32.gmra.mrb[0].mxu0 %v1627
        %v2489 = vpop.f32.mrb[0].mxu0
        %v2490 = vadd.f32 0.0, %v2489
        %v2491 = vpop.f32.mrb[0].mxu0
        %2492 = vmatprep.mubr.f32.mxu0 0.0
        %2493 = vmatmul.mubr.f32.gmra.mrb[0].mxu0 %v1628
        %v2494 = vpop.f32.mrb[0].mxu0
        %v2495 = vadd.f32 0.0, %v2494
        %v2496 = vpop.f32.mrb[0].mxu0
        %2497 = vmatprep.mubr.f32.mxu0 0.0
        %2498 = vmatmul.mubr.f32.gmra.mrb[0].mxu0 %v1629
        %v2499 = vpop.f32.mrb[0].mxu0
        %v2500 = vpop.f32.mrb[0].mxu0
        %2501 = vmatprep.mubr.f32.mxu0 0.0
        %2502 = vmatmul.mubr.f32.gmra.mrb[0].mxu0 %v1630
        %v2503 = vpop.f32.mrb[0].mxu0
        %v2504 = vadd.f32 0.0, %v2503
        %v2505 = vpop.f32.mrb[0].mxu0
        %2506 = vmatprep.mubr.f32.mxu0 0.0
        %2507 = vmatmul.mubr.f32.gmra.mrb[0].mxu0 %v1631
        %v2508 = vpop.f32.mrb[0].mxu0
        %v2509 = vadd.f32 0.0, %v2508
        %v2510 = vpop.f32.mrb[0].mxu0
        %2511 = vmatprep.mubr.f32.mxu0 0.0
        %2512 = vmatmul.mubr.f32.gmra.mrb[0].mxu0 %v1632
        %v2513 = vpop.f32.mrb[0].mxu0
        %v2514 = vpop.f32.mrb[0].mxu0
        %2515 = vmatprep.mubr.f32.mxu0 0.0
        %2516 = vmatmul.mubr.f32.gmra.mrb[0].mxu0 %v1633
        %v2517 = vpop.f32.mrb[0].mxu0
        %v2518 = vadd.f32 0.0, %v2517
        %v2519 = vpop.f32.mrb[0].mxu0
        %2520 = vmatprep.mubr.f32.mxu0 0.0
        %2521 = vmatmul.mubr.f32.gmra.mrb[0].mxu0 %v1634
        %v2522 = vpop.f32.mrb[0].mxu0
        %v2523 = vadd.f32 0.0, %v2522
        %v2524 = vpop.f32.mrb[0].mxu0
        %2525 = vmatprep.mubr.f32.mxu0 0.0
        %2526 = vmatmul.mubr.f32.gmra.mrb[0].mxu0 %v1635
        %v2527 = vpop.f32.mrb[0].mxu0
        %v2528 = vpop.f32.mrb[0].mxu0
        %2529 = vmatprep.mubr.f32.mxu0 0.0
        %2530 = vmatmul.mubr.f32.gmra.mrb[0].mxu0 %v1636
        %v2531 = vpop.f32.mrb[0].mxu0
        %v2532 = vadd.f32 0.0, %v2531
        %v2533 = vpop.f32.mrb[0].mxu0
        %2534 = vmatprep.mubr.f32.mxu0 0.0
        %2535 = vmatmul.mubr.f32.gmra.mrb[0].mxu0 %v1637
        %v2536 = vpop.f32.mrb[0].mxu0
        %v2537 = vadd.f32 0.0, %v2536
        %v2538 = vpop.f32.mrb[0].mxu0
        %2539 = vmatprep.mubr.f32.mxu0 0.0
        %2540 = vmatmul.mubr.f32.gmra.mrb[0].mxu0 %v1638
        %v2541 = vpop.f32.mrb[0].mxu0
        %v2542 = vpop.f32.mrb[0].mxu0
        %2543 = vmatprep.mubr.f32.mxu0 0.0
        %2544 = vmatmul.mubr.f32.gmra.mrb[0].mxu0 %v1639
        %v2545 = vpop.f32.mrb[0].mxu0
        %v2546 = vadd.f32 0.0, %v2545
        %v2547 = vpop.f32.mrb[0].mxu0
        %2548 = vmatprep.mubr.f32.mxu0 0.0
        %2549 = vmatmul.mubr.f32.gmra.mrb[0].mxu0 %v1640
        %v2550 = vpop.f32.mrb[0].mxu0
        %v2551 = vadd.f32 0.0, %v2550
        %v2552 = vpop.f32.mrb[0].mxu0
        %2553 = vmatprep.mubr.f32.mxu0 0.0
        %2554 = vmatmul.mubr.f32.gmra.mrb[0].mxu0 %v1641
        %v2555 = vpop.f32.mrb[0].mxu0
        %v2556 = vpop.f32.mrb[0].mxu0
        %2557 = vmatprep.mubr.f32.mxu0 0.0
        %2558 = vmatmul.mubr.f32.gmra.mrb[0].mxu0 %v1642
        %v2559 = vpop.f32.mrb[0].mxu0
        %v2560 = vadd.f32 0.0, %v2559
        %v2561 = vpop.f32.mrb[0].mxu0
        %2562 = vmatprep.mubr.f32.mxu0 0.0
        %2563 = vmatmul.mubr.f32.gmra.mrb[0].mxu0 %v1643
        %v2564 = vpop.f32.mrb[0].mxu0
        %v2565 = vadd.f32 0.0, %v2564
        %v2566 = vpop.f32.mrb[0].mxu0
        %2567 = vmatprep.mubr.f32.mxu0 0.0
        %2568 = vmatmul.mubr.f32.gmra.mrb[0].mxu0 %v1644
        %v2569 = vpop.f32.mrb[0].mxu0
        %v2570 = vpop.f32.mrb[0].mxu0
        %2571 = vmatprep.mubr.f32.mxu0 0.0
        %2572 = vmatmul.mubr.f32.gmra.mrb[0].mxu0 %v1645
        %v2573 = vpop.f32.mrb[0].mxu0
        %v2574 = vadd.f32 0.0, %v2573
        %v2575 = vpop.f32.mrb[0].mxu0
        %2576 = vmatprep.mubr.f32.mxu0 0.0
        %2577 = vmatmul.mubr.f32.gmra.mrb[0].mxu0 %v1646
        %v2578 = vpop.f32.mrb[0].mxu0
        %v2579 = vadd.f32 0.0, %v2578
        %v2580 = vpop.f32.mrb[0].mxu0
        %2581 = vmatprep.mubr.f32.mxu0 0.0
        %2582 = vmatmul.mubr.f32.gmra.mrb[0].mxu0 %v1647
        %v2583 = vpop.f32.mrb[0].mxu0
        %v2584 = vpop.f32.mrb[0].mxu0
        %2585 = vmatprep.mubr.f32.mxu0 0.0
        %2586 = vmatmul.mubr.f32.gmra.mrb[0].mxu0 %v1648
        %v2587 = vpop.f32.mrb[0].mxu0
        %v2588 = vadd.f32 0.0, %v2587
        %v2589 = vpop.f32.mrb[0].mxu0
        %2590 = vmatprep.mubr.f32.mxu0 0.0
        %2591 = vmatmul.mubr.f32.gmra.mrb[0].mxu0 %v1649
        %v2592 = vpop.f32.mrb[0].mxu0
        %v2593 = vadd.f32 0.0, %v2592
        %v2594 = vpop.f32.mrb[0].mxu0
        %2595 = vmatprep.mubr.f32.mxu0 0.0
        %2596 = vmatmul.mubr.f32.gmra.mrb[0].mxu0 %v1650
        %v2597 = vpop.f32.mrb[0].mxu0
        %v2598 = vpop.f32.mrb[0].mxu0
        %2599 = vmatprep.mubr.f32.mxu0 0.0
        %2600 = vmatmul.mubr.f32.gmra.mrb[0].mxu0 %v1651
        %v2601 = vpop.f32.mrb[0].mxu0
        %v2602 = vadd.f32 0.0, %v2601
        %v2603 = vpop.f32.mrb[0].mxu0
        %2604 = vmatprep.mubr.f32.mxu0 0.0
        %2605 = vmatmul.mubr.f32.gmra.mrb[0].mxu0 %v1652
        %v2606 = vpop.f32.mrb[0].mxu0
        %v2607 = vadd.f32 0.0, %v2606
        %v2608 = vpop.f32.mrb[0].mxu0
        %2609 = vmatprep.mubr.f32.mxu0 0.0
        %2610 = vmatmul.mubr.f32.gmra.mrb[0].mxu0 %v1653
        %v2611 = vpop.f32.mrb[0].mxu0
        %v2612 = vpop.f32.mrb[0].mxu0
        %2613 = vmatprep.mubr.f32.mxu0 0.0
        %2614 = vmatmul.mubr.f32.gmra.mrb[0].mxu0 %v1654
        %v2615 = vpop.f32.mrb[0].mxu0
        %v2616 = vadd.f32 0.0, %v2615
        %v2617 = vpop.f32.mrb[0].mxu0
        %2618 = vmatprep.mubr.f32.mxu0 0.0
        %2619 = vmatmul.mubr.f32.gmra.mrb[0].mxu0 %v1655
        %v2620 = vpop.f32.mrb[0].mxu0
        %v2621 = vadd.f32 0.0, %v2620
        %v2622 = vpop.f32.mrb[0].mxu0
        %2623 = vmatprep.mubr.f32.mxu0 0.0
        %2624 = vmatmul.mubr.f32.gmra.mrb[0].mxu0 %v1656
        %v2625 = vpop.f32.mrb[0].mxu0
        %v2626 = vpop.f32.mrb[0].mxu0
        %2627 = vmatprep.mubr.f32.mxu0 0.0
        %2628 = vmatmul.mubr.f32.gmra.mrb[0].mxu0 %v1657
        %v2629 = vpop.f32.mrb[0].mxu0
        %v2630 = vadd.f32 0.0, %v2629
        %v2631 = vpop.f32.mrb[0].mxu0
        %2632 = vmatprep.mubr.f32.mxu0 0.0
        %2633 = vmatmul.mubr.f32.gmra.mrb[0].mxu0 %v1658
        %v2634 = vpop.f32.mrb[0].mxu0
        %v2635 = vadd.f32 0.0, %v2634
        %v2636 = vpop.f32.mrb[0].mxu0
        %2637 = vmatprep.mubr.f32.mxu0 0.0
        %2638 = vmatmul.mubr.f32.gmra.mrb[0].mxu0 %v1659
        %v2639 = vpop.f32.mrb[0].mxu0
        %v2640 = vpop.f32.mrb[0].mxu0
        %2641 = vdwg.mxu0
        %v2642 = vadd.f32 %v2304, %v2420
        %v2643 = vadd.f32 %v2305, %v2425
        %v2644 = vadd.f32 %v2306, %v2434
        %v2645 = vadd.f32 %v2307, %v2439
        %v2646 = vadd.f32 %v2308, %v2448
        %v2647 = vadd.f32 %v2309, %v2453
        %v2648 = vadd.f32 %v2310, %v2462
        %v2649 = vadd.f32 %v2311, %v2467
        %v2650 = vadd.f32 %v2312, %v2476
        %v2651 = vadd.f32 %v2313, %v2481
        %v2652 = vadd.f32 %v2314, %v2490
        %v2653 = vadd.f32 %v2315, %v2495
        %v2654 = vadd.f32 %v2316, %v2504
        %v2655 = vadd.f32 %v2317, %v2509
        %v2656 = vadd.f32 %v2318, %v2518
        %v2657 = vadd.f32 %v2319, %v2523
        %v2658 = vadd.f32 %v2320, %v2532
        %v2659 = vadd.f32 %v2321, %v2537
        %v2660 = vadd.f32 %v2322, %v2546
        %v2661 = vadd.f32 %v2323, %v2551
        %v2662 = vadd.f32 %v2324, %v2560
        %v2663 = vadd.f32 %v2325, %v2565
        %v2664 = vadd.f32 %v2326, %v2574
        %v2665 = vadd.f32 %v2327, %v2579
        %v2666 = vadd.f32 %v2328, %v2588
        %v2667 = vadd.f32 %v2329, %v2593
        %v2668 = vadd.f32 %v2330, %v2602
        %v2669 = vadd.f32 %v2331, %v2607
        %v2670 = vadd.f32 %v2332, %v2616
        %v2671 = vadd.f32 %v2333, %v2621
        %v2672 = vadd.f32 %v2334, %v2630
        %v2673 = vadd.f32 %v2335, %v2635
        %v2674 = vld [vmem:[#allocation2 + $0x2] sm:$0xff]
        %v2675 = vld [vmem:[#allocation2 + $0xa] sm:$0xff]
        %v2676 = vld [vmem:[#allocation2 + $0x12] sm:$0xff]
        %v2677 = vld [vmem:[#allocation2 + $0x1a] sm:$0xff]
        %v2678 = vld [vmem:[#allocation2 + $0x22] sm:$0xff]
        %v2679 = vld [vmem:[#allocation2 + $0x2a] sm:$0xff]
        %v2680 = vld [vmem:[#allocation2 + $0x32] sm:$0xff]
        %v2681 = vld [vmem:[#allocation2 + $0x3a] sm:$0xff]
        %v2682 = vld [vmem:[#allocation2 + $0x42] sm:$0xff]
        %v2683 = vld [vmem:[#allocation2 + $0x4a] sm:$0xff]
        %v2684 = vld [vmem:[#allocation2 + $0x52] sm:$0xff]
        %v2685 = vld [vmem:[#allocation2 + $0x5a] sm:$0xff]
        %v2686 = vld [vmem:[#allocation2 + $0x62] sm:$0xff]
        %v2687 = vld [vmem:[#allocation2 + $0x6a] sm:$0xff]
        %v2688 = vld [vmem:[#allocation2 + $0x72] sm:$0xff]
        %v2689 = vld [vmem:[#allocation2 + $0x7a] sm:$0xff]
        %v2690 = vld [vmem:[#allocation2 + $0x82] sm:$0xff]
        %v2691 = vld [vmem:[#allocation2 + $0x8a] sm:$0xff]
        %v2692 = vld [vmem:[#allocation2 + $0x92] sm:$0xff]
        %v2693 = vld [vmem:[#allocation2 + $0x9a] sm:$0xff]
        %v2694 = vld [vmem:[#allocation2 + $0xa2] sm:$0xff]
        %v2695 = vld [vmem:[#allocation2 + $0xaa] sm:$0xff]
        %v2696 = vld [vmem:[#allocation2 + $0xb2] sm:$0xff]
        %v2697 = vld [vmem:[#allocation2 + $0xba] sm:$0xff]
        %v2698 = vld [vmem:[#allocation2 + $0xc2] sm:$0xff]
        %v2699 = vld [vmem:[#allocation2 + $0xca] sm:$0xff]
        %v2700 = vld [vmem:[#allocation2 + $0xd2] sm:$0xff]
        %v2701 = vld [vmem:[#allocation2 + $0xda] sm:$0xff]
        %v2702 = vld [vmem:[#allocation2 + $0xe2] sm:$0xff]
        %v2703 = vld [vmem:[#allocation2 + $0xea] sm:$0xff]
        %v2704 = vld [vmem:[#allocation2 + $0xf2] sm:$0xff]
        %v2705 = vld [vmem:[#allocation2 + $0xfa] sm:$0xff]
        %v2706 = vld [vmem:[#allocation2 + $0x102] sm:$0xff]
        %v2707 = vld [vmem:[#allocation2 + $0x10a] sm:$0xff]
        %v2708 = vld [vmem:[#allocation2 + $0x112] sm:$0xff]
        %v2709 = vld [vmem:[#allocation2 + $0x11a] sm:$0xff]
        %v2710 = vld [vmem:[#allocation2 + $0x122] sm:$0xff]
        %v2711 = vld [vmem:[#allocation2 + $0x12a] sm:$0xff]
        %v2712 = vld [vmem:[#allocation2 + $0x132] sm:$0xff]
        %v2713 = vld [vmem:[#allocation2 + $0x13a] sm:$0xff]
        %v2714 = vld [vmem:[#allocation2 + $0x142] sm:$0xff]
        %v2715 = vld [vmem:[#allocation2 + $0x14a] sm:$0xff]
        %v2716 = vld [vmem:[#allocation2 + $0x152] sm:$0xff]
        %v2717 = vld [vmem:[#allocation2 + $0x15a] sm:$0xff]
        %v2718 = vld [vmem:[#allocation2 + $0x162] sm:$0xff]
        %v2719 = vld [vmem:[#allocation2 + $0x16a] sm:$0xff]
        %v2720 = vld [vmem:[#allocation2 + $0x172] sm:$0xff]
        %v2721 = vld [vmem:[#allocation2 + $0x17a] sm:$0xff]
        %v2722 = vld [vmem:[#allocation2 + $0x182] sm:$0xff]
        %v2723 = vld [vmem:[#allocation2 + $0x18a] sm:$0xff]
        %v2724 = vld [vmem:[#allocation2 + $0x192] sm:$0xff]
        %v2725 = vld [vmem:[#allocation2 + $0x19a] sm:$0xff]
        %v2726 = vld [vmem:[#allocation2 + $0x1a2] sm:$0xff]
        %v2727 = vld [vmem:[#allocation2 + $0x1aa] sm:$0xff]
        %s2728 = scalar_lea.vmem [#allocation6], 256
        %v2729 = vld [vmem:[%s2728] sm:$0xff]
        %v2730 = vld [vmem:[%s2728 + $0x8] sm:$0xff]
        %v2731 = vld [vmem:[%s2728 + $0x10] sm:$0xff]
        %v2732 = vld [vmem:[%s2728 + $0x18] sm:$0xff]
        %v2733 = vld [vmem:[%s2728 + $0x20] sm:$0xff]
        %v2734 = vld [vmem:[%s2728 + $0x28] sm:$0xff]
        %v2735 = vld [vmem:[%s2728 + $0x30] sm:$0xff]
        %v2736 = vld [vmem:[%s2728 + $0x38] sm:$0xff]
        %v2737 = vld [vmem:[%s2728 + $0x40] sm:$0xff]
        %v2738 = vld [vmem:[%s2728 + $0x48] sm:$0xff]
        %v2739 = vld [vmem:[%s2728 + $0x50] sm:$0xff]
        %v2740 = vld [vmem:[%s2728 + $0x58] sm:$0xff]
        %v2741 = vld [vmem:[%s2728 + $0x60] sm:$0xff]
        %v2742 = vld [vmem:[%s2728 + $0x68] sm:$0xff]
        %v2743 = vld [vmem:[%s2728 + $0x70] sm:$0xff]
        %v2744 = vld [vmem:[%s2728 + $0x78] sm:$0xff]
        %2745 = vmatprep.subr.mxu0 0.0
        %2746 = vmatpush1.msra.mxu0 %v2729
        %2747 = vmatprep.subr.mxu0 0.0
        %2748 = vmatpush1.msra.mxu0 %v2730
        %2749 = vmatprep.subr.mxu0 0.0
        %2750 = vmatpush1.msra.mxu0 %v2731
        %2751 = vmatprep.subr.mxu0 0.0
        %2752 = vmatpush1.msra.mxu0 %v2732
        %2753 = vmatprep.subr.mxu0 0.0
        %2754 = vmatpush1.msra.mxu0 %v2733
        %2755 = vmatprep.subr.mxu0 0.0
        %2756 = vmatpush1.msra.mxu0 %v2734
        %2757 = vmatprep.subr.mxu0 0.0
        %2758 = vmatpush1.msra.mxu0 %v2735
        %2759 = vmatprep.subr.mxu0 0.0
        %2760 = vmatpush1.msra.mxu0 %v2736
        %2761 = vmatprep.subr.mxu0 0.0
        %2762 = vmatpush1.msra.mxu0 %v2737
        %2763 = vmatprep.subr.mxu0 0.0
        %2764 = vmatpush1.msra.mxu0 %v2738
        %2765 = vmatprep.subr.mxu0 0.0
        %2766 = vmatpush1.msra.mxu0 %v2739
        %2767 = vmatprep.subr.mxu0 0.0
        %2768 = vmatpush1.msra.mxu0 %v2740
        %2769 = vmatprep.subr.mxu0 0.0
        %2770 = vmatpush1.msra.mxu0 %v2741
        %2771 = vmatprep.subr.mxu0 0.0
        %2772 = vmatpush1.msra.mxu0 %v2742
        %2773 = vmatprep.subr.mxu0 0.0
        %2774 = vmatpush1.msra.mxu0 %v2743
        %2775 = vmatprep.subr.mxu0 0.0
        %2776 = vmatpush1.msra.mxu0 %v2744
        %2777 = vmatprep.subr.mxu0 0.0
        %2778 = vmatpush1.msra.mxu0 0.0
        %2779 = vmatprep.subr.mxu0 0.0
        %2780 = vmatpush1.msra.mxu0 0.0
        %2781 = vmatprep.subr.mxu0 0.0
        %2782 = vmatpush1.msra.mxu0 0.0
        %2783 = vmatprep.subr.mxu0 0.0
        %2784 = vmatpush1.msra.mxu0 0.0
        %2785 = vmatprep.subr.mxu0 0.0
        %2786 = vmatpush1.msra.mxu0 0.0
        %2787 = vmatprep.subr.mxu0 0.0
        %2788 = vmatpush1.msra.mxu0 0.0
        %2789 = vmatprep.subr.mxu0 0.0
        %2790 = vmatpush1.msra.mxu0 0.0
        %2791 = vmatprep.subr.mxu0 0.0
        %2792 = vmatpush1.msra.mxu0 0.0
        %2793 = vmatprep.subr.mxu0 0.0
        %2794 = vmatpush1.msra.mxu0 0.0
        %2795 = vmatprep.subr.mxu0 0.0
        %2796 = vmatpush1.msra.mxu0 0.0
        %2797 = vmatprep.subr.mxu0 0.0
        %2798 = vmatpush1.msra.mxu0 0.0
        %2799 = vmatprep.subr.mxu0 0.0
        %2800 = vmatpush1.msra.mxu0 0.0
        %2801 = vmatprep.subr.mxu0 0.0
        %2802 = vmatpush1.msra.mxu0 0.0
        %2803 = vmatprep.subr.mxu0 0.0
        %2804 = vmatpush1.msra.mxu0 0.0
        %2805 = vmatprep.subr.mxu0 0.0
        %2806 = vmatpush1.msra.mxu0 0.0
        %2807 = vmatprep.subr.mxu0 0.0
        %2808 = vmatpush1.msra.mxu0 0.0
        %2809 = vmatprep.mubr.f32.mxu0 0.0
        %2810 = vmatmul.mubr.f32.gmra.mrb[0].mxu0 %v2674
        %v2811 = vpop.f32.mrb[0].mxu0
        %v2812 = vadd.f32 0.0, %v2811
        %v2813 = vpop.f32.mrb[0].mxu0
        %2814 = vmatprep.mubr.f32.mxu0 0.0
        %2815 = vmatmul.mubr.f32.gmra.mrb[0].mxu0 %v2675
        %v2816 = vpop.f32.mrb[0].mxu0
        %v2817 = vadd.f32 0.0, %v2816
        %v2818 = vpop.f32.mrb[0].mxu0
        %2819 = vmatprep.mubr.f32.mxu0 0.0
        %2820 = vmatmul.mubr.f32.gmra.mrb[0].mxu0 %v2676
        %v2821 = vpop.f32.mrb[0].mxu0
        %v2822 = vpop.f32.mrb[0].mxu0
        %2823 = vmatprep.mubr.f32.mxu0 0.0
        %2824 = vmatmul.mubr.f32.gmra.mrb[0].mxu0 %v2677
        %v2825 = vpop.f32.mrb[0].mxu0
        %v2826 = vadd.f32 0.0, %v2825
        %v2827 = vpop.f32.mrb[0].mxu0
        %2828 = vmatprep.mubr.f32.mxu0 0.0
        %2829 = vmatmul.mubr.f32.gmra.mrb[0].mxu0 %v2678
        %v2830 = vpop.f32.mrb[0].mxu0
        %v2831 = vadd.f32 0.0, %v2830
        %v2832 = vpop.f32.mrb[0].mxu0
        %2833 = vmatprep.mubr.f32.mxu0 0.0
        %2834 = vmatmul.mubr.f32.gmra.mrb[0].mxu0 %v2679
        %v2835 = vpop.f32.mrb[0].mxu0
        %v2836 = vpop.f32.mrb[0].mxu0
        %2837 = vmatprep.mubr.f32.mxu0 0.0
        %2838 = vmatmul.mubr.f32.gmra.mrb[0].mxu0 %v2680
        %v2839 = vpop.f32.mrb[0].mxu0
        %v2840 = vadd.f32 0.0, %v2839
        %v2841 = vpop.f32.mrb[0].mxu0
        %2842 = vmatprep.mubr.f32.mxu0 0.0
        %2843 = vmatmul.mubr.f32.gmra.mrb[0].mxu0 %v2681
        %v2844 = vpop.f32.mrb[0].mxu0
        %v2845 = vadd.f32 0.0, %v2844
        %v2846 = vpop.f32.mrb[0].mxu0
        %2847 = vmatprep.mubr.f32.mxu0 0.0
        %2848 = vmatmul.mubr.f32.gmra.mrb[0].mxu0 %v2682
        %v2849 = vpop.f32.mrb[0].mxu0
        %v2850 = vpop.f32.mrb[0].mxu0
        %2851 = vmatprep.mubr.f32.mxu0 0.0
        %2852 = vmatmul.mubr.f32.gmra.mrb[0].mxu0 %v2683
        %v2853 = vpop.f32.mrb[0].mxu0
        %v2854 = vadd.f32 0.0, %v2853
        %v2855 = vpop.f32.mrb[0].mxu0
        %2856 = vmatprep.mubr.f32.mxu0 0.0
        %2857 = vmatmul.mubr.f32.gmra.mrb[0].mxu0 %v2684
        %v2858 = vpop.f32.mrb[0].mxu0
        %v2859 = vadd.f32 0.0, %v2858
        %v2860 = vpop.f32.mrb[0].mxu0
        %2861 = vmatprep.mubr.f32.mxu0 0.0
        %2862 = vmatmul.mubr.f32.gmra.mrb[0].mxu0 %v2685
        %v2863 = vpop.f32.mrb[0].mxu0
        %v2864 = vpop.f32.mrb[0].mxu0
        %2865 = vmatprep.mubr.f32.mxu0 0.0
        %2866 = vmatmul.mubr.f32.gmra.mrb[0].mxu0 %v2686
        %v2867 = vpop.f32.mrb[0].mxu0
        %v2868 = vadd.f32 0.0, %v2867
        %v2869 = vpop.f32.mrb[0].mxu0
        %2870 = vmatprep.mubr.f32.mxu0 0.0
        %2871 = vmatmul.mubr.f32.gmra.mrb[0].mxu0 %v2687
        %v2872 = vpop.f32.mrb[0].mxu0
        %v2873 = vadd.f32 0.0, %v2872
        %v2874 = vpop.f32.mrb[0].mxu0
        %2875 = vmatprep.mubr.f32.mxu0 0.0
        %2876 = vmatmul.mubr.f32.gmra.mrb[0].mxu0 %v2688
        %v2877 = vpop.f32.mrb[0].mxu0
        %v2878 = vpop.f32.mrb[0].mxu0
        %2879 = vmatprep.mubr.f32.mxu0 0.0
        %2880 = vmatmul.mubr.f32.gmra.mrb[0].mxu0 %v2689
        %v2881 = vpop.f32.mrb[0].mxu0
        %v2882 = vadd.f32 0.0, %v2881
        %v2883 = vpop.f32.mrb[0].mxu0
        %2884 = vmatprep.mubr.f32.mxu0 0.0
        %2885 = vmatmul.mubr.f32.gmra.mrb[0].mxu0 %v2690
        %v2886 = vpop.f32.mrb[0].mxu0
        %v2887 = vadd.f32 0.0, %v2886
        %v2888 = vpop.f32.mrb[0].mxu0
        %2889 = vmatprep.mubr.f32.mxu0 0.0
        %2890 = vmatmul.mubr.f32.gmra.mrb[0].mxu0 %v2691
        %v2891 = vpop.f32.mrb[0].mxu0
        %v2892 = vpop.f32.mrb[0].mxu0
        %2893 = vmatprep.mubr.f32.mxu0 0.0
        %2894 = vmatmul.mubr.f32.gmra.mrb[0].mxu0 %v2692
        %v2895 = vpop.f32.mrb[0].mxu0
        %v2896 = vadd.f32 0.0, %v2895
        %v2897 = vpop.f32.mrb[0].mxu0
        %2898 = vmatprep.mubr.f32.mxu0 0.0
        %2899 = vmatmul.mubr.f32.gmra.mrb[0].mxu0 %v2693
        %v2900 = vpop.f32.mrb[0].mxu0
        %v2901 = vadd.f32 0.0, %v2900
        %v2902 = vpop.f32.mrb[0].mxu0
        %2903 = vmatprep.mubr.f32.mxu0 0.0
        %2904 = vmatmul.mubr.f32.gmra.mrb[0].mxu0 %v2694
        %v2905 = vpop.f32.mrb[0].mxu0
        %v2906 = vpop.f32.mrb[0].mxu0
        %2907 = vmatprep.mubr.f32.mxu0 0.0
        %2908 = vmatmul.mubr.f32.gmra.mrb[0].mxu0 %v2695
        %v2909 = vpop.f32.mrb[0].mxu0
        %v2910 = vadd.f32 0.0, %v2909
        %v2911 = vpop.f32.mrb[0].mxu0
        %2912 = vmatprep.mubr.f32.mxu0 0.0
        %2913 = vmatmul.mubr.f32.gmra.mrb[0].mxu0 %v2696
        %v2914 = vpop.f32.mrb[0].mxu0
        %v2915 = vadd.f32 0.0, %v2914
        %v2916 = vpop.f32.mrb[0].mxu0
        %2917 = vmatprep.mubr.f32.mxu0 0.0
        %2918 = vmatmul.mubr.f32.gmra.mrb[0].mxu0 %v2697
        %v2919 = vpop.f32.mrb[0].mxu0
        %v2920 = vpop.f32.mrb[0].mxu0
        %2921 = vmatprep.mubr.f32.mxu0 0.0
        %2922 = vmatmul.mubr.f32.gmra.mrb[0].mxu0 %v2698
        %v2923 = vpop.f32.mrb[0].mxu0
        %v2924 = vadd.f32 0.0, %v2923
        %v2925 = vpop.f32.mrb[0].mxu0
        %2926 = vmatprep.mubr.f32.mxu0 0.0
        %2927 = vmatmul.mubr.f32.gmra.mrb[0].mxu0 %v2699
        %v2928 = vpop.f32.mrb[0].mxu0
        %v2929 = vadd.f32 0.0, %v2928
        %v2930 = vpop.f32.mrb[0].mxu0
        %2931 = vmatprep.mubr.f32.mxu0 0.0
        %2932 = vmatmul.mubr.f32.gmra.mrb[0].mxu0 %v2700
        %v2933 = vpop.f32.mrb[0].mxu0
        %v2934 = vpop.f32.mrb[0].mxu0
        %2935 = vmatprep.mubr.f32.mxu0 0.0
        %2936 = vmatmul.mubr.f32.gmra.mrb[0].mxu0 %v2701
        %v2937 = vpop.f32.mrb[0].mxu0
        %v2938 = vadd.f32 0.0, %v2937
        %v2939 = vpop.f32.mrb[0].mxu0
        %2940 = vmatprep.mubr.f32.mxu0 0.0
        %2941 = vmatmul.mubr.f32.gmra.mrb[0].mxu0 %v2702
        %v2942 = vpop.f32.mrb[0].mxu0
        %v2943 = vadd.f32 0.0, %v2942
        %v2944 = vpop.f32.mrb[0].mxu0
        %2945 = vmatprep.mubr.f32.mxu0 0.0
        %2946 = vmatmul.mubr.f32.gmra.mrb[0].mxu0 %v2703
        %v2947 = vpop.f32.mrb[0].mxu0
        %v2948 = vpop.f32.mrb[0].mxu0
        %2949 = vmatprep.mubr.f32.mxu0 0.0
        %2950 = vmatmul.mubr.f32.gmra.mrb[0].mxu0 %v2704
        %v2951 = vpop.f32.mrb[0].mxu0
        %v2952 = vadd.f32 0.0, %v2951
        %v2953 = vpop.f32.mrb[0].mxu0
        %2954 = vmatprep.mubr.f32.mxu0 0.0
        %2955 = vmatmul.mubr.f32.gmra.mrb[0].mxu0 %v2705
        %v2956 = vpop.f32.mrb[0].mxu0
        %v2957 = vadd.f32 0.0, %v2956
        %v2958 = vpop.f32.mrb[0].mxu0
        %2959 = vmatprep.mubr.f32.mxu0 0.0
        %2960 = vmatmul.mubr.f32.gmra.mrb[0].mxu0 %v2706
        %v2961 = vpop.f32.mrb[0].mxu0
        %v2962 = vpop.f32.mrb[0].mxu0
        %2963 = vmatprep.mubr.f32.mxu0 0.0
        %2964 = vmatmul.mubr.f32.gmra.mrb[0].mxu0 %v2707
        %v2965 = vpop.f32.mrb[0].mxu0
        %v2966 = vadd.f32 0.0, %v2965
        %v2967 = vpop.f32.mrb[0].mxu0
        %2968 = vmatprep.mubr.f32.mxu0 0.0
        %2969 = vmatmul.mubr.f32.gmra.mrb[0].mxu0 %v2708
        %v2970 = vpop.f32.mrb[0].mxu0
        %v2971 = vadd.f32 0.0, %v2970
        %v2972 = vpop.f32.mrb[0].mxu0
        %2973 = vmatprep.mubr.f32.mxu0 0.0
        %2974 = vmatmul.mubr.f32.gmra.mrb[0].mxu0 %v2709
        %v2975 = vpop.f32.mrb[0].mxu0
        %v2976 = vpop.f32.mrb[0].mxu0
        %2977 = vmatprep.mubr.f32.mxu0 0.0
        %2978 = vmatmul.mubr.f32.gmra.mrb[0].mxu0 %v2710
        %v2979 = vpop.f32.mrb[0].mxu0
        %v2980 = vadd.f32 0.0, %v2979
        %v2981 = vpop.f32.mrb[0].mxu0
        %2982 = vmatprep.mubr.f32.mxu0 0.0
        %2983 = vmatmul.mubr.f32.gmra.mrb[0].mxu0 %v2711
        %v2984 = vpop.f32.mrb[0].mxu0
        %v2985 = vadd.f32 0.0, %v2984
        %v2986 = vpop.f32.mrb[0].mxu0
        %2987 = vmatprep.mubr.f32.mxu0 0.0
        %2988 = vmatmul.mubr.f32.gmra.mrb[0].mxu0 %v2712
        %v2989 = vpop.f32.mrb[0].mxu0
        %v2990 = vpop.f32.mrb[0].mxu0
        %2991 = vmatprep.mubr.f32.mxu0 0.0
        %2992 = vmatmul.mubr.f32.gmra.mrb[0].mxu0 %v2713
        %v2993 = vpop.f32.mrb[0].mxu0
        %v2994 = vadd.f32 0.0, %v2993
        %v2995 = vpop.f32.mrb[0].mxu0
        %2996 = vmatprep.mubr.f32.mxu0 0.0
        %2997 = vmatmul.mubr.f32.gmra.mrb[0].mxu0 %v2714
        %v2998 = vpop.f32.mrb[0].mxu0
        %v2999 = vadd.f32 0.0, %v2998
        %v3000 = vpop.f32.mrb[0].mxu0
        %3001 = vmatprep.mubr.f32.mxu0 0.0
        %3002 = vmatmul.mubr.f32.gmra.mrb[0].mxu0 %v2715
        %v3003 = vpop.f32.mrb[0].mxu0
        %v3004 = vpop.f32.mrb[0].mxu0
        %3005 = vmatprep.mubr.f32.mxu0 0.0
        %3006 = vmatmul.mubr.f32.gmra.mrb[0].mxu0 %v2716
        %v3007 = vpop.f32.mrb[0].mxu0
        %v3008 = vadd.f32 0.0, %v3007
        %v3009 = vpop.f32.mrb[0].mxu0
        %3010 = vmatprep.mubr.f32.mxu0 0.0
        %3011 = vmatmul.mubr.f32.gmra.mrb[0].mxu0 %v2717
        %v3012 = vpop.f32.mrb[0].mxu0
        %v3013 = vadd.f32 0.0, %v3012
        %v3014 = vpop.f32.mrb[0].mxu0
        %3015 = vmatprep.mubr.f32.mxu0 0.0
        %3016 = vmatmul.mubr.f32.gmra.mrb[0].mxu0 %v2718
        %v3017 = vpop.f32.mrb[0].mxu0
        %v3018 = vpop.f32.mrb[0].mxu0
        %3019 = vmatprep.mubr.f32.mxu0 0.0
        %3020 = vmatmul.mubr.f32.gmra.mrb[0].mxu0 %v2719
        %v3021 = vpop.f32.mrb[0].mxu0
        %v3022 = vadd.f32 0.0, %v3021
        %v3023 = vpop.f32.mrb[0].mxu0
        %3024 = vmatprep.mubr.f32.mxu0 0.0
        %3025 = vmatmul.mubr.f32.gmra.mrb[0].mxu0 %v2720
        %v3026 = vpop.f32.mrb[0].mxu0
        %v3027 = vadd.f32 0.0, %v3026
        %v3028 = vpop.f32.mrb[0].mxu0
        %3029 = vmatprep.mubr.f32.mxu0 0.0
        %3030 = vmatmul.mubr.f32.gmra.mrb[0].mxu0 %v2721
        %v3031 = vpop.f32.mrb[0].mxu0
        %v3032 = vpop.f32.mrb[0].mxu0
        %3033 = vdwg.mxu0
        %v3034 = vadd.f32 %v2642, %v2812
        %v3035 = vadd.f32 %v2643, %v2817
        %v3036 = vadd.f32 %v2644, %v2826
        %v3037 = vadd.f32 %v2645, %v2831
        %v3038 = vadd.f32 %v2646, %v2840
        %v3039 = vadd.f32 %v2647, %v2845
        %v3040 = vadd.f32 %v2648, %v2854
        %v3041 = vadd.f32 %v2649, %v2859
        %v3042 = vadd.f32 %v2650, %v2868
        %v3043 = vadd.f32 %v2651, %v2873
        %v3044 = vadd.f32 %v2652, %v2882
        %v3045 = vadd.f32 %v2653, %v2887
        %v3046 = vadd.f32 %v2654, %v2896
        %v3047 = vadd.f32 %v2655, %v2901
        %v3048 = vadd.f32 %v2656, %v2910
        %v3049 = vadd.f32 %v2657, %v2915
        %v3050 = vadd.f32 %v2658, %v2924
        %v3051 = vadd.f32 %v2659, %v2929
        %v3052 = vadd.f32 %v2660, %v2938
        %v3053 = vadd.f32 %v2661, %v2943
        %v3054 = vadd.f32 %v2662, %v2952
        %v3055 = vadd.f32 %v2663, %v2957
        %v3056 = vadd.f32 %v2664, %v2966
        %v3057 = vadd.f32 %v2665, %v2971
        %v3058 = vadd.f32 %v2666, %v2980
        %v3059 = vadd.f32 %v2667, %v2985
        %v3060 = vadd.f32 %v2668, %v2994
        %v3061 = vadd.f32 %v2669, %v2999
        %v3062 = vadd.f32 %v2670, %v3008
        %v3063 = vadd.f32 %v2671, %v3013
        %v3064 = vadd.f32 %v2672, %v3022
        %v3065 = vadd.f32 %v2673, %v3027
        %s3066 = scalar_lea.vmem [#allocation6], 640
        %v3067 = vld [vmem:[%s3066] sm:$0xff]
        %v3068 = vld [vmem:[%s3066 + $0x8] sm:$0xff]
        %v3069 = vld [vmem:[%s3066 + $0x10] sm:$0xff]
        %v3070 = vld [vmem:[%s3066 + $0x18] sm:$0xff]
        %v3071 = vld [vmem:[%s3066 + $0x20] sm:$0xff]
        %v3072 = vld [vmem:[%s3066 + $0x28] sm:$0xff]
        %v3073 = vld [vmem:[%s3066 + $0x30] sm:$0xff]
        %v3074 = vld [vmem:[%s3066 + $0x38] sm:$0xff]
        %v3075 = vld [vmem:[%s3066 + $0x40] sm:$0xff]
        %v3076 = vld [vmem:[%s3066 + $0x48] sm:$0xff]
        %v3077 = vld [vmem:[%s3066 + $0x50] sm:$0xff]
        %v3078 = vld [vmem:[%s3066 + $0x58] sm:$0xff]
        %v3079 = vld [vmem:[%s3066 + $0x60] sm:$0xff]
        %v3080 = vld [vmem:[%s3066 + $0x68] sm:$0xff]
        %v3081 = vld [vmem:[%s3066 + $0x70] sm:$0xff]
        %v3082 = vld [vmem:[%s3066 + $0x78] sm:$0xff]
        %3083 = vmatprep.subr.mxu0 0.0
        %3084 = vmatpush1.msra.mxu0 %v3067
        %3085 = vmatprep.subr.mxu0 0.0
        %3086 = vmatpush1.msra.mxu0 %v3068
        %3087 = vmatprep.subr.mxu0 0.0
        %3088 = vmatpush1.msra.mxu0 %v3069
        %3089 = vmatprep.subr.mxu0 0.0
        %3090 = vmatpush1.msra.mxu0 %v3070
        %3091 = vmatprep.subr.mxu0 0.0
        %3092 = vmatpush1.msra.mxu0 %v3071
        %3093 = vmatprep.subr.mxu0 0.0
        %3094 = vmatpush1.msra.mxu0 %v3072
        %3095 = vmatprep.subr.mxu0 0.0
        %3096 = vmatpush1.msra.mxu0 %v3073
        %3097 = vmatprep.subr.mxu0 0.0
        %3098 = vmatpush1.msra.mxu0 %v3074
        %3099 = vmatprep.subr.mxu0 0.0
        %3100 = vmatpush1.msra.mxu0 %v3075
        %3101 = vmatprep.subr.mxu0 0.0
        %3102 = vmatpush1.msra.mxu0 %v3076
        %3103 = vmatprep.subr.mxu0 0.0
        %3104 = vmatpush1.msra.mxu0 %v3077
        %3105 = vmatprep.subr.mxu0 0.0
        %3106 = vmatpush1.msra.mxu0 %v3078
        %3107 = vmatprep.subr.mxu0 0.0
        %3108 = vmatpush1.msra.mxu0 %v3079
        %3109 = vmatprep.subr.mxu0 0.0
        %3110 = vmatpush1.msra.mxu0 %v3080
        %3111 = vmatprep.subr.mxu0 0.0
        %3112 = vmatpush1.msra.mxu0 %v3081
        %3113 = vmatprep.subr.mxu0 0.0
        %3114 = vmatpush1.msra.mxu0 %v3082
        %3115 = vmatprep.subr.mxu0 0.0
        %3116 = vmatpush1.msra.mxu0 0.0
        %3117 = vmatprep.subr.mxu0 0.0
        %3118 = vmatpush1.msra.mxu0 0.0
        %3119 = vmatprep.subr.mxu0 0.0
        %3120 = vmatpush1.msra.mxu0 0.0
        %3121 = vmatprep.subr.mxu0 0.0
        %3122 = vmatpush1.msra.mxu0 0.0
        %3123 = vmatprep.subr.mxu0 0.0
        %3124 = vmatpush1.msra.mxu0 0.0
        %3125 = vmatprep.subr.mxu0 0.0
        %3126 = vmatpush1.msra.mxu0 0.0
        %3127 = vmatprep.subr.mxu0 0.0
        %3128 = vmatpush1.msra.mxu0 0.0
        %3129 = vmatprep.subr.mxu0 0.0
        %3130 = vmatpush1.msra.mxu0 0.0
        %3131 = vmatprep.subr.mxu0 0.0
        %3132 = vmatpush1.msra.mxu0 0.0
        %3133 = vmatprep.subr.mxu0 0.0
        %3134 = vmatpush1.msra.mxu0 0.0
        %3135 = vmatprep.subr.mxu0 0.0
        %3136 = vmatpush1.msra.mxu0 0.0
        %3137 = vmatprep.subr.mxu0 0.0
        %3138 = vmatpush1.msra.mxu0 0.0
        %3139 = vmatprep.subr.mxu0 0.0
        %3140 = vmatpush1.msra.mxu0 0.0
        %3141 = vmatprep.subr.mxu0 0.0
        %3142 = vmatpush1.msra.mxu0 0.0
        %3143 = vmatprep.subr.mxu0 0.0
        %3144 = vmatpush1.msra.mxu0 0.0
        %3145 = vmatprep.subr.mxu0 0.0
        %3146 = vmatpush1.msra.mxu0 0.0
        %3147 = vmatprep.mubr.f32.mxu0 0.0
        %3148 = vmatmul.mubr.f32.gmra.mrb[0].mxu0 %v2677
        %v3149 = vpop.f32.mrb[0].mxu0
        %v3150 = vadd.f32 0.0, %v3149
        %v3151 = vpop.f32.mrb[0].mxu0
        %3152 = vmatprep.mubr.f32.mxu0 0.0
        %3153 = vmatmul.mubr.f32.gmra.mrb[0].mxu0 %v2678
        %v3154 = vpop.f32.mrb[0].mxu0
        %v3155 = vadd.f32 0.0, %v3154
        %v3156 = vpop.f32.mrb[0].mxu0
        %3157 = vmatprep.mubr.f32.mxu0 0.0
        %3158 = vmatmul.mubr.f32.gmra.mrb[0].mxu0 %v2679
        %v3159 = vpop.f32.mrb[0].mxu0
        %v3160 = vpop.f32.mrb[0].mxu0
        %3161 = vmatprep.mubr.f32.mxu0 0.0
        %3162 = vmatmul.mubr.f32.gmra.mrb[0].mxu0 %v2680
        %v3163 = vpop.f32.mrb[0].mxu0
        %v3164 = vadd.f32 0.0, %v3163
        %v3165 = vpop.f32.mrb[0].mxu0
        %3166 = vmatprep.mubr.f32.mxu0 0.0
        %3167 = vmatmul.mubr.f32.gmra.mrb[0].mxu0 %v2681
        %v3168 = vpop.f32.mrb[0].mxu0
        %v3169 = vadd.f32 0.0, %v3168
        %v3170 = vpop.f32.mrb[0].mxu0
        %3171 = vmatprep.mubr.f32.mxu0 0.0
        %3172 = vmatmul.mubr.f32.gmra.mrb[0].mxu0 %v2682
        %v3173 = vpop.f32.mrb[0].mxu0
        %v3174 = vpop.f32.mrb[0].mxu0
        %3175 = vmatprep.mubr.f32.mxu0 0.0
        %3176 = vmatmul.mubr.f32.gmra.mrb[0].mxu0 %v2683
        %v3177 = vpop.f32.mrb[0].mxu0
        %v3178 = vadd.f32 0.0, %v3177
        %v3179 = vpop.f32.mrb[0].mxu0
        %3180 = vmatprep.mubr.f32.mxu0 0.0
        %3181 = vmatmul.mubr.f32.gmra.mrb[0].mxu0 %v2684
        %v3182 = vpop.f32.mrb[0].mxu0
        %v3183 = vadd.f32 0.0, %v3182
        %v3184 = vpop.f32.mrb[0].mxu0
        %3185 = vmatprep.mubr.f32.mxu0 0.0
        %3186 = vmatmul.mubr.f32.gmra.mrb[0].mxu0 %v2685
        %v3187 = vpop.f32.mrb[0].mxu0
        %v3188 = vpop.f32.mrb[0].mxu0
        %3189 = vmatprep.mubr.f32.mxu0 0.0
        %3190 = vmatmul.mubr.f32.gmra.mrb[0].mxu0 %v2686
        %v3191 = vpop.f32.mrb[0].mxu0
        %v3192 = vadd.f32 0.0, %v3191
        %v3193 = vpop.f32.mrb[0].mxu0
        %3194 = vmatprep.mubr.f32.mxu0 0.0
        %3195 = vmatmul.mubr.f32.gmra.mrb[0].mxu0 %v2687
        %v3196 = vpop.f32.mrb[0].mxu0
        %v3197 = vadd.f32 0.0, %v3196
        %v3198 = vpop.f32.mrb[0].mxu0
        %3199 = vmatprep.mubr.f32.mxu0 0.0
        %3200 = vmatmul.mubr.f32.gmra.mrb[0].mxu0 %v2688
        %v3201 = vpop.f32.mrb[0].mxu0
        %v3202 = vpop.f32.mrb[0].mxu0
        %3203 = vmatprep.mubr.f32.mxu0 0.0
        %3204 = vmatmul.mubr.f32.gmra.mrb[0].mxu0 %v2689
        %v3205 = vpop.f32.mrb[0].mxu0
        %v3206 = vadd.f32 0.0, %v3205
        %v3207 = vpop.f32.mrb[0].mxu0
        %3208 = vmatprep.mubr.f32.mxu0 0.0
        %3209 = vmatmul.mubr.f32.gmra.mrb[0].mxu0 %v2690
        %v3210 = vpop.f32.mrb[0].mxu0
        %v3211 = vadd.f32 0.0, %v3210
        %v3212 = vpop.f32.mrb[0].mxu0
        %3213 = vmatprep.mubr.f32.mxu0 0.0
        %3214 = vmatmul.mubr.f32.gmra.mrb[0].mxu0 %v2691
        %v3215 = vpop.f32.mrb[0].mxu0
        %v3216 = vpop.f32.mrb[0].mxu0
        %3217 = vmatprep.mubr.f32.mxu0 0.0
        %3218 = vmatmul.mubr.f32.gmra.mrb[0].mxu0 %v2692
        %v3219 = vpop.f32.mrb[0].mxu0
        %v3220 = vadd.f32 0.0, %v3219
        %v3221 = vpop.f32.mrb[0].mxu0
        %3222 = vmatprep.mubr.f32.mxu0 0.0
        %3223 = vmatmul.mubr.f32.gmra.mrb[0].mxu0 %v2693
        %v3224 = vpop.f32.mrb[0].mxu0
        %v3225 = vadd.f32 0.0, %v3224
        %v3226 = vpop.f32.mrb[0].mxu0
        %3227 = vmatprep.mubr.f32.mxu0 0.0
        %3228 = vmatmul.mubr.f32.gmra.mrb[0].mxu0 %v2694
        %v3229 = vpop.f32.mrb[0].mxu0
        %v3230 = vpop.f32.mrb[0].mxu0
        %3231 = vmatprep.mubr.f32.mxu0 0.0
        %3232 = vmatmul.mubr.f32.gmra.mrb[0].mxu0 %v2695
        %v3233 = vpop.f32.mrb[0].mxu0
        %v3234 = vadd.f32 0.0, %v3233
        %v3235 = vpop.f32.mrb[0].mxu0
        %3236 = vmatprep.mubr.f32.mxu0 0.0
        %3237 = vmatmul.mubr.f32.gmra.mrb[0].mxu0 %v2696
        %v3238 = vpop.f32.mrb[0].mxu0
        %v3239 = vadd.f32 0.0, %v3238
        %v3240 = vpop.f32.mrb[0].mxu0
        %3241 = vmatprep.mubr.f32.mxu0 0.0
        %3242 = vmatmul.mubr.f32.gmra.mrb[0].mxu0 %v2697
        %v3243 = vpop.f32.mrb[0].mxu0
        %v3244 = vpop.f32.mrb[0].mxu0
        %3245 = vmatprep.mubr.f32.mxu0 0.0
        %3246 = vmatmul.mubr.f32.gmra.mrb[0].mxu0 %v2698
        %v3247 = vpop.f32.mrb[0].mxu0
        %v3248 = vadd.f32 0.0, %v3247
        %v3249 = vpop.f32.mrb[0].mxu0
        %3250 = vmatprep.mubr.f32.mxu0 0.0
        %3251 = vmatmul.mubr.f32.gmra.mrb[0].mxu0 %v2699
        %v3252 = vpop.f32.mrb[0].mxu0
        %v3253 = vadd.f32 0.0, %v3252
        %v3254 = vpop.f32.mrb[0].mxu0
        %3255 = vmatprep.mubr.f32.mxu0 0.0
        %3256 = vmatmul.mubr.f32.gmra.mrb[0].mxu0 %v2700
        %v3257 = vpop.f32.mrb[0].mxu0
        %v3258 = vpop.f32.mrb[0].mxu0
        %3259 = vmatprep.mubr.f32.mxu0 0.0
        %3260 = vmatmul.mubr.f32.gmra.mrb[0].mxu0 %v2701
        %v3261 = vpop.f32.mrb[0].mxu0
        %v3262 = vadd.f32 0.0, %v3261
        %v3263 = vpop.f32.mrb[0].mxu0
        %3264 = vmatprep.mubr.f32.mxu0 0.0
        %3265 = vmatmul.mubr.f32.gmra.mrb[0].mxu0 %v2702
        %v3266 = vpop.f32.mrb[0].mxu0
        %v3267 = vadd.f32 0.0, %v3266
        %v3268 = vpop.f32.mrb[0].mxu0
        %3269 = vmatprep.mubr.f32.mxu0 0.0
        %3270 = vmatmul.mubr.f32.gmra.mrb[0].mxu0 %v2703
        %v3271 = vpop.f32.mrb[0].mxu0
        %v3272 = vpop.f32.mrb[0].mxu0
        %3273 = vmatprep.mubr.f32.mxu0 0.0
        %3274 = vmatmul.mubr.f32.gmra.mrb[0].mxu0 %v2704
        %v3275 = vpop.f32.mrb[0].mxu0
        %v3276 = vadd.f32 0.0, %v3275
        %v3277 = vpop.f32.mrb[0].mxu0
        %3278 = vmatprep.mubr.f32.mxu0 0.0
        %3279 = vmatmul.mubr.f32.gmra.mrb[0].mxu0 %v2705
        %v3280 = vpop.f32.mrb[0].mxu0
        %v3281 = vadd.f32 0.0, %v3280
        %v3282 = vpop.f32.mrb[0].mxu0
        %3283 = vmatprep.mubr.f32.mxu0 0.0
        %3284 = vmatmul.mubr.f32.gmra.mrb[0].mxu0 %v2706
        %v3285 = vpop.f32.mrb[0].mxu0
        %v3286 = vpop.f32.mrb[0].mxu0
        %3287 = vmatprep.mubr.f32.mxu0 0.0
        %3288 = vmatmul.mubr.f32.gmra.mrb[0].mxu0 %v2707
        %v3289 = vpop.f32.mrb[0].mxu0
        %v3290 = vadd.f32 0.0, %v3289
        %v3291 = vpop.f32.mrb[0].mxu0
        %3292 = vmatprep.mubr.f32.mxu0 0.0
        %3293 = vmatmul.mubr.f32.gmra.mrb[0].mxu0 %v2708
        %v3294 = vpop.f32.mrb[0].mxu0
        %v3295 = vadd.f32 0.0, %v3294
        %v3296 = vpop.f32.mrb[0].mxu0
        %3297 = vmatprep.mubr.f32.mxu0 0.0
        %3298 = vmatmul.mubr.f32.gmra.mrb[0].mxu0 %v2709
        %v3299 = vpop.f32.mrb[0].mxu0
        %v3300 = vpop.f32.mrb[0].mxu0
        %3301 = vmatprep.mubr.f32.mxu0 0.0
        %3302 = vmatmul.mubr.f32.gmra.mrb[0].mxu0 %v2710
        %v3303 = vpop.f32.mrb[0].mxu0
        %v3304 = vadd.f32 0.0, %v3303
        %v3305 = vpop.f32.mrb[0].mxu0
        %3306 = vmatprep.mubr.f32.mxu0 0.0
        %3307 = vmatmul.mubr.f32.gmra.mrb[0].mxu0 %v2711
        %v3308 = vpop.f32.mrb[0].mxu0
        %v3309 = vadd.f32 0.0, %v3308
        %v3310 = vpop.f32.mrb[0].mxu0
        %3311 = vmatprep.mubr.f32.mxu0 0.0
        %3312 = vmatmul.mubr.f32.gmra.mrb[0].mxu0 %v2712
        %v3313 = vpop.f32.mrb[0].mxu0
        %v3314 = vpop.f32.mrb[0].mxu0
        %3315 = vmatprep.mubr.f32.mxu0 0.0
        %3316 = vmatmul.mubr.f32.gmra.mrb[0].mxu0 %v2713
        %v3317 = vpop.f32.mrb[0].mxu0
        %v3318 = vadd.f32 0.0, %v3317
        %v3319 = vpop.f32.mrb[0].mxu0
        %3320 = vmatprep.mubr.f32.mxu0 0.0
        %3321 = vmatmul.mubr.f32.gmra.mrb[0].mxu0 %v2714
        %v3322 = vpop.f32.mrb[0].mxu0
        %v3323 = vadd.f32 0.0, %v3322
        %v3324 = vpop.f32.mrb[0].mxu0
        %3325 = vmatprep.mubr.f32.mxu0 0.0
        %3326 = vmatmul.mubr.f32.gmra.mrb[0].mxu0 %v2715
        %v3327 = vpop.f32.mrb[0].mxu0
        %v3328 = vpop.f32.mrb[0].mxu0
        %3329 = vmatprep.mubr.f32.mxu0 0.0
        %3330 = vmatmul.mubr.f32.gmra.mrb[0].mxu0 %v2716
        %v3331 = vpop.f32.mrb[0].mxu0
        %v3332 = vadd.f32 0.0, %v3331
        %v3333 = vpop.f32.mrb[0].mxu0
        %3334 = vmatprep.mubr.f32.mxu0 0.0
        %3335 = vmatmul.mubr.f32.gmra.mrb[0].mxu0 %v2717
        %v3336 = vpop.f32.mrb[0].mxu0
        %v3337 = vadd.f32 0.0, %v3336
        %v3338 = vpop.f32.mrb[0].mxu0
        %3339 = vmatprep.mubr.f32.mxu0 0.0
        %3340 = vmatmul.mubr.f32.gmra.mrb[0].mxu0 %v2718
        %v3341 = vpop.f32.mrb[0].mxu0
        %v3342 = vpop.f32.mrb[0].mxu0
        %3343 = vmatprep.mubr.f32.mxu0 0.0
        %3344 = vmatmul.mubr.f32.gmra.mrb[0].mxu0 %v2719
        %v3345 = vpop.f32.mrb[0].mxu0
        %v3346 = vadd.f32 0.0, %v3345
        %v3347 = vpop.f32.mrb[0].mxu0
        %3348 = vmatprep.mubr.f32.mxu0 0.0
        %3349 = vmatmul.mubr.f32.gmra.mrb[0].mxu0 %v2720
        %v3350 = vpop.f32.mrb[0].mxu0
        %v3351 = vadd.f32 0.0, %v3350
        %v3352 = vpop.f32.mrb[0].mxu0
        %3353 = vmatprep.mubr.f32.mxu0 0.0
        %3354 = vmatmul.mubr.f32.gmra.mrb[0].mxu0 %v2721
        %v3355 = vpop.f32.mrb[0].mxu0
        %v3356 = vpop.f32.mrb[0].mxu0
        %3357 = vmatprep.mubr.f32.mxu0 0.0
        %3358 = vmatmul.mubr.f32.gmra.mrb[0].mxu0 %v2722
        %v3359 = vpop.f32.mrb[0].mxu0
        %v3360 = vadd.f32 0.0, %v3359
        %v3361 = vpop.f32.mrb[0].mxu0
        %3362 = vmatprep.mubr.f32.mxu0 0.0
        %3363 = vmatmul.mubr.f32.gmra.mrb[0].mxu0 %v2723
        %v3364 = vpop.f32.mrb[0].mxu0
        %v3365 = vadd.f32 0.0, %v3364
        %v3366 = vpop.f32.mrb[0].mxu0
        %3367 = vmatprep.mubr.f32.mxu0 0.0
        %3368 = vmatmul.mubr.f32.gmra.mrb[0].mxu0 %v2724
        %v3369 = vpop.f32.mrb[0].mxu0
        %v3370 = vpop.f32.mrb[0].mxu0
        %3371 = vdwg.mxu0
        %v3372 = vadd.f32 %v3034, %v3150
        %v3373 = vadd.f32 %v3035, %v3155
        %v3374 = vadd.f32 %v3036, %v3164
        %v3375 = vadd.f32 %v3037, %v3169
        %v3376 = vadd.f32 %v3038, %v3178
        %v3377 = vadd.f32 %v3039, %v3183
        %v3378 = vadd.f32 %v3040, %v3192
        %v3379 = vadd.f32 %v3041, %v3197
        %v3380 = vadd.f32 %v3042, %v3206
        %v3381 = vadd.f32 %v3043, %v3211
        %v3382 = vadd.f32 %v3044, %v3220
        %v3383 = vadd.f32 %v3045, %v3225
        %v3384 = vadd.f32 %v3046, %v3234
        %v3385 = vadd.f32 %v3047, %v3239
        %v3386 = vadd.f32 %v3048, %v3248
        %v3387 = vadd.f32 %v3049, %v3253
        %v3388 = vadd.f32 %v3050, %v3262
        %v3389 = vadd.f32 %v3051, %v3267
        %v3390 = vadd.f32 %v3052, %v3276
        %v3391 = vadd.f32 %v3053, %v3281
        %v3392 = vadd.f32 %v3054, %v3290
        %v3393 = vadd.f32 %v3055, %v3295
        %v3394 = vadd.f32 %v3056, %v3304
        %v3395 = vadd.f32 %v3057, %v3309
        %v3396 = vadd.f32 %v3058, %v3318
        %v3397 = vadd.f32 %v3059, %v3323
        %v3398 = vadd.f32 %v3060, %v3332
        %v3399 = vadd.f32 %v3061, %v3337
        %v3400 = vadd.f32 %v3062, %v3346
        %v3401 = vadd.f32 %v3063, %v3351
        %v3402 = vadd.f32 %v3064, %v3360
        %v3403 = vadd.f32 %v3065, %v3365
        %s3404 = scalar_lea.vmem [#allocation6], 1024
        %v3405 = vld [vmem:[%s3404] sm:$0xff]
        %v3406 = vld [vmem:[%s3404 + $0x8] sm:$0xff]
        %v3407 = vld [vmem:[%s3404 + $0x10] sm:$0xff]
        %v3408 = vld [vmem:[%s3404 + $0x18] sm:$0xff]
        %v3409 = vld [vmem:[%s3404 + $0x20] sm:$0xff]
        %v3410 = vld [vmem:[%s3404 + $0x28] sm:$0xff]
        %v3411 = vld [vmem:[%s3404 + $0x30] sm:$0xff]
        %v3412 = vld [vmem:[%s3404 + $0x38] sm:$0xff]
        %v3413 = vld [vmem:[%s3404 + $0x40] sm:$0xff]
        %v3414 = vld [vmem:[%s3404 + $0x48] sm:$0xff]
        %v3415 = vld [vmem:[%s3404 + $0x50] sm:$0xff]
        %v3416 = vld [vmem:[%s3404 + $0x58] sm:$0xff]
        %v3417 = vld [vmem:[%s3404 + $0x60] sm:$0xff]
        %v3418 = vld [vmem:[%s3404 + $0x68] sm:$0xff]
        %v3419 = vld [vmem:[%s3404 + $0x70] sm:$0xff]
        %v3420 = vld [vmem:[%s3404 + $0x78] sm:$0xff]
        %3421 = vmatprep.subr.mxu0 0.0
        %3422 = vmatpush1.msra.mxu0 %v3405
        %3423 = vmatprep.subr.mxu0 0.0
        %3424 = vmatpush1.msra.mxu0 %v3406
        %3425 = vmatprep.subr.mxu0 0.0
        %3426 = vmatpush1.msra.mxu0 %v3407
        %3427 = vmatprep.subr.mxu0 0.0
        %3428 = vmatpush1.msra.mxu0 %v3408
        %3429 = vmatprep.subr.mxu0 0.0
        %3430 = vmatpush1.msra.mxu0 %v3409
        %3431 = vmatprep.subr.mxu0 0.0
        %3432 = vmatpush1.msra.mxu0 %v3410
        %3433 = vmatprep.subr.mxu0 0.0
        %3434 = vmatpush1.msra.mxu0 %v3411
        %3435 = vmatprep.subr.mxu0 0.0
        %3436 = vmatpush1.msra.mxu0 %v3412
        %3437 = vmatprep.subr.mxu0 0.0
        %3438 = vmatpush1.msra.mxu0 %v3413
        %3439 = vmatprep.subr.mxu0 0.0
        %3440 = vmatpush1.msra.mxu0 %v3414
        %3441 = vmatprep.subr.mxu0 0.0
        %3442 = vmatpush1.msra.mxu0 %v3415
        %3443 = vmatprep.subr.mxu0 0.0
        %3444 = vmatpush1.msra.mxu0 %v3416
        %3445 = vmatprep.subr.mxu0 0.0
        %3446 = vmatpush1.msra.mxu0 %v3417
        %3447 = vmatprep.subr.mxu0 0.0
        %3448 = vmatpush1.msra.mxu0 %v3418
        %3449 = vmatprep.subr.mxu0 0.0
        %3450 = vmatpush1.msra.mxu0 %v3419
        %3451 = vmatprep.subr.mxu0 0.0
        %3452 = vmatpush1.msra.mxu0 %v3420
        %3453 = vmatprep.subr.mxu0 0.0
        %3454 = vmatpush1.msra.mxu0 0.0
        %3455 = vmatprep.subr.mxu0 0.0
        %3456 = vmatpush1.msra.mxu0 0.0
        %3457 = vmatprep.subr.mxu0 0.0
        %3458 = vmatpush1.msra.mxu0 0.0
        %3459 = vmatprep.subr.mxu0 0.0
        %3460 = vmatpush1.msra.mxu0 0.0
        %3461 = vmatprep.subr.mxu0 0.0
        %3462 = vmatpush1.msra.mxu0 0.0
        %3463 = vmatprep.subr.mxu0 0.0
        %3464 = vmatpush1.msra.mxu0 0.0
        %3465 = vmatprep.subr.mxu0 0.0
        %3466 = vmatpush1.msra.mxu0 0.0
        %3467 = vmatprep.subr.mxu0 0.0
        %3468 = vmatpush1.msra.mxu0 0.0
        %3469 = vmatprep.subr.mxu0 0.0
        %3470 = vmatpush1.msra.mxu0 0.0
        %3471 = vmatprep.subr.mxu0 0.0
        %3472 = vmatpush1.msra.mxu0 0.0
        %3473 = vmatprep.subr.mxu0 0.0
        %3474 = vmatpush1.msra.mxu0 0.0
        %3475 = vmatprep.subr.mxu0 0.0
        %3476 = vmatpush1.msra.mxu0 0.0
        %3477 = vmatprep.subr.mxu0 0.0
        %3478 = vmatpush1.msra.mxu0 0.0
        %3479 = vmatprep.subr.mxu0 0.0
        %3480 = vmatpush1.msra.mxu0 0.0
        %3481 = vmatprep.subr.mxu0 0.0
        %3482 = vmatpush1.msra.mxu0 0.0
        %3483 = vmatprep.subr.mxu0 0.0
        %3484 = vmatpush1.msra.mxu0 0.0
        %3485 = vmatprep.mubr.f32.mxu0 0.0
        %3486 = vmatmul.mubr.f32.gmra.mrb[0].mxu0 %v2680
        %v3487 = vpop.f32.mrb[0].mxu0
        %v3488 = vadd.f32 0.0, %v3487
        %v3489 = vpop.f32.mrb[0].mxu0
        %3490 = vmatprep.mubr.f32.mxu0 0.0
        %3491 = vmatmul.mubr.f32.gmra.mrb[0].mxu0 %v2681
        %v3492 = vpop.f32.mrb[0].mxu0
        %v3493 = vadd.f32 0.0, %v3492
        %v3494 = vpop.f32.mrb[0].mxu0
        %3495 = vmatprep.mubr.f32.mxu0 0.0
        %3496 = vmatmul.mubr.f32.gmra.mrb[0].mxu0 %v2682
        %v3497 = vpop.f32.mrb[0].mxu0
        %v3498 = vpop.f32.mrb[0].mxu0
        %3499 = vmatprep.mubr.f32.mxu0 0.0
        %3500 = vmatmul.mubr.f32.gmra.mrb[0].mxu0 %v2683
        %v3501 = vpop.f32.mrb[0].mxu0
        %v3502 = vadd.f32 0.0, %v3501
        %v3503 = vpop.f32.mrb[0].mxu0
        %3504 = vmatprep.mubr.f32.mxu0 0.0
        %3505 = vmatmul.mubr.f32.gmra.mrb[0].mxu0 %v2684
        %v3506 = vpop.f32.mrb[0].mxu0
        %v3507 = vadd.f32 0.0, %v3506
        %v3508 = vpop.f32.mrb[0].mxu0
        %3509 = vmatprep.mubr.f32.mxu0 0.0
        %3510 = vmatmul.mubr.f32.gmra.mrb[0].mxu0 %v2685
        %v3511 = vpop.f32.mrb[0].mxu0
        %v3512 = vpop.f32.mrb[0].mxu0
        %3513 = vmatprep.mubr.f32.mxu0 0.0
        %3514 = vmatmul.mubr.f32.gmra.mrb[0].mxu0 %v2686
        %v3515 = vpop.f32.mrb[0].mxu0
        %v3516 = vadd.f32 0.0, %v3515
        %v3517 = vpop.f32.mrb[0].mxu0
        %3518 = vmatprep.mubr.f32.mxu0 0.0
        %3519 = vmatmul.mubr.f32.gmra.mrb[0].mxu0 %v2687
        %v3520 = vpop.f32.mrb[0].mxu0
        %v3521 = vadd.f32 0.0, %v3520
        %v3522 = vpop.f32.mrb[0].mxu0
        %3523 = vmatprep.mubr.f32.mxu0 0.0
        %3524 = vmatmul.mubr.f32.gmra.mrb[0].mxu0 %v2688
        %v3525 = vpop.f32.mrb[0].mxu0
        %v3526 = vpop.f32.mrb[0].mxu0
        %3527 = vmatprep.mubr.f32.mxu0 0.0
        %3528 = vmatmul.mubr.f32.gmra.mrb[0].mxu0 %v2689
        %v3529 = vpop.f32.mrb[0].mxu0
        %v3530 = vadd.f32 0.0, %v3529
        %v3531 = vpop.f32.mrb[0].mxu0
        %3532 = vmatprep.mubr.f32.mxu0 0.0
        %3533 = vmatmul.mubr.f32.gmra.mrb[0].mxu0 %v2690
        %v3534 = vpop.f32.mrb[0].mxu0
        %v3535 = vadd.f32 0.0, %v3534
        %v3536 = vpop.f32.mrb[0].mxu0
        %3537 = vmatprep.mubr.f32.mxu0 0.0
        %3538 = vmatmul.mubr.f32.gmra.mrb[0].mxu0 %v2691
        %v3539 = vpop.f32.mrb[0].mxu0
        %v3540 = vpop.f32.mrb[0].mxu0
        %3541 = vmatprep.mubr.f32.mxu0 0.0
        %3542 = vmatmul.mubr.f32.gmra.mrb[0].mxu0 %v2692
        %v3543 = vpop.f32.mrb[0].mxu0
        %v3544 = vadd.f32 0.0, %v3543
        %v3545 = vpop.f32.mrb[0].mxu0
        %3546 = vmatprep.mubr.f32.mxu0 0.0
        %3547 = vmatmul.mubr.f32.gmra.mrb[0].mxu0 %v2693
        %v3548 = vpop.f32.mrb[0].mxu0
        %v3549 = vadd.f32 0.0, %v3548
        %v3550 = vpop.f32.mrb[0].mxu0
        %3551 = vmatprep.mubr.f32.mxu0 0.0
        %3552 = vmatmul.mubr.f32.gmra.mrb[0].mxu0 %v2694
        %v3553 = vpop.f32.mrb[0].mxu0
        %v3554 = vpop.f32.mrb[0].mxu0
        %3555 = vmatprep.mubr.f32.mxu0 0.0
        %3556 = vmatmul.mubr.f32.gmra.mrb[0].mxu0 %v2695
        %v3557 = vpop.f32.mrb[0].mxu0
        %v3558 = vadd.f32 0.0, %v3557
        %v3559 = vpop.f32.mrb[0].mxu0
        %3560 = vmatprep.mubr.f32.mxu0 0.0
        %3561 = vmatmul.mubr.f32.gmra.mrb[0].mxu0 %v2696
        %v3562 = vpop.f32.mrb[0].mxu0
        %v3563 = vadd.f32 0.0, %v3562
        %v3564 = vpop.f32.mrb[0].mxu0
        %3565 = vmatprep.mubr.f32.mxu0 0.0
        %3566 = vmatmul.mubr.f32.gmra.mrb[0].mxu0 %v2697
        %v3567 = vpop.f32.mrb[0].mxu0
        %v3568 = vpop.f32.mrb[0].mxu0
        %3569 = vmatprep.mubr.f32.mxu0 0.0
        %3570 = vmatmul.mubr.f32.gmra.mrb[0].mxu0 %v2698
        %v3571 = vpop.f32.mrb[0].mxu0
        %v3572 = vadd.f32 0.0, %v3571
        %v3573 = vpop.f32.mrb[0].mxu0
        %3574 = vmatprep.mubr.f32.mxu0 0.0
        %3575 = vmatmul.mubr.f32.gmra.mrb[0].mxu0 %v2699
        %v3576 = vpop.f32.mrb[0].mxu0
        %v3577 = vadd.f32 0.0, %v3576
        %v3578 = vpop.f32.mrb[0].mxu0
        %3579 = vmatprep.mubr.f32.mxu0 0.0
        %3580 = vmatmul.mubr.f32.gmra.mrb[0].mxu0 %v2700
        %v3581 = vpop.f32.mrb[0].mxu0
        %v3582 = vpop.f32.mrb[0].mxu0
        %3583 = vmatprep.mubr.f32.mxu0 0.0
        %3584 = vmatmul.mubr.f32.gmra.mrb[0].mxu0 %v2701
        %v3585 = vpop.f32.mrb[0].mxu0
        %v3586 = vadd.f32 0.0, %v3585
        %v3587 = vpop.f32.mrb[0].mxu0
        %3588 = vmatprep.mubr.f32.mxu0 0.0
        %3589 = vmatmul.mubr.f32.gmra.mrb[0].mxu0 %v2702
        %v3590 = vpop.f32.mrb[0].mxu0
        %v3591 = vadd.f32 0.0, %v3590
        %v3592 = vpop.f32.mrb[0].mxu0
        %3593 = vmatprep.mubr.f32.mxu0 0.0
        %3594 = vmatmul.mubr.f32.gmra.mrb[0].mxu0 %v2703
        %v3595 = vpop.f32.mrb[0].mxu0
        %v3596 = vpop.f32.mrb[0].mxu0
        %3597 = vmatprep.mubr.f32.mxu0 0.0
        %3598 = vmatmul.mubr.f32.gmra.mrb[0].mxu0 %v2704
        %v3599 = vpop.f32.mrb[0].mxu0
        %v3600 = vadd.f32 0.0, %v3599
        %v3601 = vpop.f32.mrb[0].mxu0
        %3602 = vmatprep.mubr.f32.mxu0 0.0
        %3603 = vmatmul.mubr.f32.gmra.mrb[0].mxu0 %v2705
        %v3604 = vpop.f32.mrb[0].mxu0
        %v3605 = vadd.f32 0.0, %v3604
        %v3606 = vpop.f32.mrb[0].mxu0
        %3607 = vmatprep.mubr.f32.mxu0 0.0
        %3608 = vmatmul.mubr.f32.gmra.mrb[0].mxu0 %v2706
        %v3609 = vpop.f32.mrb[0].mxu0
        %v3610 = vpop.f32.mrb[0].mxu0
        %3611 = vmatprep.mubr.f32.mxu0 0.0
        %3612 = vmatmul.mubr.f32.gmra.mrb[0].mxu0 %v2707
        %v3613 = vpop.f32.mrb[0].mxu0
        %v3614 = vadd.f32 0.0, %v3613
        %v3615 = vpop.f32.mrb[0].mxu0
        %3616 = vmatprep.mubr.f32.mxu0 0.0
        %3617 = vmatmul.mubr.f32.gmra.mrb[0].mxu0 %v2708
        %v3618 = vpop.f32.mrb[0].mxu0
        %v3619 = vadd.f32 0.0, %v3618
        %v3620 = vpop.f32.mrb[0].mxu0
        %3621 = vmatprep.mubr.f32.mxu0 0.0
        %3622 = vmatmul.mubr.f32.gmra.mrb[0].mxu0 %v2709
        %v3623 = vpop.f32.mrb[0].mxu0
        %v3624 = vpop.f32.mrb[0].mxu0
        %3625 = vmatprep.mubr.f32.mxu0 0.0
        %3626 = vmatmul.mubr.f32.gmra.mrb[0].mxu0 %v2710
        %v3627 = vpop.f32.mrb[0].mxu0
        %v3628 = vadd.f32 0.0, %v3627
        %v3629 = vpop.f32.mrb[0].mxu0
        %3630 = vmatprep.mubr.f32.mxu0 0.0
        %3631 = vmatmul.mubr.f32.gmra.mrb[0].mxu0 %v2711
        %v3632 = vpop.f32.mrb[0].mxu0
        %v3633 = vadd.f32 0.0, %v3632
        %v3634 = vpop.f32.mrb[0].mxu0
        %3635 = vmatprep.mubr.f32.mxu0 0.0
        %3636 = vmatmul.mubr.f32.gmra.mrb[0].mxu0 %v2712
        %v3637 = vpop.f32.mrb[0].mxu0
        %v3638 = vpop.f32.mrb[0].mxu0
        %3639 = vmatprep.mubr.f32.mxu0 0.0
        %3640 = vmatmul.mubr.f32.gmra.mrb[0].mxu0 %v2713
        %v3641 = vpop.f32.mrb[0].mxu0
        %v3642 = vadd.f32 0.0, %v3641
        %v3643 = vpop.f32.mrb[0].mxu0
        %3644 = vmatprep.mubr.f32.mxu0 0.0
        %3645 = vmatmul.mubr.f32.gmra.mrb[0].mxu0 %v2714
        %v3646 = vpop.f32.mrb[0].mxu0
        %v3647 = vadd.f32 0.0, %v3646
        %v3648 = vpop.f32.mrb[0].mxu0
        %3649 = vmatprep.mubr.f32.mxu0 0.0
        %3650 = vmatmul.mubr.f32.gmra.mrb[0].mxu0 %v2715
        %v3651 = vpop.f32.mrb[0].mxu0
        %v3652 = vpop.f32.mrb[0].mxu0
        %3653 = vmatprep.mubr.f32.mxu0 0.0
        %3654 = vmatmul.mubr.f32.gmra.mrb[0].mxu0 %v2716
        %v3655 = vpop.f32.mrb[0].mxu0
        %v3656 = vadd.f32 0.0, %v3655
        %v3657 = vpop.f32.mrb[0].mxu0
        %3658 = vmatprep.mubr.f32.mxu0 0.0
        %3659 = vmatmul.mubr.f32.gmra.mrb[0].mxu0 %v2717
        %v3660 = vpop.f32.mrb[0].mxu0
        %v3661 = vadd.f32 0.0, %v3660
        %v3662 = vpop.f32.mrb[0].mxu0
        %3663 = vmatprep.mubr.f32.mxu0 0.0
        %3664 = vmatmul.mubr.f32.gmra.mrb[0].mxu0 %v2718
        %v3665 = vpop.f32.mrb[0].mxu0
        %v3666 = vpop.f32.mrb[0].mxu0
        %3667 = vmatprep.mubr.f32.mxu0 0.0
        %3668 = vmatmul.mubr.f32.gmra.mrb[0].mxu0 %v2719
        %v3669 = vpop.f32.mrb[0].mxu0
        %v3670 = vadd.f32 0.0, %v3669
        %v3671 = vpop.f32.mrb[0].mxu0
        %3672 = vmatprep.mubr.f32.mxu0 0.0
        %3673 = vmatmul.mubr.f32.gmra.mrb[0].mxu0 %v2720
        %v3674 = vpop.f32.mrb[0].mxu0
        %v3675 = vadd.f32 0.0, %v3674
        %v3676 = vpop.f32.mrb[0].mxu0
        %3677 = vmatprep.mubr.f32.mxu0 0.0
        %3678 = vmatmul.mubr.f32.gmra.mrb[0].mxu0 %v2721
        %v3679 = vpop.f32.mrb[0].mxu0
        %v3680 = vpop.f32.mrb[0].mxu0
        %3681 = vmatprep.mubr.f32.mxu0 0.0
        %3682 = vmatmul.mubr.f32.gmra.mrb[0].mxu0 %v2722
        %v3683 = vpop.f32.mrb[0].mxu0
        %v3684 = vadd.f32 0.0, %v3683
        %v3685 = vpop.f32.mrb[0].mxu0
        %3686 = vmatprep.mubr.f32.mxu0 0.0
        %3687 = vmatmul.mubr.f32.gmra.mrb[0].mxu0 %v2723
        %v3688 = vpop.f32.mrb[0].mxu0
        %v3689 = vadd.f32 0.0, %v3688
        %v3690 = vpop.f32.mrb[0].mxu0
        %3691 = vmatprep.mubr.f32.mxu0 0.0
        %3692 = vmatmul.mubr.f32.gmra.mrb[0].mxu0 %v2724
        %v3693 = vpop.f32.mrb[0].mxu0
        %v3694 = vpop.f32.mrb[0].mxu0
        %3695 = vmatprep.mubr.f32.mxu0 0.0
        %3696 = vmatmul.mubr.f32.gmra.mrb[0].mxu0 %v2725
        %v3697 = vpop.f32.mrb[0].mxu0
        %v3698 = vadd.f32 0.0, %v3697
        %v3699 = vpop.f32.mrb[0].mxu0
        %3700 = vmatprep.mubr.f32.mxu0 0.0
        %3701 = vmatmul.mubr.f32.gmra.mrb[0].mxu0 %v2726
        %v3702 = vpop.f32.mrb[0].mxu0
        %v3703 = vadd.f32 0.0, %v3702
        %v3704 = vpop.f32.mrb[0].mxu0
        %3705 = vmatprep.mubr.f32.mxu0 0.0
        %3706 = vmatmul.mubr.f32.gmra.mrb[0].mxu0 %v2727
        %v3707 = vpop.f32.mrb[0].mxu0
        %v3708 = vpop.f32.mrb[0].mxu0
        %3709 = vdwg.mxu0
        %v3710 = vadd.f32 %v3372, %v3488
        %v3711 = vadd.f32 %v3373, %v3493
        %v3712 = vadd.f32 %v3374, %v3502
        %v3713 = vadd.f32 %v3375, %v3507
        %v3714 = vadd.f32 %v3376, %v3516
        %v3715 = vadd.f32 %v3377, %v3521
        %v3716 = vadd.f32 %v3378, %v3530
        %v3717 = vadd.f32 %v3379, %v3535
        %v3718 = vadd.f32 %v3380, %v3544
        %v3719 = vadd.f32 %v3381, %v3549
        %v3720 = vadd.f32 %v3382, %v3558
        %v3721 = vadd.f32 %v3383, %v3563
        %v3722 = vadd.f32 %v3384, %v3572
        %v3723 = vadd.f32 %v3385, %v3577
        %v3724 = vadd.f32 %v3386, %v3586
        %v3725 = vadd.f32 %v3387, %v3591
        %v3726 = vadd.f32 %v3388, %v3600
        %v3727 = vadd.f32 %v3389, %v3605
        %v3728 = vadd.f32 %v3390, %v3614
        %v3729 = vadd.f32 %v3391, %v3619
        %v3730 = vadd.f32 %v3392, %v3628
        %v3731 = vadd.f32 %v3393, %v3633
        %v3732 = vadd.f32 %v3394, %v3642
        %v3733 = vadd.f32 %v3395, %v3647
        %v3734 = vadd.f32 %v3396, %v3656
        %v3735 = vadd.f32 %v3397, %v3661
        %v3736 = vadd.f32 %v3398, %v3670
        %v3737 = vadd.f32 %v3399, %v3675
        %v3738 = vadd.f32 %v3400, %v3684
        %v3739 = vadd.f32 %v3401, %v3689
        %v3740 = vadd.f32 %v3402, %v3698
        %v3741 = vadd.f32 %v3403, %v3703
        %v3742 = vld [vmem:[%s2] sm:$0x1]
        %v3744 = vlaneseq
        %v3745 = vshrl.u32 %v3744, 7
        %v3746 = vsub.s32 0, %v3745
        %v3747 = vrot.slane %v3742, %v3746
        %v3749 = vadd.f32 %v3710, %v3747
        %v3750 = vadd.f32 %v3711, %v3747
        %v3751 = vadd.f32 %v3712, %v3747
        %v3752 = vadd.f32 %v3713, %v3747
        %v3753 = vadd.f32 %v3714, %v3747
        %v3754 = vadd.f32 %v3715, %v3747
        %v3755 = vadd.f32 %v3716, %v3747
        %v3756 = vadd.f32 %v3717, %v3747
        %v3757 = vadd.f32 %v3718, %v3747
        %v3758 = vadd.f32 %v3719, %v3747
        %v3759 = vadd.f32 %v3720, %v3747
        %v3760 = vadd.f32 %v3721, %v3747
        %v3761 = vadd.f32 %v3722, %v3747
        %v3762 = vadd.f32 %v3723, %v3747
        %v3763 = vadd.f32 %v3724, %v3747
        %v3764 = vadd.f32 %v3725, %v3747
        %v3765 = vadd.f32 %v3726, %v3747
        %v3766 = vadd.f32 %v3727, %v3747
        %v3767 = vadd.f32 %v3728, %v3747
        %v3768 = vadd.f32 %v3729, %v3747
        %v3769 = vadd.f32 %v3730, %v3747
        %v3770 = vadd.f32 %v3731, %v3747
        %v3771 = vadd.f32 %v3732, %v3747
        %v3772 = vadd.f32 %v3733, %v3747
        %v3773 = vadd.f32 %v3734, %v3747
        %v3774 = vadd.f32 %v3735, %v3747
        %v3775 = vadd.f32 %v3736, %v3747
        %v3776 = vadd.f32 %v3737, %v3747
        %v3777 = vadd.f32 %v3738, %v3747
        %v3778 = vadd.f32 %v3739, %v3747
        %v3779 = vadd.f32 %v3740, %v3747
        %v3780 = vadd.f32 %v3741, %v3747
        %v3781 = vadd.f32 %v3749, %v3750
        %v3782 = vadd.f32 %v3781, %v3751
        %v3783 = vadd.f32 %v3782, %v3752
        %v3784 = vadd.f32 %v3783, %v3753
        %v3785 = vadd.f32 %v3784, %v3754
        %v3786 = vadd.f32 %v3785, %v3755
        %v3787 = vadd.f32 %v3786, %v3756
        %v3788 = vadd.f32 %v3787, %v3757
        %v3789 = vadd.f32 %v3788, %v3758
        %v3790 = vadd.f32 %v3789, %v3759
        %v3791 = vadd.f32 %v3790, %v3760
        %v3792 = vadd.f32 %v3791, %v3761
        %v3793 = vadd.f32 %v3792, %v3762
        %v3794 = vadd.f32 %v3793, %v3763
        %v3795 = vadd.f32 %v3794, %v3764
        %v3796 = vadd.f32 %v3795, %v3765
        %v3797 = vadd.f32 %v3796, %v3766
        %v3798 = vadd.f32 %v3797, %v3767
        %v3799 = vadd.f32 %v3798, %v3768
        %v3800 = vadd.f32 %v3799, %v3769
        %v3801 = vadd.f32 %v3800, %v3770
        %v3802 = vadd.f32 %v3801, %v3771
        %v3803 = vadd.f32 %v3802, %v3772
        %v3804 = vadd.f32 %v3803, %v3773
        %v3805 = vadd.f32 %v3804, %v3774
        %v3806 = vadd.f32 %v3805, %v3775
        %v3807 = vadd.f32 %v3806, %v3776
        %v3808 = vadd.f32 %v3807, %v3777
        %v3809 = vadd.f32 %v3808, %v3778
        %v3810 = vadd.f32 %v3809, %v3779
        %v3811 = vadd.f32 %v3810, %v3780
        %v3812 = vrot.slane %v3811, 4
        %v3813 = vadd.f32 %v3811, %v3812
        %v3814 = vrot.slane %v3813, 2
        %v3815 = vadd.f32 %v3813, %v3814
        %v3816 = vrot.slane %v3815, 1
        %v3817 = vadd.f32 %v3815, %v3816
        %v3818 = vmul.f32 %v3817, 0.00390625
        %v3819 = vsub.f32 %v3749, %v3818
        %v3820 = vsub.f32 %v3750, %v3818
        %v3821 = vsub.f32 %v3751, %v3818
        %v3822 = vsub.f32 %v3752, %v3818
        %v3823 = vsub.f32 %v3753, %v3818
        %v3824 = vsub.f32 %v3754, %v3818
        %v3825 = vsub.f32 %v3755, %v3818
        %v3826 = vsub.f32 %v3756, %v3818
        %v3827 = vsub.f32 %v3757, %v3818
        %v3828 = vsub.f32 %v3758, %v3818
        %v3829 = vsub.f32 %v3759, %v3818
        %v3830 = vsub.f32 %v3760, %v3818
        %v3831 = vsub.f32 %v3761, %v3818
        %v3832 = vsub.f32 %v3762, %v3818
        %v3833 = vsub.f32 %v3763, %v3818
        %v3834 = vsub.f32 %v3764, %v3818
        %v3835 = vsub.f32 %v3765, %v3818
        %v3836 = vsub.f32 %v3766, %v3818
        %v3837 = vsub.f32 %v3767, %v3818
        %v3838 = vsub.f32 %v3768, %v3818
        %v3839 = vsub.f32 %v3769, %v3818
        %v3840 = vsub.f32 %v3770, %v3818
        %v3841 = vsub.f32 %v3771, %v3818
        %v3842 = vsub.f32 %v3772, %v3818
        %v3843 = vsub.f32 %v3773, %v3818
        %v3844 = vsub.f32 %v3774, %v3818
        %v3845 = vsub.f32 %v3775, %v3818
        %v3846 = vsub.f32 %v3776, %v3818
        %v3847 = vsub.f32 %v3777, %v3818
        %v3848 = vsub.f32 %v3778, %v3818
        %v3849 = vsub.f32 %v3779, %v3818
        %v3850 = vsub.f32 %v3780, %v3818
        %v3851 = vmul.f32 %v3819, %v3819
        %v3852 = vmul.f32 %v3820, %v3820
        %v3853 = vmul.f32 %v3821, %v3821
        %v3854 = vmul.f32 %v3822, %v3822
        %v3855 = vmul.f32 %v3823, %v3823
        %v3856 = vmul.f32 %v3824, %v3824
        %v3857 = vmul.f32 %v3825, %v3825
        %v3858 = vmul.f32 %v3826, %v3826
        %v3859 = vmul.f32 %v3827, %v3827
        %v3860 = vmul.f32 %v3828, %v3828
        %v3861 = vmul.f32 %v3829, %v3829
        %v3862 = vmul.f32 %v3830, %v3830
        %v3863 = vmul.f32 %v3831, %v3831
        %v3864 = vmul.f32 %v3832, %v3832
        %v3865 = vmul.f32 %v3833, %v3833
        %v3866 = vmul.f32 %v3834, %v3834
        %v3867 = vmul.f32 %v3835, %v3835
        %v3868 = vmul.f32 %v3836, %v3836
        %v3869 = vmul.f32 %v3837, %v3837
        %v3870 = vmul.f32 %v3838, %v3838
        %v3871 = vmul.f32 %v3839, %v3839
        %v3872 = vmul.f32 %v3840, %v3840
        %v3873 = vmul.f32 %v3841, %v3841
        %v3874 = vmul.f32 %v3842, %v3842
        %v3875 = vmul.f32 %v3843, %v3843
        %v3876 = vmul.f32 %v3844, %v3844
        %v3877 = vmul.f32 %v3845, %v3845
        %v3878 = vmul.f32 %v3846, %v3846
        %v3879 = vmul.f32 %v3847, %v3847
        %v3880 = vmul.f32 %v3848, %v3848
        %v3881 = vmul.f32 %v3849, %v3849
        %v3882 = vmul.f32 %v3850, %v3850
        %v3883 = vadd.f32 %v3851, %v3852
        %v3884 = vadd.f32 %v3883, %v3853
        %v3885 = vadd.f32 %v3884, %v3854
        %v3886 = vadd.f32 %v3885, %v3855
        %v3887 = vadd.f32 %v3886, %v3856
        %v3888 = vadd.f32 %v3887, %v3857
        %v3889 = vadd.f32 %v3888, %v3858
        %v3890 = vadd.f32 %v3889, %v3859
        %v3891 = vadd.f32 %v3890, %v3860
        %v3892 = vadd.f32 %v3891, %v3861
        %v3893 = vadd.f32 %v3892, %v3862
        %v3894 = vadd.f32 %v3893, %v3863
        %v3895 = vadd.f32 %v3894, %v3864
        %v3896 = vadd.f32 %v3895, %v3865
        %v3897 = vadd.f32 %v3896, %v3866
        %v3898 = vadd.f32 %v3897, %v3867
        %v3899 = vadd.f32 %v3898, %v3868
        %v3900 = vadd.f32 %v3899, %v3869
        %v3901 = vadd.f32 %v3900, %v3870
        %v3902 = vadd.f32 %v3901, %v3871
        %v3903 = vadd.f32 %v3902, %v3872
        %v3904 = vadd.f32 %v3903, %v3873
        %v3905 = vadd.f32 %v3904, %v3874
        %v3906 = vadd.f32 %v3905, %v3875
        %v3907 = vadd.f32 %v3906, %v3876
        %v3908 = vadd.f32 %v3907, %v3877
        %v3909 = vadd.f32 %v3908, %v3878
        %v3910 = vadd.f32 %v3909, %v3879
        %v3911 = vadd.f32 %v3910, %v3880
        %v3912 = vadd.f32 %v3911, %v3881
        %v3913 = vadd.f32 %v3912, %v3882
        %v3914 = vrot.slane %v3913, 4
        %v3915 = vadd.f32 %v3913, %v3914
        %v3916 = vrot.slane %v3915, 2
        %v3917 = vadd.f32 %v3915, %v3916
        %v3918 = vrot.slane %v3917, 1
        %v3919 = vadd.f32 %v3917, %v3918
        %v3920 = vmul.f32 %v3919, 0.00390625
        %v3921 = vadd.f32 %v3920, 1e-05
        %v3922 = vrsqrt.pop %v3921
        %v3923 = vmul.f32 %v3819, %v3922
        %v3924 = vmul.f32 %v3820, %v3922
        %v3925 = vmul.f32 %v3821, %v3922
        %v3926 = vmul.f32 %v3822, %v3922
        %v3927 = vmul.f32 %v3823, %v3922
        %v3928 = vmul.f32 %v3824, %v3922
        %v3929 = vmul.f32 %v3825, %v3922
        %v3930 = vmul.f32 %v3826, %v3922
        %v3931 = vmul.f32 %v3827, %v3922
        %v3932 = vmul.f32 %v3828, %v3922
        %v3933 = vmul.f32 %v3829, %v3922
        %v3934 = vmul.f32 %v3830, %v3922
        %v3935 = vmul.f32 %v3831, %v3922
        %v3936 = vmul.f32 %v3832, %v3922
        %v3937 = vmul.f32 %v3833, %v3922
        %v3938 = vmul.f32 %v3834, %v3922
        %v3939 = vmul.f32 %v3835, %v3922
        %v3940 = vmul.f32 %v3836, %v3922
        %v3941 = vmul.f32 %v3837, %v3922
        %v3942 = vmul.f32 %v3838, %v3922
        %v3943 = vmul.f32 %v3839, %v3922
        %v3944 = vmul.f32 %v3840, %v3922
        %v3945 = vmul.f32 %v3841, %v3922
        %v3946 = vmul.f32 %v3842, %v3922
        %v3947 = vmul.f32 %v3843, %v3922
        %v3948 = vmul.f32 %v3844, %v3922
        %v3949 = vmul.f32 %v3845, %v3922
        %v3950 = vmul.f32 %v3846, %v3922
        %v3951 = vmul.f32 %v3847, %v3922
        %v3952 = vmul.f32 %v3848, %v3922
        %v3953 = vmul.f32 %v3849, %v3922
        %v3954 = vmul.f32 %v3850, %v3922
        %v3955 = vmax.f32 %v3923, 0.0
        %v3956 = vmax.f32 %v3924, 0.0
        %v3957 = vmax.f32 %v3925, 0.0
        %v3958 = vmax.f32 %v3926, 0.0
        %v3959 = vmax.f32 %v3927, 0.0
        %v3960 = vmax.f32 %v3928, 0.0
        %v3961 = vmax.f32 %v3929, 0.0
        %v3962 = vmax.f32 %v3930, 0.0
        %v3963 = vmax.f32 %v3931, 0.0
        %v3964 = vmax.f32 %v3932, 0.0
        %v3965 = vmax.f32 %v3933, 0.0
        %v3966 = vmax.f32 %v3934, 0.0
        %v3967 = vmax.f32 %v3935, 0.0
        %v3968 = vmax.f32 %v3936, 0.0
        %v3969 = vmax.f32 %v3937, 0.0
        %v3970 = vmax.f32 %v3938, 0.0
        %v3971 = vmax.f32 %v3939, 0.0
        %v3972 = vmax.f32 %v3940, 0.0
        %v3973 = vmax.f32 %v3941, 0.0
        %v3974 = vmax.f32 %v3942, 0.0
        %v3975 = vmax.f32 %v3943, 0.0
        %v3976 = vmax.f32 %v3944, 0.0
        %v3977 = vmax.f32 %v3945, 0.0
        %v3978 = vmax.f32 %v3946, 0.0
        %v3979 = vmax.f32 %v3947, 0.0
        %v3980 = vmax.f32 %v3948, 0.0
        %v3981 = vmax.f32 %v3949, 0.0
        %v3982 = vmax.f32 %v3950, 0.0
        %v3983 = vmax.f32 %v3951, 0.0
        %v3984 = vmax.f32 %v3952, 0.0
        %v3985 = vmax.f32 %v3953, 0.0
        %v3986 = vmax.f32 %v3954, 0.0
        %v4003 = vrot.slane %v3955, 1
        %v4004 = vrot.slane %v3957, 1
        %v4005 = vrot.slane %v3959, 1
        %v4006 = vrot.slane %v3961, 1
        %v4007 = vrot.slane %v3963, 1
        %v4008 = vrot.slane %v3965, 1
        %v4009 = vrot.slane %v3967, 1
        %v4010 = vrot.slane %v3969, 1
        %v4011 = vrot.slane %v3971, 1
        %v4012 = vrot.slane %v3973, 1
        %v4013 = vrot.slane %v3975, 1
        %v4014 = vrot.slane %v3977, 1
        %v4015 = vrot.slane %v3979, 1
        %v4016 = vrot.slane %v3981, 1
        %v4017 = vrot.slane %v3983, 1
        %v4018 = vrot.slane %v3985, 1
        %v4051 = vrot.slane %v3955, 7
        %v4052 = vrot.slane %v3956, 7
        %v4053 = vsel %vm371, %v4051, %v4052
        %v4054 = vrot.slane %v3957, 7
        %v4055 = vrot.slane %v3958, 7
        %v4056 = vsel %vm371, %v4054, %v4055
        %v4057 = vrot.slane %v3959, 7
        %v4058 = vrot.slane %v3960, 7
        %v4059 = vsel %vm371, %v4057, %v4058
        %v4060 = vrot.slane %v3961, 7
        %v4061 = vrot.slane %v3962, 7
        %v4062 = vsel %vm371, %v4060, %v4061
        %v4063 = vrot.slane %v3963, 7
        %v4064 = vrot.slane %v3964, 7
        %v4065 = vsel %vm371, %v4063, %v4064
        %v4066 = vrot.slane %v3965, 7
        %v4067 = vrot.slane %v3966, 7
        %v4068 = vsel %vm371, %v4066, %v4067
        %v4069 = vrot.slane %v3967, 7
        %v4070 = vrot.slane %v3968, 7
        %v4071 = vsel %vm371, %v4069, %v4070
        %v4072 = vrot.slane %v3969, 7
        %v4073 = vrot.slane %v3970, 7
        %v4074 = vsel %vm371, %v4072, %v4073
        %v4075 = vrot.slane %v3971, 7
        %v4076 = vrot.slane %v3972, 7
        %v4077 = vsel %vm371, %v4075, %v4076
        %v4078 = vrot.slane %v3973, 7
        %v4079 = vrot.slane %v3974, 7
        %v4080 = vsel %vm371, %v4078, %v4079
        %v4081 = vrot.slane %v3975, 7
        %v4082 = vrot.slane %v3976, 7
        %v4083 = vsel %vm371, %v4081, %v4082
        %v4084 = vrot.slane %v3977, 7
        %v4085 = vrot.slane %v3978, 7
        %v4086 = vsel %vm371, %v4084, %v4085
        %v4087 = vrot.slane %v3979, 7
        %v4088 = vrot.slane %v3980, 7
        %v4089 = vsel %vm371, %v4087, %v4088
        %v4090 = vrot.slane %v3981, 7
        %v4091 = vrot.slane %v3982, 7
        %v4092 = vsel %vm371, %v4090, %v4091
        %v4093 = vrot.slane %v3983, 7
        %v4094 = vrot.slane %v3984, 7
        %v4095 = vsel %vm371, %v4093, %v4094
        %v4096 = vrot.slane %v3985, 7
        %v4097 = vrot.slane %v3986, 7
        %v4098 = vsel %vm371, %v4096, %v4097
        %v4147 = vrot.slane %v3956, 5
        %v4148 = vrot.slane %v3958, 5
        %v4149 = vrot.slane %v3960, 5
        %v4150 = vrot.slane %v3962, 5
        %v4151 = vrot.slane %v3964, 5
        %v4152 = vrot.slane %v3966, 5
        %v4153 = vrot.slane %v3968, 5
        %v4154 = vrot.slane %v3970, 5
        %v4155 = vrot.slane %v3972, 5
        %v4156 = vrot.slane %v3974, 5
        %v4157 = vrot.slane %v3976, 5
        %v4158 = vrot.slane %v3978, 5
        %v4159 = vrot.slane %v3980, 5
        %v4160 = vrot.slane %v3982, 5
        %v4161 = vrot.slane %v3984, 5
        %v4162 = vrot.slane %v3986, 5
        %v4179 = vsel %vm371, %v4003, %v4051
        %v4180 = vsel %vm371, %v4004, %v4054
        %v4181 = vsel %vm371, %v4005, %v4057
        %v4182 = vsel %vm371, %v4006, %v4060
        %v4183 = vsel %vm371, %v4007, %v4063
        %v4184 = vsel %vm371, %v4008, %v4066
        %v4185 = vsel %vm371, %v4009, %v4069
        %v4186 = vsel %vm371, %v4010, %v4072
        %v4187 = vsel %vm371, %v4011, %v4075
        %v4188 = vsel %vm371, %v4012, %v4078
        %v4189 = vsel %vm371, %v4013, %v4081
        %v4190 = vsel %vm371, %v4014, %v4084
        %v4191 = vsel %vm371, %v4015, %v4087
        %v4192 = vsel %vm371, %v4016, %v4090
        %v4193 = vsel %vm371, %v4017, %v4093
        %v4194 = vsel %vm371, %v4018, %v4096
        %v4195 = vsel %vm371, %v4052, %v4147
        %v4196 = vsel %vm371, %v4055, %v4148
        %v4197 = vsel %vm371, %v4058, %v4149
        %v4198 = vsel %vm371, %v4061, %v4150
        %v4199 = vsel %vm371, %v4064, %v4151
        %v4200 = vsel %vm371, %v4067, %v4152
        %v4201 = vsel %vm371, %v4070, %v4153
        %v4202 = vsel %vm371, %v4073, %v4154
        %v4203 = vsel %vm371, %v4076, %v4155
        %v4204 = vsel %vm371, %v4079, %v4156
        %v4205 = vsel %vm371, %v4082, %v4157
        %v4206 = vsel %vm371, %v4085, %v4158
        %v4207 = vsel %vm371, %v4088, %v4159
        %v4208 = vsel %vm371, %v4091, %v4160
        %v4209 = vsel %vm371, %v4094, %v4161
        %v4210 = vsel %vm371, %v4097, %v4162
        %v4211 = vsel %vm532, %v4195, 0.0
        %v4212 = vsel %vm532, %v4196, 0.0
        %v4213 = vsel %vm532, %v4197, 0.0
        %v4214 = vsel %vm532, %v4198, 0.0
        %v4215 = vsel %vm532, %v4199, 0.0
        %v4216 = vsel %vm532, %v4200, 0.0
        %v4217 = vsel %vm532, %v4201, 0.0
        %v4218 = vsel %vm532, %v4202, 0.0
        %v4219 = vsel %vm532, %v4203, 0.0
        %v4220 = vsel %vm532, %v4204, 0.0
        %v4221 = vsel %vm532, %v4205, 0.0
        %v4222 = vsel %vm532, %v4206, 0.0
        %v4223 = vsel %vm532, %v4207, 0.0
        %v4224 = vsel %vm532, %v4208, 0.0
        %v4225 = vsel %vm532, %v4209, 0.0
        %v4226 = vsel %vm532, %v4210, 0.0
        %4227 = vst [vmem:[#allocation2 + $0x18] sm:$0xff] %v4179
        %4228 = vst [vmem:[#allocation2 + $0x20] sm:$0xff] %v4053
        %4229 = vst [vmem:[#allocation2 + $0x28] sm:$0xff] %v4211
        %4230 = vst [vmem:[#allocation2 + $0x30] sm:$0xff] %v4180
        %4231 = vst [vmem:[#allocation2 + $0x38] sm:$0xff] %v4056
        %4232 = vst [vmem:[#allocation2 + $0x40] sm:$0xff] %v4212
        %4233 = vst [vmem:[#allocation2 + $0x48] sm:$0xff] %v4181
        %4234 = vst [vmem:[#allocation2 + $0x50] sm:$0xff] %v4059
        %4235 = vst [vmem:[#allocation2 + $0x58] sm:$0xff] %v4213
        %4236 = vst [vmem:[#allocation2 + $0x60] sm:$0xff] %v4182
        %4237 = vst [vmem:[#allocation2 + $0x68] sm:$0xff] %v4062
        %4238 = vst [vmem:[#allocation2 + $0x70] sm:$0xff] %v4214
        %4239 = vst [vmem:[#allocation2 + $0x78] sm:$0xff] %v4183
        %4240 = vst [vmem:[#allocation2 + $0x80] sm:$0xff] %v4065
        %4241 = vst [vmem:[#allocation2 + $0x88] sm:$0xff] %v4215
        %4242 = vst [vmem:[#allocation2 + $0x90] sm:$0xff] %v4184
        %4243 = vst [vmem:[#allocation2 + $0x98] sm:$0xff] %v4068
        %4244 = vst [vmem:[#allocation2 + $0xa0] sm:$0xff] %v4216
        %4245 = vst [vmem:[#allocation2 + $0xa8] sm:$0xff] %v4185
        %4246 = vst [vmem:[#allocation2 + $0xb0] sm:$0xff] %v4071
        %4247 = vst [vmem:[#allocation2 + $0xb8] sm:$0xff] %v4217
        %4248 = vst [vmem:[#allocation2 + $0xc0] sm:$0xff] %v4186
        %4249 = vst [vmem:[#allocation2 + $0xc8] sm:$0xff] %v4074
        %4250 = vst [vmem:[#allocation2 + $0xd0] sm:$0xff] %v4218
        %4251 = vst [vmem:[#allocation2 + $0xd8] sm:$0xff] %v4187
        %4252 = vst [vmem:[#allocation2 + $0xe0] sm:$0xff] %v4077
        %4253 = vst [vmem:[#allocation2 + $0xe8] sm:$0xff] %v4219
        %4254 = vst [vmem:[#allocation2 + $0xf0] sm:$0xff] %v4188
        %4255 = vst [vmem:[#allocation2 + $0xf8] sm:$0xff] %v4080
        %4256 = vst [vmem:[#allocation2 + $0x100] sm:$0xff] %v4220
        %4257 = vst [vmem:[#allocation2 + $0x108] sm:$0xff] %v4189
        %4258 = vst [vmem:[#allocation2 + $0x110] sm:$0xff] %v4083
        %4259 = vst [vmem:[#allocation2 + $0x118] sm:$0xff] %v4221
        %4260 = vst [vmem:[#allocation2 + $0x120] sm:$0xff] %v4190
        %4261 = vst [vmem:[#allocation2 + $0x128] sm:$0xff] %v4086
        %4262 = vst [vmem:[#allocation2 + $0x130] sm:$0xff] %v4222
        %4263 = vst [vmem:[#allocation2 + $0x138] sm:$0xff] %v4191
        %4264 = vst [vmem:[#allocation2 + $0x140] sm:$0xff] %v4089
        %4265 = vst [vmem:[#allocation2 + $0x148] sm:$0xff] %v4223
        %4266 = vst [vmem:[#allocation2 + $0x150] sm:$0xff] %v4192
        %4267 = vst [vmem:[#allocation2 + $0x158] sm:$0xff] %v4092
        %4268 = vst [vmem:[#allocation2 + $0x160] sm:$0xff] %v4224
        %4269 = vst [vmem:[#allocation2 + $0x168] sm:$0xff] %v4193
        %4270 = vst [vmem:[#allocation2 + $0x170] sm:$0xff] %v4095
        %4271 = vst [vmem:[#allocation2 + $0x178] sm:$0xff] %v4225
        %4272 = vst [vmem:[#allocation2 + $0x180] sm:$0xff] %v4194
        %4273 = vst [vmem:[#allocation2 + $0x188] sm:$0xff] %v4098
        %4274 = vst [vmem:[#allocation2 + $0x190] sm:$0xff] %v4226
        %4275 = vst [vmem:[#allocation2] sm:$0xff] %v4180
        %4276 = vst [vmem:[#allocation2 + $0x8] sm:$0xff] %v4056
        %4277 = vst [vmem:[#allocation2 + $0x10] sm:$0xff] %v4212
        %4278 = vst [vmem:[#allocation2 + $0x198] sm:$0xff] %v4193
        %4279 = vst [vmem:[#allocation2 + $0x1a0] sm:$0xff] %v4095
        %4280 = vst [vmem:[#allocation2 + $0x1a8] sm:$0xff] %v4225
        %v4281 = vld [vmem:[#allocation2] sm:$0xff]
        %v4282 = vld [vmem:[#allocation2 + $0x8] sm:$0xff]
        %v4283 = vld [vmem:[#allocation2 + $0x10] sm:$0xff]
        %v4284 = vld [vmem:[#allocation2 + $0x18] sm:$0xff]
        %v4285 = vld [vmem:[#allocation2 + $0x20] sm:$0xff]
        %v4286 = vld [vmem:[#allocation2 + $0x28] sm:$0xff]
        %v4287 = vld [vmem:[#allocation2 + $0x30] sm:$0xff]
        %v4288 = vld [vmem:[#allocation2 + $0x38] sm:$0xff]
        %v4289 = vld [vmem:[#allocation2 + $0x40] sm:$0xff]
        %v4290 = vld [vmem:[#allocation2 + $0x48] sm:$0xff]
        %v4291 = vld [vmem:[#allocation2 + $0x50] sm:$0xff]
        %v4292 = vld [vmem:[#allocation2 + $0x58] sm:$0xff]
        %v4293 = vld [vmem:[#allocation2 + $0x60] sm:$0xff]
        %v4294 = vld [vmem:[#allocation2 + $0x68] sm:$0xff]
        %v4295 = vld [vmem:[#allocation2 + $0x70] sm:$0xff]
        %v4296 = vld [vmem:[#allocation2 + $0x78] sm:$0xff]
        %v4297 = vld [vmem:[#allocation2 + $0x80] sm:$0xff]
        %v4298 = vld [vmem:[#allocation2 + $0x88] sm:$0xff]
        %v4299 = vld [vmem:[#allocation2 + $0x90] sm:$0xff]
        %v4300 = vld [vmem:[#allocation2 + $0x98] sm:$0xff]
        %v4301 = vld [vmem:[#allocation2 + $0xa0] sm:$0xff]
        %v4302 = vld [vmem:[#allocation2 + $0xa8] sm:$0xff]
        %v4303 = vld [vmem:[#allocation2 + $0xb0] sm:$0xff]
        %v4304 = vld [vmem:[#allocation2 + $0xb8] sm:$0xff]
        %v4305 = vld [vmem:[#allocation2 + $0xc0] sm:$0xff]
        %v4306 = vld [vmem:[#allocation2 + $0xc8] sm:$0xff]
        %v4307 = vld [vmem:[#allocation2 + $0xd0] sm:$0xff]
        %v4308 = vld [vmem:[#allocation2 + $0xd8] sm:$0xff]
        %v4309 = vld [vmem:[#allocation2 + $0xe0] sm:$0xff]
        %v4310 = vld [vmem:[#allocation2 + $0xe8] sm:$0xff]
        %v4311 = vld [vmem:[#allocation2 + $0xf0] sm:$0xff]
        %v4312 = vld [vmem:[#allocation2 + $0xf8] sm:$0xff]
        %v4313 = vld [vmem:[#allocation2 + $0x100] sm:$0xff]
        %v4314 = vld [vmem:[#allocation2 + $0x108] sm:$0xff]
        %v4315 = vld [vmem:[#allocation2 + $0x110] sm:$0xff]
        %v4316 = vld [vmem:[#allocation2 + $0x118] sm:$0xff]
        %v4317 = vld [vmem:[#allocation2 + $0x120] sm:$0xff]
        %v4318 = vld [vmem:[#allocation2 + $0x128] sm:$0xff]
        %v4319 = vld [vmem:[#allocation2 + $0x130] sm:$0xff]
        %v4320 = vld [vmem:[#allocation2 + $0x138] sm:$0xff]
        %v4321 = vld [vmem:[#allocation2 + $0x140] sm:$0xff]
        %v4322 = vld [vmem:[#allocation2 + $0x148] sm:$0xff]
        %v4323 = vld [vmem:[#allocation2 + $0x150] sm:$0xff]
        %v4324 = vld [vmem:[#allocation2 + $0x158] sm:$0xff]
        %v4325 = vld [vmem:[#allocation2 + $0x160] sm:$0xff]
        %v4326 = vld [vmem:[#allocation2 + $0x168] sm:$0xff]
        %v4327 = vld [vmem:[#allocation2 + $0x170] sm:$0xff]
        %v4328 = vld [vmem:[#allocation2 + $0x178] sm:$0xff]
        %v4329 = vld [vmem:[#allocation2 + $0x180] sm:$0xff]
        %v4330 = vld [vmem:[#allocation2 + $0x188] sm:$0xff]
        %v4331 = vld [vmem:[#allocation2 + $0x190] sm:$0xff]
        %v4332 = vld [vmem:[#allocation2 + $0x198] sm:$0xff]
        %v4333 = vld [vmem:[#allocation2 + $0x1a0] sm:$0xff]
        %v4334 = vld [vmem:[#allocation2 + $0x1a8] sm:$0xff]
        %v4335 = vld [vmem:[#allocation8] sm:$0xff]
        %v4336 = vld [vmem:[#allocation8 + $0x8] sm:$0xff]
        %v4337 = vld [vmem:[#allocation8 + $0x10] sm:$0xff]
        %v4338 = vld [vmem:[#allocation8 + $0x18] sm:$0xff]
        %v4339 = vld [vmem:[#allocation8 + $0x20] sm:$0xff]
        %v4340 = vld [vmem:[#allocation8 + $0x28] sm:$0xff]
        %v4341 = vld [vmem:[#allocation8 + $0x30] sm:$0xff]
        %v4342 = vld [vmem:[#allocation8 + $0x38] sm:$0xff]
        %v4343 = vld [vmem:[#allocation8 + $0x40] sm:$0xff]
        %v4344 = vld [vmem:[#allocation8 + $0x48] sm:$0xff]
        %v4345 = vld [vmem:[#allocation8 + $0x50] sm:$0xff]
        %v4346 = vld [vmem:[#allocation8 + $0x58] sm:$0xff]
        %v4347 = vld [vmem:[#allocation8 + $0x60] sm:$0xff]
        %v4348 = vld [vmem:[#allocation8 + $0x68] sm:$0xff]
        %v4349 = vld [vmem:[#allocation8 + $0x70] sm:$0xff]
        %v4350 = vld [vmem:[#allocation8 + $0x78] sm:$0xff]
        %s4351 = scalar_lea.vmem [#allocation8], 384
        %v4352 = vld [vmem:[%s4351] sm:$0xff]
        %v4353 = vld [vmem:[%s4351 + $0x8] sm:$0xff]
        %v4354 = vld [vmem:[%s4351 + $0x10] sm:$0xff]
        %v4355 = vld [vmem:[%s4351 + $0x18] sm:$0xff]
        %v4356 = vld [vmem:[%s4351 + $0x20] sm:$0xff]
        %v4357 = vld [vmem:[%s4351 + $0x28] sm:$0xff]
        %v4358 = vld [vmem:[%s4351 + $0x30] sm:$0xff]
        %v4359 = vld [vmem:[%s4351 + $0x38] sm:$0xff]
        %v4360 = vld [vmem:[%s4351 + $0x40] sm:$0xff]
        %v4361 = vld [vmem:[%s4351 + $0x48] sm:$0xff]
        %v4362 = vld [vmem:[%s4351 + $0x50] sm:$0xff]
        %v4363 = vld [vmem:[%s4351 + $0x58] sm:$0xff]
        %v4364 = vld [vmem:[%s4351 + $0x60] sm:$0xff]
        %v4365 = vld [vmem:[%s4351 + $0x68] sm:$0xff]
        %v4366 = vld [vmem:[%s4351 + $0x70] sm:$0xff]
        %v4367 = vld [vmem:[%s4351 + $0x78] sm:$0xff]
        %4368 = vmatprep.subr.mxu0 0.0
        %4369 = vmatpush1.msra.mxu0 %v4352
        %4370 = vmatprep.subr.mxu0 0.0
        %4371 = vmatpush1.msra.mxu0 %v4353
        %4372 = vmatprep.subr.mxu0 0.0
        %4373 = vmatpush1.msra.mxu0 %v4354
        %4374 = vmatprep.subr.mxu0 0.0
        %4375 = vmatpush1.msra.mxu0 %v4355
        %4376 = vmatprep.subr.mxu0 0.0
        %4377 = vmatpush1.msra.mxu0 %v4356
        %4378 = vmatprep.subr.mxu0 0.0
        %4379 = vmatpush1.msra.mxu0 %v4357
        %4380 = vmatprep.subr.mxu0 0.0
        %4381 = vmatpush1.msra.mxu0 %v4358
        %4382 = vmatprep.subr.mxu0 0.0
        %4383 = vmatpush1.msra.mxu0 %v4359
        %4384 = vmatprep.subr.mxu0 0.0
        %4385 = vmatpush1.msra.mxu0 %v4360
        %4386 = vmatprep.subr.mxu0 0.0
        %4387 = vmatpush1.msra.mxu0 %v4361
        %4388 = vmatprep.subr.mxu0 0.0
        %4389 = vmatpush1.msra.mxu0 %v4362
        %4390 = vmatprep.subr.mxu0 0.0
        %4391 = vmatpush1.msra.mxu0 %v4363
        %4392 = vmatprep.subr.mxu0 0.0
        %4393 = vmatpush1.msra.mxu0 %v4364
        %4394 = vmatprep.subr.mxu0 0.0
        %4395 = vmatpush1.msra.mxu0 %v4365
        %4396 = vmatprep.subr.mxu0 0.0
        %4397 = vmatpush1.msra.mxu0 %v4366
        %4398 = vmatprep.subr.mxu0 0.0
        %4399 = vmatpush1.msra.mxu0 %v4367
        %4400 = vmatprep.subr.mxu0 0.0
        %4401 = vmatpush1.msra.mxu0 0.0
        %4402 = vmatprep.subr.mxu0 0.0
        %4403 = vmatpush1.msra.mxu0 0.0
        %4404 = vmatprep.subr.mxu0 0.0
        %4405 = vmatpush1.msra.mxu0 0.0
        %4406 = vmatprep.subr.mxu0 0.0
        %4407 = vmatpush1.msra.mxu0 0.0
        %4408 = vmatprep.subr.mxu0 0.0
        %4409 = vmatpush1.msra.mxu0 0.0
        %4410 = vmatprep.subr.mxu0 0.0
        %4411 = vmatpush1.msra.mxu0 0.0
        %4412 = vmatprep.subr.mxu0 0.0
        %4413 = vmatpush1.msra.mxu0 0.0
        %4414 = vmatprep.subr.mxu0 0.0
        %4415 = vmatpush1.msra.mxu0 0.0
        %4416 = vmatprep.subr.mxu0 0.0
        %4417 = vmatpush1.msra.mxu0 0.0
        %4418 = vmatprep.subr.mxu0 0.0
        %4419 = vmatpush1.msra.mxu0 0.0
        %4420 = vmatprep.subr.mxu0 0.0
        %4421 = vmatpush1.msra.mxu0 0.0
        %4422 = vmatprep.subr.mxu0 0.0
        %4423 = vmatpush1.msra.mxu0 0.0
        %4424 = vmatprep.subr.mxu0 0.0
        %4425 = vmatpush1.msra.mxu0 0.0
        %4426 = vmatprep.subr.mxu0 0.0
        %4427 = vmatpush1.msra.mxu0 0.0
        %4428 = vmatprep.subr.mxu0 0.0
        %4429 = vmatpush1.msra.mxu0 0.0
        %4430 = vmatprep.subr.mxu0 0.0
        %4431 = vmatpush1.msra.mxu0 0.0
        %4432 = vmatprep.mubr.f32.mxu0 0.0
        %4433 = vmatmul.mubr.f32.gmra.mrb[0].mxu0 %v4284
        %v4434 = vpop.f32.mrb[0].mxu0
        %v4435 = vadd.f32 0.0, %v4434
        %v4436 = vpop.f32.mrb[0].mxu0
        %4437 = vmatprep.mubr.f32.mxu0 0.0
        %4438 = vmatmul.mubr.f32.gmra.mrb[0].mxu0 %v4285
        %v4439 = vpop.f32.mrb[0].mxu0
        %v4440 = vadd.f32 0.0, %v4439
        %v4441 = vpop.f32.mrb[0].mxu0
        %4442 = vmatprep.mubr.f32.mxu0 0.0
        %4443 = vmatmul.mubr.f32.gmra.mrb[0].mxu0 %v4286
        %v4444 = vpop.f32.mrb[0].mxu0
        %v4445 = vpop.f32.mrb[0].mxu0
        %4446 = vmatprep.mubr.f32.mxu0 0.0
        %4447 = vmatmul.mubr.f32.gmra.mrb[0].mxu0 %v4287
        %v4448 = vpop.f32.mrb[0].mxu0
        %v4449 = vadd.f32 0.0, %v4448
        %v4450 = vpop.f32.mrb[0].mxu0
        %4451 = vmatprep.mubr.f32.mxu0 0.0
        %4452 = vmatmul.mubr.f32.gmra.mrb[0].mxu0 %v4288
        %v4453 = vpop.f32.mrb[0].mxu0
        %v4454 = vadd.f32 0.0, %v4453
        %v4455 = vpop.f32.mrb[0].mxu0
        %4456 = vmatprep.mubr.f32.mxu0 0.0
        %4457 = vmatmul.mubr.f32.gmra.mrb[0].mxu0 %v4289
        %v4458 = vpop.f32.mrb[0].mxu0
        %v4459 = vpop.f32.mrb[0].mxu0
        %4460 = vmatprep.mubr.f32.mxu0 0.0
        %4461 = vmatmul.mubr.f32.gmra.mrb[0].mxu0 %v4290
        %v4462 = vpop.f32.mrb[0].mxu0
        %v4463 = vadd.f32 0.0, %v4462
        %v4464 = vpop.f32.mrb[0].mxu0
        %4465 = vmatprep.mubr.f32.mxu0 0.0
        %4466 = vmatmul.mubr.f32.gmra.mrb[0].mxu0 %v4291
        %v4467 = vpop.f32.mrb[0].mxu0
        %v4468 = vadd.f32 0.0, %v4467
        %v4469 = vpop.f32.mrb[0].mxu0
        %4470 = vmatprep.mubr.f32.mxu0 0.0
        %4471 = vmatmul.mubr.f32.gmra.mrb[0].mxu0 %v4292
        %v4472 = vpop.f32.mrb[0].mxu0
        %v4473 = vpop.f32.mrb[0].mxu0
        %4474 = vmatprep.mubr.f32.mxu0 0.0
        %4475 = vmatmul.mubr.f32.gmra.mrb[0].mxu0 %v4293
        %v4476 = vpop.f32.mrb[0].mxu0
        %v4477 = vadd.f32 0.0, %v4476
        %v4478 = vpop.f32.mrb[0].mxu0
        %4479 = vmatprep.mubr.f32.mxu0 0.0
        %4480 = vmatmul.mubr.f32.gmra.mrb[0].mxu0 %v4294
        %v4481 = vpop.f32.mrb[0].mxu0
        %v4482 = vadd.f32 0.0, %v4481
        %v4483 = vpop.f32.mrb[0].mxu0
        %4484 = vmatprep.mubr.f32.mxu0 0.0
        %4485 = vmatmul.mubr.f32.gmra.mrb[0].mxu0 %v4295
        %v4486 = vpop.f32.mrb[0].mxu0
        %v4487 = vpop.f32.mrb[0].mxu0
        %4488 = vmatprep.mubr.f32.mxu0 0.0
        %4489 = vmatmul.mubr.f32.gmra.mrb[0].mxu0 %v4296
        %v4490 = vpop.f32.mrb[0].mxu0
        %v4491 = vadd.f32 0.0, %v4490
        %v4492 = vpop.f32.mrb[0].mxu0
        %4493 = vmatprep.mubr.f32.mxu0 0.0
        %4494 = vmatmul.mubr.f32.gmra.mrb[0].mxu0 %v4297
        %v4495 = vpop.f32.mrb[0].mxu0
        %v4496 = vadd.f32 0.0, %v4495
        %v4497 = vpop.f32.mrb[0].mxu0
        %4498 = vmatprep.mubr.f32.mxu0 0.0
        %4499 = vmatmul.mubr.f32.gmra.mrb[0].mxu0 %v4298
        %v4500 = vpop.f32.mrb[0].mxu0
        %v4501 = vpop.f32.mrb[0].mxu0
        %4502 = vmatprep.mubr.f32.mxu0 0.0
        %4503 = vmatmul.mubr.f32.gmra.mrb[0].mxu0 %v4299
        %v4504 = vpop.f32.mrb[0].mxu0
        %v4505 = vadd.f32 0.0, %v4504
        %v4506 = vpop.f32.mrb[0].mxu0
        %4507 = vmatprep.mubr.f32.mxu0 0.0
        %4508 = vmatmul.mubr.f32.gmra.mrb[0].mxu0 %v4300
        %v4509 = vpop.f32.mrb[0].mxu0
        %v4510 = vadd.f32 0.0, %v4509
        %v4511 = vpop.f32.mrb[0].mxu0
        %4512 = vmatprep.mubr.f32.mxu0 0.0
        %4513 = vmatmul.mubr.f32.gmra.mrb[0].mxu0 %v4301
        %v4514 = vpop.f32.mrb[0].mxu0
        %v4515 = vpop.f32.mrb[0].mxu0
        %4516 = vmatprep.mubr.f32.mxu0 0.0
        %4517 = vmatmul.mubr.f32.gmra.mrb[0].mxu0 %v4302
        %v4518 = vpop.f32.mrb[0].mxu0
        %v4519 = vadd.f32 0.0, %v4518
        %v4520 = vpop.f32.mrb[0].mxu0
        %4521 = vmatprep.mubr.f32.mxu0 0.0
        %4522 = vmatmul.mubr.f32.gmra.mrb[0].mxu0 %v4303
        %v4523 = vpop.f32.mrb[0].mxu0
        %v4524 = vadd.f32 0.0, %v4523
        %v4525 = vpop.f32.mrb[0].mxu0
        %4526 = vmatprep.mubr.f32.mxu0 0.0
        %4527 = vmatmul.mubr.f32.gmra.mrb[0].mxu0 %v4304
        %v4528 = vpop.f32.mrb[0].mxu0
        %v4529 = vpop.f32.mrb[0].mxu0
        %4530 = vmatprep.mubr.f32.mxu0 0.0
        %4531 = vmatmul.mubr.f32.gmra.mrb[0].mxu0 %v4305
        %v4532 = vpop.f32.mrb[0].mxu0
        %v4533 = vadd.f32 0.0, %v4532
        %v4534 = vpop.f32.mrb[0].mxu0
        %4535 = vmatprep.mubr.f32.mxu0 0.0
        %4536 = vmatmul.mubr.f32.gmra.mrb[0].mxu0 %v4306
        %v4537 = vpop.f32.mrb[0].mxu0
        %v4538 = vadd.f32 0.0, %v4537
        %v4539 = vpop.f32.mrb[0].mxu0
        %4540 = vmatprep.mubr.f32.mxu0 0.0
        %4541 = vmatmul.mubr.f32.gmra.mrb[0].mxu0 %v4307
        %v4542 = vpop.f32.mrb[0].mxu0
        %v4543 = vpop.f32.mrb[0].mxu0
        %4544 = vmatprep.mubr.f32.mxu0 0.0
        %4545 = vmatmul.mubr.f32.gmra.mrb[0].mxu0 %v4308
        %v4546 = vpop.f32.mrb[0].mxu0
        %v4547 = vadd.f32 0.0, %v4546
        %v4548 = vpop.f32.mrb[0].mxu0
        %4549 = vmatprep.mubr.f32.mxu0 0.0
        %4550 = vmatmul.mubr.f32.gmra.mrb[0].mxu0 %v4309
        %v4551 = vpop.f32.mrb[0].mxu0
        %v4552 = vadd.f32 0.0, %v4551
        %v4553 = vpop.f32.mrb[0].mxu0
        %4554 = vmatprep.mubr.f32.mxu0 0.0
        %4555 = vmatmul.mubr.f32.gmra.mrb[0].mxu0 %v4310
        %v4556 = vpop.f32.mrb[0].mxu0
        %v4557 = vpop.f32.mrb[0].mxu0
        %4558 = vmatprep.mubr.f32.mxu0 0.0
        %4559 = vmatmul.mubr.f32.gmra.mrb[0].mxu0 %v4311
        %v4560 = vpop.f32.mrb[0].mxu0
        %v4561 = vadd.f32 0.0, %v4560
        %v4562 = vpop.f32.mrb[0].mxu0
        %4563 = vmatprep.mubr.f32.mxu0 0.0
        %4564 = vmatmul.mubr.f32.gmra.mrb[0].mxu0 %v4312
        %v4565 = vpop.f32.mrb[0].mxu0
        %v4566 = vadd.f32 0.0, %v4565
        %v4567 = vpop.f32.mrb[0].mxu0
        %4568 = vmatprep.mubr.f32.mxu0 0.0
        %4569 = vmatmul.mubr.f32.gmra.mrb[0].mxu0 %v4313
        %v4570 = vpop.f32.mrb[0].mxu0
        %v4571 = vpop.f32.mrb[0].mxu0
        %4572 = vmatprep.mubr.f32.mxu0 0.0
        %4573 = vmatmul.mubr.f32.gmra.mrb[0].mxu0 %v4314
        %v4574 = vpop.f32.mrb[0].mxu0
        %v4575 = vadd.f32 0.0, %v4574
        %v4576 = vpop.f32.mrb[0].mxu0
        %4577 = vmatprep.mubr.f32.mxu0 0.0
        %4578 = vmatmul.mubr.f32.gmra.mrb[0].mxu0 %v4315
        %v4579 = vpop.f32.mrb[0].mxu0
        %v4580 = vadd.f32 0.0, %v4579
        %v4581 = vpop.f32.mrb[0].mxu0
        %4582 = vmatprep.mubr.f32.mxu0 0.0
        %4583 = vmatmul.mubr.f32.gmra.mrb[0].mxu0 %v4316
        %v4584 = vpop.f32.mrb[0].mxu0
        %v4585 = vpop.f32.mrb[0].mxu0
        %4586 = vmatprep.mubr.f32.mxu0 0.0
        %4587 = vmatmul.mubr.f32.gmra.mrb[0].mxu0 %v4317
        %v4588 = vpop.f32.mrb[0].mxu0
        %v4589 = vadd.f32 0.0, %v4588
        %v4590 = vpop.f32.mrb[0].mxu0
        %4591 = vmatprep.mubr.f32.mxu0 0.0
        %4592 = vmatmul.mubr.f32.gmra.mrb[0].mxu0 %v4318
        %v4593 = vpop.f32.mrb[0].mxu0
        %v4594 = vadd.f32 0.0, %v4593
        %v4595 = vpop.f32.mrb[0].mxu0
        %4596 = vmatprep.mubr.f32.mxu0 0.0
        %4597 = vmatmul.mubr.f32.gmra.mrb[0].mxu0 %v4319
        %v4598 = vpop.f32.mrb[0].mxu0
        %v4599 = vpop.f32.mrb[0].mxu0
        %4600 = vmatprep.mubr.f32.mxu0 0.0
        %4601 = vmatmul.mubr.f32.gmra.mrb[0].mxu0 %v4320
        %v4602 = vpop.f32.mrb[0].mxu0
        %v4603 = vadd.f32 0.0, %v4602
        %v4604 = vpop.f32.mrb[0].mxu0
        %4605 = vmatprep.mubr.f32.mxu0 0.0
        %4606 = vmatmul.mubr.f32.gmra.mrb[0].mxu0 %v4321
        %v4607 = vpop.f32.mrb[0].mxu0
        %v4608 = vadd.f32 0.0, %v4607
        %v4609 = vpop.f32.mrb[0].mxu0
        %4610 = vmatprep.mubr.f32.mxu0 0.0
        %4611 = vmatmul.mubr.f32.gmra.mrb[0].mxu0 %v4322
        %v4612 = vpop.f32.mrb[0].mxu0
        %v4613 = vpop.f32.mrb[0].mxu0
        %4614 = vmatprep.mubr.f32.mxu0 0.0
        %4615 = vmatmul.mubr.f32.gmra.mrb[0].mxu0 %v4323
        %v4616 = vpop.f32.mrb[0].mxu0
        %v4617 = vadd.f32 0.0, %v4616
        %v4618 = vpop.f32.mrb[0].mxu0
        %4619 = vmatprep.mubr.f32.mxu0 0.0
        %4620 = vmatmul.mubr.f32.gmra.mrb[0].mxu0 %v4324
        %v4621 = vpop.f32.mrb[0].mxu0
        %v4622 = vadd.f32 0.0, %v4621
        %v4623 = vpop.f32.mrb[0].mxu0
        %4624 = vmatprep.mubr.f32.mxu0 0.0
        %4625 = vmatmul.mubr.f32.gmra.mrb[0].mxu0 %v4325
        %v4626 = vpop.f32.mrb[0].mxu0
        %v4627 = vpop.f32.mrb[0].mxu0
        %4628 = vmatprep.mubr.f32.mxu0 0.0
        %4629 = vmatmul.mubr.f32.gmra.mrb[0].mxu0 %v4326
        %v4630 = vpop.f32.mrb[0].mxu0
        %v4631 = vadd.f32 0.0, %v4630
        %v4632 = vpop.f32.mrb[0].mxu0
        %4633 = vmatprep.mubr.f32.mxu0 0.0
        %4634 = vmatmul.mubr.f32.gmra.mrb[0].mxu0 %v4327
        %v4635 = vpop.f32.mrb[0].mxu0
        %v4636 = vadd.f32 0.0, %v4635
        %v4637 = vpop.f32.mrb[0].mxu0
        %4638 = vmatprep.mubr.f32.mxu0 0.0
        %4639 = vmatmul.mubr.f32.gmra.mrb[0].mxu0 %v4328
        %v4640 = vpop.f32.mrb[0].mxu0
        %v4641 = vpop.f32.mrb[0].mxu0
        %4642 = vmatprep.mubr.f32.mxu0 0.0
        %4643 = vmatmul.mubr.f32.gmra.mrb[0].mxu0 %v4329
        %v4644 = vpop.f32.mrb[0].mxu0
        %v4645 = vadd.f32 0.0, %v4644
        %v4646 = vpop.f32.mrb[0].mxu0
        %4647 = vmatprep.mubr.f32.mxu0 0.0
        %4648 = vmatmul.mubr.f32.gmra.mrb[0].mxu0 %v4330
        %v4649 = vpop.f32.mrb[0].mxu0
        %v4650 = vadd.f32 0.0, %v4649
        %v4651 = vpop.f32.mrb[0].mxu0
        %4652 = vmatprep.mubr.f32.mxu0 0.0
        %4653 = vmatmul.mubr.f32.gmra.mrb[0].mxu0 %v4331
        %v4654 = vpop.f32.mrb[0].mxu0
        %v4655 = vpop.f32.mrb[0].mxu0
        %4656 = vdwg.mxu0
        %4657 = vmatprep.subr.mxu0 0.0
        %4658 = vmatpush1.msra.mxu0 %v4335
        %4659 = vmatprep.subr.mxu0 0.0
        %4660 = vmatpush1.msra.mxu0 %v4336
        %4661 = vmatprep.subr.mxu0 0.0
        %4662 = vmatpush1.msra.mxu0 %v4337
        %4663 = vmatprep.subr.mxu0 0.0
        %4664 = vmatpush1.msra.mxu0 %v4338
        %4665 = vmatprep.subr.mxu0 0.0
        %4666 = vmatpush1.msra.mxu0 %v4339
        %4667 = vmatprep.subr.mxu0 0.0
        %4668 = vmatpush1.msra.mxu0 %v4340
        %4669 = vmatprep.subr.mxu0 0.0
        %4670 = vmatpush1.msra.mxu0 %v4341
        %4671 = vmatprep.subr.mxu0 0.0
        %4672 = vmatpush1.msra.mxu0 %v4342
        %4673 = vmatprep.subr.mxu0 0.0
        %4674 = vmatpush1.msra.mxu0 %v4343
        %4675 = vmatprep.subr.mxu0 0.0
        %4676 = vmatpush1.msra.mxu0 %v4344
        %4677 = vmatprep.subr.mxu0 0.0
        %4678 = vmatpush1.msra.mxu0 %v4345
        %4679 = vmatprep.subr.mxu0 0.0
        %4680 = vmatpush1.msra.mxu0 %v4346
        %4681 = vmatprep.subr.mxu0 0.0
        %4682 = vmatpush1.msra.mxu0 %v4347
        %4683 = vmatprep.subr.mxu0 0.0
        %4684 = vmatpush1.msra.mxu0 %v4348
        %4685 = vmatprep.subr.mxu0 0.0
        %4686 = vmatpush1.msra.mxu0 %v4349
        %4687 = vmatprep.subr.mxu0 0.0
        %4688 = vmatpush1.msra.mxu0 %v4350
        %4689 = vmatprep.subr.mxu0 0.0
        %4690 = vmatpush1.msra.mxu0 0.0
        %4691 = vmatprep.subr.mxu0 0.0
        %4692 = vmatpush1.msra.mxu0 0.0
        %4693 = vmatprep.subr.mxu0 0.0
        %4694 = vmatpush1.msra.mxu0 0.0
        %4695 = vmatprep.subr.mxu0 0.0
        %4696 = vmatpush1.msra.mxu0 0.0
        %4697 = vmatprep.subr.mxu0 0.0
        %4698 = vmatpush1.msra.mxu0 0.0
        %4699 = vmatprep.subr.mxu0 0.0
        %4700 = vmatpush1.msra.mxu0 0.0
        %4701 = vmatprep.subr.mxu0 0.0
        %4702 = vmatpush1.msra.mxu0 0.0
        %4703 = vmatprep.subr.mxu0 0.0
        %4704 = vmatpush1.msra.mxu0 0.0
        %4705 = vmatprep.subr.mxu0 0.0
        %4706 = vmatpush1.msra.mxu0 0.0
        %4707 = vmatprep.subr.mxu0 0.0
        %4708 = vmatpush1.msra.mxu0 0.0
        %4709 = vmatprep.subr.mxu0 0.0
        %4710 = vmatpush1.msra.mxu0 0.0
        %4711 = vmatprep.subr.mxu0 0.0
        %4712 = vmatpush1.msra.mxu0 0.0
        %4713 = vmatprep.subr.mxu0 0.0
        %4714 = vmatpush1.msra.mxu0 0.0
        %4715 = vmatprep.subr.mxu0 0.0
        %4716 = vmatpush1.msra.mxu0 0.0
        %4717 = vmatprep.subr.mxu0 0.0
        %4718 = vmatpush1.msra.mxu0 0.0
        %4719 = vmatprep.subr.mxu0 0.0
        %4720 = vmatpush1.msra.mxu0 0.0
        %4721 = vmatprep.mubr.f32.mxu0 0.0
        %4722 = vmatmul.mubr.f32.gmra.mrb[0].mxu0 %v4281
        %v4723 = vpop.f32.mrb[0].mxu0
        %v4724 = vadd.f32 %v4435, %v4723
        %v4725 = vpop.f32.mrb[0].mxu0
        %4726 = vmatprep.mubr.f32.mxu0 0.0
        %4727 = vmatmul.mubr.f32.gmra.mrb[0].mxu0 %v4282
        %v4728 = vpop.f32.mrb[0].mxu0
        %v4729 = vadd.f32 %v4440, %v4728
        %v4730 = vpop.f32.mrb[0].mxu0
        %4731 = vmatprep.mubr.f32.mxu0 0.0
        %4732 = vmatmul.mubr.f32.gmra.mrb[0].mxu0 %v4283
        %v4733 = vpop.f32.mrb[0].mxu0
        %v4734 = vpop.f32.mrb[0].mxu0
        %4735 = vmatprep.mubr.f32.mxu0 0.0
        %4736 = vmatmul.mubr.f32.gmra.mrb[0].mxu0 %v4284
        %v4737 = vpop.f32.mrb[0].mxu0
        %v4738 = vadd.f32 %v4449, %v4737
        %v4739 = vpop.f32.mrb[0].mxu0
        %4740 = vmatprep.mubr.f32.mxu0 0.0
        %4741 = vmatmul.mubr.f32.gmra.mrb[0].mxu0 %v4285
        %v4742 = vpop.f32.mrb[0].mxu0
        %v4743 = vadd.f32 %v4454, %v4742
        %v4744 = vpop.f32.mrb[0].mxu0
        %4745 = vmatprep.mubr.f32.mxu0 0.0
        %4746 = vmatmul.mubr.f32.gmra.mrb[0].mxu0 %v4286
        %v4747 = vpop.f32.mrb[0].mxu0
        %v4748 = vpop.f32.mrb[0].mxu0
        %4749 = vmatprep.mubr.f32.mxu0 0.0
        %4750 = vmatmul.mubr.f32.gmra.mrb[0].mxu0 %v4287
        %v4751 = vpop.f32.mrb[0].mxu0
        %v4752 = vadd.f32 %v4463, %v4751
        %v4753 = vpop.f32.mrb[0].mxu0
        %4754 = vmatprep.mubr.f32.mxu0 0.0
        %4755 = vmatmul.mubr.f32.gmra.mrb[0].mxu0 %v4288
        %v4756 = vpop.f32.mrb[0].mxu0
        %v4757 = vadd.f32 %v4468, %v4756
        %v4758 = vpop.f32.mrb[0].mxu0
        %4759 = vmatprep.mubr.f32.mxu0 0.0
        %4760 = vmatmul.mubr.f32.gmra.mrb[0].mxu0 %v4289
        %v4761 = vpop.f32.mrb[0].mxu0
        %v4762 = vpop.f32.mrb[0].mxu0
        %4763 = vmatprep.mubr.f32.mxu0 0.0
        %4764 = vmatmul.mubr.f32.gmra.mrb[0].mxu0 %v4290
        %v4765 = vpop.f32.mrb[0].mxu0
        %v4766 = vadd.f32 %v4477, %v4765
        %v4767 = vpop.f32.mrb[0].mxu0
        %4768 = vmatprep.mubr.f32.mxu0 0.0
        %4769 = vmatmul.mubr.f32.gmra.mrb[0].mxu0 %v4291
        %v4770 = vpop.f32.mrb[0].mxu0
        %v4771 = vadd.f32 %v4482, %v4770
        %v4772 = vpop.f32.mrb[0].mxu0
        %4773 = vmatprep.mubr.f32.mxu0 0.0
        %4774 = vmatmul.mubr.f32.gmra.mrb[0].mxu0 %v4292
        %v4775 = vpop.f32.mrb[0].mxu0
        %v4776 = vpop.f32.mrb[0].mxu0
        %4777 = vmatprep.mubr.f32.mxu0 0.0
        %4778 = vmatmul.mubr.f32.gmra.mrb[0].mxu0 %v4293
        %v4779 = vpop.f32.mrb[0].mxu0
        %v4780 = vadd.f32 %v4491, %v4779
        %v4781 = vpop.f32.mrb[0].mxu0
        %4782 = vmatprep.mubr.f32.mxu0 0.0
        %4783 = vmatmul.mubr.f32.gmra.mrb[0].mxu0 %v4294
        %v4784 = vpop.f32.mrb[0].mxu0
        %v4785 = vadd.f32 %v4496, %v4784
        %v4786 = vpop.f32.mrb[0].mxu0
        %4787 = vmatprep.mubr.f32.mxu0 0.0
        %4788 = vmatmul.mubr.f32.gmra.mrb[0].mxu0 %v4295
        %v4789 = vpop.f32.mrb[0].mxu0
        %v4790 = vpop.f32.mrb[0].mxu0
        %4791 = vmatprep.mubr.f32.mxu0 0.0
        %4792 = vmatmul.mubr.f32.gmra.mrb[0].mxu0 %v4296
        %v4793 = vpop.f32.mrb[0].mxu0
        %v4794 = vadd.f32 %v4505, %v4793
        %v4795 = vpop.f32.mrb[0].mxu0
        %4796 = vmatprep.mubr.f32.mxu0 0.0
        %4797 = vmatmul.mubr.f32.gmra.mrb[0].mxu0 %v4297
        %v4798 = vpop.f32.mrb[0].mxu0
        %v4799 = vadd.f32 %v4510, %v4798
        %v4800 = vpop.f32.mrb[0].mxu0
        %4801 = vmatprep.mubr.f32.mxu0 0.0
        %4802 = vmatmul.mubr.f32.gmra.mrb[0].mxu0 %v4298
        %v4803 = vpop.f32.mrb[0].mxu0
        %v4804 = vpop.f32.mrb[0].mxu0
        %4805 = vmatprep.mubr.f32.mxu0 0.0
        %4806 = vmatmul.mubr.f32.gmra.mrb[0].mxu0 %v4299
        %v4807 = vpop.f32.mrb[0].mxu0
        %v4808 = vadd.f32 %v4519, %v4807
        %v4809 = vpop.f32.mrb[0].mxu0
        %4810 = vmatprep.mubr.f32.mxu0 0.0
        %4811 = vmatmul.mubr.f32.gmra.mrb[0].mxu0 %v4300
        %v4812 = vpop.f32.mrb[0].mxu0
        %v4813 = vadd.f32 %v4524, %v4812
        %v4814 = vpop.f32.mrb[0].mxu0
        %4815 = vmatprep.mubr.f32.mxu0 0.0
        %4816 = vmatmul.mubr.f32.gmra.mrb[0].mxu0 %v4301
        %v4817 = vpop.f32.mrb[0].mxu0
        %v4818 = vpop.f32.mrb[0].mxu0
        %4819 = vmatprep.mubr.f32.mxu0 0.0
        %4820 = vmatmul.mubr.f32.gmra.mrb[0].mxu0 %v4302
        %v4821 = vpop.f32.mrb[0].mxu0
        %v4822 = vadd.f32 %v4533, %v4821
        %v4823 = vpop.f32.mrb[0].mxu0
        %4824 = vmatprep.mubr.f32.mxu0 0.0
        %4825 = vmatmul.mubr.f32.gmra.mrb[0].mxu0 %v4303
        %v4826 = vpop.f32.mrb[0].mxu0
        %v4827 = vadd.f32 %v4538, %v4826
        %v4828 = vpop.f32.mrb[0].mxu0
        %4829 = vmatprep.mubr.f32.mxu0 0.0
        %4830 = vmatmul.mubr.f32.gmra.mrb[0].mxu0 %v4304
        %v4831 = vpop.f32.mrb[0].mxu0
        %v4832 = vpop.f32.mrb[0].mxu0
        %4833 = vmatprep.mubr.f32.mxu0 0.0
        %4834 = vmatmul.mubr.f32.gmra.mrb[0].mxu0 %v4305
        %v4835 = vpop.f32.mrb[0].mxu0
        %v4836 = vadd.f32 %v4547, %v4835
        %v4837 = vpop.f32.mrb[0].mxu0
        %4838 = vmatprep.mubr.f32.mxu0 0.0
        %4839 = vmatmul.mubr.f32.gmra.mrb[0].mxu0 %v4306
        %v4840 = vpop.f32.mrb[0].mxu0
        %v4841 = vadd.f32 %v4552, %v4840
        %v4842 = vpop.f32.mrb[0].mxu0
        %4843 = vmatprep.mubr.f32.mxu0 0.0
        %4844 = vmatmul.mubr.f32.gmra.mrb[0].mxu0 %v4307
        %v4845 = vpop.f32.mrb[0].mxu0
        %v4846 = vpop.f32.mrb[0].mxu0
        %4847 = vmatprep.mubr.f32.mxu0 0.0
        %4848 = vmatmul.mubr.f32.gmra.mrb[0].mxu0 %v4308
        %v4849 = vpop.f32.mrb[0].mxu0
        %v4850 = vadd.f32 %v4561, %v4849
        %v4851 = vpop.f32.mrb[0].mxu0
        %4852 = vmatprep.mubr.f32.mxu0 0.0
        %4853 = vmatmul.mubr.f32.gmra.mrb[0].mxu0 %v4309
        %v4854 = vpop.f32.mrb[0].mxu0
        %v4855 = vadd.f32 %v4566, %v4854
        %v4856 = vpop.f32.mrb[0].mxu0
        %4857 = vmatprep.mubr.f32.mxu0 0.0
        %4858 = vmatmul.mubr.f32.gmra.mrb[0].mxu0 %v4310
        %v4859 = vpop.f32.mrb[0].mxu0
        %v4860 = vpop.f32.mrb[0].mxu0
        %4861 = vmatprep.mubr.f32.mxu0 0.0
        %4862 = vmatmul.mubr.f32.gmra.mrb[0].mxu0 %v4311
        %v4863 = vpop.f32.mrb[0].mxu0
        %v4864 = vadd.f32 %v4575, %v4863
        %v4865 = vpop.f32.mrb[0].mxu0
        %4866 = vmatprep.mubr.f32.mxu0 0.0
        %4867 = vmatmul.mubr.f32.gmra.mrb[0].mxu0 %v4312
        %v4868 = vpop.f32.mrb[0].mxu0
        %v4869 = vadd.f32 %v4580, %v4868
        %v4870 = vpop.f32.mrb[0].mxu0
        %4871 = vmatprep.mubr.f32.mxu0 0.0
        %4872 = vmatmul.mubr.f32.gmra.mrb[0].mxu0 %v4313
        %v4873 = vpop.f32.mrb[0].mxu0
        %v4874 = vpop.f32.mrb[0].mxu0
        %4875 = vmatprep.mubr.f32.mxu0 0.0
        %4876 = vmatmul.mubr.f32.gmra.mrb[0].mxu0 %v4314
        %v4877 = vpop.f32.mrb[0].mxu0
        %v4878 = vadd.f32 %v4589, %v4877
        %v4879 = vpop.f32.mrb[0].mxu0
        %4880 = vmatprep.mubr.f32.mxu0 0.0
        %4881 = vmatmul.mubr.f32.gmra.mrb[0].mxu0 %v4315
        %v4882 = vpop.f32.mrb[0].mxu0
        %v4883 = vadd.f32 %v4594, %v4882
        %v4884 = vpop.f32.mrb[0].mxu0
        %4885 = vmatprep.mubr.f32.mxu0 0.0
        %4886 = vmatmul.mubr.f32.gmra.mrb[0].mxu0 %v4316
        %v4887 = vpop.f32.mrb[0].mxu0
        %v4888 = vpop.f32.mrb[0].mxu0
        %4889 = vmatprep.mubr.f32.mxu0 0.0
        %4890 = vmatmul.mubr.f32.gmra.mrb[0].mxu0 %v4317
        %v4891 = vpop.f32.mrb[0].mxu0
        %v4892 = vadd.f32 %v4603, %v4891
        %v4893 = vpop.f32.mrb[0].mxu0
        %4894 = vmatprep.mubr.f32.mxu0 0.0
        %4895 = vmatmul.mubr.f32.gmra.mrb[0].mxu0 %v4318
        %v4896 = vpop.f32.mrb[0].mxu0
        %v4897 = vadd.f32 %v4608, %v4896
        %v4898 = vpop.f32.mrb[0].mxu0
        %4899 = vmatprep.mubr.f32.mxu0 0.0
        %4900 = vmatmul.mubr.f32.gmra.mrb[0].mxu0 %v4319
        %v4901 = vpop.f32.mrb[0].mxu0
        %v4902 = vpop.f32.mrb[0].mxu0
        %4903 = vmatprep.mubr.f32.mxu0 0.0
        %4904 = vmatmul.mubr.f32.gmra.mrb[0].mxu0 %v4320
        %v4905 = vpop.f32.mrb[0].mxu0
        %v4906 = vadd.f32 %v4617, %v4905
        %v4907 = vpop.f32.mrb[0].mxu0
        %4908 = vmatprep.mubr.f32.mxu0 0.0
        %4909 = vmatmul.mubr.f32.gmra.mrb[0].mxu0 %v4321
        %v4910 = vpop.f32.mrb[0].mxu0
        %v4911 = vadd.f32 %v4622, %v4910
        %v4912 = vpop.f32.mrb[0].mxu0
        %4913 = vmatprep.mubr.f32.mxu0 0.0
        %4914 = vmatmul.mubr.f32.gmra.mrb[0].mxu0 %v4322
        %v4915 = vpop.f32.mrb[0].mxu0
        %v4916 = vpop.f32.mrb[0].mxu0
        %4917 = vmatprep.mubr.f32.mxu0 0.0
        %4918 = vmatmul.mubr.f32.gmra.mrb[0].mxu0 %v4323
        %v4919 = vpop.f32.mrb[0].mxu0
        %v4920 = vadd.f32 %v4631, %v4919
        %v4921 = vpop.f32.mrb[0].mxu0
        %4922 = vmatprep.mubr.f32.mxu0 0.0
        %4923 = vmatmul.mubr.f32.gmra.mrb[0].mxu0 %v4324
        %v4924 = vpop.f32.mrb[0].mxu0
        %v4925 = vadd.f32 %v4636, %v4924
        %v4926 = vpop.f32.mrb[0].mxu0
        %4927 = vmatprep.mubr.f32.mxu0 0.0
        %4928 = vmatmul.mubr.f32.gmra.mrb[0].mxu0 %v4325
        %v4929 = vpop.f32.mrb[0].mxu0
        %v4930 = vpop.f32.mrb[0].mxu0
        %4931 = vmatprep.mubr.f32.mxu0 0.0
        %4932 = vmatmul.mubr.f32.gmra.mrb[0].mxu0 %v4326
        %v4933 = vpop.f32.mrb[0].mxu0
        %v4934 = vadd.f32 %v4645, %v4933
        %v4935 = vpop.f32.mrb[0].mxu0
        %4936 = vmatprep.mubr.f32.mxu0 0.0
        %4937 = vmatmul.mubr.f32.gmra.mrb[0].mxu0 %v4327
        %v4938 = vpop.f32.mrb[0].mxu0
        %v4939 = vadd.f32 %v4650, %v4938
        %v4940 = vpop.f32.mrb[0].mxu0
        %4941 = vmatprep.mubr.f32.mxu0 0.0
        %4942 = vmatmul.mubr.f32.gmra.mrb[0].mxu0 %v4328
        %v4943 = vpop.f32.mrb[0].mxu0
        %v4944 = vpop.f32.mrb[0].mxu0
        %4945 = vdwg.mxu0
        %s4946 = scalar_lea.vmem [#allocation8], 768
        %v4947 = vld [vmem:[%s4946] sm:$0xff]
        %v4948 = vld [vmem:[%s4946 + $0x8] sm:$0xff]
        %v4949 = vld [vmem:[%s4946 + $0x10] sm:$0xff]
        %v4950 = vld [vmem:[%s4946 + $0x18] sm:$0xff]
        %v4951 = vld [vmem:[%s4946 + $0x20] sm:$0xff]
        %v4952 = vld [vmem:[%s4946 + $0x28] sm:$0xff]
        %v4953 = vld [vmem:[%s4946 + $0x30] sm:$0xff]
        %v4954 = vld [vmem:[%s4946 + $0x38] sm:$0xff]
        %v4955 = vld [vmem:[%s4946 + $0x40] sm:$0xff]
        %v4956 = vld [vmem:[%s4946 + $0x48] sm:$0xff]
        %v4957 = vld [vmem:[%s4946 + $0x50] sm:$0xff]
        %v4958 = vld [vmem:[%s4946 + $0x58] sm:$0xff]
        %v4959 = vld [vmem:[%s4946 + $0x60] sm:$0xff]
        %v4960 = vld [vmem:[%s4946 + $0x68] sm:$0xff]
        %v4961 = vld [vmem:[%s4946 + $0x70] sm:$0xff]
        %v4962 = vld [vmem:[%s4946 + $0x78] sm:$0xff]
        %4963 = vmatprep.subr.mxu0 0.0
        %4964 = vmatpush1.msra.mxu0 %v4947
        %4965 = vmatprep.subr.mxu0 0.0
        %4966 = vmatpush1.msra.mxu0 %v4948
        %4967 = vmatprep.subr.mxu0 0.0
        %4968 = vmatpush1.msra.mxu0 %v4949
        %4969 = vmatprep.subr.mxu0 0.0
        %4970 = vmatpush1.msra.mxu0 %v4950
        %4971 = vmatprep.subr.mxu0 0.0
        %4972 = vmatpush1.msra.mxu0 %v4951
        %4973 = vmatprep.subr.mxu0 0.0
        %4974 = vmatpush1.msra.mxu0 %v4952
        %4975 = vmatprep.subr.mxu0 0.0
        %4976 = vmatpush1.msra.mxu0 %v4953
        %4977 = vmatprep.subr.mxu0 0.0
        %4978 = vmatpush1.msra.mxu0 %v4954
        %4979 = vmatprep.subr.mxu0 0.0
        %4980 = vmatpush1.msra.mxu0 %v4955
        %4981 = vmatprep.subr.mxu0 0.0
        %4982 = vmatpush1.msra.mxu0 %v4956
        %4983 = vmatprep.subr.mxu0 0.0
        %4984 = vmatpush1.msra.mxu0 %v4957
        %4985 = vmatprep.subr.mxu0 0.0
        %4986 = vmatpush1.msra.mxu0 %v4958
        %4987 = vmatprep.subr.mxu0 0.0
        %4988 = vmatpush1.msra.mxu0 %v4959
        %4989 = vmatprep.subr.mxu0 0.0
        %4990 = vmatpush1.msra.mxu0 %v4960
        %4991 = vmatprep.subr.mxu0 0.0
        %4992 = vmatpush1.msra.mxu0 %v4961
        %4993 = vmatprep.subr.mxu0 0.0
        %4994 = vmatpush1.msra.mxu0 %v4962
        %4995 = vmatprep.subr.mxu0 0.0
        %4996 = vmatpush1.msra.mxu0 0.0
        %4997 = vmatprep.subr.mxu0 0.0
        %4998 = vmatpush1.msra.mxu0 0.0
        %4999 = vmatprep.subr.mxu0 0.0
        %5000 = vmatpush1.msra.mxu0 0.0
        %5001 = vmatprep.subr.mxu0 0.0
        %5002 = vmatpush1.msra.mxu0 0.0
        %5003 = vmatprep.subr.mxu0 0.0
        %5004 = vmatpush1.msra.mxu0 0.0
        %5005 = vmatprep.subr.mxu0 0.0
        %5006 = vmatpush1.msra.mxu0 0.0
        %5007 = vmatprep.subr.mxu0 0.0
        %5008 = vmatpush1.msra.mxu0 0.0
        %5009 = vmatprep.subr.mxu0 0.0
        %5010 = vmatpush1.msra.mxu0 0.0
        %5011 = vmatprep.subr.mxu0 0.0
        %5012 = vmatpush1.msra.mxu0 0.0
        %5013 = vmatprep.subr.mxu0 0.0
        %5014 = vmatpush1.msra.mxu0 0.0
        %5015 = vmatprep.subr.mxu0 0.0
        %5016 = vmatpush1.msra.mxu0 0.0
        %5017 = vmatprep.subr.mxu0 0.0
        %5018 = vmatpush1.msra.mxu0 0.0
        %5019 = vmatprep.subr.mxu0 0.0
        %5020 = vmatpush1.msra.mxu0 0.0
        %5021 = vmatprep.subr.mxu0 0.0
        %5022 = vmatpush1.msra.mxu0 0.0
        %5023 = vmatprep.subr.mxu0 0.0
        %5024 = vmatpush1.msra.mxu0 0.0
        %5025 = vmatprep.subr.mxu0 0.0
        %5026 = vmatpush1.msra.mxu0 0.0
        %5027 = vmatprep.mubr.f32.mxu0 0.0
        %5028 = vmatmul.mubr.f32.gmra.mrb[0].mxu0 %v4287
        %v5029 = vpop.f32.mrb[0].mxu0
        %v5030 = vadd.f32 0.0, %v5029
        %v5031 = vpop.f32.mrb[0].mxu0
        %5032 = vmatprep.mubr.f32.mxu0 0.0
        %5033 = vmatmul.mubr.f32.gmra.mrb[0].mxu0 %v4288
        %v5034 = vpop.f32.mrb[0].mxu0
        %v5035 = vadd.f32 0.0, %v5034
        %v5036 = vpop.f32.mrb[0].mxu0
        %5037 = vmatprep.mubr.f32.mxu0 0.0
        %5038 = vmatmul.mubr.f32.gmra.mrb[0].mxu0 %v4289
        %v5039 = vpop.f32.mrb[0].mxu0
        %v5040 = vpop.f32.mrb[0].mxu0
        %5041 = vmatprep.mubr.f32.mxu0 0.0
        %5042 = vmatmul.mubr.f32.gmra.mrb[0].mxu0 %v4290
        %v5043 = vpop.f32.mrb[0].mxu0
        %v5044 = vadd.f32 0.0, %v5043
        %v5045 = vpop.f32.mrb[0].mxu0
        %5046 = vmatprep.mubr.f32.mxu0 0.0
        %5047 = vmatmul.mubr.f32.gmra.mrb[0].mxu0 %v4291
        %v5048 = vpop.f32.mrb[0].mxu0
        %v5049 = vadd.f32 0.0, %v5048
        %v5050 = vpop.f32.mrb[0].mxu0
        %5051 = vmatprep.mubr.f32.mxu0 0.0
        %5052 = vmatmul.mubr.f32.gmra.mrb[0].mxu0 %v4292
        %v5053 = vpop.f32.mrb[0].mxu0
        %v5054 = vpop.f32.mrb[0].mxu0
        %5055 = vmatprep.mubr.f32.mxu0 0.0
        %5056 = vmatmul.mubr.f32.gmra.mrb[0].mxu0 %v4293
        %v5057 = vpop.f32.mrb[0].mxu0
        %v5058 = vadd.f32 0.0, %v5057
        %v5059 = vpop.f32.mrb[0].mxu0
        %5060 = vmatprep.mubr.f32.mxu0 0.0
        %5061 = vmatmul.mubr.f32.gmra.mrb[0].mxu0 %v4294
        %v5062 = vpop.f32.mrb[0].mxu0
        %v5063 = vadd.f32 0.0, %v5062
        %v5064 = vpop.f32.mrb[0].mxu0
        %5065 = vmatprep.mubr.f32.mxu0 0.0
        %5066 = vmatmul.mubr.f32.gmra.mrb[0].mxu0 %v4295
        %v5067 = vpop.f32.mrb[0].mxu0
        %v5068 = vpop.f32.mrb[0].mxu0
        %5069 = vmatprep.mubr.f32.mxu0 0.0
        %5070 = vmatmul.mubr.f32.gmra.mrb[0].mxu0 %v4296
        %v5071 = vpop.f32.mrb[0].mxu0
        %v5072 = vadd.f32 0.0, %v5071
        %v5073 = vpop.f32.mrb[0].mxu0
        %5074 = vmatprep.mubr.f32.mxu0 0.0
        %5075 = vmatmul.mubr.f32.gmra.mrb[0].mxu0 %v4297
        %v5076 = vpop.f32.mrb[0].mxu0
        %v5077 = vadd.f32 0.0, %v5076
        %v5078 = vpop.f32.mrb[0].mxu0
        %5079 = vmatprep.mubr.f32.mxu0 0.0
        %5080 = vmatmul.mubr.f32.gmra.mrb[0].mxu0 %v4298
        %v5081 = vpop.f32.mrb[0].mxu0
        %v5082 = vpop.f32.mrb[0].mxu0
        %5083 = vmatprep.mubr.f32.mxu0 0.0
        %5084 = vmatmul.mubr.f32.gmra.mrb[0].mxu0 %v4299
        %v5085 = vpop.f32.mrb[0].mxu0
        %v5086 = vadd.f32 0.0, %v5085
        %v5087 = vpop.f32.mrb[0].mxu0
        %5088 = vmatprep.mubr.f32.mxu0 0.0
        %5089 = vmatmul.mubr.f32.gmra.mrb[0].mxu0 %v4300
        %v5090 = vpop.f32.mrb[0].mxu0
        %v5091 = vadd.f32 0.0, %v5090
        %v5092 = vpop.f32.mrb[0].mxu0
        %5093 = vmatprep.mubr.f32.mxu0 0.0
        %5094 = vmatmul.mubr.f32.gmra.mrb[0].mxu0 %v4301
        %v5095 = vpop.f32.mrb[0].mxu0
        %v5096 = vpop.f32.mrb[0].mxu0
        %5097 = vmatprep.mubr.f32.mxu0 0.0
        %5098 = vmatmul.mubr.f32.gmra.mrb[0].mxu0 %v4302
        %v5099 = vpop.f32.mrb[0].mxu0
        %v5100 = vadd.f32 0.0, %v5099
        %v5101 = vpop.f32.mrb[0].mxu0
        %5102 = vmatprep.mubr.f32.mxu0 0.0
        %5103 = vmatmul.mubr.f32.gmra.mrb[0].mxu0 %v4303
        %v5104 = vpop.f32.mrb[0].mxu0
        %v5105 = vadd.f32 0.0, %v5104
        %v5106 = vpop.f32.mrb[0].mxu0
        %5107 = vmatprep.mubr.f32.mxu0 0.0
        %5108 = vmatmul.mubr.f32.gmra.mrb[0].mxu0 %v4304
        %v5109 = vpop.f32.mrb[0].mxu0
        %v5110 = vpop.f32.mrb[0].mxu0
        %5111 = vmatprep.mubr.f32.mxu0 0.0
        %5112 = vmatmul.mubr.f32.gmra.mrb[0].mxu0 %v4305
        %v5113 = vpop.f32.mrb[0].mxu0
        %v5114 = vadd.f32 0.0, %v5113
        %v5115 = vpop.f32.mrb[0].mxu0
        %5116 = vmatprep.mubr.f32.mxu0 0.0
        %5117 = vmatmul.mubr.f32.gmra.mrb[0].mxu0 %v4306
        %v5118 = vpop.f32.mrb[0].mxu0
        %v5119 = vadd.f32 0.0, %v5118
        %v5120 = vpop.f32.mrb[0].mxu0
        %5121 = vmatprep.mubr.f32.mxu0 0.0
        %5122 = vmatmul.mubr.f32.gmra.mrb[0].mxu0 %v4307
        %v5123 = vpop.f32.mrb[0].mxu0
        %v5124 = vpop.f32.mrb[0].mxu0
        %5125 = vmatprep.mubr.f32.mxu0 0.0
        %5126 = vmatmul.mubr.f32.gmra.mrb[0].mxu0 %v4308
        %v5127 = vpop.f32.mrb[0].mxu0
        %v5128 = vadd.f32 0.0, %v5127
        %v5129 = vpop.f32.mrb[0].mxu0
        %5130 = vmatprep.mubr.f32.mxu0 0.0
        %5131 = vmatmul.mubr.f32.gmra.mrb[0].mxu0 %v4309
        %v5132 = vpop.f32.mrb[0].mxu0
        %v5133 = vadd.f32 0.0, %v5132
        %v5134 = vpop.f32.mrb[0].mxu0
        %5135 = vmatprep.mubr.f32.mxu0 0.0
        %5136 = vmatmul.mubr.f32.gmra.mrb[0].mxu0 %v4310
        %v5137 = vpop.f32.mrb[0].mxu0
        %v5138 = vpop.f32.mrb[0].mxu0
        %5139 = vmatprep.mubr.f32.mxu0 0.0
        %5140 = vmatmul.mubr.f32.gmra.mrb[0].mxu0 %v4311
        %v5141 = vpop.f32.mrb[0].mxu0
        %v5142 = vadd.f32 0.0, %v5141
        %v5143 = vpop.f32.mrb[0].mxu0
        %5144 = vmatprep.mubr.f32.mxu0 0.0
        %5145 = vmatmul.mubr.f32.gmra.mrb[0].mxu0 %v4312
        %v5146 = vpop.f32.mrb[0].mxu0
        %v5147 = vadd.f32 0.0, %v5146
        %v5148 = vpop.f32.mrb[0].mxu0
        %5149 = vmatprep.mubr.f32.mxu0 0.0
        %5150 = vmatmul.mubr.f32.gmra.mrb[0].mxu0 %v4313
        %v5151 = vpop.f32.mrb[0].mxu0
        %v5152 = vpop.f32.mrb[0].mxu0
        %5153 = vmatprep.mubr.f32.mxu0 0.0
        %5154 = vmatmul.mubr.f32.gmra.mrb[0].mxu0 %v4314
        %v5155 = vpop.f32.mrb[0].mxu0
        %v5156 = vadd.f32 0.0, %v5155
        %v5157 = vpop.f32.mrb[0].mxu0
        %5158 = vmatprep.mubr.f32.mxu0 0.0
        %5159 = vmatmul.mubr.f32.gmra.mrb[0].mxu0 %v4315
        %v5160 = vpop.f32.mrb[0].mxu0
        %v5161 = vadd.f32 0.0, %v5160
        %v5162 = vpop.f32.mrb[0].mxu0
        %5163 = vmatprep.mubr.f32.mxu0 0.0
        %5164 = vmatmul.mubr.f32.gmra.mrb[0].mxu0 %v4316
        %v5165 = vpop.f32.mrb[0].mxu0
        %v5166 = vpop.f32.mrb[0].mxu0
        %5167 = vmatprep.mubr.f32.mxu0 0.0
        %5168 = vmatmul.mubr.f32.gmra.mrb[0].mxu0 %v4317
        %v5169 = vpop.f32.mrb[0].mxu0
        %v5170 = vadd.f32 0.0, %v5169
        %v5171 = vpop.f32.mrb[0].mxu0
        %5172 = vmatprep.mubr.f32.mxu0 0.0
        %5173 = vmatmul.mubr.f32.gmra.mrb[0].mxu0 %v4318
        %v5174 = vpop.f32.mrb[0].mxu0
        %v5175 = vadd.f32 0.0, %v5174
        %v5176 = vpop.f32.mrb[0].mxu0
        %5177 = vmatprep.mubr.f32.mxu0 0.0
        %5178 = vmatmul.mubr.f32.gmra.mrb[0].mxu0 %v4319
        %v5179 = vpop.f32.mrb[0].mxu0
        %v5180 = vpop.f32.mrb[0].mxu0
        %5181 = vmatprep.mubr.f32.mxu0 0.0
        %5182 = vmatmul.mubr.f32.gmra.mrb[0].mxu0 %v4320
        %v5183 = vpop.f32.mrb[0].mxu0
        %v5184 = vadd.f32 0.0, %v5183
        %v5185 = vpop.f32.mrb[0].mxu0
        %5186 = vmatprep.mubr.f32.mxu0 0.0
        %5187 = vmatmul.mubr.f32.gmra.mrb[0].mxu0 %v4321
        %v5188 = vpop.f32.mrb[0].mxu0
        %v5189 = vadd.f32 0.0, %v5188
        %v5190 = vpop.f32.mrb[0].mxu0
        %5191 = vmatprep.mubr.f32.mxu0 0.0
        %5192 = vmatmul.mubr.f32.gmra.mrb[0].mxu0 %v4322
        %v5193 = vpop.f32.mrb[0].mxu0
        %v5194 = vpop.f32.mrb[0].mxu0
        %5195 = vmatprep.mubr.f32.mxu0 0.0
        %5196 = vmatmul.mubr.f32.gmra.mrb[0].mxu0 %v4323
        %v5197 = vpop.f32.mrb[0].mxu0
        %v5198 = vadd.f32 0.0, %v5197
        %v5199 = vpop.f32.mrb[0].mxu0
        %5200 = vmatprep.mubr.f32.mxu0 0.0
        %5201 = vmatmul.mubr.f32.gmra.mrb[0].mxu0 %v4324
        %v5202 = vpop.f32.mrb[0].mxu0
        %v5203 = vadd.f32 0.0, %v5202
        %v5204 = vpop.f32.mrb[0].mxu0
        %5205 = vmatprep.mubr.f32.mxu0 0.0
        %5206 = vmatmul.mubr.f32.gmra.mrb[0].mxu0 %v4325
        %v5207 = vpop.f32.mrb[0].mxu0
        %v5208 = vpop.f32.mrb[0].mxu0
        %5209 = vmatprep.mubr.f32.mxu0 0.0
        %5210 = vmatmul.mubr.f32.gmra.mrb[0].mxu0 %v4326
        %v5211 = vpop.f32.mrb[0].mxu0
        %v5212 = vadd.f32 0.0, %v5211
        %v5213 = vpop.f32.mrb[0].mxu0
        %5214 = vmatprep.mubr.f32.mxu0 0.0
        %5215 = vmatmul.mubr.f32.gmra.mrb[0].mxu0 %v4327
        %v5216 = vpop.f32.mrb[0].mxu0
        %v5217 = vadd.f32 0.0, %v5216
        %v5218 = vpop.f32.mrb[0].mxu0
        %5219 = vmatprep.mubr.f32.mxu0 0.0
        %5220 = vmatmul.mubr.f32.gmra.mrb[0].mxu0 %v4328
        %v5221 = vpop.f32.mrb[0].mxu0
        %v5222 = vpop.f32.mrb[0].mxu0
        %5223 = vmatprep.mubr.f32.mxu0 0.0
        %5224 = vmatmul.mubr.f32.gmra.mrb[0].mxu0 %v4329
        %v5225 = vpop.f32.mrb[0].mxu0
        %v5226 = vadd.f32 0.0, %v5225
        %v5227 = vpop.f32.mrb[0].mxu0
        %5228 = vmatprep.mubr.f32.mxu0 0.0
        %5229 = vmatmul.mubr.f32.gmra.mrb[0].mxu0 %v4330
        %v5230 = vpop.f32.mrb[0].mxu0
        %v5231 = vadd.f32 0.0, %v5230
        %v5232 = vpop.f32.mrb[0].mxu0
        %5233 = vmatprep.mubr.f32.mxu0 0.0
        %5234 = vmatmul.mubr.f32.gmra.mrb[0].mxu0 %v4331
        %v5235 = vpop.f32.mrb[0].mxu0
        %v5236 = vpop.f32.mrb[0].mxu0
        %5237 = vmatprep.mubr.f32.mxu0 0.0
        %5238 = vmatmul.mubr.f32.gmra.mrb[0].mxu0 %v4332
        %v5239 = vpop.f32.mrb[0].mxu0
        %v5240 = vadd.f32 0.0, %v5239
        %v5241 = vpop.f32.mrb[0].mxu0
        %5242 = vmatprep.mubr.f32.mxu0 0.0
        %5243 = vmatmul.mubr.f32.gmra.mrb[0].mxu0 %v4333
        %v5244 = vpop.f32.mrb[0].mxu0
        %v5245 = vadd.f32 0.0, %v5244
        %v5246 = vpop.f32.mrb[0].mxu0
        %5247 = vmatprep.mubr.f32.mxu0 0.0
        %5248 = vmatmul.mubr.f32.gmra.mrb[0].mxu0 %v4334
        %v5249 = vpop.f32.mrb[0].mxu0
        %v5250 = vpop.f32.mrb[0].mxu0
        %5251 = vdwg.mxu0
        %v5252 = vadd.f32 %v4724, %v5030
        %v5253 = vadd.f32 %v4729, %v5035
        %v5254 = vadd.f32 %v4738, %v5044
        %v5255 = vadd.f32 %v4743, %v5049
        %v5256 = vadd.f32 %v4752, %v5058
        %v5257 = vadd.f32 %v4757, %v5063
        %v5258 = vadd.f32 %v4766, %v5072
        %v5259 = vadd.f32 %v4771, %v5077
        %v5260 = vadd.f32 %v4780, %v5086
        %v5261 = vadd.f32 %v4785, %v5091
        %v5262 = vadd.f32 %v4794, %v5100
        %v5263 = vadd.f32 %v4799, %v5105
        %v5264 = vadd.f32 %v4808, %v5114
        %v5265 = vadd.f32 %v4813, %v5119
        %v5266 = vadd.f32 %v4822, %v5128
        %v5267 = vadd.f32 %v4827, %v5133
        %v5268 = vadd.f32 %v4836, %v5142
        %v5269 = vadd.f32 %v4841, %v5147
        %v5270 = vadd.f32 %v4850, %v5156
        %v5271 = vadd.f32 %v4855, %v5161
        %v5272 = vadd.f32 %v4864, %v5170
        %v5273 = vadd.f32 %v4869, %v5175
        %v5274 = vadd.f32 %v4878, %v5184
        %v5275 = vadd.f32 %v4883, %v5189
        %v5276 = vadd.f32 %v4892, %v5198
        %v5277 = vadd.f32 %v4897, %v5203
        %v5278 = vadd.f32 %v4906, %v5212
        %v5279 = vadd.f32 %v4911, %v5217
        %v5280 = vadd.f32 %v4920, %v5226
        %v5281 = vadd.f32 %v4925, %v5231
        %v5282 = vadd.f32 %v4934, %v5240
        %v5283 = vadd.f32 %v4939, %v5245
        %v5284 = vld [vmem:[#allocation2 + $0x1] sm:$0xff]
        %v5285 = vld [vmem:[#allocation2 + $0x9] sm:$0xff]
        %v5286 = vld [vmem:[#allocation2 + $0x11] sm:$0xff]
        %v5287 = vld [vmem:[#allocation2 + $0x19] sm:$0xff]
        %v5288 = vld [vmem:[#allocation2 + $0x21] sm:$0xff]
        %v5289 = vld [vmem:[#allocation2 + $0x29] sm:$0xff]
        %v5290 = vld [vmem:[#allocation2 + $0x31] sm:$0xff]
        %v5291 = vld [vmem:[#allocation2 + $0x39] sm:$0xff]
        %v5292 = vld [vmem:[#allocation2 + $0x41] sm:$0xff]
        %v5293 = vld [vmem:[#allocation2 + $0x49] sm:$0xff]
        %v5294 = vld [vmem:[#allocation2 + $0x51] sm:$0xff]
        %v5295 = vld [vmem:[#allocation2 + $0x59] sm:$0xff]
        %v5296 = vld [vmem:[#allocation2 + $0x61] sm:$0xff]
        %v5297 = vld [vmem:[#allocation2 + $0x69] sm:$0xff]
        %v5298 = vld [vmem:[#allocation2 + $0x71] sm:$0xff]
        %v5299 = vld [vmem:[#allocation2 + $0x79] sm:$0xff]
        %v5300 = vld [vmem:[#allocation2 + $0x81] sm:$0xff]
        %v5301 = vld [vmem:[#allocation2 + $0x89] sm:$0xff]
        %v5302 = vld [vmem:[#allocation2 + $0x91] sm:$0xff]
        %v5303 = vld [vmem:[#allocation2 + $0x99] sm:$0xff]
        %v5304 = vld [vmem:[#allocation2 + $0xa1] sm:$0xff]
        %v5305 = vld [vmem:[#allocation2 + $0xa9] sm:$0xff]
        %v5306 = vld [vmem:[#allocation2 + $0xb1] sm:$0xff]
        %v5307 = vld [vmem:[#allocation2 + $0xb9] sm:$0xff]
        %v5308 = vld [vmem:[#allocation2 + $0xc1] sm:$0xff]
        %v5309 = vld [vmem:[#allocation2 + $0xc9] sm:$0xff]
        %v5310 = vld [vmem:[#allocation2 + $0xd1] sm:$0xff]
        %v5311 = vld [vmem:[#allocation2 + $0xd9] sm:$0xff]
        %v5312 = vld [vmem:[#allocation2 + $0xe1] sm:$0xff]
        %v5313 = vld [vmem:[#allocation2 + $0xe9] sm:$0xff]
        %v5314 = vld [vmem:[#allocation2 + $0xf1] sm:$0xff]
        %v5315 = vld [vmem:[#allocation2 + $0xf9] sm:$0xff]
        %v5316 = vld [vmem:[#allocation2 + $0x101] sm:$0xff]
        %v5317 = vld [vmem:[#allocation2 + $0x109] sm:$0xff]
        %v5318 = vld [vmem:[#allocation2 + $0x111] sm:$0xff]
        %v5319 = vld [vmem:[#allocation2 + $0x119] sm:$0xff]
        %v5320 = vld [vmem:[#allocation2 + $0x121] sm:$0xff]
        %v5321 = vld [vmem:[#allocation2 + $0x129] sm:$0xff]
        %v5322 = vld [vmem:[#allocation2 + $0x131] sm:$0xff]
        %v5323 = vld [vmem:[#allocation2 + $0x139] sm:$0xff]
        %v5324 = vld [vmem:[#allocation2 + $0x141] sm:$0xff]
        %v5325 = vld [vmem:[#allocation2 + $0x149] sm:$0xff]
        %v5326 = vld [vmem:[#allocation2 + $0x151] sm:$0xff]
        %v5327 = vld [vmem:[#allocation2 + $0x159] sm:$0xff]
        %v5328 = vld [vmem:[#allocation2 + $0x161] sm:$0xff]
        %v5329 = vld [vmem:[#allocation2 + $0x169] sm:$0xff]
        %v5330 = vld [vmem:[#allocation2 + $0x171] sm:$0xff]
        %v5331 = vld [vmem:[#allocation2 + $0x179] sm:$0xff]
        %v5332 = vld [vmem:[#allocation2 + $0x181] sm:$0xff]
        %v5333 = vld [vmem:[#allocation2 + $0x189] sm:$0xff]
        %v5334 = vld [vmem:[#allocation2 + $0x191] sm:$0xff]
        %v5335 = vld [vmem:[#allocation2 + $0x199] sm:$0xff]
        %v5336 = vld [vmem:[#allocation2 + $0x1a1] sm:$0xff]
        %v5337 = vld [vmem:[#allocation2 + $0x1a9] sm:$0xff]
        %s5338 = scalar_lea.vmem [#allocation8], 128
        %v5339 = vld [vmem:[%s5338] sm:$0xff]
        %v5340 = vld [vmem:[%s5338 + $0x8] sm:$0xff]
        %v5341 = vld [vmem:[%s5338 + $0x10] sm:$0xff]
        %v5342 = vld [vmem:[%s5338 + $0x18] sm:$0xff]
        %v5343 = vld [vmem:[%s5338 + $0x20] sm:$0xff]
        %v5344 = vld [vmem:[%s5338 + $0x28] sm:$0xff]
        %v5345 = vld [vmem:[%s5338 + $0x30] sm:$0xff]
        %v5346 = vld [vmem:[%s5338 + $0x38] sm:$0xff]
        %v5347 = vld [vmem:[%s5338 + $0x40] sm:$0xff]
        %v5348 = vld [vmem:[%s5338 + $0x48] sm:$0xff]
        %v5349 = vld [vmem:[%s5338 + $0x50] sm:$0xff]
        %v5350 = vld [vmem:[%s5338 + $0x58] sm:$0xff]
        %v5351 = vld [vmem:[%s5338 + $0x60] sm:$0xff]
        %v5352 = vld [vmem:[%s5338 + $0x68] sm:$0xff]
        %v5353 = vld [vmem:[%s5338 + $0x70] sm:$0xff]
        %v5354 = vld [vmem:[%s5338 + $0x78] sm:$0xff]
        %5355 = vmatprep.subr.mxu0 0.0
        %5356 = vmatpush1.msra.mxu0 %v5339
        %5357 = vmatprep.subr.mxu0 0.0
        %5358 = vmatpush1.msra.mxu0 %v5340
        %5359 = vmatprep.subr.mxu0 0.0
        %5360 = vmatpush1.msra.mxu0 %v5341
        %5361 = vmatprep.subr.mxu0 0.0
        %5362 = vmatpush1.msra.mxu0 %v5342
        %5363 = vmatprep.subr.mxu0 0.0
        %5364 = vmatpush1.msra.mxu0 %v5343
        %5365 = vmatprep.subr.mxu0 0.0
        %5366 = vmatpush1.msra.mxu0 %v5344
        %5367 = vmatprep.subr.mxu0 0.0
        %5368 = vmatpush1.msra.mxu0 %v5345
        %5369 = vmatprep.subr.mxu0 0.0
        %5370 = vmatpush1.msra.mxu0 %v5346
        %5371 = vmatprep.subr.mxu0 0.0
        %5372 = vmatpush1.msra.mxu0 %v5347
        %5373 = vmatprep.subr.mxu0 0.0
        %5374 = vmatpush1.msra.mxu0 %v5348
        %5375 = vmatprep.subr.mxu0 0.0
        %5376 = vmatpush1.msra.mxu0 %v5349
        %5377 = vmatprep.subr.mxu0 0.0
        %5378 = vmatpush1.msra.mxu0 %v5350
        %5379 = vmatprep.subr.mxu0 0.0
        %5380 = vmatpush1.msra.mxu0 %v5351
        %5381 = vmatprep.subr.mxu0 0.0
        %5382 = vmatpush1.msra.mxu0 %v5352
        %5383 = vmatprep.subr.mxu0 0.0
        %5384 = vmatpush1.msra.mxu0 %v5353
        %5385 = vmatprep.subr.mxu0 0.0
        %5386 = vmatpush1.msra.mxu0 %v5354
        %5387 = vmatprep.subr.mxu0 0.0
        %5388 = vmatpush1.msra.mxu0 0.0
        %5389 = vmatprep.subr.mxu0 0.0
        %5390 = vmatpush1.msra.mxu0 0.0
        %5391 = vmatprep.subr.mxu0 0.0
        %5392 = vmatpush1.msra.mxu0 0.0
        %5393 = vmatprep.subr.mxu0 0.0
        %5394 = vmatpush1.msra.mxu0 0.0
        %5395 = vmatprep.subr.mxu0 0.0
        %5396 = vmatpush1.msra.mxu0 0.0
        %5397 = vmatprep.subr.mxu0 0.0
        %5398 = vmatpush1.msra.mxu0 0.0
        %5399 = vmatprep.subr.mxu0 0.0
        %5400 = vmatpush1.msra.mxu0 0.0
        %5401 = vmatprep.subr.mxu0 0.0
        %5402 = vmatpush1.msra.mxu0 0.0
        %5403 = vmatprep.subr.mxu0 0.0
        %5404 = vmatpush1.msra.mxu0 0.0
        %5405 = vmatprep.subr.mxu0 0.0
        %5406 = vmatpush1.msra.mxu0 0.0
        %5407 = vmatprep.subr.mxu0 0.0
        %5408 = vmatpush1.msra.mxu0 0.0
        %5409 = vmatprep.subr.mxu0 0.0
        %5410 = vmatpush1.msra.mxu0 0.0
        %5411 = vmatprep.subr.mxu0 0.0
        %5412 = vmatpush1.msra.mxu0 0.0
        %5413 = vmatprep.subr.mxu0 0.0
        %5414 = vmatpush1.msra.mxu0 0.0
        %5415 = vmatprep.subr.mxu0 0.0
        %5416 = vmatpush1.msra.mxu0 0.0
        %5417 = vmatprep.subr.mxu0 0.0
        %5418 = vmatpush1.msra.mxu0 0.0
        %5419 = vmatprep.mubr.f32.mxu0 0.0
        %5420 = vmatmul.mubr.f32.gmra.mrb[0].mxu0 %v5284
        %v5421 = vpop.f32.mrb[0].mxu0
        %v5422 = vadd.f32 0.0, %v5421
        %v5423 = vpop.f32.mrb[0].mxu0
        %5424 = vmatprep.mubr.f32.mxu0 0.0
        %5425 = vmatmul.mubr.f32.gmra.mrb[0].mxu0 %v5285
        %v5426 = vpop.f32.mrb[0].mxu0
        %v5427 = vadd.f32 0.0, %v5426
        %v5428 = vpop.f32.mrb[0].mxu0
        %5429 = vmatprep.mubr.f32.mxu0 0.0
        %5430 = vmatmul.mubr.f32.gmra.mrb[0].mxu0 %v5286
        %v5431 = vpop.f32.mrb[0].mxu0
        %v5432 = vpop.f32.mrb[0].mxu0
        %5433 = vmatprep.mubr.f32.mxu0 0.0
        %5434 = vmatmul.mubr.f32.gmra.mrb[0].mxu0 %v5287
        %v5435 = vpop.f32.mrb[0].mxu0
        %v5436 = vadd.f32 0.0, %v5435
        %v5437 = vpop.f32.mrb[0].mxu0
        %5438 = vmatprep.mubr.f32.mxu0 0.0
        %5439 = vmatmul.mubr.f32.gmra.mrb[0].mxu0 %v5288
        %v5440 = vpop.f32.mrb[0].mxu0
        %v5441 = vadd.f32 0.0, %v5440
        %v5442 = vpop.f32.mrb[0].mxu0
        %5443 = vmatprep.mubr.f32.mxu0 0.0
        %5444 = vmatmul.mubr.f32.gmra.mrb[0].mxu0 %v5289
        %v5445 = vpop.f32.mrb[0].mxu0
        %v5446 = vpop.f32.mrb[0].mxu0
        %5447 = vmatprep.mubr.f32.mxu0 0.0
        %5448 = vmatmul.mubr.f32.gmra.mrb[0].mxu0 %v5290
        %v5449 = vpop.f32.mrb[0].mxu0
        %v5450 = vadd.f32 0.0, %v5449
        %v5451 = vpop.f32.mrb[0].mxu0
        %5452 = vmatprep.mubr.f32.mxu0 0.0
        %5453 = vmatmul.mubr.f32.gmra.mrb[0].mxu0 %v5291
        %v5454 = vpop.f32.mrb[0].mxu0
        %v5455 = vadd.f32 0.0, %v5454
        %v5456 = vpop.f32.mrb[0].mxu0
        %5457 = vmatprep.mubr.f32.mxu0 0.0
        %5458 = vmatmul.mubr.f32.gmra.mrb[0].mxu0 %v5292
        %v5459 = vpop.f32.mrb[0].mxu0
        %v5460 = vpop.f32.mrb[0].mxu0
        %5461 = vmatprep.mubr.f32.mxu0 0.0
        %5462 = vmatmul.mubr.f32.gmra.mrb[0].mxu0 %v5293
        %v5463 = vpop.f32.mrb[0].mxu0
        %v5464 = vadd.f32 0.0, %v5463
        %v5465 = vpop.f32.mrb[0].mxu0
        %5466 = vmatprep.mubr.f32.mxu0 0.0
        %5467 = vmatmul.mubr.f32.gmra.mrb[0].mxu0 %v5294
        %v5468 = vpop.f32.mrb[0].mxu0
        %v5469 = vadd.f32 0.0, %v5468
        %v5470 = vpop.f32.mrb[0].mxu0
        %5471 = vmatprep.mubr.f32.mxu0 0.0
        %5472 = vmatmul.mubr.f32.gmra.mrb[0].mxu0 %v5295
        %v5473 = vpop.f32.mrb[0].mxu0
        %v5474 = vpop.f32.mrb[0].mxu0
        %5475 = vmatprep.mubr.f32.mxu0 0.0
        %5476 = vmatmul.mubr.f32.gmra.mrb[0].mxu0 %v5296
        %v5477 = vpop.f32.mrb[0].mxu0
        %v5478 = vadd.f32 0.0, %v5477
        %v5479 = vpop.f32.mrb[0].mxu0
        %5480 = vmatprep.mubr.f32.mxu0 0.0
        %5481 = vmatmul.mubr.f32.gmra.mrb[0].mxu0 %v5297
        %v5482 = vpop.f32.mrb[0].mxu0
        %v5483 = vadd.f32 0.0, %v5482
        %v5484 = vpop.f32.mrb[0].mxu0
        %5485 = vmatprep.mubr.f32.mxu0 0.0
        %5486 = vmatmul.mubr.f32.gmra.mrb[0].mxu0 %v5298
        %v5487 = vpop.f32.mrb[0].mxu0
        %v5488 = vpop.f32.mrb[0].mxu0
        %5489 = vmatprep.mubr.f32.mxu0 0.0
        %5490 = vmatmul.mubr.f32.gmra.mrb[0].mxu0 %v5299
        %v5491 = vpop.f32.mrb[0].mxu0
        %v5492 = vadd.f32 0.0, %v5491
        %v5493 = vpop.f32.mrb[0].mxu0
        %5494 = vmatprep.mubr.f32.mxu0 0.0
        %5495 = vmatmul.mubr.f32.gmra.mrb[0].mxu0 %v5300
        %v5496 = vpop.f32.mrb[0].mxu0
        %v5497 = vadd.f32 0.0, %v5496
        %v5498 = vpop.f32.mrb[0].mxu0
        %5499 = vmatprep.mubr.f32.mxu0 0.0
        %5500 = vmatmul.mubr.f32.gmra.mrb[0].mxu0 %v5301
        %v5501 = vpop.f32.mrb[0].mxu0
        %v5502 = vpop.f32.mrb[0].mxu0
        %5503 = vmatprep.mubr.f32.mxu0 0.0
        %5504 = vmatmul.mubr.f32.gmra.mrb[0].mxu0 %v5302
        %v5505 = vpop.f32.mrb[0].mxu0
        %v5506 = vadd.f32 0.0, %v5505
        %v5507 = vpop.f32.mrb[0].mxu0
        %5508 = vmatprep.mubr.f32.mxu0 0.0
        %5509 = vmatmul.mubr.f32.gmra.mrb[0].mxu0 %v5303
        %v5510 = vpop.f32.mrb[0].mxu0
        %v5511 = vadd.f32 0.0, %v5510
        %v5512 = vpop.f32.mrb[0].mxu0
        %5513 = vmatprep.mubr.f32.mxu0 0.0
        %5514 = vmatmul.mubr.f32.gmra.mrb[0].mxu0 %v5304
        %v5515 = vpop.f32.mrb[0].mxu0
        %v5516 = vpop.f32.mrb[0].mxu0
        %5517 = vmatprep.mubr.f32.mxu0 0.0
        %5518 = vmatmul.mubr.f32.gmra.mrb[0].mxu0 %v5305
        %v5519 = vpop.f32.mrb[0].mxu0
        %v5520 = vadd.f32 0.0, %v5519
        %v5521 = vpop.f32.mrb[0].mxu0
        %5522 = vmatprep.mubr.f32.mxu0 0.0
        %5523 = vmatmul.mubr.f32.gmra.mrb[0].mxu0 %v5306
        %v5524 = vpop.f32.mrb[0].mxu0
        %v5525 = vadd.f32 0.0, %v5524
        %v5526 = vpop.f32.mrb[0].mxu0
        %5527 = vmatprep.mubr.f32.mxu0 0.0
        %5528 = vmatmul.mubr.f32.gmra.mrb[0].mxu0 %v5307
        %v5529 = vpop.f32.mrb[0].mxu0
        %v5530 = vpop.f32.mrb[0].mxu0
        %5531 = vmatprep.mubr.f32.mxu0 0.0
        %5532 = vmatmul.mubr.f32.gmra.mrb[0].mxu0 %v5308
        %v5533 = vpop.f32.mrb[0].mxu0
        %v5534 = vadd.f32 0.0, %v5533
        %v5535 = vpop.f32.mrb[0].mxu0
        %5536 = vmatprep.mubr.f32.mxu0 0.0
        %5537 = vmatmul.mubr.f32.gmra.mrb[0].mxu0 %v5309
        %v5538 = vpop.f32.mrb[0].mxu0
        %v5539 = vadd.f32 0.0, %v5538
        %v5540 = vpop.f32.mrb[0].mxu0
        %5541 = vmatprep.mubr.f32.mxu0 0.0
        %5542 = vmatmul.mubr.f32.gmra.mrb[0].mxu0 %v5310
        %v5543 = vpop.f32.mrb[0].mxu0
        %v5544 = vpop.f32.mrb[0].mxu0
        %5545 = vmatprep.mubr.f32.mxu0 0.0
        %5546 = vmatmul.mubr.f32.gmra.mrb[0].mxu0 %v5311
        %v5547 = vpop.f32.mrb[0].mxu0
        %v5548 = vadd.f32 0.0, %v5547
        %v5549 = vpop.f32.mrb[0].mxu0
        %5550 = vmatprep.mubr.f32.mxu0 0.0
        %5551 = vmatmul.mubr.f32.gmra.mrb[0].mxu0 %v5312
        %v5552 = vpop.f32.mrb[0].mxu0
        %v5553 = vadd.f32 0.0, %v5552
        %v5554 = vpop.f32.mrb[0].mxu0
        %5555 = vmatprep.mubr.f32.mxu0 0.0
        %5556 = vmatmul.mubr.f32.gmra.mrb[0].mxu0 %v5313
        %v5557 = vpop.f32.mrb[0].mxu0
        %v5558 = vpop.f32.mrb[0].mxu0
        %5559 = vmatprep.mubr.f32.mxu0 0.0
        %5560 = vmatmul.mubr.f32.gmra.mrb[0].mxu0 %v5314
        %v5561 = vpop.f32.mrb[0].mxu0
        %v5562 = vadd.f32 0.0, %v5561
        %v5563 = vpop.f32.mrb[0].mxu0
        %5564 = vmatprep.mubr.f32.mxu0 0.0
        %5565 = vmatmul.mubr.f32.gmra.mrb[0].mxu0 %v5315
        %v5566 = vpop.f32.mrb[0].mxu0
        %v5567 = vadd.f32 0.0, %v5566
        %v5568 = vpop.f32.mrb[0].mxu0
        %5569 = vmatprep.mubr.f32.mxu0 0.0
        %5570 = vmatmul.mubr.f32.gmra.mrb[0].mxu0 %v5316
        %v5571 = vpop.f32.mrb[0].mxu0
        %v5572 = vpop.f32.mrb[0].mxu0
        %5573 = vmatprep.mubr.f32.mxu0 0.0
        %5574 = vmatmul.mubr.f32.gmra.mrb[0].mxu0 %v5317
        %v5575 = vpop.f32.mrb[0].mxu0
        %v5576 = vadd.f32 0.0, %v5575
        %v5577 = vpop.f32.mrb[0].mxu0
        %5578 = vmatprep.mubr.f32.mxu0 0.0
        %5579 = vmatmul.mubr.f32.gmra.mrb[0].mxu0 %v5318
        %v5580 = vpop.f32.mrb[0].mxu0
        %v5581 = vadd.f32 0.0, %v5580
        %v5582 = vpop.f32.mrb[0].mxu0
        %5583 = vmatprep.mubr.f32.mxu0 0.0
        %5584 = vmatmul.mubr.f32.gmra.mrb[0].mxu0 %v5319
        %v5585 = vpop.f32.mrb[0].mxu0
        %v5586 = vpop.f32.mrb[0].mxu0
        %5587 = vmatprep.mubr.f32.mxu0 0.0
        %5588 = vmatmul.mubr.f32.gmra.mrb[0].mxu0 %v5320
        %v5589 = vpop.f32.mrb[0].mxu0
        %v5590 = vadd.f32 0.0, %v5589
        %v5591 = vpop.f32.mrb[0].mxu0
        %5592 = vmatprep.mubr.f32.mxu0 0.0
        %5593 = vmatmul.mubr.f32.gmra.mrb[0].mxu0 %v5321
        %v5594 = vpop.f32.mrb[0].mxu0
        %v5595 = vadd.f32 0.0, %v5594
        %v5596 = vpop.f32.mrb[0].mxu0
        %5597 = vmatprep.mubr.f32.mxu0 0.0
        %5598 = vmatmul.mubr.f32.gmra.mrb[0].mxu0 %v5322
        %v5599 = vpop.f32.mrb[0].mxu0
        %v5600 = vpop.f32.mrb[0].mxu0
        %5601 = vmatprep.mubr.f32.mxu0 0.0
        %5602 = vmatmul.mubr.f32.gmra.mrb[0].mxu0 %v5323
        %v5603 = vpop.f32.mrb[0].mxu0
        %v5604 = vadd.f32 0.0, %v5603
        %v5605 = vpop.f32.mrb[0].mxu0
        %5606 = vmatprep.mubr.f32.mxu0 0.0
        %5607 = vmatmul.mubr.f32.gmra.mrb[0].mxu0 %v5324
        %v5608 = vpop.f32.mrb[0].mxu0
        %v5609 = vadd.f32 0.0, %v5608
        %v5610 = vpop.f32.mrb[0].mxu0
        %5611 = vmatprep.mubr.f32.mxu0 0.0
        %5612 = vmatmul.mubr.f32.gmra.mrb[0].mxu0 %v5325
        %v5613 = vpop.f32.mrb[0].mxu0
        %v5614 = vpop.f32.mrb[0].mxu0
        %5615 = vmatprep.mubr.f32.mxu0 0.0
        %5616 = vmatmul.mubr.f32.gmra.mrb[0].mxu0 %v5326
        %v5617 = vpop.f32.mrb[0].mxu0
        %v5618 = vadd.f32 0.0, %v5617
        %v5619 = vpop.f32.mrb[0].mxu0
        %5620 = vmatprep.mubr.f32.mxu0 0.0
        %5621 = vmatmul.mubr.f32.gmra.mrb[0].mxu0 %v5327
        %v5622 = vpop.f32.mrb[0].mxu0
        %v5623 = vadd.f32 0.0, %v5622
        %v5624 = vpop.f32.mrb[0].mxu0
        %5625 = vmatprep.mubr.f32.mxu0 0.0
        %5626 = vmatmul.mubr.f32.gmra.mrb[0].mxu0 %v5328
        %v5627 = vpop.f32.mrb[0].mxu0
        %v5628 = vpop.f32.mrb[0].mxu0
        %5629 = vmatprep.mubr.f32.mxu0 0.0
        %5630 = vmatmul.mubr.f32.gmra.mrb[0].mxu0 %v5329
        %v5631 = vpop.f32.mrb[0].mxu0
        %v5632 = vadd.f32 0.0, %v5631
        %v5633 = vpop.f32.mrb[0].mxu0
        %5634 = vmatprep.mubr.f32.mxu0 0.0
        %5635 = vmatmul.mubr.f32.gmra.mrb[0].mxu0 %v5330
        %v5636 = vpop.f32.mrb[0].mxu0
        %v5637 = vadd.f32 0.0, %v5636
        %v5638 = vpop.f32.mrb[0].mxu0
        %5639 = vmatprep.mubr.f32.mxu0 0.0
        %5640 = vmatmul.mubr.f32.gmra.mrb[0].mxu0 %v5331
        %v5641 = vpop.f32.mrb[0].mxu0
        %v5642 = vpop.f32.mrb[0].mxu0
        %5643 = vdwg.mxu0
        %v5644 = vadd.f32 %v5252, %v5422
        %v5645 = vadd.f32 %v5253, %v5427
        %v5646 = vadd.f32 %v5254, %v5436
        %v5647 = vadd.f32 %v5255, %v5441
        %v5648 = vadd.f32 %v5256, %v5450
        %v5649 = vadd.f32 %v5257, %v5455
        %v5650 = vadd.f32 %v5258, %v5464
        %v5651 = vadd.f32 %v5259, %v5469
        %v5652 = vadd.f32 %v5260, %v5478
        %v5653 = vadd.f32 %v5261, %v5483
        %v5654 = vadd.f32 %v5262, %v5492
        %v5655 = vadd.f32 %v5263, %v5497
        %v5656 = vadd.f32 %v5264, %v5506
        %v5657 = vadd.f32 %v5265, %v5511
        %v5658 = vadd.f32 %v5266, %v5520
        %v5659 = vadd.f32 %v5267, %v5525
        %v5660 = vadd.f32 %v5268, %v5534
        %v5661 = vadd.f32 %v5269, %v5539
        %v5662 = vadd.f32 %v5270, %v5548
        %v5663 = vadd.f32 %v5271, %v5553
        %v5664 = vadd.f32 %v5272, %v5562
        %v5665 = vadd.f32 %v5273, %v5567
        %v5666 = vadd.f32 %v5274, %v5576
        %v5667 = vadd.f32 %v5275, %v5581
        %v5668 = vadd.f32 %v5276, %v5590
        %v5669 = vadd.f32 %v5277, %v5595
        %v5670 = vadd.f32 %v5278, %v5604
        %v5671 = vadd.f32 %v5279, %v5609
        %v5672 = vadd.f32 %v5280, %v5618
        %v5673 = vadd.f32 %v5281, %v5623
        %v5674 = vadd.f32 %v5282, %v5632
        %v5675 = vadd.f32 %v5283, %v5637
        %s5676 = scalar_lea.vmem [#allocation8], 512
        %v5677 = vld [vmem:[%s5676] sm:$0xff]
        %v5678 = vld [vmem:[%s5676 + $0x8] sm:$0xff]
        %v5679 = vld [vmem:[%s5676 + $0x10] sm:$0xff]
        %v5680 = vld [vmem:[%s5676 + $0x18] sm:$0xff]
        %v5681 = vld [vmem:[%s5676 + $0x20] sm:$0xff]
        %v5682 = vld [vmem:[%s5676 + $0x28] sm:$0xff]
        %v5683 = vld [vmem:[%s5676 + $0x30] sm:$0xff]
        %v5684 = vld [vmem:[%s5676 + $0x38] sm:$0xff]
        %v5685 = vld [vmem:[%s5676 + $0x40] sm:$0xff]
        %v5686 = vld [vmem:[%s5676 + $0x48] sm:$0xff]
        %v5687 = vld [vmem:[%s5676 + $0x50] sm:$0xff]
        %v5688 = vld [vmem:[%s5676 + $0x58] sm:$0xff]
        %v5689 = vld [vmem:[%s5676 + $0x60] sm:$0xff]
        %v5690 = vld [vmem:[%s5676 + $0x68] sm:$0xff]
        %v5691 = vld [vmem:[%s5676 + $0x70] sm:$0xff]
        %v5692 = vld [vmem:[%s5676 + $0x78] sm:$0xff]
        %5693 = vmatprep.subr.mxu0 0.0
        %5694 = vmatpush1.msra.mxu0 %v5677
        %5695 = vmatprep.subr.mxu0 0.0
        %5696 = vmatpush1.msra.mxu0 %v5678
        %5697 = vmatprep.subr.mxu0 0.0
        %5698 = vmatpush1.msra.mxu0 %v5679
        %5699 = vmatprep.subr.mxu0 0.0
        %5700 = vmatpush1.msra.mxu0 %v5680
        %5701 = vmatprep.subr.mxu0 0.0
        %5702 = vmatpush1.msra.mxu0 %v5681
        %5703 = vmatprep.subr.mxu0 0.0
        %5704 = vmatpush1.msra.mxu0 %v5682
        %5705 = vmatprep.subr.mxu0 0.0
        %5706 = vmatpush1.msra.mxu0 %v5683
        %5707 = vmatprep.subr.mxu0 0.0
        %5708 = vmatpush1.msra.mxu0 %v5684
        %5709 = vmatprep.subr.mxu0 0.0
        %5710 = vmatpush1.msra.mxu0 %v5685
        %5711 = vmatprep.subr.mxu0 0.0
        %5712 = vmatpush1.msra.mxu0 %v5686
        %5713 = vmatprep.subr.mxu0 0.0
        %5714 = vmatpush1.msra.mxu0 %v5687
        %5715 = vmatprep.subr.mxu0 0.0
        %5716 = vmatpush1.msra.mxu0 %v5688
        %5717 = vmatprep.subr.mxu0 0.0
        %5718 = vmatpush1.msra.mxu0 %v5689
        %5719 = vmatprep.subr.mxu0 0.0
        %5720 = vmatpush1.msra.mxu0 %v5690
        %5721 = vmatprep.subr.mxu0 0.0
        %5722 = vmatpush1.msra.mxu0 %v5691
        %5723 = vmatprep.subr.mxu0 0.0
        %5724 = vmatpush1.msra.mxu0 %v5692
        %5725 = vmatprep.subr.mxu0 0.0
        %5726 = vmatpush1.msra.mxu0 0.0
        %5727 = vmatprep.subr.mxu0 0.0
        %5728 = vmatpush1.msra.mxu0 0.0
        %5729 = vmatprep.subr.mxu0 0.0
        %5730 = vmatpush1.msra.mxu0 0.0
        %5731 = vmatprep.subr.mxu0 0.0
        %5732 = vmatpush1.msra.mxu0 0.0
        %5733 = vmatprep.subr.mxu0 0.0
        %5734 = vmatpush1.msra.mxu0 0.0
        %5735 = vmatprep.subr.mxu0 0.0
        %5736 = vmatpush1.msra.mxu0 0.0
        %5737 = vmatprep.subr.mxu0 0.0
        %5738 = vmatpush1.msra.mxu0 0.0
        %5739 = vmatprep.subr.mxu0 0.0
        %5740 = vmatpush1.msra.mxu0 0.0
        %5741 = vmatprep.subr.mxu0 0.0
        %5742 = vmatpush1.msra.mxu0 0.0
        %5743 = vmatprep.subr.mxu0 0.0
        %5744 = vmatpush1.msra.mxu0 0.0
        %5745 = vmatprep.subr.mxu0 0.0
        %5746 = vmatpush1.msra.mxu0 0.0
        %5747 = vmatprep.subr.mxu0 0.0
        %5748 = vmatpush1.msra.mxu0 0.0
        %5749 = vmatprep.subr.mxu0 0.0
        %5750 = vmatpush1.msra.mxu0 0.0
        %5751 = vmatprep.subr.mxu0 0.0
        %5752 = vmatpush1.msra.mxu0 0.0
        %5753 = vmatprep.subr.mxu0 0.0
        %5754 = vmatpush1.msra.mxu0 0.0
        %5755 = vmatprep.subr.mxu0 0.0
        %5756 = vmatpush1.msra.mxu0 0.0
        %5757 = vmatprep.mubr.f32.mxu0 0.0
        %5758 = vmatmul.mubr.f32.gmra.mrb[0].mxu0 %v5287
        %v5759 = vpop.f32.mrb[0].mxu0
        %v5760 = vadd.f32 0.0, %v5759
        %v5761 = vpop.f32.mrb[0].mxu0
        %5762 = vmatprep.mubr.f32.mxu0 0.0
        %5763 = vmatmul.mubr.f32.gmra.mrb[0].mxu0 %v5288
        %v5764 = vpop.f32.mrb[0].mxu0
        %v5765 = vadd.f32 0.0, %v5764
        %v5766 = vpop.f32.mrb[0].mxu0
        %5767 = vmatprep.mubr.f32.mxu0 0.0
        %5768 = vmatmul.mubr.f32.gmra.mrb[0].mxu0 %v5289
        %v5769 = vpop.f32.mrb[0].mxu0
        %v5770 = vpop.f32.mrb[0].mxu0
        %5771 = vmatprep.mubr.f32.mxu0 0.0
        %5772 = vmatmul.mubr.f32.gmra.mrb[0].mxu0 %v5290
        %v5773 = vpop.f32.mrb[0].mxu0
        %v5774 = vadd.f32 0.0, %v5773
        %v5775 = vpop.f32.mrb[0].mxu0
        %5776 = vmatprep.mubr.f32.mxu0 0.0
        %5777 = vmatmul.mubr.f32.gmra.mrb[0].mxu0 %v5291
        %v5778 = vpop.f32.mrb[0].mxu0
        %v5779 = vadd.f32 0.0, %v5778
        %v5780 = vpop.f32.mrb[0].mxu0
        %5781 = vmatprep.mubr.f32.mxu0 0.0
        %5782 = vmatmul.mubr.f32.gmra.mrb[0].mxu0 %v5292
        %v5783 = vpop.f32.mrb[0].mxu0
        %v5784 = vpop.f32.mrb[0].mxu0
        %5785 = vmatprep.mubr.f32.mxu0 0.0
        %5786 = vmatmul.mubr.f32.gmra.mrb[0].mxu0 %v5293
        %v5787 = vpop.f32.mrb[0].mxu0
        %v5788 = vadd.f32 0.0, %v5787
        %v5789 = vpop.f32.mrb[0].mxu0
        %5790 = vmatprep.mubr.f32.mxu0 0.0
        %5791 = vmatmul.mubr.f32.gmra.mrb[0].mxu0 %v5294
        %v5792 = vpop.f32.mrb[0].mxu0
        %v5793 = vadd.f32 0.0, %v5792
        %v5794 = vpop.f32.mrb[0].mxu0
        %5795 = vmatprep.mubr.f32.mxu0 0.0
        %5796 = vmatmul.mubr.f32.gmra.mrb[0].mxu0 %v5295
        %v5797 = vpop.f32.mrb[0].mxu0
        %v5798 = vpop.f32.mrb[0].mxu0
        %5799 = vmatprep.mubr.f32.mxu0 0.0
        %5800 = vmatmul.mubr.f32.gmra.mrb[0].mxu0 %v5296
        %v5801 = vpop.f32.mrb[0].mxu0
        %v5802 = vadd.f32 0.0, %v5801
        %v5803 = vpop.f32.mrb[0].mxu0
        %5804 = vmatprep.mubr.f32.mxu0 0.0
        %5805 = vmatmul.mubr.f32.gmra.mrb[0].mxu0 %v5297
        %v5806 = vpop.f32.mrb[0].mxu0
        %v5807 = vadd.f32 0.0, %v5806
        %v5808 = vpop.f32.mrb[0].mxu0
        %5809 = vmatprep.mubr.f32.mxu0 0.0
        %5810 = vmatmul.mubr.f32.gmra.mrb[0].mxu0 %v5298
        %v5811 = vpop.f32.mrb[0].mxu0
        %v5812 = vpop.f32.mrb[0].mxu0
        %5813 = vmatprep.mubr.f32.mxu0 0.0
        %5814 = vmatmul.mubr.f32.gmra.mrb[0].mxu0 %v5299
        %v5815 = vpop.f32.mrb[0].mxu0
        %v5816 = vadd.f32 0.0, %v5815
        %v5817 = vpop.f32.mrb[0].mxu0
        %5818 = vmatprep.mubr.f32.mxu0 0.0
        %5819 = vmatmul.mubr.f32.gmra.mrb[0].mxu0 %v5300
        %v5820 = vpop.f32.mrb[0].mxu0
        %v5821 = vadd.f32 0.0, %v5820
        %v5822 = vpop.f32.mrb[0].mxu0
        %5823 = vmatprep.mubr.f32.mxu0 0.0
        %5824 = vmatmul.mubr.f32.gmra.mrb[0].mxu0 %v5301
        %v5825 = vpop.f32.mrb[0].mxu0
        %v5826 = vpop.f32.mrb[0].mxu0
        %5827 = vmatprep.mubr.f32.mxu0 0.0
        %5828 = vmatmul.mubr.f32.gmra.mrb[0].mxu0 %v5302
        %v5829 = vpop.f32.mrb[0].mxu0
        %v5830 = vadd.f32 0.0, %v5829
        %v5831 = vpop.f32.mrb[0].mxu0
        %5832 = vmatprep.mubr.f32.mxu0 0.0
        %5833 = vmatmul.mubr.f32.gmra.mrb[0].mxu0 %v5303
        %v5834 = vpop.f32.mrb[0].mxu0
        %v5835 = vadd.f32 0.0, %v5834
        %v5836 = vpop.f32.mrb[0].mxu0
        %5837 = vmatprep.mubr.f32.mxu0 0.0
        %5838 = vmatmul.mubr.f32.gmra.mrb[0].mxu0 %v5304
        %v5839 = vpop.f32.mrb[0].mxu0
        %v5840 = vpop.f32.mrb[0].mxu0
        %5841 = vmatprep.mubr.f32.mxu0 0.0
        %5842 = vmatmul.mubr.f32.gmra.mrb[0].mxu0 %v5305
        %v5843 = vpop.f32.mrb[0].mxu0
        %v5844 = vadd.f32 0.0, %v5843
        %v5845 = vpop.f32.mrb[0].mxu0
        %5846 = vmatprep.mubr.f32.mxu0 0.0
        %5847 = vmatmul.mubr.f32.gmra.mrb[0].mxu0 %v5306
        %v5848 = vpop.f32.mrb[0].mxu0
        %v5849 = vadd.f32 0.0, %v5848
        %v5850 = vpop.f32.mrb[0].mxu0
        %5851 = vmatprep.mubr.f32.mxu0 0.0
        %5852 = vmatmul.mubr.f32.gmra.mrb[0].mxu0 %v5307
        %v5853 = vpop.f32.mrb[0].mxu0
        %v5854 = vpop.f32.mrb[0].mxu0
        %5855 = vmatprep.mubr.f32.mxu0 0.0
        %5856 = vmatmul.mubr.f32.gmra.mrb[0].mxu0 %v5308
        %v5857 = vpop.f32.mrb[0].mxu0
        %v5858 = vadd.f32 0.0, %v5857
        %v5859 = vpop.f32.mrb[0].mxu0
        %5860 = vmatprep.mubr.f32.mxu0 0.0
        %5861 = vmatmul.mubr.f32.gmra.mrb[0].mxu0 %v5309
        %v5862 = vpop.f32.mrb[0].mxu0
        %v5863 = vadd.f32 0.0, %v5862
        %v5864 = vpop.f32.mrb[0].mxu0
        %5865 = vmatprep.mubr.f32.mxu0 0.0
        %5866 = vmatmul.mubr.f32.gmra.mrb[0].mxu0 %v5310
        %v5867 = vpop.f32.mrb[0].mxu0
        %v5868 = vpop.f32.mrb[0].mxu0
        %5869 = vmatprep.mubr.f32.mxu0 0.0
        %5870 = vmatmul.mubr.f32.gmra.mrb[0].mxu0 %v5311
        %v5871 = vpop.f32.mrb[0].mxu0
        %v5872 = vadd.f32 0.0, %v5871
        %v5873 = vpop.f32.mrb[0].mxu0
        %5874 = vmatprep.mubr.f32.mxu0 0.0
        %5875 = vmatmul.mubr.f32.gmra.mrb[0].mxu0 %v5312
        %v5876 = vpop.f32.mrb[0].mxu0
        %v5877 = vadd.f32 0.0, %v5876
        %v5878 = vpop.f32.mrb[0].mxu0
        %5879 = vmatprep.mubr.f32.mxu0 0.0
        %5880 = vmatmul.mubr.f32.gmra.mrb[0].mxu0 %v5313
        %v5881 = vpop.f32.mrb[0].mxu0
        %v5882 = vpop.f32.mrb[0].mxu0
        %5883 = vmatprep.mubr.f32.mxu0 0.0
        %5884 = vmatmul.mubr.f32.gmra.mrb[0].mxu0 %v5314
        %v5885 = vpop.f32.mrb[0].mxu0
        %v5886 = vadd.f32 0.0, %v5885
        %v5887 = vpop.f32.mrb[0].mxu0
        %5888 = vmatprep.mubr.f32.mxu0 0.0
        %5889 = vmatmul.mubr.f32.gmra.mrb[0].mxu0 %v5315
        %v5890 = vpop.f32.mrb[0].mxu0
        %v5891 = vadd.f32 0.0, %v5890
        %v5892 = vpop.f32.mrb[0].mxu0
        %5893 = vmatprep.mubr.f32.mxu0 0.0
        %5894 = vmatmul.mubr.f32.gmra.mrb[0].mxu0 %v5316
        %v5895 = vpop.f32.mrb[0].mxu0
        %v5896 = vpop.f32.mrb[0].mxu0
        %5897 = vmatprep.mubr.f32.mxu0 0.0
        %5898 = vmatmul.mubr.f32.gmra.mrb[0].mxu0 %v5317
        %v5899 = vpop.f32.mrb[0].mxu0
        %v5900 = vadd.f32 0.0, %v5899
        %v5901 = vpop.f32.mrb[0].mxu0
        %5902 = vmatprep.mubr.f32.mxu0 0.0
        %5903 = vmatmul.mubr.f32.gmra.mrb[0].mxu0 %v5318
        %v5904 = vpop.f32.mrb[0].mxu0
        %v5905 = vadd.f32 0.0, %v5904
        %v5906 = vpop.f32.mrb[0].mxu0
        %5907 = vmatprep.mubr.f32.mxu0 0.0
        %5908 = vmatmul.mubr.f32.gmra.mrb[0].mxu0 %v5319
        %v5909 = vpop.f32.mrb[0].mxu0
        %v5910 = vpop.f32.mrb[0].mxu0
        %5911 = vmatprep.mubr.f32.mxu0 0.0
        %5912 = vmatmul.mubr.f32.gmra.mrb[0].mxu0 %v5320
        %v5913 = vpop.f32.mrb[0].mxu0
        %v5914 = vadd.f32 0.0, %v5913
        %v5915 = vpop.f32.mrb[0].mxu0
        %5916 = vmatprep.mubr.f32.mxu0 0.0
        %5917 = vmatmul.mubr.f32.gmra.mrb[0].mxu0 %v5321
        %v5918 = vpop.f32.mrb[0].mxu0
        %v5919 = vadd.f32 0.0, %v5918
        %v5920 = vpop.f32.mrb[0].mxu0
        %5921 = vmatprep.mubr.f32.mxu0 0.0
        %5922 = vmatmul.mubr.f32.gmra.mrb[0].mxu0 %v5322
        %v5923 = vpop.f32.mrb[0].mxu0
        %v5924 = vpop.f32.mrb[0].mxu0
        %5925 = vmatprep.mubr.f32.mxu0 0.0
        %5926 = vmatmul.mubr.f32.gmra.mrb[0].mxu0 %v5323
        %v5927 = vpop.f32.mrb[0].mxu0
        %v5928 = vadd.f32 0.0, %v5927
        %v5929 = vpop.f32.mrb[0].mxu0
        %5930 = vmatprep.mubr.f32.mxu0 0.0
        %5931 = vmatmul.mubr.f32.gmra.mrb[0].mxu0 %v5324
        %v5932 = vpop.f32.mrb[0].mxu0
        %v5933 = vadd.f32 0.0, %v5932
        %v5934 = vpop.f32.mrb[0].mxu0
        %5935 = vmatprep.mubr.f32.mxu0 0.0
        %5936 = vmatmul.mubr.f32.gmra.mrb[0].mxu0 %v5325
        %v5937 = vpop.f32.mrb[0].mxu0
        %v5938 = vpop.f32.mrb[0].mxu0
        %5939 = vmatprep.mubr.f32.mxu0 0.0
        %5940 = vmatmul.mubr.f32.gmra.mrb[0].mxu0 %v5326
        %v5941 = vpop.f32.mrb[0].mxu0
        %v5942 = vadd.f32 0.0, %v5941
        %v5943 = vpop.f32.mrb[0].mxu0
        %5944 = vmatprep.mubr.f32.mxu0 0.0
        %5945 = vmatmul.mubr.f32.gmra.mrb[0].mxu0 %v5327
        %v5946 = vpop.f32.mrb[0].mxu0
        %v5947 = vadd.f32 0.0, %v5946
        %v5948 = vpop.f32.mrb[0].mxu0
        %5949 = vmatprep.mubr.f32.mxu0 0.0
        %5950 = vmatmul.mubr.f32.gmra.mrb[0].mxu0 %v5328
        %v5951 = vpop.f32.mrb[0].mxu0
        %v5952 = vpop.f32.mrb[0].mxu0
        %5953 = vmatprep.mubr.f32.mxu0 0.0
        %5954 = vmatmul.mubr.f32.gmra.mrb[0].mxu0 %v5329
        %v5955 = vpop.f32.mrb[0].mxu0
        %v5956 = vadd.f32 0.0, %v5955
        %v5957 = vpop.f32.mrb[0].mxu0
        %5958 = vmatprep.mubr.f32.mxu0 0.0
        %5959 = vmatmul.mubr.f32.gmra.mrb[0].mxu0 %v5330
        %v5960 = vpop.f32.mrb[0].mxu0
        %v5961 = vadd.f32 0.0, %v5960
        %v5962 = vpop.f32.mrb[0].mxu0
        %5963 = vmatprep.mubr.f32.mxu0 0.0
        %5964 = vmatmul.mubr.f32.gmra.mrb[0].mxu0 %v5331
        %v5965 = vpop.f32.mrb[0].mxu0
        %v5966 = vpop.f32.mrb[0].mxu0
        %5967 = vmatprep.mubr.f32.mxu0 0.0
        %5968 = vmatmul.mubr.f32.gmra.mrb[0].mxu0 %v5332
        %v5969 = vpop.f32.mrb[0].mxu0
        %v5970 = vadd.f32 0.0, %v5969
        %v5971 = vpop.f32.mrb[0].mxu0
        %5972 = vmatprep.mubr.f32.mxu0 0.0
        %5973 = vmatmul.mubr.f32.gmra.mrb[0].mxu0 %v5333
        %v5974 = vpop.f32.mrb[0].mxu0
        %v5975 = vadd.f32 0.0, %v5974
        %v5976 = vpop.f32.mrb[0].mxu0
        %5977 = vmatprep.mubr.f32.mxu0 0.0
        %5978 = vmatmul.mubr.f32.gmra.mrb[0].mxu0 %v5334
        %v5979 = vpop.f32.mrb[0].mxu0
        %v5980 = vpop.f32.mrb[0].mxu0
        %5981 = vdwg.mxu0
        %v5982 = vadd.f32 %v5644, %v5760
        %v5983 = vadd.f32 %v5645, %v5765
        %v5984 = vadd.f32 %v5646, %v5774
        %v5985 = vadd.f32 %v5647, %v5779
        %v5986 = vadd.f32 %v5648, %v5788
        %v5987 = vadd.f32 %v5649, %v5793
        %v5988 = vadd.f32 %v5650, %v5802
        %v5989 = vadd.f32 %v5651, %v5807
        %v5990 = vadd.f32 %v5652, %v5816
        %v5991 = vadd.f32 %v5653, %v5821
        %v5992 = vadd.f32 %v5654, %v5830
        %v5993 = vadd.f32 %v5655, %v5835
        %v5994 = vadd.f32 %v5656, %v5844
        %v5995 = vadd.f32 %v5657, %v5849
        %v5996 = vadd.f32 %v5658, %v5858
        %v5997 = vadd.f32 %v5659, %v5863
        %v5998 = vadd.f32 %v5660, %v5872
        %v5999 = vadd.f32 %v5661, %v5877
        %v6000 = vadd.f32 %v5662, %v5886
        %v6001 = vadd.f32 %v5663, %v5891
        %v6002 = vadd.f32 %v5664, %v5900
        %v6003 = vadd.f32 %v5665, %v5905
        %v6004 = vadd.f32 %v5666, %v5914
        %v6005 = vadd.f32 %v5667, %v5919
        %v6006 = vadd.f32 %v5668, %v5928
        %v6007 = vadd.f32 %v5669, %v5933
        %v6008 = vadd.f32 %v5670, %v5942
        %v6009 = vadd.f32 %v5671, %v5947
        %v6010 = vadd.f32 %v5672, %v5956
        %v6011 = vadd.f32 %v5673, %v5961
        %v6012 = vadd.f32 %v5674, %v5970
        %v6013 = vadd.f32 %v5675, %v5975
        %s6014 = scalar_lea.vmem [#allocation8], 896
        %v6015 = vld [vmem:[%s6014] sm:$0xff]
        %v6016 = vld [vmem:[%s6014 + $0x8] sm:$0xff]
        %v6017 = vld [vmem:[%s6014 + $0x10] sm:$0xff]
        %v6018 = vld [vmem:[%s6014 + $0x18] sm:$0xff]
        %v6019 = vld [vmem:[%s6014 + $0x20] sm:$0xff]
        %v6020 = vld [vmem:[%s6014 + $0x28] sm:$0xff]
        %v6021 = vld [vmem:[%s6014 + $0x30] sm:$0xff]
        %v6022 = vld [vmem:[%s6014 + $0x38] sm:$0xff]
        %v6023 = vld [vmem:[%s6014 + $0x40] sm:$0xff]
        %v6024 = vld [vmem:[%s6014 + $0x48] sm:$0xff]
        %v6025 = vld [vmem:[%s6014 + $0x50] sm:$0xff]
        %v6026 = vld [vmem:[%s6014 + $0x58] sm:$0xff]
        %v6027 = vld [vmem:[%s6014 + $0x60] sm:$0xff]
        %v6028 = vld [vmem:[%s6014 + $0x68] sm:$0xff]
        %v6029 = vld [vmem:[%s6014 + $0x70] sm:$0xff]
        %v6030 = vld [vmem:[%s6014 + $0x78] sm:$0xff]
        %6031 = vmatprep.subr.mxu0 0.0
        %6032 = vmatpush1.msra.mxu0 %v6015
        %6033 = vmatprep.subr.mxu0 0.0
        %6034 = vmatpush1.msra.mxu0 %v6016
        %6035 = vmatprep.subr.mxu0 0.0
        %6036 = vmatpush1.msra.mxu0 %v6017
        %6037 = vmatprep.subr.mxu0 0.0
        %6038 = vmatpush1.msra.mxu0 %v6018
        %6039 = vmatprep.subr.mxu0 0.0
        %6040 = vmatpush1.msra.mxu0 %v6019
        %6041 = vmatprep.subr.mxu0 0.0
        %6042 = vmatpush1.msra.mxu0 %v6020
        %6043 = vmatprep.subr.mxu0 0.0
        %6044 = vmatpush1.msra.mxu0 %v6021
        %6045 = vmatprep.subr.mxu0 0.0
        %6046 = vmatpush1.msra.mxu0 %v6022
        %6047 = vmatprep.subr.mxu0 0.0
        %6048 = vmatpush1.msra.mxu0 %v6023
        %6049 = vmatprep.subr.mxu0 0.0
        %6050 = vmatpush1.msra.mxu0 %v6024
        %6051 = vmatprep.subr.mxu0 0.0
        %6052 = vmatpush1.msra.mxu0 %v6025
        %6053 = vmatprep.subr.mxu0 0.0
        %6054 = vmatpush1.msra.mxu0 %v6026
        %6055 = vmatprep.subr.mxu0 0.0
        %6056 = vmatpush1.msra.mxu0 %v6027
        %6057 = vmatprep.subr.mxu0 0.0
        %6058 = vmatpush1.msra.mxu0 %v6028
        %6059 = vmatprep.subr.mxu0 0.0
        %6060 = vmatpush1.msra.mxu0 %v6029
        %6061 = vmatprep.subr.mxu0 0.0
        %6062 = vmatpush1.msra.mxu0 %v6030
        %6063 = vmatprep.subr.mxu0 0.0
        %6064 = vmatpush1.msra.mxu0 0.0
        %6065 = vmatprep.subr.mxu0 0.0
        %6066 = vmatpush1.msra.mxu0 0.0
        %6067 = vmatprep.subr.mxu0 0.0
        %6068 = vmatpush1.msra.mxu0 0.0
        %6069 = vmatprep.subr.mxu0 0.0
        %6070 = vmatpush1.msra.mxu0 0.0
        %6071 = vmatprep.subr.mxu0 0.0
        %6072 = vmatpush1.msra.mxu0 0.0
        %6073 = vmatprep.subr.mxu0 0.0
        %6074 = vmatpush1.msra.mxu0 0.0
        %6075 = vmatprep.subr.mxu0 0.0
        %6076 = vmatpush1.msra.mxu0 0.0
        %6077 = vmatprep.subr.mxu0 0.0
        %6078 = vmatpush1.msra.mxu0 0.0
        %6079 = vmatprep.subr.mxu0 0.0
        %6080 = vmatpush1.msra.mxu0 0.0
        %6081 = vmatprep.subr.mxu0 0.0
        %6082 = vmatpush1.msra.mxu0 0.0
        %6083 = vmatprep.subr.mxu0 0.0
        %6084 = vmatpush1.msra.mxu0 0.0
        %6085 = vmatprep.subr.mxu0 0.0
        %6086 = vmatpush1.msra.mxu0 0.0
        %6087 = vmatprep.subr.mxu0 0.0
        %6088 = vmatpush1.msra.mxu0 0.0
        %6089 = vmatprep.subr.mxu0 0.0
        %6090 = vmatpush1.msra.mxu0 0.0
        %6091 = vmatprep.subr.mxu0 0.0
        %6092 = vmatpush1.msra.mxu0 0.0
        %6093 = vmatprep.subr.mxu0 0.0
        %6094 = vmatpush1.msra.mxu0 0.0
        %6095 = vmatprep.mubr.f32.mxu0 0.0
        %6096 = vmatmul.mubr.f32.gmra.mrb[0].mxu0 %v5290
        %v6097 = vpop.f32.mrb[0].mxu0
        %v6098 = vadd.f32 0.0, %v6097
        %v6099 = vpop.f32.mrb[0].mxu0
        %6100 = vmatprep.mubr.f32.mxu0 0.0
        %6101 = vmatmul.mubr.f32.gmra.mrb[0].mxu0 %v5291
        %v6102 = vpop.f32.mrb[0].mxu0
        %v6103 = vadd.f32 0.0, %v6102
        %v6104 = vpop.f32.mrb[0].mxu0
        %6105 = vmatprep.mubr.f32.mxu0 0.0
        %6106 = vmatmul.mubr.f32.gmra.mrb[0].mxu0 %v5292
        %v6107 = vpop.f32.mrb[0].mxu0
        %v6108 = vpop.f32.mrb[0].mxu0
        %6109 = vmatprep.mubr.f32.mxu0 0.0
        %6110 = vmatmul.mubr.f32.gmra.mrb[0].mxu0 %v5293
        %v6111 = vpop.f32.mrb[0].mxu0
        %v6112 = vadd.f32 0.0, %v6111
        %v6113 = vpop.f32.mrb[0].mxu0
        %6114 = vmatprep.mubr.f32.mxu0 0.0
        %6115 = vmatmul.mubr.f32.gmra.mrb[0].mxu0 %v5294
        %v6116 = vpop.f32.mrb[0].mxu0
        %v6117 = vadd.f32 0.0, %v6116
        %v6118 = vpop.f32.mrb[0].mxu0
        %6119 = vmatprep.mubr.f32.mxu0 0.0
        %6120 = vmatmul.mubr.f32.gmra.mrb[0].mxu0 %v5295
        %v6121 = vpop.f32.mrb[0].mxu0
        %v6122 = vpop.f32.mrb[0].mxu0
        %6123 = vmatprep.mubr.f32.mxu0 0.0
        %6124 = vmatmul.mubr.f32.gmra.mrb[0].mxu0 %v5296
        %v6125 = vpop.f32.mrb[0].mxu0
        %v6126 = vadd.f32 0.0, %v6125
        %v6127 = vpop.f32.mrb[0].mxu0
        %6128 = vmatprep.mubr.f32.mxu0 0.0
        %6129 = vmatmul.mubr.f32.gmra.mrb[0].mxu0 %v5297
        %v6130 = vpop.f32.mrb[0].mxu0
        %v6131 = vadd.f32 0.0, %v6130
        %v6132 = vpop.f32.mrb[0].mxu0
        %6133 = vmatprep.mubr.f32.mxu0 0.0
        %6134 = vmatmul.mubr.f32.gmra.mrb[0].mxu0 %v5298
        %v6135 = vpop.f32.mrb[0].mxu0
        %v6136 = vpop.f32.mrb[0].mxu0
        %6137 = vmatprep.mubr.f32.mxu0 0.0
        %6138 = vmatmul.mubr.f32.gmra.mrb[0].mxu0 %v5299
        %v6139 = vpop.f32.mrb[0].mxu0
        %v6140 = vadd.f32 0.0, %v6139
        %v6141 = vpop.f32.mrb[0].mxu0
        %6142 = vmatprep.mubr.f32.mxu0 0.0
        %6143 = vmatmul.mubr.f32.gmra.mrb[0].mxu0 %v5300
        %v6144 = vpop.f32.mrb[0].mxu0
        %v6145 = vadd.f32 0.0, %v6144
        %v6146 = vpop.f32.mrb[0].mxu0
        %6147 = vmatprep.mubr.f32.mxu0 0.0
        %6148 = vmatmul.mubr.f32.gmra.mrb[0].mxu0 %v5301
        %v6149 = vpop.f32.mrb[0].mxu0
        %v6150 = vpop.f32.mrb[0].mxu0
        %6151 = vmatprep.mubr.f32.mxu0 0.0
        %6152 = vmatmul.mubr.f32.gmra.mrb[0].mxu0 %v5302
        %v6153 = vpop.f32.mrb[0].mxu0
        %v6154 = vadd.f32 0.0, %v6153
        %v6155 = vpop.f32.mrb[0].mxu0
        %6156 = vmatprep.mubr.f32.mxu0 0.0
        %6157 = vmatmul.mubr.f32.gmra.mrb[0].mxu0 %v5303
        %v6158 = vpop.f32.mrb[0].mxu0
        %v6159 = vadd.f32 0.0, %v6158
        %v6160 = vpop.f32.mrb[0].mxu0
        %6161 = vmatprep.mubr.f32.mxu0 0.0
        %6162 = vmatmul.mubr.f32.gmra.mrb[0].mxu0 %v5304
        %v6163 = vpop.f32.mrb[0].mxu0
        %v6164 = vpop.f32.mrb[0].mxu0
        %6165 = vmatprep.mubr.f32.mxu0 0.0
        %6166 = vmatmul.mubr.f32.gmra.mrb[0].mxu0 %v5305
        %v6167 = vpop.f32.mrb[0].mxu0
        %v6168 = vadd.f32 0.0, %v6167
        %v6169 = vpop.f32.mrb[0].mxu0
        %6170 = vmatprep.mubr.f32.mxu0 0.0
        %6171 = vmatmul.mubr.f32.gmra.mrb[0].mxu0 %v5306
        %v6172 = vpop.f32.mrb[0].mxu0
        %v6173 = vadd.f32 0.0, %v6172
        %v6174 = vpop.f32.mrb[0].mxu0
        %6175 = vmatprep.mubr.f32.mxu0 0.0
        %6176 = vmatmul.mubr.f32.gmra.mrb[0].mxu0 %v5307
        %v6177 = vpop.f32.mrb[0].mxu0
        %v6178 = vpop.f32.mrb[0].mxu0
        %6179 = vmatprep.mubr.f32.mxu0 0.0
        %6180 = vmatmul.mubr.f32.gmra.mrb[0].mxu0 %v5308
        %v6181 = vpop.f32.mrb[0].mxu0
        %v6182 = vadd.f32 0.0, %v6181
        %v6183 = vpop.f32.mrb[0].mxu0
        %6184 = vmatprep.mubr.f32.mxu0 0.0
        %6185 = vmatmul.mubr.f32.gmra.mrb[0].mxu0 %v5309
        %v6186 = vpop.f32.mrb[0].mxu0
        %v6187 = vadd.f32 0.0, %v6186
        %v6188 = vpop.f32.mrb[0].mxu0
        %6189 = vmatprep.mubr.f32.mxu0 0.0
        %6190 = vmatmul.mubr.f32.gmra.mrb[0].mxu0 %v5310
        %v6191 = vpop.f32.mrb[0].mxu0
        %v6192 = vpop.f32.mrb[0].mxu0
        %6193 = vmatprep.mubr.f32.mxu0 0.0
        %6194 = vmatmul.mubr.f32.gmra.mrb[0].mxu0 %v5311
        %v6195 = vpop.f32.mrb[0].mxu0
        %v6196 = vadd.f32 0.0, %v6195
        %v6197 = vpop.f32.mrb[0].mxu0
        %6198 = vmatprep.mubr.f32.mxu0 0.0
        %6199 = vmatmul.mubr.f32.gmra.mrb[0].mxu0 %v5312
        %v6200 = vpop.f32.mrb[0].mxu0
        %v6201 = vadd.f32 0.0, %v6200
        %v6202 = vpop.f32.mrb[0].mxu0
        %6203 = vmatprep.mubr.f32.mxu0 0.0
        %6204 = vmatmul.mubr.f32.gmra.mrb[0].mxu0 %v5313
        %v6205 = vpop.f32.mrb[0].mxu0
        %v6206 = vpop.f32.mrb[0].mxu0
        %6207 = vmatprep.mubr.f32.mxu0 0.0
        %6208 = vmatmul.mubr.f32.gmra.mrb[0].mxu0 %v5314
        %v6209 = vpop.f32.mrb[0].mxu0
        %v6210 = vadd.f32 0.0, %v6209
        %v6211 = vpop.f32.mrb[0].mxu0
        %6212 = vmatprep.mubr.f32.mxu0 0.0
        %6213 = vmatmul.mubr.f32.gmra.mrb[0].mxu0 %v5315
        %v6214 = vpop.f32.mrb[0].mxu0
        %v6215 = vadd.f32 0.0, %v6214
        %v6216 = vpop.f32.mrb[0].mxu0
        %6217 = vmatprep.mubr.f32.mxu0 0.0
        %6218 = vmatmul.mubr.f32.gmra.mrb[0].mxu0 %v5316
        %v6219 = vpop.f32.mrb[0].mxu0
        %v6220 = vpop.f32.mrb[0].mxu0
        %6221 = vmatprep.mubr.f32.mxu0 0.0
        %6222 = vmatmul.mubr.f32.gmra.mrb[0].mxu0 %v5317
        %v6223 = vpop.f32.mrb[0].mxu0
        %v6224 = vadd.f32 0.0, %v6223
        %v6225 = vpop.f32.mrb[0].mxu0
        %6226 = vmatprep.mubr.f32.mxu0 0.0
        %6227 = vmatmul.mubr.f32.gmra.mrb[0].mxu0 %v5318
        %v6228 = vpop.f32.mrb[0].mxu0
        %v6229 = vadd.f32 0.0, %v6228
        %v6230 = vpop.f32.mrb[0].mxu0
        %6231 = vmatprep.mubr.f32.mxu0 0.0
        %6232 = vmatmul.mubr.f32.gmra.mrb[0].mxu0 %v5319
        %v6233 = vpop.f32.mrb[0].mxu0
        %v6234 = vpop.f32.mrb[0].mxu0
        %6235 = vmatprep.mubr.f32.mxu0 0.0
        %6236 = vmatmul.mubr.f32.gmra.mrb[0].mxu0 %v5320
        %v6237 = vpop.f32.mrb[0].mxu0
        %v6238 = vadd.f32 0.0, %v6237
        %v6239 = vpop.f32.mrb[0].mxu0
        %6240 = vmatprep.mubr.f32.mxu0 0.0
        %6241 = vmatmul.mubr.f32.gmra.mrb[0].mxu0 %v5321
        %v6242 = vpop.f32.mrb[0].mxu0
        %v6243 = vadd.f32 0.0, %v6242
        %v6244 = vpop.f32.mrb[0].mxu0
        %6245 = vmatprep.mubr.f32.mxu0 0.0
        %6246 = vmatmul.mubr.f32.gmra.mrb[0].mxu0 %v5322
        %v6247 = vpop.f32.mrb[0].mxu0
        %v6248 = vpop.f32.mrb[0].mxu0
        %6249 = vmatprep.mubr.f32.mxu0 0.0
        %6250 = vmatmul.mubr.f32.gmra.mrb[0].mxu0 %v5323
        %v6251 = vpop.f32.mrb[0].mxu0
        %v6252 = vadd.f32 0.0, %v6251
        %v6253 = vpop.f32.mrb[0].mxu0
        %6254 = vmatprep.mubr.f32.mxu0 0.0
        %6255 = vmatmul.mubr.f32.gmra.mrb[0].mxu0 %v5324
        %v6256 = vpop.f32.mrb[0].mxu0
        %v6257 = vadd.f32 0.0, %v6256
        %v6258 = vpop.f32.mrb[0].mxu0
        %6259 = vmatprep.mubr.f32.mxu0 0.0
        %6260 = vmatmul.mubr.f32.gmra.mrb[0].mxu0 %v5325
        %v6261 = vpop.f32.mrb[0].mxu0
        %v6262 = vpop.f32.mrb[0].mxu0
        %6263 = vmatprep.mubr.f32.mxu0 0.0
        %6264 = vmatmul.mubr.f32.gmra.mrb[0].mxu0 %v5326
        %v6265 = vpop.f32.mrb[0].mxu0
        %v6266 = vadd.f32 0.0, %v6265
        %v6267 = vpop.f32.mrb[0].mxu0
        %6268 = vmatprep.mubr.f32.mxu0 0.0
        %6269 = vmatmul.mubr.f32.gmra.mrb[0].mxu0 %v5327
        %v6270 = vpop.f32.mrb[0].mxu0
        %v6271 = vadd.f32 0.0, %v6270
        %v6272 = vpop.f32.mrb[0].mxu0
        %6273 = vmatprep.mubr.f32.mxu0 0.0
        %6274 = vmatmul.mubr.f32.gmra.mrb[0].mxu0 %v5328
        %v6275 = vpop.f32.mrb[0].mxu0
        %v6276 = vpop.f32.mrb[0].mxu0
        %6277 = vmatprep.mubr.f32.mxu0 0.0
        %6278 = vmatmul.mubr.f32.gmra.mrb[0].mxu0 %v5329
        %v6279 = vpop.f32.mrb[0].mxu0
        %v6280 = vadd.f32 0.0, %v6279
        %v6281 = vpop.f32.mrb[0].mxu0
        %6282 = vmatprep.mubr.f32.mxu0 0.0
        %6283 = vmatmul.mubr.f32.gmra.mrb[0].mxu0 %v5330
        %v6284 = vpop.f32.mrb[0].mxu0
        %v6285 = vadd.f32 0.0, %v6284
        %v6286 = vpop.f32.mrb[0].mxu0
        %6287 = vmatprep.mubr.f32.mxu0 0.0
        %6288 = vmatmul.mubr.f32.gmra.mrb[0].mxu0 %v5331
        %v6289 = vpop.f32.mrb[0].mxu0
        %v6290 = vpop.f32.mrb[0].mxu0
        %6291 = vmatprep.mubr.f32.mxu0 0.0
        %6292 = vmatmul.mubr.f32.gmra.mrb[0].mxu0 %v5332
        %v6293 = vpop.f32.mrb[0].mxu0
        %v6294 = vadd.f32 0.0, %v6293
        %v6295 = vpop.f32.mrb[0].mxu0
        %6296 = vmatprep.mubr.f32.mxu0 0.0
        %6297 = vmatmul.mubr.f32.gmra.mrb[0].mxu0 %v5333
        %v6298 = vpop.f32.mrb[0].mxu0
        %v6299 = vadd.f32 0.0, %v6298
        %v6300 = vpop.f32.mrb[0].mxu0
        %6301 = vmatprep.mubr.f32.mxu0 0.0
        %6302 = vmatmul.mubr.f32.gmra.mrb[0].mxu0 %v5334
        %v6303 = vpop.f32.mrb[0].mxu0
        %v6304 = vpop.f32.mrb[0].mxu0
        %6305 = vmatprep.mubr.f32.mxu0 0.0
        %6306 = vmatmul.mubr.f32.gmra.mrb[0].mxu0 %v5335
        %v6307 = vpop.f32.mrb[0].mxu0
        %v6308 = vadd.f32 0.0, %v6307
        %v6309 = vpop.f32.mrb[0].mxu0
        %6310 = vmatprep.mubr.f32.mxu0 0.0
        %6311 = vmatmul.mubr.f32.gmra.mrb[0].mxu0 %v5336
        %v6312 = vpop.f32.mrb[0].mxu0
        %v6313 = vadd.f32 0.0, %v6312
        %v6314 = vpop.f32.mrb[0].mxu0
        %6315 = vmatprep.mubr.f32.mxu0 0.0
        %6316 = vmatmul.mubr.f32.gmra.mrb[0].mxu0 %v5337
        %v6317 = vpop.f32.mrb[0].mxu0
        %v6318 = vpop.f32.mrb[0].mxu0
        %6319 = vdwg.mxu0
        %v6320 = vadd.f32 %v5982, %v6098
        %v6321 = vadd.f32 %v5983, %v6103
        %v6322 = vadd.f32 %v5984, %v6112
        %v6323 = vadd.f32 %v5985, %v6117
        %v6324 = vadd.f32 %v5986, %v6126
        %v6325 = vadd.f32 %v5987, %v6131
        %v6326 = vadd.f32 %v5988, %v6140
        %v6327 = vadd.f32 %v5989, %v6145
        %v6328 = vadd.f32 %v5990, %v6154
        %v6329 = vadd.f32 %v5991, %v6159
        %v6330 = vadd.f32 %v5992, %v6168
        %v6331 = vadd.f32 %v5993, %v6173
        %v6332 = vadd.f32 %v5994, %v6182
        %v6333 = vadd.f32 %v5995, %v6187
        %v6334 = vadd.f32 %v5996, %v6196
        %v6335 = vadd.f32 %v5997, %v6201
        %v6336 = vadd.f32 %v5998, %v6210
        %v6337 = vadd.f32 %v5999, %v6215
        %v6338 = vadd.f32 %v6000, %v6224
        %v6339 = vadd.f32 %v6001, %v6229
        %v6340 = vadd.f32 %v6002, %v6238
        %v6341 = vadd.f32 %v6003, %v6243
        %v6342 = vadd.f32 %v6004, %v6252
        %v6343 = vadd.f32 %v6005, %v6257
        %v6344 = vadd.f32 %v6006, %v6266
        %v6345 = vadd.f32 %v6007, %v6271
        %v6346 = vadd.f32 %v6008, %v6280
        %v6347 = vadd.f32 %v6009, %v6285
        %v6348 = vadd.f32 %v6010, %v6294
        %v6349 = vadd.f32 %v6011, %v6299
        %v6350 = vadd.f32 %v6012, %v6308
        %v6351 = vadd.f32 %v6013, %v6313
        %v6352 = vld [vmem:[#allocation2 + $0x2] sm:$0xff]
        %v6353 = vld [vmem:[#allocation2 + $0xa] sm:$0xff]
        %v6354 = vld [vmem:[#allocation2 + $0x12] sm:$0xff]
        %v6355 = vld [vmem:[#allocation2 + $0x1a] sm:$0xff]
        %v6356 = vld [vmem:[#allocation2 + $0x22] sm:$0xff]
        %v6357 = vld [vmem:[#allocation2 + $0x2a] sm:$0xff]
        %v6358 = vld [vmem:[#allocation2 + $0x32] sm:$0xff]
        %v6359 = vld [vmem:[#allocation2 + $0x3a] sm:$0xff]
        %v6360 = vld [vmem:[#allocation2 + $0x42] sm:$0xff]
        %v6361 = vld [vmem:[#allocation2 + $0x4a] sm:$0xff]
        %v6362 = vld [vmem:[#allocation2 + $0x52] sm:$0xff]
        %v6363 = vld [vmem:[#allocation2 + $0x5a] sm:$0xff]
        %v6364 = vld [vmem:[#allocation2 + $0x62] sm:$0xff]
        %v6365 = vld [vmem:[#allocation2 + $0x6a] sm:$0xff]
        %v6366 = vld [vmem:[#allocation2 + $0x72] sm:$0xff]
        %v6367 = vld [vmem:[#allocation2 + $0x7a] sm:$0xff]
        %v6368 = vld [vmem:[#allocation2 + $0x82] sm:$0xff]
        %v6369 = vld [vmem:[#allocation2 + $0x8a] sm:$0xff]
        %v6370 = vld [vmem:[#allocation2 + $0x92] sm:$0xff]
        %v6371 = vld [vmem:[#allocation2 + $0x9a] sm:$0xff]
        %v6372 = vld [vmem:[#allocation2 + $0xa2] sm:$0xff]
        %v6373 = vld [vmem:[#allocation2 + $0xaa] sm:$0xff]
        %v6374 = vld [vmem:[#allocation2 + $0xb2] sm:$0xff]
        %v6375 = vld [vmem:[#allocation2 + $0xba] sm:$0xff]
        %v6376 = vld [vmem:[#allocation2 + $0xc2] sm:$0xff]
        %v6377 = vld [vmem:[#allocation2 + $0xca] sm:$0xff]
        %v6378 = vld [vmem:[#allocation2 + $0xd2] sm:$0xff]
        %v6379 = vld [vmem:[#allocation2 + $0xda] sm:$0xff]
        %v6380 = vld [vmem:[#allocation2 + $0xe2] sm:$0xff]
        %v6381 = vld [vmem:[#allocation2 + $0xea] sm:$0xff]
        %v6382 = vld [vmem:[#allocation2 + $0xf2] sm:$0xff]
        %v6383 = vld [vmem:[#allocation2 + $0xfa] sm:$0xff]
        %v6384 = vld [vmem:[#allocation2 + $0x102] sm:$0xff]
        %v6385 = vld [vmem:[#allocation2 + $0x10a] sm:$0xff]
        %v6386 = vld [vmem:[#allocation2 + $0x112] sm:$0xff]
        %v6387 = vld [vmem:[#allocation2 + $0x11a] sm:$0xff]
        %v6388 = vld [vmem:[#allocation2 + $0x122] sm:$0xff]
        %v6389 = vld [vmem:[#allocation2 + $0x12a] sm:$0xff]
        %v6390 = vld [vmem:[#allocation2 + $0x132] sm:$0xff]
        %v6391 = vld [vmem:[#allocation2 + $0x13a] sm:$0xff]
        %v6392 = vld [vmem:[#allocation2 + $0x142] sm:$0xff]
        %v6393 = vld [vmem:[#allocation2 + $0x14a] sm:$0xff]
        %v6394 = vld [vmem:[#allocation2 + $0x152] sm:$0xff]
        %v6395 = vld [vmem:[#allocation2 + $0x15a] sm:$0xff]
        %v6396 = vld [vmem:[#allocation2 + $0x162] sm:$0xff]
        %v6397 = vld [vmem:[#allocation2 + $0x16a] sm:$0xff]
        %v6398 = vld [vmem:[#allocation2 + $0x172] sm:$0xff]
        %v6399 = vld [vmem:[#allocation2 + $0x17a] sm:$0xff]
        %v6400 = vld [vmem:[#allocation2 + $0x182] sm:$0xff]
        %v6401 = vld [vmem:[#allocation2 + $0x18a] sm:$0xff]
        %v6402 = vld [vmem:[#allocation2 + $0x192] sm:$0xff]
        %v6403 = vld [vmem:[#allocation2 + $0x19a] sm:$0xff]
        %v6404 = vld [vmem:[#allocation2 + $0x1a2] sm:$0xff]
        %v6405 = vld [vmem:[#allocation2 + $0x1aa] sm:$0xff]
        %s6406 = scalar_lea.vmem [#allocation8], 256
        %v6407 = vld [vmem:[%s6406] sm:$0xff]
        %v6408 = vld [vmem:[%s6406 + $0x8] sm:$0xff]
        %v6409 = vld [vmem:[%s6406 + $0x10] sm:$0xff]
        %v6410 = vld [vmem:[%s6406 + $0x18] sm:$0xff]
        %v6411 = vld [vmem:[%s6406 + $0x20] sm:$0xff]
        %v6412 = vld [vmem:[%s6406 + $0x28] sm:$0xff]
        %v6413 = vld [vmem:[%s6406 + $0x30] sm:$0xff]
        %v6414 = vld [vmem:[%s6406 + $0x38] sm:$0xff]
        %v6415 = vld [vmem:[%s6406 + $0x40] sm:$0xff]
        %v6416 = vld [vmem:[%s6406 + $0x48] sm:$0xff]
        %v6417 = vld [vmem:[%s6406 + $0x50] sm:$0xff]
        %v6418 = vld [vmem:[%s6406 + $0x58] sm:$0xff]
        %v6419 = vld [vmem:[%s6406 + $0x60] sm:$0xff]
        %v6420 = vld [vmem:[%s6406 + $0x68] sm:$0xff]
        %v6421 = vld [vmem:[%s6406 + $0x70] sm:$0xff]
        %v6422 = vld [vmem:[%s6406 + $0x78] sm:$0xff]
        %6423 = vmatprep.subr.mxu0 0.0
        %6424 = vmatpush1.msra.mxu0 %v6407
        %6425 = vmatprep.subr.mxu0 0.0
        %6426 = vmatpush1.msra.mxu0 %v6408
        %6427 = vmatprep.subr.mxu0 0.0
        %6428 = vmatpush1.msra.mxu0 %v6409
        %6429 = vmatprep.subr.mxu0 0.0
        %6430 = vmatpush1.msra.mxu0 %v6410
        %6431 = vmatprep.subr.mxu0 0.0
        %6432 = vmatpush1.msra.mxu0 %v6411
        %6433 = vmatprep.subr.mxu0 0.0
        %6434 = vmatpush1.msra.mxu0 %v6412
        %6435 = vmatprep.subr.mxu0 0.0
        %6436 = vmatpush1.msra.mxu0 %v6413
        %6437 = vmatprep.subr.mxu0 0.0
        %6438 = vmatpush1.msra.mxu0 %v6414
        %6439 = vmatprep.subr.mxu0 0.0
        %6440 = vmatpush1.msra.mxu0 %v6415
        %6441 = vmatprep.subr.mxu0 0.0
        %6442 = vmatpush1.msra.mxu0 %v6416
        %6443 = vmatprep.subr.mxu0 0.0
        %6444 = vmatpush1.msra.mxu0 %v6417
        %6445 = vmatprep.subr.mxu0 0.0
        %6446 = vmatpush1.msra.mxu0 %v6418
        %6447 = vmatprep.subr.mxu0 0.0
        %6448 = vmatpush1.msra.mxu0 %v6419
        %6449 = vmatprep.subr.mxu0 0.0
        %6450 = vmatpush1.msra.mxu0 %v6420
        %6451 = vmatprep.subr.mxu0 0.0
        %6452 = vmatpush1.msra.mxu0 %v6421
        %6453 = vmatprep.subr.mxu0 0.0
        %6454 = vmatpush1.msra.mxu0 %v6422
        %6455 = vmatprep.subr.mxu0 0.0
        %6456 = vmatpush1.msra.mxu0 0.0
        %6457 = vmatprep.subr.mxu0 0.0
        %6458 = vmatpush1.msra.mxu0 0.0
        %6459 = vmatprep.subr.mxu0 0.0
        %6460 = vmatpush1.msra.mxu0 0.0
        %6461 = vmatprep.subr.mxu0 0.0
        %6462 = vmatpush1.msra.mxu0 0.0
        %6463 = vmatprep.subr.mxu0 0.0
        %6464 = vmatpush1.msra.mxu0 0.0
        %6465 = vmatprep.subr.mxu0 0.0
        %6466 = vmatpush1.msra.mxu0 0.0
        %6467 = vmatprep.subr.mxu0 0.0
        %6468 = vmatpush1.msra.mxu0 0.0
        %6469 = vmatprep.subr.mxu0 0.0
        %6470 = vmatpush1.msra.mxu0 0.0
        %6471 = vmatprep.subr.mxu0 0.0
        %6472 = vmatpush1.msra.mxu0 0.0
        %6473 = vmatprep.subr.mxu0 0.0
        %6474 = vmatpush1.msra.mxu0 0.0
        %6475 = vmatprep.subr.mxu0 0.0
        %6476 = vmatpush1.msra.mxu0 0.0
        %6477 = vmatprep.subr.mxu0 0.0
        %6478 = vmatpush1.msra.mxu0 0.0
        %6479 = vmatprep.subr.mxu0 0.0
        %6480 = vmatpush1.msra.mxu0 0.0
        %6481 = vmatprep.subr.mxu0 0.0
        %6482 = vmatpush1.msra.mxu0 0.0
        %6483 = vmatprep.subr.mxu0 0.0
        %6484 = vmatpush1.msra.mxu0 0.0
        %6485 = vmatprep.subr.mxu0 0.0
        %6486 = vmatpush1.msra.mxu0 0.0
        %6487 = vmatprep.mubr.f32.mxu0 0.0
        %6488 = vmatmul.mubr.f32.gmra.mrb[0].mxu0 %v6352
        %v6489 = vpop.f32.mrb[0].mxu0
        %v6490 = vadd.f32 0.0, %v6489
        %v6491 = vpop.f32.mrb[0].mxu0
        %6492 = vmatprep.mubr.f32.mxu0 0.0
        %6493 = vmatmul.mubr.f32.gmra.mrb[0].mxu0 %v6353
        %v6494 = vpop.f32.mrb[0].mxu0
        %v6495 = vadd.f32 0.0, %v6494
        %v6496 = vpop.f32.mrb[0].mxu0
        %6497 = vmatprep.mubr.f32.mxu0 0.0
        %6498 = vmatmul.mubr.f32.gmra.mrb[0].mxu0 %v6354
        %v6499 = vpop.f32.mrb[0].mxu0
        %v6500 = vpop.f32.mrb[0].mxu0
        %6501 = vmatprep.mubr.f32.mxu0 0.0
        %6502 = vmatmul.mubr.f32.gmra.mrb[0].mxu0 %v6355
        %v6503 = vpop.f32.mrb[0].mxu0
        %v6504 = vadd.f32 0.0, %v6503
        %v6505 = vpop.f32.mrb[0].mxu0
        %6506 = vmatprep.mubr.f32.mxu0 0.0
        %6507 = vmatmul.mubr.f32.gmra.mrb[0].mxu0 %v6356
        %v6508 = vpop.f32.mrb[0].mxu0
        %v6509 = vadd.f32 0.0, %v6508
        %v6510 = vpop.f32.mrb[0].mxu0
        %6511 = vmatprep.mubr.f32.mxu0 0.0
        %6512 = vmatmul.mubr.f32.gmra.mrb[0].mxu0 %v6357
        %v6513 = vpop.f32.mrb[0].mxu0
        %v6514 = vpop.f32.mrb[0].mxu0
        %6515 = vmatprep.mubr.f32.mxu0 0.0
        %6516 = vmatmul.mubr.f32.gmra.mrb[0].mxu0 %v6358
        %v6517 = vpop.f32.mrb[0].mxu0
        %v6518 = vadd.f32 0.0, %v6517
        %v6519 = vpop.f32.mrb[0].mxu0
        %6520 = vmatprep.mubr.f32.mxu0 0.0
        %6521 = vmatmul.mubr.f32.gmra.mrb[0].mxu0 %v6359
        %v6522 = vpop.f32.mrb[0].mxu0
        %v6523 = vadd.f32 0.0, %v6522
        %v6524 = vpop.f32.mrb[0].mxu0
        %6525 = vmatprep.mubr.f32.mxu0 0.0
        %6526 = vmatmul.mubr.f32.gmra.mrb[0].mxu0 %v6360
        %v6527 = vpop.f32.mrb[0].mxu0
        %v6528 = vpop.f32.mrb[0].mxu0
        %6529 = vmatprep.mubr.f32.mxu0 0.0
        %6530 = vmatmul.mubr.f32.gmra.mrb[0].mxu0 %v6361
        %v6531 = vpop.f32.mrb[0].mxu0
        %v6532 = vadd.f32 0.0, %v6531
        %v6533 = vpop.f32.mrb[0].mxu0
        %6534 = vmatprep.mubr.f32.mxu0 0.0
        %6535 = vmatmul.mubr.f32.gmra.mrb[0].mxu0 %v6362
        %v6536 = vpop.f32.mrb[0].mxu0
        %v6537 = vadd.f32 0.0, %v6536
        %v6538 = vpop.f32.mrb[0].mxu0
        %6539 = vmatprep.mubr.f32.mxu0 0.0
        %6540 = vmatmul.mubr.f32.gmra.mrb[0].mxu0 %v6363
        %v6541 = vpop.f32.mrb[0].mxu0
        %v6542 = vpop.f32.mrb[0].mxu0
        %6543 = vmatprep.mubr.f32.mxu0 0.0
        %6544 = vmatmul.mubr.f32.gmra.mrb[0].mxu0 %v6364
        %v6545 = vpop.f32.mrb[0].mxu0
        %v6546 = vadd.f32 0.0, %v6545
        %v6547 = vpop.f32.mrb[0].mxu0
        %6548 = vmatprep.mubr.f32.mxu0 0.0
        %6549 = vmatmul.mubr.f32.gmra.mrb[0].mxu0 %v6365
        %v6550 = vpop.f32.mrb[0].mxu0
        %v6551 = vadd.f32 0.0, %v6550
        %v6552 = vpop.f32.mrb[0].mxu0
        %6553 = vmatprep.mubr.f32.mxu0 0.0
        %6554 = vmatmul.mubr.f32.gmra.mrb[0].mxu0 %v6366
        %v6555 = vpop.f32.mrb[0].mxu0
        %v6556 = vpop.f32.mrb[0].mxu0
        %6557 = vmatprep.mubr.f32.mxu0 0.0
        %6558 = vmatmul.mubr.f32.gmra.mrb[0].mxu0 %v6367
        %v6559 = vpop.f32.mrb[0].mxu0
        %v6560 = vadd.f32 0.0, %v6559
        %v6561 = vpop.f32.mrb[0].mxu0
        %6562 = vmatprep.mubr.f32.mxu0 0.0
        %6563 = vmatmul.mubr.f32.gmra.mrb[0].mxu0 %v6368
        %v6564 = vpop.f32.mrb[0].mxu0
        %v6565 = vadd.f32 0.0, %v6564
        %v6566 = vpop.f32.mrb[0].mxu0
        %6567 = vmatprep.mubr.f32.mxu0 0.0
        %6568 = vmatmul.mubr.f32.gmra.mrb[0].mxu0 %v6369
        %v6569 = vpop.f32.mrb[0].mxu0
        %v6570 = vpop.f32.mrb[0].mxu0
        %6571 = vmatprep.mubr.f32.mxu0 0.0
        %6572 = vmatmul.mubr.f32.gmra.mrb[0].mxu0 %v6370
        %v6573 = vpop.f32.mrb[0].mxu0
        %v6574 = vadd.f32 0.0, %v6573
        %v6575 = vpop.f32.mrb[0].mxu0
        %6576 = vmatprep.mubr.f32.mxu0 0.0
        %6577 = vmatmul.mubr.f32.gmra.mrb[0].mxu0 %v6371
        %v6578 = vpop.f32.mrb[0].mxu0
        %v6579 = vadd.f32 0.0, %v6578
        %v6580 = vpop.f32.mrb[0].mxu0
        %6581 = vmatprep.mubr.f32.mxu0 0.0
        %6582 = vmatmul.mubr.f32.gmra.mrb[0].mxu0 %v6372
        %v6583 = vpop.f32.mrb[0].mxu0
        %v6584 = vpop.f32.mrb[0].mxu0
        %6585 = vmatprep.mubr.f32.mxu0 0.0
        %6586 = vmatmul.mubr.f32.gmra.mrb[0].mxu0 %v6373
        %v6587 = vpop.f32.mrb[0].mxu0
        %v6588 = vadd.f32 0.0, %v6587
        %v6589 = vpop.f32.mrb[0].mxu0
        %6590 = vmatprep.mubr.f32.mxu0 0.0
        %6591 = vmatmul.mubr.f32.gmra.mrb[0].mxu0 %v6374
        %v6592 = vpop.f32.mrb[0].mxu0
        %v6593 = vadd.f32 0.0, %v6592
        %v6594 = vpop.f32.mrb[0].mxu0
        %6595 = vmatprep.mubr.f32.mxu0 0.0
        %6596 = vmatmul.mubr.f32.gmra.mrb[0].mxu0 %v6375
        %v6597 = vpop.f32.mrb[0].mxu0
        %v6598 = vpop.f32.mrb[0].mxu0
        %6599 = vmatprep.mubr.f32.mxu0 0.0
        %6600 = vmatmul.mubr.f32.gmra.mrb[0].mxu0 %v6376
        %v6601 = vpop.f32.mrb[0].mxu0
        %v6602 = vadd.f32 0.0, %v6601
        %v6603 = vpop.f32.mrb[0].mxu0
        %6604 = vmatprep.mubr.f32.mxu0 0.0
        %6605 = vmatmul.mubr.f32.gmra.mrb[0].mxu0 %v6377
        %v6606 = vpop.f32.mrb[0].mxu0
        %v6607 = vadd.f32 0.0, %v6606
        %v6608 = vpop.f32.mrb[0].mxu0
        %6609 = vmatprep.mubr.f32.mxu0 0.0
        %6610 = vmatmul.mubr.f32.gmra.mrb[0].mxu0 %v6378
        %v6611 = vpop.f32.mrb[0].mxu0
        %v6612 = vpop.f32.mrb[0].mxu0
        %6613 = vmatprep.mubr.f32.mxu0 0.0
        %6614 = vmatmul.mubr.f32.gmra.mrb[0].mxu0 %v6379
        %v6615 = vpop.f32.mrb[0].mxu0
        %v6616 = vadd.f32 0.0, %v6615
        %v6617 = vpop.f32.mrb[0].mxu0
        %6618 = vmatprep.mubr.f32.mxu0 0.0
        %6619 = vmatmul.mubr.f32.gmra.mrb[0].mxu0 %v6380
        %v6620 = vpop.f32.mrb[0].mxu0
        %v6621 = vadd.f32 0.0, %v6620
        %v6622 = vpop.f32.mrb[0].mxu0
        %6623 = vmatprep.mubr.f32.mxu0 0.0
        %6624 = vmatmul.mubr.f32.gmra.mrb[0].mxu0 %v6381
        %v6625 = vpop.f32.mrb[0].mxu0
        %v6626 = vpop.f32.mrb[0].mxu0
        %6627 = vmatprep.mubr.f32.mxu0 0.0
        %6628 = vmatmul.mubr.f32.gmra.mrb[0].mxu0 %v6382
        %v6629 = vpop.f32.mrb[0].mxu0
        %v6630 = vadd.f32 0.0, %v6629
        %v6631 = vpop.f32.mrb[0].mxu0
        %6632 = vmatprep.mubr.f32.mxu0 0.0
        %6633 = vmatmul.mubr.f32.gmra.mrb[0].mxu0 %v6383
        %v6634 = vpop.f32.mrb[0].mxu0
        %v6635 = vadd.f32 0.0, %v6634
        %v6636 = vpop.f32.mrb[0].mxu0
        %6637 = vmatprep.mubr.f32.mxu0 0.0
        %6638 = vmatmul.mubr.f32.gmra.mrb[0].mxu0 %v6384
        %v6639 = vpop.f32.mrb[0].mxu0
        %v6640 = vpop.f32.mrb[0].mxu0
        %6641 = vmatprep.mubr.f32.mxu0 0.0
        %6642 = vmatmul.mubr.f32.gmra.mrb[0].mxu0 %v6385
        %v6643 = vpop.f32.mrb[0].mxu0
        %v6644 = vadd.f32 0.0, %v6643
        %v6645 = vpop.f32.mrb[0].mxu0
        %6646 = vmatprep.mubr.f32.mxu0 0.0
        %6647 = vmatmul.mubr.f32.gmra.mrb[0].mxu0 %v6386
        %v6648 = vpop.f32.mrb[0].mxu0
        %v6649 = vadd.f32 0.0, %v6648
        %v6650 = vpop.f32.mrb[0].mxu0
        %6651 = vmatprep.mubr.f32.mxu0 0.0
        %6652 = vmatmul.mubr.f32.gmra.mrb[0].mxu0 %v6387
        %v6653 = vpop.f32.mrb[0].mxu0
        %v6654 = vpop.f32.mrb[0].mxu0
        %6655 = vmatprep.mubr.f32.mxu0 0.0
        %6656 = vmatmul.mubr.f32.gmra.mrb[0].mxu0 %v6388
        %v6657 = vpop.f32.mrb[0].mxu0
        %v6658 = vadd.f32 0.0, %v6657
        %v6659 = vpop.f32.mrb[0].mxu0
        %6660 = vmatprep.mubr.f32.mxu0 0.0
        %6661 = vmatmul.mubr.f32.gmra.mrb[0].mxu0 %v6389
        %v6662 = vpop.f32.mrb[0].mxu0
        %v6663 = vadd.f32 0.0, %v6662
        %v6664 = vpop.f32.mrb[0].mxu0
        %6665 = vmatprep.mubr.f32.mxu0 0.0
        %6666 = vmatmul.mubr.f32.gmra.mrb[0].mxu0 %v6390
        %v6667 = vpop.f32.mrb[0].mxu0
        %v6668 = vpop.f32.mrb[0].mxu0
        %6669 = vmatprep.mubr.f32.mxu0 0.0
        %6670 = vmatmul.mubr.f32.gmra.mrb[0].mxu0 %v6391
        %v6671 = vpop.f32.mrb[0].mxu0
        %v6672 = vadd.f32 0.0, %v6671
        %v6673 = vpop.f32.mrb[0].mxu0
        %6674 = vmatprep.mubr.f32.mxu0 0.0
        %6675 = vmatmul.mubr.f32.gmra.mrb[0].mxu0 %v6392
        %v6676 = vpop.f32.mrb[0].mxu0
        %v6677 = vadd.f32 0.0, %v6676
        %v6678 = vpop.f32.mrb[0].mxu0
        %6679 = vmatprep.mubr.f32.mxu0 0.0
        %6680 = vmatmul.mubr.f32.gmra.mrb[0].mxu0 %v6393
        %v6681 = vpop.f32.mrb[0].mxu0
        %v6682 = vpop.f32.mrb[0].mxu0
        %6683 = vmatprep.mubr.f32.mxu0 0.0
        %6684 = vmatmul.mubr.f32.gmra.mrb[0].mxu0 %v6394
        %v6685 = vpop.f32.mrb[0].mxu0
        %v6686 = vadd.f32 0.0, %v6685
        %v6687 = vpop.f32.mrb[0].mxu0
        %6688 = vmatprep.mubr.f32.mxu0 0.0
        %6689 = vmatmul.mubr.f32.gmra.mrb[0].mxu0 %v6395
        %v6690 = vpop.f32.mrb[0].mxu0
        %v6691 = vadd.f32 0.0, %v6690
        %v6692 = vpop.f32.mrb[0].mxu0
        %6693 = vmatprep.mubr.f32.mxu0 0.0
        %6694 = vmatmul.mubr.f32.gmra.mrb[0].mxu0 %v6396
        %v6695 = vpop.f32.mrb[0].mxu0
        %v6696 = vpop.f32.mrb[0].mxu0
        %6697 = vmatprep.mubr.f32.mxu0 0.0
        %6698 = vmatmul.mubr.f32.gmra.mrb[0].mxu0 %v6397
        %v6699 = vpop.f32.mrb[0].mxu0
        %v6700 = vadd.f32 0.0, %v6699
        %v6701 = vpop.f32.mrb[0].mxu0
        %6702 = vmatprep.mubr.f32.mxu0 0.0
        %6703 = vmatmul.mubr.f32.gmra.mrb[0].mxu0 %v6398
        %v6704 = vpop.f32.mrb[0].mxu0
        %v6705 = vadd.f32 0.0, %v6704
        %v6706 = vpop.f32.mrb[0].mxu0
        %6707 = vmatprep.mubr.f32.mxu0 0.0
        %6708 = vmatmul.mubr.f32.gmra.mrb[0].mxu0 %v6399
        %v6709 = vpop.f32.mrb[0].mxu0
        %v6710 = vpop.f32.mrb[0].mxu0
        %6711 = vdwg.mxu0
        %v6712 = vadd.f32 %v6320, %v6490
        %v6713 = vadd.f32 %v6321, %v6495
        %v6714 = vadd.f32 %v6322, %v6504
        %v6715 = vadd.f32 %v6323, %v6509
        %v6716 = vadd.f32 %v6324, %v6518
        %v6717 = vadd.f32 %v6325, %v6523
        %v6718 = vadd.f32 %v6326, %v6532
        %v6719 = vadd.f32 %v6327, %v6537
        %v6720 = vadd.f32 %v6328, %v6546
        %v6721 = vadd.f32 %v6329, %v6551
        %v6722 = vadd.f32 %v6330, %v6560
        %v6723 = vadd.f32 %v6331, %v6565
        %v6724 = vadd.f32 %v6332, %v6574
        %v6725 = vadd.f32 %v6333, %v6579
        %v6726 = vadd.f32 %v6334, %v6588
        %v6727 = vadd.f32 %v6335, %v6593
        %v6728 = vadd.f32 %v6336, %v6602
        %v6729 = vadd.f32 %v6337, %v6607
        %v6730 = vadd.f32 %v6338, %v6616
        %v6731 = vadd.f32 %v6339, %v6621
        %v6732 = vadd.f32 %v6340, %v6630
        %v6733 = vadd.f32 %v6341, %v6635
        %v6734 = vadd.f32 %v6342, %v6644
        %v6735 = vadd.f32 %v6343, %v6649
        %v6736 = vadd.f32 %v6344, %v6658
        %v6737 = vadd.f32 %v6345, %v6663
        %v6738 = vadd.f32 %v6346, %v6672
        %v6739 = vadd.f32 %v6347, %v6677
        %v6740 = vadd.f32 %v6348, %v6686
        %v6741 = vadd.f32 %v6349, %v6691
        %v6742 = vadd.f32 %v6350, %v6700
        %v6743 = vadd.f32 %v6351, %v6705
        %s6744 = scalar_lea.vmem [#allocation8], 640
        %v6745 = vld [vmem:[%s6744] sm:$0xff]
        %v6746 = vld [vmem:[%s6744 + $0x8] sm:$0xff]
        %v6747 = vld [vmem:[%s6744 + $0x10] sm:$0xff]
        %v6748 = vld [vmem:[%s6744 + $0x18] sm:$0xff]
        %v6749 = vld [vmem:[%s6744 + $0x20] sm:$0xff]
        %v6750 = vld [vmem:[%s6744 + $0x28] sm:$0xff]
        %v6751 = vld [vmem:[%s6744 + $0x30] sm:$0xff]
        %v6752 = vld [vmem:[%s6744 + $0x38] sm:$0xff]
        %v6753 = vld [vmem:[%s6744 + $0x40] sm:$0xff]
        %v6754 = vld [vmem:[%s6744 + $0x48] sm:$0xff]
        %v6755 = vld [vmem:[%s6744 + $0x50] sm:$0xff]
        %v6756 = vld [vmem:[%s6744 + $0x58] sm:$0xff]
        %v6757 = vld [vmem:[%s6744 + $0x60] sm:$0xff]
        %v6758 = vld [vmem:[%s6744 + $0x68] sm:$0xff]
        %v6759 = vld [vmem:[%s6744 + $0x70] sm:$0xff]
        %v6760 = vld [vmem:[%s6744 + $0x78] sm:$0xff]
        %6761 = vmatprep.subr.mxu0 0.0
        %6762 = vmatpush1.msra.mxu0 %v6745
        %6763 = vmatprep.subr.mxu0 0.0
        %6764 = vmatpush1.msra.mxu0 %v6746
        %6765 = vmatprep.subr.mxu0 0.0
        %6766 = vmatpush1.msra.mxu0 %v6747
        %6767 = vmatprep.subr.mxu0 0.0
        %6768 = vmatpush1.msra.mxu0 %v6748
        %6769 = vmatprep.subr.mxu0 0.0
        %6770 = vmatpush1.msra.mxu0 %v6749
        %6771 = vmatprep.subr.mxu0 0.0
        %6772 = vmatpush1.msra.mxu0 %v6750
        %6773 = vmatprep.subr.mxu0 0.0
        %6774 = vmatpush1.msra.mxu0 %v6751
        %6775 = vmatprep.subr.mxu0 0.0
        %6776 = vmatpush1.msra.mxu0 %v6752
        %6777 = vmatprep.subr.mxu0 0.0
        %6778 = vmatpush1.msra.mxu0 %v6753
        %6779 = vmatprep.subr.mxu0 0.0
        %6780 = vmatpush1.msra.mxu0 %v6754
        %6781 = vmatprep.subr.mxu0 0.0
        %6782 = vmatpush1.msra.mxu0 %v6755
        %6783 = vmatprep.subr.mxu0 0.0
        %6784 = vmatpush1.msra.mxu0 %v6756
        %6785 = vmatprep.subr.mxu0 0.0
        %6786 = vmatpush1.msra.mxu0 %v6757
        %6787 = vmatprep.subr.mxu0 0.0
        %6788 = vmatpush1.msra.mxu0 %v6758
        %6789 = vmatprep.subr.mxu0 0.0
        %6790 = vmatpush1.msra.mxu0 %v6759
        %6791 = vmatprep.subr.mxu0 0.0
        %6792 = vmatpush1.msra.mxu0 %v6760
        %6793 = vmatprep.subr.mxu0 0.0
        %6794 = vmatpush1.msra.mxu0 0.0
        %6795 = vmatprep.subr.mxu0 0.0
        %6796 = vmatpush1.msra.mxu0 0.0
        %6797 = vmatprep.subr.mxu0 0.0
        %6798 = vmatpush1.msra.mxu0 0.0
        %6799 = vmatprep.subr.mxu0 0.0
        %6800 = vmatpush1.msra.mxu0 0.0
        %6801 = vmatprep.subr.mxu0 0.0
        %6802 = vmatpush1.msra.mxu0 0.0
        %6803 = vmatprep.subr.mxu0 0.0
        %6804 = vmatpush1.msra.mxu0 0.0
        %6805 = vmatprep.subr.mxu0 0.0
        %6806 = vmatpush1.msra.mxu0 0.0
        %6807 = vmatprep.subr.mxu0 0.0
        %6808 = vmatpush1.msra.mxu0 0.0
        %6809 = vmatprep.subr.mxu0 0.0
        %6810 = vmatpush1.msra.mxu0 0.0
        %6811 = vmatprep.subr.mxu0 0.0
        %6812 = vmatpush1.msra.mxu0 0.0
        %6813 = vmatprep.subr.mxu0 0.0
        %6814 = vmatpush1.msra.mxu0 0.0
        %6815 = vmatprep.subr.mxu0 0.0
        %6816 = vmatpush1.msra.mxu0 0.0
        %6817 = vmatprep.subr.mxu0 0.0
        %6818 = vmatpush1.msra.mxu0 0.0
        %6819 = vmatprep.subr.mxu0 0.0
        %6820 = vmatpush1.msra.mxu0 0.0
        %6821 = vmatprep.subr.mxu0 0.0
        %6822 = vmatpush1.msra.mxu0 0.0
        %6823 = vmatprep.subr.mxu0 0.0
        %6824 = vmatpush1.msra.mxu0 0.0
        %6825 = vmatprep.mubr.f32.mxu0 0.0
        %6826 = vmatmul.mubr.f32.gmra.mrb[0].mxu0 %v6355
        %v6827 = vpop.f32.mrb[0].mxu0
        %v6828 = vadd.f32 0.0, %v6827
        %v6829 = vpop.f32.mrb[0].mxu0
        %6830 = vmatprep.mubr.f32.mxu0 0.0
        %6831 = vmatmul.mubr.f32.gmra.mrb[0].mxu0 %v6356
        %v6832 = vpop.f32.mrb[0].mxu0
        %v6833 = vadd.f32 0.0, %v6832
        %v6834 = vpop.f32.mrb[0].mxu0
        %6835 = vmatprep.mubr.f32.mxu0 0.0
        %6836 = vmatmul.mubr.f32.gmra.mrb[0].mxu0 %v6357
        %v6837 = vpop.f32.mrb[0].mxu0
        %v6838 = vpop.f32.mrb[0].mxu0
        %6839 = vmatprep.mubr.f32.mxu0 0.0
        %6840 = vmatmul.mubr.f32.gmra.mrb[0].mxu0 %v6358
        %v6841 = vpop.f32.mrb[0].mxu0
        %v6842 = vadd.f32 0.0, %v6841
        %v6843 = vpop.f32.mrb[0].mxu0
        %6844 = vmatprep.mubr.f32.mxu0 0.0
        %6845 = vmatmul.mubr.f32.gmra.mrb[0].mxu0 %v6359
        %v6846 = vpop.f32.mrb[0].mxu0
        %v6847 = vadd.f32 0.0, %v6846
        %v6848 = vpop.f32.mrb[0].mxu0
        %6849 = vmatprep.mubr.f32.mxu0 0.0
        %6850 = vmatmul.mubr.f32.gmra.mrb[0].mxu0 %v6360
        %v6851 = vpop.f32.mrb[0].mxu0
        %v6852 = vpop.f32.mrb[0].mxu0
        %6853 = vmatprep.mubr.f32.mxu0 0.0
        %6854 = vmatmul.mubr.f32.gmra.mrb[0].mxu0 %v6361
        %v6855 = vpop.f32.mrb[0].mxu0
        %v6856 = vadd.f32 0.0, %v6855
        %v6857 = vpop.f32.mrb[0].mxu0
        %6858 = vmatprep.mubr.f32.mxu0 0.0
        %6859 = vmatmul.mubr.f32.gmra.mrb[0].mxu0 %v6362
        %v6860 = vpop.f32.mrb[0].mxu0
        %v6861 = vadd.f32 0.0, %v6860
        %v6862 = vpop.f32.mrb[0].mxu0
        %6863 = vmatprep.mubr.f32.mxu0 0.0
        %6864 = vmatmul.mubr.f32.gmra.mrb[0].mxu0 %v6363
        %v6865 = vpop.f32.mrb[0].mxu0
        %v6866 = vpop.f32.mrb[0].mxu0
        %6867 = vmatprep.mubr.f32.mxu0 0.0
        %6868 = vmatmul.mubr.f32.gmra.mrb[0].mxu0 %v6364
        %v6869 = vpop.f32.mrb[0].mxu0
        %v6870 = vadd.f32 0.0, %v6869
        %v6871 = vpop.f32.mrb[0].mxu0
        %6872 = vmatprep.mubr.f32.mxu0 0.0
        %6873 = vmatmul.mubr.f32.gmra.mrb[0].mxu0 %v6365
        %v6874 = vpop.f32.mrb[0].mxu0
        %v6875 = vadd.f32 0.0, %v6874
        %v6876 = vpop.f32.mrb[0].mxu0
        %6877 = vmatprep.mubr.f32.mxu0 0.0
        %6878 = vmatmul.mubr.f32.gmra.mrb[0].mxu0 %v6366
        %v6879 = vpop.f32.mrb[0].mxu0
        %v6880 = vpop.f32.mrb[0].mxu0
        %6881 = vmatprep.mubr.f32.mxu0 0.0
        %6882 = vmatmul.mubr.f32.gmra.mrb[0].mxu0 %v6367
        %v6883 = vpop.f32.mrb[0].mxu0
        %v6884 = vadd.f32 0.0, %v6883
        %v6885 = vpop.f32.mrb[0].mxu0
        %6886 = vmatprep.mubr.f32.mxu0 0.0
        %6887 = vmatmul.mubr.f32.gmra.mrb[0].mxu0 %v6368
        %v6888 = vpop.f32.mrb[0].mxu0
        %v6889 = vadd.f32 0.0, %v6888
        %v6890 = vpop.f32.mrb[0].mxu0
        %6891 = vmatprep.mubr.f32.mxu0 0.0
        %6892 = vmatmul.mubr.f32.gmra.mrb[0].mxu0 %v6369
        %v6893 = vpop.f32.mrb[0].mxu0
        %v6894 = vpop.f32.mrb[0].mxu0
        %6895 = vmatprep.mubr.f32.mxu0 0.0
        %6896 = vmatmul.mubr.f32.gmra.mrb[0].mxu0 %v6370
        %v6897 = vpop.f32.mrb[0].mxu0
        %v6898 = vadd.f32 0.0, %v6897
        %v6899 = vpop.f32.mrb[0].mxu0
        %6900 = vmatprep.mubr.f32.mxu0 0.0
        %6901 = vmatmul.mubr.f32.gmra.mrb[0].mxu0 %v6371
        %v6902 = vpop.f32.mrb[0].mxu0
        %v6903 = vadd.f32 0.0, %v6902
        %v6904 = vpop.f32.mrb[0].mxu0
        %6905 = vmatprep.mubr.f32.mxu0 0.0
        %6906 = vmatmul.mubr.f32.gmra.mrb[0].mxu0 %v6372
        %v6907 = vpop.f32.mrb[0].mxu0
        %v6908 = vpop.f32.mrb[0].mxu0
        %6909 = vmatprep.mubr.f32.mxu0 0.0
        %6910 = vmatmul.mubr.f32.gmra.mrb[0].mxu0 %v6373
        %v6911 = vpop.f32.mrb[0].mxu0
        %v6912 = vadd.f32 0.0, %v6911
        %v6913 = vpop.f32.mrb[0].mxu0
        %6914 = vmatprep.mubr.f32.mxu0 0.0
        %6915 = vmatmul.mubr.f32.gmra.mrb[0].mxu0 %v6374
        %v6916 = vpop.f32.mrb[0].mxu0
        %v6917 = vadd.f32 0.0, %v6916
        %v6918 = vpop.f32.mrb[0].mxu0
        %6919 = vmatprep.mubr.f32.mxu0 0.0
        %6920 = vmatmul.mubr.f32.gmra.mrb[0].mxu0 %v6375
        %v6921 = vpop.f32.mrb[0].mxu0
        %v6922 = vpop.f32.mrb[0].mxu0
        %6923 = vmatprep.mubr.f32.mxu0 0.0
        %6924 = vmatmul.mubr.f32.gmra.mrb[0].mxu0 %v6376
        %v6925 = vpop.f32.mrb[0].mxu0
        %v6926 = vadd.f32 0.0, %v6925
        %v6927 = vpop.f32.mrb[0].mxu0
        %6928 = vmatprep.mubr.f32.mxu0 0.0
        %6929 = vmatmul.mubr.f32.gmra.mrb[0].mxu0 %v6377
        %v6930 = vpop.f32.mrb[0].mxu0
        %v6931 = vadd.f32 0.0, %v6930
        %v6932 = vpop.f32.mrb[0].mxu0
        %6933 = vmatprep.mubr.f32.mxu0 0.0
        %6934 = vmatmul.mubr.f32.gmra.mrb[0].mxu0 %v6378
        %v6935 = vpop.f32.mrb[0].mxu0
        %v6936 = vpop.f32.mrb[0].mxu0
        %6937 = vmatprep.mubr.f32.mxu0 0.0
        %6938 = vmatmul.mubr.f32.gmra.mrb[0].mxu0 %v6379
        %v6939 = vpop.f32.mrb[0].mxu0
        %v6940 = vadd.f32 0.0, %v6939
        %v6941 = vpop.f32.mrb[0].mxu0
        %6942 = vmatprep.mubr.f32.mxu0 0.0
        %6943 = vmatmul.mubr.f32.gmra.mrb[0].mxu0 %v6380
        %v6944 = vpop.f32.mrb[0].mxu0
        %v6945 = vadd.f32 0.0, %v6944
        %v6946 = vpop.f32.mrb[0].mxu0
        %6947 = vmatprep.mubr.f32.mxu0 0.0
        %6948 = vmatmul.mubr.f32.gmra.mrb[0].mxu0 %v6381
        %v6949 = vpop.f32.mrb[0].mxu0
        %v6950 = vpop.f32.mrb[0].mxu0
        %6951 = vmatprep.mubr.f32.mxu0 0.0
        %6952 = vmatmul.mubr.f32.gmra.mrb[0].mxu0 %v6382
        %v6953 = vpop.f32.mrb[0].mxu0
        %v6954 = vadd.f32 0.0, %v6953
        %v6955 = vpop.f32.mrb[0].mxu0
        %6956 = vmatprep.mubr.f32.mxu0 0.0
        %6957 = vmatmul.mubr.f32.gmra.mrb[0].mxu0 %v6383
        %v6958 = vpop.f32.mrb[0].mxu0
        %v6959 = vadd.f32 0.0, %v6958
        %v6960 = vpop.f32.mrb[0].mxu0
        %6961 = vmatprep.mubr.f32.mxu0 0.0
        %6962 = vmatmul.mubr.f32.gmra.mrb[0].mxu0 %v6384
        %v6963 = vpop.f32.mrb[0].mxu0
        %v6964 = vpop.f32.mrb[0].mxu0
        %6965 = vmatprep.mubr.f32.mxu0 0.0
        %6966 = vmatmul.mubr.f32.gmra.mrb[0].mxu0 %v6385
        %v6967 = vpop.f32.mrb[0].mxu0
        %v6968 = vadd.f32 0.0, %v6967
        %v6969 = vpop.f32.mrb[0].mxu0
        %6970 = vmatprep.mubr.f32.mxu0 0.0
        %6971 = vmatmul.mubr.f32.gmra.mrb[0].mxu0 %v6386
        %v6972 = vpop.f32.mrb[0].mxu0
        %v6973 = vadd.f32 0.0, %v6972
        %v6974 = vpop.f32.mrb[0].mxu0
        %6975 = vmatprep.mubr.f32.mxu0 0.0
        %6976 = vmatmul.mubr.f32.gmra.mrb[0].mxu0 %v6387
        %v6977 = vpop.f32.mrb[0].mxu0
        %v6978 = vpop.f32.mrb[0].mxu0
        %6979 = vmatprep.mubr.f32.mxu0 0.0
        %6980 = vmatmul.mubr.f32.gmra.mrb[0].mxu0 %v6388
        %v6981 = vpop.f32.mrb[0].mxu0
        %v6982 = vadd.f32 0.0, %v6981
        %v6983 = vpop.f32.mrb[0].mxu0
        %6984 = vmatprep.mubr.f32.mxu0 0.0
        %6985 = vmatmul.mubr.f32.gmra.mrb[0].mxu0 %v6389
        %v6986 = vpop.f32.mrb[0].mxu0
        %v6987 = vadd.f32 0.0, %v6986
        %v6988 = vpop.f32.mrb[0].mxu0
        %6989 = vmatprep.mubr.f32.mxu0 0.0
        %6990 = vmatmul.mubr.f32.gmra.mrb[0].mxu0 %v6390
        %v6991 = vpop.f32.mrb[0].mxu0
        %v6992 = vpop.f32.mrb[0].mxu0
        %6993 = vmatprep.mubr.f32.mxu0 0.0
        %6994 = vmatmul.mubr.f32.gmra.mrb[0].mxu0 %v6391
        %v6995 = vpop.f32.mrb[0].mxu0
        %v6996 = vadd.f32 0.0, %v6995
        %v6997 = vpop.f32.mrb[0].mxu0
        %6998 = vmatprep.mubr.f32.mxu0 0.0
        %6999 = vmatmul.mubr.f32.gmra.mrb[0].mxu0 %v6392
        %v7000 = vpop.f32.mrb[0].mxu0
        %v7001 = vadd.f32 0.0, %v7000
        %v7002 = vpop.f32.mrb[0].mxu0
        %7003 = vmatprep.mubr.f32.mxu0 0.0
        %7004 = vmatmul.mubr.f32.gmra.mrb[0].mxu0 %v6393
        %v7005 = vpop.f32.mrb[0].mxu0
        %v7006 = vpop.f32.mrb[0].mxu0
        %7007 = vmatprep.mubr.f32.mxu0 0.0
        %7008 = vmatmul.mubr.f32.gmra.mrb[0].mxu0 %v6394
        %v7009 = vpop.f32.mrb[0].mxu0
        %v7010 = vadd.f32 0.0, %v7009
        %v7011 = vpop.f32.mrb[0].mxu0
        %7012 = vmatprep.mubr.f32.mxu0 0.0
        %7013 = vmatmul.mubr.f32.gmra.mrb[0].mxu0 %v6395
        %v7014 = vpop.f32.mrb[0].mxu0
        %v7015 = vadd.f32 0.0, %v7014
        %v7016 = vpop.f32.mrb[0].mxu0
        %7017 = vmatprep.mubr.f32.mxu0 0.0
        %7018 = vmatmul.mubr.f32.gmra.mrb[0].mxu0 %v6396
        %v7019 = vpop.f32.mrb[0].mxu0
        %v7020 = vpop.f32.mrb[0].mxu0
        %7021 = vmatprep.mubr.f32.mxu0 0.0
        %7022 = vmatmul.mubr.f32.gmra.mrb[0].mxu0 %v6397
        %v7023 = vpop.f32.mrb[0].mxu0
        %v7024 = vadd.f32 0.0, %v7023
        %v7025 = vpop.f32.mrb[0].mxu0
        %7026 = vmatprep.mubr.f32.mxu0 0.0
        %7027 = vmatmul.mubr.f32.gmra.mrb[0].mxu0 %v6398
        %v7028 = vpop.f32.mrb[0].mxu0
        %v7029 = vadd.f32 0.0, %v7028
        %v7030 = vpop.f32.mrb[0].mxu0
        %7031 = vmatprep.mubr.f32.mxu0 0.0
        %7032 = vmatmul.mubr.f32.gmra.mrb[0].mxu0 %v6399
        %v7033 = vpop.f32.mrb[0].mxu0
        %v7034 = vpop.f32.mrb[0].mxu0
        %7035 = vmatprep.mubr.f32.mxu0 0.0
        %7036 = vmatmul.mubr.f32.gmra.mrb[0].mxu0 %v6400
        %v7037 = vpop.f32.mrb[0].mxu0
        %v7038 = vadd.f32 0.0, %v7037
        %v7039 = vpop.f32.mrb[0].mxu0
        %7040 = vmatprep.mubr.f32.mxu0 0.0
        %7041 = vmatmul.mubr.f32.gmra.mrb[0].mxu0 %v6401
        %v7042 = vpop.f32.mrb[0].mxu0
        %v7043 = vadd.f32 0.0, %v7042
        %v7044 = vpop.f32.mrb[0].mxu0
        %7045 = vmatprep.mubr.f32.mxu0 0.0
        %7046 = vmatmul.mubr.f32.gmra.mrb[0].mxu0 %v6402
        %v7047 = vpop.f32.mrb[0].mxu0
        %v7048 = vpop.f32.mrb[0].mxu0
        %7049 = vdwg.mxu0
        %v7050 = vadd.f32 %v6712, %v6828
        %v7051 = vadd.f32 %v6713, %v6833
        %v7052 = vadd.f32 %v6714, %v6842
        %v7053 = vadd.f32 %v6715, %v6847
        %v7054 = vadd.f32 %v6716, %v6856
        %v7055 = vadd.f32 %v6717, %v6861
        %v7056 = vadd.f32 %v6718, %v6870
        %v7057 = vadd.f32 %v6719, %v6875
        %v7058 = vadd.f32 %v6720, %v6884
        %v7059 = vadd.f32 %v6721, %v6889
        %v7060 = vadd.f32 %v6722, %v6898
        %v7061 = vadd.f32 %v6723, %v6903
        %v7062 = vadd.f32 %v6724, %v6912
        %v7063 = vadd.f32 %v6725, %v6917
        %v7064 = vadd.f32 %v6726, %v6926
        %v7065 = vadd.f32 %v6727, %v6931
        %v7066 = vadd.f32 %v6728, %v6940
        %v7067 = vadd.f32 %v6729, %v6945
        %v7068 = vadd.f32 %v6730, %v6954
        %v7069 = vadd.f32 %v6731, %v6959
        %v7070 = vadd.f32 %v6732, %v6968
        %v7071 = vadd.f32 %v6733, %v6973
        %v7072 = vadd.f32 %v6734, %v6982
        %v7073 = vadd.f32 %v6735, %v6987
        %v7074 = vadd.f32 %v6736, %v6996
        %v7075 = vadd.f32 %v6737, %v7001
        %v7076 = vadd.f32 %v6738, %v7010
        %v7077 = vadd.f32 %v6739, %v7015
        %v7078 = vadd.f32 %v6740, %v7024
        %v7079 = vadd.f32 %v6741, %v7029
        %v7080 = vadd.f32 %v6742, %v7038
        %v7081 = vadd.f32 %v6743, %v7043
        %s7082 = scalar_lea.vmem [#allocation8], 1024
        %v7083 = vld [vmem:[%s7082] sm:$0xff]
        %v7084 = vld [vmem:[%s7082 + $0x8] sm:$0xff]
        %v7085 = vld [vmem:[%s7082 + $0x10] sm:$0xff]
        %v7086 = vld [vmem:[%s7082 + $0x18] sm:$0xff]
        %v7087 = vld [vmem:[%s7082 + $0x20] sm:$0xff]
        %v7088 = vld [vmem:[%s7082 + $0x28] sm:$0xff]
        %v7089 = vld [vmem:[%s7082 + $0x30] sm:$0xff]
        %v7090 = vld [vmem:[%s7082 + $0x38] sm:$0xff]
        %v7091 = vld [vmem:[%s7082 + $0x40] sm:$0xff]
        %v7092 = vld [vmem:[%s7082 + $0x48] sm:$0xff]
        %v7093 = vld [vmem:[%s7082 + $0x50] sm:$0xff]
        %v7094 = vld [vmem:[%s7082 + $0x58] sm:$0xff]
        %v7095 = vld [vmem:[%s7082 + $0x60] sm:$0xff]
        %v7096 = vld [vmem:[%s7082 + $0x68] sm:$0xff]
        %v7097 = vld [vmem:[%s7082 + $0x70] sm:$0xff]
        %v7098 = vld [vmem:[%s7082 + $0x78] sm:$0xff]
        %7099 = vmatprep.subr.mxu0 0.0
        %7100 = vmatpush1.msra.mxu0 %v7083
        %7101 = vmatprep.subr.mxu0 0.0
        %7102 = vmatpush1.msra.mxu0 %v7084
        %7103 = vmatprep.subr.mxu0 0.0
        %7104 = vmatpush1.msra.mxu0 %v7085
        %7105 = vmatprep.subr.mxu0 0.0
        %7106 = vmatpush1.msra.mxu0 %v7086
        %7107 = vmatprep.subr.mxu0 0.0
        %7108 = vmatpush1.msra.mxu0 %v7087
        %7109 = vmatprep.subr.mxu0 0.0
        %7110 = vmatpush1.msra.mxu0 %v7088
        %7111 = vmatprep.subr.mxu0 0.0
        %7112 = vmatpush1.msra.mxu0 %v7089
        %7113 = vmatprep.subr.mxu0 0.0
        %7114 = vmatpush1.msra.mxu0 %v7090
        %7115 = vmatprep.subr.mxu0 0.0
        %7116 = vmatpush1.msra.mxu0 %v7091
        %7117 = vmatprep.subr.mxu0 0.0
        %7118 = vmatpush1.msra.mxu0 %v7092
        %7119 = vmatprep.subr.mxu0 0.0
        %7120 = vmatpush1.msra.mxu0 %v7093
        %7121 = vmatprep.subr.mxu0 0.0
        %7122 = vmatpush1.msra.mxu0 %v7094
        %7123 = vmatprep.subr.mxu0 0.0
        %7124 = vmatpush1.msra.mxu0 %v7095
        %7125 = vmatprep.subr.mxu0 0.0
        %7126 = vmatpush1.msra.mxu0 %v7096
        %7127 = vmatprep.subr.mxu0 0.0
        %7128 = vmatpush1.msra.mxu0 %v7097
        %7129 = vmatprep.subr.mxu0 0.0
        %7130 = vmatpush1.msra.mxu0 %v7098
        %7131 = vmatprep.subr.mxu0 0.0
        %7132 = vmatpush1.msra.mxu0 0.0
        %7133 = vmatprep.subr.mxu0 0.0
        %7134 = vmatpush1.msra.mxu0 0.0
        %7135 = vmatprep.subr.mxu0 0.0
        %7136 = vmatpush1.msra.mxu0 0.0
        %7137 = vmatprep.subr.mxu0 0.0
        %7138 = vmatpush1.msra.mxu0 0.0
        %7139 = vmatprep.subr.mxu0 0.0
        %7140 = vmatpush1.msra.mxu0 0.0
        %7141 = vmatprep.subr.mxu0 0.0
        %7142 = vmatpush1.msra.mxu0 0.0
        %7143 = vmatprep.subr.mxu0 0.0
        %7144 = vmatpush1.msra.mxu0 0.0
        %7145 = vmatprep.subr.mxu0 0.0
        %7146 = vmatpush1.msra.mxu0 0.0
        %7147 = vmatprep.subr.mxu0 0.0
        %7148 = vmatpush1.msra.mxu0 0.0
        %7149 = vmatprep.subr.mxu0 0.0
        %7150 = vmatpush1.msra.mxu0 0.0
        %7151 = vmatprep.subr.mxu0 0.0
        %7152 = vmatpush1.msra.mxu0 0.0
        %7153 = vmatprep.subr.mxu0 0.0
        %7154 = vmatpush1.msra.mxu0 0.0
        %7155 = vmatprep.subr.mxu0 0.0
        %7156 = vmatpush1.msra.mxu0 0.0
        %7157 = vmatprep.subr.mxu0 0.0
        %7158 = vmatpush1.msra.mxu0 0.0
        %7159 = vmatprep.subr.mxu0 0.0
        %7160 = vmatpush1.msra.mxu0 0.0
        %7161 = vmatprep.subr.mxu0 0.0
        %7162 = vmatpush1.msra.mxu0 0.0
        %7163 = vmatprep.mubr.f32.mxu0 0.0
        %7164 = vmatmul.mubr.f32.gmra.mrb[0].mxu0 %v6358
        %v7165 = vpop.f32.mrb[0].mxu0
        %v7166 = vadd.f32 0.0, %v7165
        %v7167 = vpop.f32.mrb[0].mxu0
        %7168 = vmatprep.mubr.f32.mxu0 0.0
        %7169 = vmatmul.mubr.f32.gmra.mrb[0].mxu0 %v6359
        %v7170 = vpop.f32.mrb[0].mxu0
        %v7171 = vadd.f32 0.0, %v7170
        %v7172 = vpop.f32.mrb[0].mxu0
        %7173 = vmatprep.mubr.f32.mxu0 0.0
        %7174 = vmatmul.mubr.f32.gmra.mrb[0].mxu0 %v6360
        %v7175 = vpop.f32.mrb[0].mxu0
        %v7176 = vpop.f32.mrb[0].mxu0
        %7177 = vmatprep.mubr.f32.mxu0 0.0
        %7178 = vmatmul.mubr.f32.gmra.mrb[0].mxu0 %v6361
        %v7179 = vpop.f32.mrb[0].mxu0
        %v7180 = vadd.f32 0.0, %v7179
        %v7181 = vpop.f32.mrb[0].mxu0
        %7182 = vmatprep.mubr.f32.mxu0 0.0
        %7183 = vmatmul.mubr.f32.gmra.mrb[0].mxu0 %v6362
        %v7184 = vpop.f32.mrb[0].mxu0
        %v7185 = vadd.f32 0.0, %v7184
        %v7186 = vpop.f32.mrb[0].mxu0
        %7187 = vmatprep.mubr.f32.mxu0 0.0
        %7188 = vmatmul.mubr.f32.gmra.mrb[0].mxu0 %v6363
        %v7189 = vpop.f32.mrb[0].mxu0
        %v7190 = vpop.f32.mrb[0].mxu0
        %7191 = vmatprep.mubr.f32.mxu0 0.0
        %7192 = vmatmul.mubr.f32.gmra.mrb[0].mxu0 %v6364
        %v7193 = vpop.f32.mrb[0].mxu0
        %v7194 = vadd.f32 0.0, %v7193
        %v7195 = vpop.f32.mrb[0].mxu0
        %7196 = vmatprep.mubr.f32.mxu0 0.0
        %7197 = vmatmul.mubr.f32.gmra.mrb[0].mxu0 %v6365
        %v7198 = vpop.f32.mrb[0].mxu0
        %v7199 = vadd.f32 0.0, %v7198
        %v7200 = vpop.f32.mrb[0].mxu0
        %7201 = vmatprep.mubr.f32.mxu0 0.0
        %7202 = vmatmul.mubr.f32.gmra.mrb[0].mxu0 %v6366
        %v7203 = vpop.f32.mrb[0].mxu0
        %v7204 = vpop.f32.mrb[0].mxu0
        %7205 = vmatprep.mubr.f32.mxu0 0.0
        %7206 = vmatmul.mubr.f32.gmra.mrb[0].mxu0 %v6367
        %v7207 = vpop.f32.mrb[0].mxu0
        %v7208 = vadd.f32 0.0, %v7207
        %v7209 = vpop.f32.mrb[0].mxu0
        %7210 = vmatprep.mubr.f32.mxu0 0.0
        %7211 = vmatmul.mubr.f32.gmra.mrb[0].mxu0 %v6368
        %v7212 = vpop.f32.mrb[0].mxu0
        %v7213 = vadd.f32 0.0, %v7212
        %v7214 = vpop.f32.mrb[0].mxu0
        %7215 = vmatprep.mubr.f32.mxu0 0.0
        %7216 = vmatmul.mubr.f32.gmra.mrb[0].mxu0 %v6369
        %v7217 = vpop.f32.mrb[0].mxu0
        %v7218 = vpop.f32.mrb[0].mxu0
        %7219 = vmatprep.mubr.f32.mxu0 0.0
        %7220 = vmatmul.mubr.f32.gmra.mrb[0].mxu0 %v6370
        %v7221 = vpop.f32.mrb[0].mxu0
        %v7222 = vadd.f32 0.0, %v7221
        %v7223 = vpop.f32.mrb[0].mxu0
        %7224 = vmatprep.mubr.f32.mxu0 0.0
        %7225 = vmatmul.mubr.f32.gmra.mrb[0].mxu0 %v6371
        %v7226 = vpop.f32.mrb[0].mxu0
        %v7227 = vadd.f32 0.0, %v7226
        %v7228 = vpop.f32.mrb[0].mxu0
        %7229 = vmatprep.mubr.f32.mxu0 0.0
        %7230 = vmatmul.mubr.f32.gmra.mrb[0].mxu0 %v6372
        %v7231 = vpop.f32.mrb[0].mxu0
        %v7232 = vpop.f32.mrb[0].mxu0
        %7233 = vmatprep.mubr.f32.mxu0 0.0
        %7234 = vmatmul.mubr.f32.gmra.mrb[0].mxu0 %v6373
        %v7235 = vpop.f32.mrb[0].mxu0
        %v7236 = vadd.f32 0.0, %v7235
        %v7237 = vpop.f32.mrb[0].mxu0
        %7238 = vmatprep.mubr.f32.mxu0 0.0
        %7239 = vmatmul.mubr.f32.gmra.mrb[0].mxu0 %v6374
        %v7240 = vpop.f32.mrb[0].mxu0
        %v7241 = vadd.f32 0.0, %v7240
        %v7242 = vpop.f32.mrb[0].mxu0
        %7243 = vmatprep.mubr.f32.mxu0 0.0
        %7244 = vmatmul.mubr.f32.gmra.mrb[0].mxu0 %v6375
        %v7245 = vpop.f32.mrb[0].mxu0
        %v7246 = vpop.f32.mrb[0].mxu0
        %7247 = vmatprep.mubr.f32.mxu0 0.0
        %7248 = vmatmul.mubr.f32.gmra.mrb[0].mxu0 %v6376
        %v7249 = vpop.f32.mrb[0].mxu0
        %v7250 = vadd.f32 0.0, %v7249
        %v7251 = vpop.f32.mrb[0].mxu0
        %7252 = vmatprep.mubr.f32.mxu0 0.0
        %7253 = vmatmul.mubr.f32.gmra.mrb[0].mxu0 %v6377
        %v7254 = vpop.f32.mrb[0].mxu0
        %v7255 = vadd.f32 0.0, %v7254
        %v7256 = vpop.f32.mrb[0].mxu0
        %7257 = vmatprep.mubr.f32.mxu0 0.0
        %7258 = vmatmul.mubr.f32.gmra.mrb[0].mxu0 %v6378
        %v7259 = vpop.f32.mrb[0].mxu0
        %v7260 = vpop.f32.mrb[0].mxu0
        %7261 = vmatprep.mubr.f32.mxu0 0.0
        %7262 = vmatmul.mubr.f32.gmra.mrb[0].mxu0 %v6379
        %v7263 = vpop.f32.mrb[0].mxu0
        %v7264 = vadd.f32 0.0, %v7263
        %v7265 = vpop.f32.mrb[0].mxu0
        %7266 = vmatprep.mubr.f32.mxu0 0.0
        %7267 = vmatmul.mubr.f32.gmra.mrb[0].mxu0 %v6380
        %v7268 = vpop.f32.mrb[0].mxu0
        %v7269 = vadd.f32 0.0, %v7268
        %v7270 = vpop.f32.mrb[0].mxu0
        %7271 = vmatprep.mubr.f32.mxu0 0.0
        %7272 = vmatmul.mubr.f32.gmra.mrb[0].mxu0 %v6381
        %v7273 = vpop.f32.mrb[0].mxu0
        %v7274 = vpop.f32.mrb[0].mxu0
        %7275 = vmatprep.mubr.f32.mxu0 0.0
        %7276 = vmatmul.mubr.f32.gmra.mrb[0].mxu0 %v6382
        %v7277 = vpop.f32.mrb[0].mxu0
        %v7278 = vadd.f32 0.0, %v7277
        %v7279 = vpop.f32.mrb[0].mxu0
        %7280 = vmatprep.mubr.f32.mxu0 0.0
        %7281 = vmatmul.mubr.f32.gmra.mrb[0].mxu0 %v6383
        %v7282 = vpop.f32.mrb[0].mxu0
        %v7283 = vadd.f32 0.0, %v7282
        %v7284 = vpop.f32.mrb[0].mxu0
        %7285 = vmatprep.mubr.f32.mxu0 0.0
        %7286 = vmatmul.mubr.f32.gmra.mrb[0].mxu0 %v6384
        %v7287 = vpop.f32.mrb[0].mxu0
        %v7288 = vpop.f32.mrb[0].mxu0
        %7289 = vmatprep.mubr.f32.mxu0 0.0
        %7290 = vmatmul.mubr.f32.gmra.mrb[0].mxu0 %v6385
        %v7291 = vpop.f32.mrb[0].mxu0
        %v7292 = vadd.f32 0.0, %v7291
        %v7293 = vpop.f32.mrb[0].mxu0
        %7294 = vmatprep.mubr.f32.mxu0 0.0
        %7295 = vmatmul.mubr.f32.gmra.mrb[0].mxu0 %v6386
        %v7296 = vpop.f32.mrb[0].mxu0
        %v7297 = vadd.f32 0.0, %v7296
        %v7298 = vpop.f32.mrb[0].mxu0
        %7299 = vmatprep.mubr.f32.mxu0 0.0
        %7300 = vmatmul.mubr.f32.gmra.mrb[0].mxu0 %v6387
        %v7301 = vpop.f32.mrb[0].mxu0
        %v7302 = vpop.f32.mrb[0].mxu0
        %7303 = vmatprep.mubr.f32.mxu0 0.0
        %7304 = vmatmul.mubr.f32.gmra.mrb[0].mxu0 %v6388
        %v7305 = vpop.f32.mrb[0].mxu0
        %v7306 = vadd.f32 0.0, %v7305
        %v7307 = vpop.f32.mrb[0].mxu0
        %7308 = vmatprep.mubr.f32.mxu0 0.0
        %7309 = vmatmul.mubr.f32.gmra.mrb[0].mxu0 %v6389
        %v7310 = vpop.f32.mrb[0].mxu0
        %v7311 = vadd.f32 0.0, %v7310
        %v7312 = vpop.f32.mrb[0].mxu0
        %7313 = vmatprep.mubr.f32.mxu0 0.0
        %7314 = vmatmul.mubr.f32.gmra.mrb[0].mxu0 %v6390
        %v7315 = vpop.f32.mrb[0].mxu0
        %v7316 = vpop.f32.mrb[0].mxu0
        %7317 = vmatprep.mubr.f32.mxu0 0.0
        %7318 = vmatmul.mubr.f32.gmra.mrb[0].mxu0 %v6391
        %v7319 = vpop.f32.mrb[0].mxu0
        %v7320 = vadd.f32 0.0, %v7319
        %v7321 = vpop.f32.mrb[0].mxu0
        %7322 = vmatprep.mubr.f32.mxu0 0.0
        %7323 = vmatmul.mubr.f32.gmra.mrb[0].mxu0 %v6392
        %v7324 = vpop.f32.mrb[0].mxu0
        %v7325 = vadd.f32 0.0, %v7324
        %v7326 = vpop.f32.mrb[0].mxu0
        %7327 = vmatprep.mubr.f32.mxu0 0.0
        %7328 = vmatmul.mubr.f32.gmra.mrb[0].mxu0 %v6393
        %v7329 = vpop.f32.mrb[0].mxu0
        %v7330 = vpop.f32.mrb[0].mxu0
        %7331 = vmatprep.mubr.f32.mxu0 0.0
        %7332 = vmatmul.mubr.f32.gmra.mrb[0].mxu0 %v6394
        %v7333 = vpop.f32.mrb[0].mxu0
        %v7334 = vadd.f32 0.0, %v7333
        %v7335 = vpop.f32.mrb[0].mxu0
        %7336 = vmatprep.mubr.f32.mxu0 0.0
        %7337 = vmatmul.mubr.f32.gmra.mrb[0].mxu0 %v6395
        %v7338 = vpop.f32.mrb[0].mxu0
        %v7339 = vadd.f32 0.0, %v7338
        %v7340 = vpop.f32.mrb[0].mxu0
        %7341 = vmatprep.mubr.f32.mxu0 0.0
        %7342 = vmatmul.mubr.f32.gmra.mrb[0].mxu0 %v6396
        %v7343 = vpop.f32.mrb[0].mxu0
        %v7344 = vpop.f32.mrb[0].mxu0
        %7345 = vmatprep.mubr.f32.mxu0 0.0
        %7346 = vmatmul.mubr.f32.gmra.mrb[0].mxu0 %v6397
        %v7347 = vpop.f32.mrb[0].mxu0
        %v7348 = vadd.f32 0.0, %v7347
        %v7349 = vpop.f32.mrb[0].mxu0
        %7350 = vmatprep.mubr.f32.mxu0 0.0
        %7351 = vmatmul.mubr.f32.gmra.mrb[0].mxu0 %v6398
        %v7352 = vpop.f32.mrb[0].mxu0
        %v7353 = vadd.f32 0.0, %v7352
        %v7354 = vpop.f32.mrb[0].mxu0
        %7355 = vmatprep.mubr.f32.mxu0 0.0
        %7356 = vmatmul.mubr.f32.gmra.mrb[0].mxu0 %v6399
        %v7357 = vpop.f32.mrb[0].mxu0
        %v7358 = vpop.f32.mrb[0].mxu0
        %7359 = vmatprep.mubr.f32.mxu0 0.0
        %7360 = vmatmul.mubr.f32.gmra.mrb[0].mxu0 %v6400
        %v7361 = vpop.f32.mrb[0].mxu0
        %v7362 = vadd.f32 0.0, %v7361
        %v7363 = vpop.f32.mrb[0].mxu0
        %7364 = vmatprep.mubr.f32.mxu0 0.0
        %7365 = vmatmul.mubr.f32.gmra.mrb[0].mxu0 %v6401
        %v7366 = vpop.f32.mrb[0].mxu0
        %v7367 = vadd.f32 0.0, %v7366
        %v7368 = vpop.f32.mrb[0].mxu0
        %7369 = vmatprep.mubr.f32.mxu0 0.0
        %7370 = vmatmul.mubr.f32.gmra.mrb[0].mxu0 %v6402
        %v7371 = vpop.f32.mrb[0].mxu0
        %v7372 = vpop.f32.mrb[0].mxu0
        %7373 = vmatprep.mubr.f32.mxu0 0.0
        %7374 = vmatmul.mubr.f32.gmra.mrb[0].mxu0 %v6403
        %v7375 = vpop.f32.mrb[0].mxu0
        %v7376 = vadd.f32 0.0, %v7375
        %v7377 = vpop.f32.mrb[0].mxu0
        %7378 = vmatprep.mubr.f32.mxu0 0.0
        %7379 = vmatmul.mubr.f32.gmra.mrb[0].mxu0 %v6404
        %v7380 = vpop.f32.mrb[0].mxu0
        %v7381 = vadd.f32 0.0, %v7380
        %v7382 = vpop.f32.mrb[0].mxu0
        %7383 = vmatprep.mubr.f32.mxu0 0.0
        %7384 = vmatmul.mubr.f32.gmra.mrb[0].mxu0 %v6405
        %v7385 = vpop.f32.mrb[0].mxu0
        %v7386 = vpop.f32.mrb[0].mxu0
        %7387 = vdwg.mxu0
        %v7388 = vadd.f32 %v7050, %v7166
        %v7389 = vadd.f32 %v7051, %v7171
        %v7390 = vadd.f32 %v7052, %v7180
        %v7391 = vadd.f32 %v7053, %v7185
        %v7392 = vadd.f32 %v7054, %v7194
        %v7393 = vadd.f32 %v7055, %v7199
        %v7394 = vadd.f32 %v7056, %v7208
        %v7395 = vadd.f32 %v7057, %v7213
        %v7396 = vadd.f32 %v7058, %v7222
        %v7397 = vadd.f32 %v7059, %v7227
        %v7398 = vadd.f32 %v7060, %v7236
        %v7399 = vadd.f32 %v7061, %v7241
        %v7400 = vadd.f32 %v7062, %v7250
        %v7401 = vadd.f32 %v7063, %v7255
        %v7402 = vadd.f32 %v7064, %v7264
        %v7403 = vadd.f32 %v7065, %v7269
        %v7404 = vadd.f32 %v7066, %v7278
        %v7405 = vadd.f32 %v7067, %v7283
        %v7406 = vadd.f32 %v7068, %v7292
        %v7407 = vadd.f32 %v7069, %v7297
        %v7408 = vadd.f32 %v7070, %v7306
        %v7409 = vadd.f32 %v7071, %v7311
        %v7410 = vadd.f32 %v7072, %v7320
        %v7411 = vadd.f32 %v7073, %v7325
        %v7412 = vadd.f32 %v7074, %v7334
        %v7413 = vadd.f32 %v7075, %v7339
        %v7414 = vadd.f32 %v7076, %v7348
        %v7415 = vadd.f32 %v7077, %v7353
        %v7416 = vadd.f32 %v7078, %v7362
        %v7417 = vadd.f32 %v7079, %v7367
        %v7418 = vadd.f32 %v7080, %v7376
        %v7419 = vadd.f32 %v7081, %v7381
        %v7420 = vld [vmem:[%s4] sm:$0x1]
        %v7422 = vlaneseq
        %v7423 = vshrl.u32 %v7422, 7
        %v7424 = vsub.s32 0, %v7423
        %v7425 = vrot.slane %v7420, %v7424
        %v7427 = vadd.f32 %v7388, %v7425
        %v7428 = vadd.f32 %v7389, %v7425
        %v7429 = vadd.f32 %v7390, %v7425
        %v7430 = vadd.f32 %v7391, %v7425
        %v7431 = vadd.f32 %v7392, %v7425
        %v7432 = vadd.f32 %v7393, %v7425
        %v7433 = vadd.f32 %v7394, %v7425
        %v7434 = vadd.f32 %v7395, %v7425
        %v7435 = vadd.f32 %v7396, %v7425
        %v7436 = vadd.f32 %v7397, %v7425
        %v7437 = vadd.f32 %v7398, %v7425
        %v7438 = vadd.f32 %v7399, %v7425
        %v7439 = vadd.f32 %v7400, %v7425
        %v7440 = vadd.f32 %v7401, %v7425
        %v7441 = vadd.f32 %v7402, %v7425
        %v7442 = vadd.f32 %v7403, %v7425
        %v7443 = vadd.f32 %v7404, %v7425
        %v7444 = vadd.f32 %v7405, %v7425
        %v7445 = vadd.f32 %v7406, %v7425
        %v7446 = vadd.f32 %v7407, %v7425
        %v7447 = vadd.f32 %v7408, %v7425
        %v7448 = vadd.f32 %v7409, %v7425
        %v7449 = vadd.f32 %v7410, %v7425
        %v7450 = vadd.f32 %v7411, %v7425
        %v7451 = vadd.f32 %v7412, %v7425
        %v7452 = vadd.f32 %v7413, %v7425
        %v7453 = vadd.f32 %v7414, %v7425
        %v7454 = vadd.f32 %v7415, %v7425
        %v7455 = vadd.f32 %v7416, %v7425
        %v7456 = vadd.f32 %v7417, %v7425
        %v7457 = vadd.f32 %v7418, %v7425
        %v7458 = vadd.f32 %v7419, %v7425
        %v7459 = vadd.f32 %v7427, %v7428
        %v7460 = vadd.f32 %v7459, %v7429
        %v7461 = vadd.f32 %v7460, %v7430
        %v7462 = vadd.f32 %v7461, %v7431
        %v7463 = vadd.f32 %v7462, %v7432
        %v7464 = vadd.f32 %v7463, %v7433
        %v7465 = vadd.f32 %v7464, %v7434
        %v7466 = vadd.f32 %v7465, %v7435
        %v7467 = vadd.f32 %v7466, %v7436
        %v7468 = vadd.f32 %v7467, %v7437
        %v7469 = vadd.f32 %v7468, %v7438
        %v7470 = vadd.f32 %v7469, %v7439
        %v7471 = vadd.f32 %v7470, %v7440
        %v7472 = vadd.f32 %v7471, %v7441
        %v7473 = vadd.f32 %v7472, %v7442
        %v7474 = vadd.f32 %v7473, %v7443
        %v7475 = vadd.f32 %v7474, %v7444
        %v7476 = vadd.f32 %v7475, %v7445
        %v7477 = vadd.f32 %v7476, %v7446
        %v7478 = vadd.f32 %v7477, %v7447
        %v7479 = vadd.f32 %v7478, %v7448
        %v7480 = vadd.f32 %v7479, %v7449
        %v7481 = vadd.f32 %v7480, %v7450
        %v7482 = vadd.f32 %v7481, %v7451
        %v7483 = vadd.f32 %v7482, %v7452
        %v7484 = vadd.f32 %v7483, %v7453
        %v7485 = vadd.f32 %v7484, %v7454
        %v7486 = vadd.f32 %v7485, %v7455
        %v7487 = vadd.f32 %v7486, %v7456
        %v7488 = vadd.f32 %v7487, %v7457
        %v7489 = vadd.f32 %v7488, %v7458
        %v7490 = vrot.slane %v7489, 4
        %v7491 = vadd.f32 %v7489, %v7490
        %v7492 = vrot.slane %v7491, 2
        %v7493 = vadd.f32 %v7491, %v7492
        %v7494 = vrot.slane %v7493, 1
        %v7495 = vadd.f32 %v7493, %v7494
        %v7496 = vmul.f32 %v7495, 0.00390625
        %v7497 = vsub.f32 %v7427, %v7496
        %v7498 = vsub.f32 %v7428, %v7496
        %v7499 = vsub.f32 %v7429, %v7496
        %v7500 = vsub.f32 %v7430, %v7496
        %v7501 = vsub.f32 %v7431, %v7496
        %v7502 = vsub.f32 %v7432, %v7496
        %v7503 = vsub.f32 %v7433, %v7496
        %v7504 = vsub.f32 %v7434, %v7496
        %v7505 = vsub.f32 %v7435, %v7496
        %v7506 = vsub.f32 %v7436, %v7496
        %v7507 = vsub.f32 %v7437, %v7496
        %v7508 = vsub.f32 %v7438, %v7496
        %v7509 = vsub.f32 %v7439, %v7496
        %v7510 = vsub.f32 %v7440, %v7496
        %v7511 = vsub.f32 %v7441, %v7496
        %v7512 = vsub.f32 %v7442, %v7496
        %v7513 = vsub.f32 %v7443, %v7496
        %v7514 = vsub.f32 %v7444, %v7496
        %v7515 = vsub.f32 %v7445, %v7496
        %v7516 = vsub.f32 %v7446, %v7496
        %v7517 = vsub.f32 %v7447, %v7496
        %v7518 = vsub.f32 %v7448, %v7496
        %v7519 = vsub.f32 %v7449, %v7496
        %v7520 = vsub.f32 %v7450, %v7496
        %v7521 = vsub.f32 %v7451, %v7496
        %v7522 = vsub.f32 %v7452, %v7496
        %v7523 = vsub.f32 %v7453, %v7496
        %v7524 = vsub.f32 %v7454, %v7496
        %v7525 = vsub.f32 %v7455, %v7496
        %v7526 = vsub.f32 %v7456, %v7496
        %v7527 = vsub.f32 %v7457, %v7496
        %v7528 = vsub.f32 %v7458, %v7496
        %v7529 = vmul.f32 %v7497, %v7497
        %v7530 = vmul.f32 %v7498, %v7498
        %v7531 = vmul.f32 %v7499, %v7499
        %v7532 = vmul.f32 %v7500, %v7500
        %v7533 = vmul.f32 %v7501, %v7501
        %v7534 = vmul.f32 %v7502, %v7502
        %v7535 = vmul.f32 %v7503, %v7503
        %v7536 = vmul.f32 %v7504, %v7504
        %v7537 = vmul.f32 %v7505, %v7505
        %v7538 = vmul.f32 %v7506, %v7506
        %v7539 = vmul.f32 %v7507, %v7507
        %v7540 = vmul.f32 %v7508, %v7508
        %v7541 = vmul.f32 %v7509, %v7509
        %v7542 = vmul.f32 %v7510, %v7510
        %v7543 = vmul.f32 %v7511, %v7511
        %v7544 = vmul.f32 %v7512, %v7512
        %v7545 = vmul.f32 %v7513, %v7513
        %v7546 = vmul.f32 %v7514, %v7514
        %v7547 = vmul.f32 %v7515, %v7515
        %v7548 = vmul.f32 %v7516, %v7516
        %v7549 = vmul.f32 %v7517, %v7517
        %v7550 = vmul.f32 %v7518, %v7518
        %v7551 = vmul.f32 %v7519, %v7519
        %v7552 = vmul.f32 %v7520, %v7520
        %v7553 = vmul.f32 %v7521, %v7521
        %v7554 = vmul.f32 %v7522, %v7522
        %v7555 = vmul.f32 %v7523, %v7523
        %v7556 = vmul.f32 %v7524, %v7524
        %v7557 = vmul.f32 %v7525, %v7525
        %v7558 = vmul.f32 %v7526, %v7526
        %v7559 = vmul.f32 %v7527, %v7527
        %v7560 = vmul.f32 %v7528, %v7528
        %v7561 = vadd.f32 %v7529, %v7530
        %v7562 = vadd.f32 %v7561, %v7531
        %v7563 = vadd.f32 %v7562, %v7532
        %v7564 = vadd.f32 %v7563, %v7533
        %v7565 = vadd.f32 %v7564, %v7534
        %v7566 = vadd.f32 %v7565, %v7535
        %v7567 = vadd.f32 %v7566, %v7536
        %v7568 = vadd.f32 %v7567, %v7537
        %v7569 = vadd.f32 %v7568, %v7538
        %v7570 = vadd.f32 %v7569, %v7539
        %v7571 = vadd.f32 %v7570, %v7540
        %v7572 = vadd.f32 %v7571, %v7541
        %v7573 = vadd.f32 %v7572, %v7542
        %v7574 = vadd.f32 %v7573, %v7543
        %v7575 = vadd.f32 %v7574, %v7544
        %v7576 = vadd.f32 %v7575, %v7545
        %v7577 = vadd.f32 %v7576, %v7546
        %v7578 = vadd.f32 %v7577, %v7547
        %v7579 = vadd.f32 %v7578, %v7548
        %v7580 = vadd.f32 %v7579, %v7549
        %v7581 = vadd.f32 %v7580, %v7550
        %v7582 = vadd.f32 %v7581, %v7551
        %v7583 = vadd.f32 %v7582, %v7552
        %v7584 = vadd.f32 %v7583, %v7553
        %v7585 = vadd.f32 %v7584, %v7554
        %v7586 = vadd.f32 %v7585, %v7555
        %v7587 = vadd.f32 %v7586, %v7556
        %v7588 = vadd.f32 %v7587, %v7557
        %v7589 = vadd.f32 %v7588, %v7558
        %v7590 = vadd.f32 %v7589, %v7559
        %v7591 = vadd.f32 %v7590, %v7560
        %v7592 = vrot.slane %v7591, 4
        %v7593 = vadd.f32 %v7591, %v7592
        %v7594 = vrot.slane %v7593, 2
        %v7595 = vadd.f32 %v7593, %v7594
        %v7596 = vrot.slane %v7595, 1
        %v7597 = vadd.f32 %v7595, %v7596
        %v7598 = vmul.f32 %v7597, 0.00390625
        %v7599 = vadd.f32 %v7598, 1e-05
        %v7600 = vrsqrt.pop %v7599
        %v7601 = vmul.f32 %v7497, %v7600
        %v7602 = vmul.f32 %v7498, %v7600
        %v7603 = vmul.f32 %v7499, %v7600
        %v7604 = vmul.f32 %v7500, %v7600
        %v7605 = vmul.f32 %v7501, %v7600
        %v7606 = vmul.f32 %v7502, %v7600
        %v7607 = vmul.f32 %v7503, %v7600
        %v7608 = vmul.f32 %v7504, %v7600
        %v7609 = vmul.f32 %v7505, %v7600
        %v7610 = vmul.f32 %v7506, %v7600
        %v7611 = vmul.f32 %v7507, %v7600
        %v7612 = vmul.f32 %v7508, %v7600
        %v7613 = vmul.f32 %v7509, %v7600
        %v7614 = vmul.f32 %v7510, %v7600
        %v7615 = vmul.f32 %v7511, %v7600
        %v7616 = vmul.f32 %v7512, %v7600
        %v7617 = vmul.f32 %v7513, %v7600
        %v7618 = vmul.f32 %v7514, %v7600
        %v7619 = vmul.f32 %v7515, %v7600
        %v7620 = vmul.f32 %v7516, %v7600
        %v7621 = vmul.f32 %v7517, %v7600
        %v7622 = vmul.f32 %v7518, %v7600
        %v7623 = vmul.f32 %v7519, %v7600
        %v7624 = vmul.f32 %v7520, %v7600
        %v7625 = vmul.f32 %v7521, %v7600
        %v7626 = vmul.f32 %v7522, %v7600
        %v7627 = vmul.f32 %v7523, %v7600
        %v7628 = vmul.f32 %v7524, %v7600
        %v7629 = vmul.f32 %v7525, %v7600
        %v7630 = vmul.f32 %v7526, %v7600
        %v7631 = vmul.f32 %v7527, %v7600
        %v7632 = vmul.f32 %v7528, %v7600
        %v7633 = vadd.f32 %v275, %v7601
        %v7634 = vadd.f32 %v276, %v7602
        %v7635 = vadd.f32 %v277, %v7603
        %v7636 = vadd.f32 %v278, %v7604
        %v7637 = vadd.f32 %v279, %v7605
        %v7638 = vadd.f32 %v280, %v7606
        %v7639 = vadd.f32 %v281, %v7607
        %v7640 = vadd.f32 %v282, %v7608
        %v7641 = vadd.f32 %v283, %v7609
        %v7642 = vadd.f32 %v284, %v7610
        %v7643 = vadd.f32 %v285, %v7611
        %v7644 = vadd.f32 %v286, %v7612
        %v7645 = vadd.f32 %v287, %v7613
        %v7646 = vadd.f32 %v288, %v7614
        %v7647 = vadd.f32 %v289, %v7615
        %v7648 = vadd.f32 %v290, %v7616
        %v7649 = vadd.f32 %v291, %v7617
        %v7650 = vadd.f32 %v292, %v7618
        %v7651 = vadd.f32 %v293, %v7619
        %v7652 = vadd.f32 %v294, %v7620
        %v7653 = vadd.f32 %v295, %v7621
        %v7654 = vadd.f32 %v296, %v7622
        %v7655 = vadd.f32 %v297, %v7623
        %v7656 = vadd.f32 %v298, %v7624
        %v7657 = vadd.f32 %v299, %v7625
        %v7658 = vadd.f32 %v300, %v7626
        %v7659 = vadd.f32 %v301, %v7627
        %v7660 = vadd.f32 %v302, %v7628
        %v7661 = vadd.f32 %v303, %v7629
        %v7662 = vadd.f32 %v304, %v7630
        %v7663 = vadd.f32 %v305, %v7631
        %v7664 = vadd.f32 %v306, %v7632
        %7665 = vst [vmem:[%s271] sm:$0xff] %v7633
        %7666 = vst [vmem:[%s271 + $0x8] sm:$0xff] %v7634
        %7667 = vst [vmem:[%s271 + $0x10] sm:$0xff] %v7635
        %7668 = vst [vmem:[%s271 + $0x18] sm:$0xff] %v7636
        %7669 = vst [vmem:[%s271 + $0x20] sm:$0xff] %v7637
        %7670 = vst [vmem:[%s271 + $0x28] sm:$0xff] %v7638
        %7671 = vst [vmem:[%s271 + $0x30] sm:$0xff] %v7639
        %7672 = vst [vmem:[%s271 + $0x38] sm:$0xff] %v7640
        %7673 = vst [vmem:[%s271 + $0x40] sm:$0xff] %v7641
        %7674 = vst [vmem:[%s271 + $0x48] sm:$0xff] %v7642
        %7675 = vst [vmem:[%s271 + $0x50] sm:$0xff] %v7643
        %7676 = vst [vmem:[%s271 + $0x58] sm:$0xff] %v7644
        %7677 = vst [vmem:[%s271 + $0x60] sm:$0xff] %v7645
        %7678 = vst [vmem:[%s271 + $0x68] sm:$0xff] %v7646
        %7679 = vst [vmem:[%s271 + $0x70] sm:$0xff] %v7647
        %7680 = vst [vmem:[%s271 + $0x78] sm:$0xff] %v7648
        %7681 = vst [vmem:[%s271 + $0x80] sm:$0xff] %v7649
        %7682 = vst [vmem:[%s271 + $0x88] sm:$0xff] %v7650
        %7683 = vst [vmem:[%s271 + $0x90] sm:$0xff] %v7651
        %7684 = vst [vmem:[%s271 + $0x98] sm:$0xff] %v7652
        %7685 = vst [vmem:[%s271 + $0xa0] sm:$0xff] %v7653
        %7686 = vst [vmem:[%s271 + $0xa8] sm:$0xff] %v7654
        %7687 = vst [vmem:[%s271 + $0xb0] sm:$0xff] %v7655
        %7688 = vst [vmem:[%s271 + $0xb8] sm:$0xff] %v7656
        %7689 = vst [vmem:[%s271 + $0xc0] sm:$0xff] %v7657
        %7690 = vst [vmem:[%s271 + $0xc8] sm:$0xff] %v7658
        %7691 = vst [vmem:[%s271 + $0xd0] sm:$0xff] %v7659
        %7692 = vst [vmem:[%s271 + $0xd8] sm:$0xff] %v7660
        %7693 = vst [vmem:[%s271 + $0xe0] sm:$0xff] %v7661
        %7694 = vst [vmem:[%s271 + $0xe8] sm:$0xff] %v7662
        %7695 = vst [vmem:[%s271 + $0xf0] sm:$0xff] %v7663
        %7696 = vst [vmem:[%s271 + $0xf8] sm:$0xff] %v7664
        %s7697 = sand.u32 %s141, 1
        %s7698 = scalar_lea.sflag [#allocation5], %s7697
        %s7699 = sand.u32 %s141, 1
        %s7700 = smul.addr %s7699, 256
        %s7701 = scalar_lea.vmem [#allocation9], %s7700
        // Predicated region
        $region53: #{tpu_custom_call.1} parent=39 // pred_check
          %p7702 = pneg %p151
        $region54: #{tpu_custom_call.1} parent=39 // pred_check_branch
          %7704 = sbr.rel (%p7702) target = $region56
        $region55: #{tpu_custom_call.1} parent=39 // pred_region
          %s7706 = ssub.s32 4096, 4096
          %7707 = vsyncadd %s7698, %s7706
          %s7708 = smul.addr %s23, 32
          %s7709 = smul.addr %s7708, 128
          %s7710 = scalar_lea.hbm %s5, %s7709
          %s7711 = sshll.u32 %s7701, 4
          %s7712 = int_to_ptr.vmem [resolvable:$true] %s7711
          %7717 = dma.vmem_to_hbm [thread:$0]  %s7712, 4096, %s7710, %s7698, 128, 128, 8
        $region56: #{tpu_custom_call.1} parent=39 // pred_fallthru
          _
      $region40: #{tpu_custom_call.1} parent=5 // pred_fallthru
        _
      %p7718 = scmp.le.s32.totalorder 2, %s18
      // Predicated region
      $region57: #{tpu_custom_call.1} parent=5 // pred_check
        %p7719 = pneg %p7718
      $region58: #{tpu_custom_call.1} parent=5 // pred_check_branch
        %7721 = sbr.rel (%p7719) target = $region60
      $region59: #{tpu_custom_call.1} parent=5 // pred_region
        %s7722 = ssub.s32 %s18, 2
        // Predicated region
        $region61: #{tpu_custom_call.1} parent=59 // pred_check
          %p7723 = pneg %p157
        $region62: #{tpu_custom_call.1} parent=59 // pred_check_branch
          %7725 = sbr.rel (%p7723) target = $region64
        $region63: #{tpu_custom_call.1} parent=59 // pred_region
          %s7726 = sand.u32 %s142, 1
          %s7727 = scalar_lea.sflag [#allocation5], %s7726
          %s7728 = sand.u32 %s142, 1
          %s7729 = smul.addr %s7728, 256
          %s7730 = scalar_lea.vmem [#allocation9], %s7729
          %7731 = dma.done %s7727, 4096
        $region64: #{tpu_custom_call.1} parent=59 // pred_fallthru
          _
      $region60: #{tpu_custom_call.1} parent=5 // pred_fallthru
        _
    $region6: #{tpu_custom_call.1} parent=1 // loop_footer
      %s22 = sadd.s32 1, %s18
    $region7: #{tpu_custom_call.1} parent=1 // loop_footer_branch
      %17 = sbr.rel target = $region3
    $region8: #{tpu_custom_call.1} parent=1 // loop_exit
      _
    %7732 = vsyncpa [#allocation4], 1
    %s7733 = scalar_lea.sflag [#allocation4], 1
    %7734 = vsyncpa %s7733, 1
    %7735 = vsyncpa [#allocation7], 1
    %7736 = vsyncpa [#allocation5], 1
    %s7737 = scalar_lea.sflag [#allocation5], 1
    %7738 = vsyncpa %s7737, 1

</llo_original>
